<compile_context>
chip_gen: v5e
topology: v5e:2x2
jax: 0.10.0
libtpu: 0.0.40
codegen_flags: <defaults>
</compile_context>

<pallas_src>
import functools

import jax
import jax.numpy as jnp
from jax import lax
from jax.experimental import pallas as pl
from jax.experimental.pallas import tpu as pltpu

LANE = 128
MXU_DTYPE = jnp.bfloat16      # MXU operand dtype; accumulation stays f32.


def _round_up(x, m):
    return (x + m - 1) // m * m


def _vmem_capacity_bytes():
    """Per-TensorCore VMEM capacity (gen-aware tiling); conservative fallback = v7x (64 MiB)."""
    try:
        cap = int(pltpu.get_tpu_info().vmem_capacity_bytes)
        if cap > 0:
            return cap
    except Exception:
        pass
    return 64 * 1024 * 1024


def _pick_row_tile(H, W, N, Cinp, Coutp, budget_bytes):
    """Largest H-divisor row tile whose working set fits the VMEM budget.

    Prefers the smallest tile giving the MXU/DMA >= ~1K rows per step (per-step overhead amortized);
    when N == 1 keeps >= 2 row tiles so both v7x TensorCores get work.
    """
    def vmem_need(th):
        slab = (th + 2) * (W + 2) * Cinp * 4
        return (2 * slab                      # double-buffered DMA slab scratch (f32)
                + 2 * slab                    # slab value + fused-activation temporary
                + th * W * Cinp * 6           # per-tap view (f32 slice + bf16 cast)
                + 3 * th * W * Coutp * 4      # f32 accumulator + double-buffered y block
                + 2 * 9 * Cinp * Coutp * 2    # double-buffered bf16 weights
                + (2 << 20))                  # stats / compiler temporaries

    divisors = [d for d in range(1, H + 1) if H % d == 0]
    if N == 1 and len(divisors) > 1:
        divisors = divisors[:-1]              # keep >= 2 row tiles for megacore balance
    fitting = [d for d in divisors if vmem_need(d) <= budget_bytes]
    if not fitting:
        return divisors[0]
    for d in fitting:
        if d * W >= 1024:
            return d
    return fitting[-1]


def _elem_row_tile(M, cap):
    for d in range(min(M, cap), 7, -1):
        if M % d == 0 and d % 8 == 0:
            return d
    return M


# ----------------------------- conv + BN-stats kernel -----------------------------

def _conv3x3_bn_stats_kernel(apply_input_act, x_hbm, w_ref, sc_ref, bi_ref,
                             y_ref, stat_ref, xbuf, sems):
    """One (batch-sample, row-tile) grid step: 3x3 same-conv + BN partial stats.

    x_hbm   : (N, H, W, Cinp)      input in HBM (pl.ANY), manual double-buffered halo DMA
    w_ref   : (9, Cinp, Coutp)     per-tap weights, bf16, resident in VMEM
    sc_ref  : (1, Cinp)            fused input-BN scale (conv2 path; unused for conv1)
    bi_ref  : (1, Cinp)            fused input-BN bias
    y_ref   : (1, TH, W, Coutp)    conv output tile (f32)
    stat_ref: (1, 1, 2, Coutp)     per-tile [sum, sum_sq] of the conv output
    xbuf    : (2, TH+2, W+2, Cinp) double-buffered input slab incl. spatial halo
    sems    : (2, 3) DMA sems      [slot, {body rows, top halo row, bottom halo row}]
    """
    _, th, wd, coutp = y_ref.shape
    _, slab_rows, wp, cpad = xbuf.shape
    n = pl.program_id(0)
    h = pl.program_id(1)
    n_h = pl.num_programs(1)
    slot = h % 2

    def start_fetch(nn, hh, sl):
        # Main rows [hh*th, hh*th+th) -> slab rows [1, th+1), columns [1, W+1).
        pltpu.make_async_copy(
            x_hbm.at[nn, pl.ds(hh * th, th)],
            xbuf.at[sl, pl.ds(1, th), pl.ds(1, wd)],
            sems.at[sl, 0]).start()

        @pl.when(hh > 0)            # top halo row (image top is zero padding instead)
        def _():
            pltpu.make_async_copy(
                x_hbm.at[nn, pl.ds(hh * th - 1, 1)],
                xbuf.at[sl, pl.ds(0, 1), pl.ds(1, wd)],
                sems.at[sl, 1]).start()

        @pl.when(hh < n_h - 1)      # bottom halo row (image bottom is zero padding instead)
        def _():
            pltpu.make_async_copy(
                x_hbm.at[nn, pl.ds((hh + 1) * th, 1)],
                xbuf.at[sl, pl.ds(th + 1, 1), pl.ds(1, wd)],
                sems.at[sl, 2]).start()

    def wait_fetch(hh, sl):
        pltpu.make_async_copy(
            x_hbm.at[0, pl.ds(0, th)],
            xbuf.at[sl, pl.ds(1, th), pl.ds(1, wd)],
            sems.at[sl, 0]).wait()

        @pl.when(hh > 0)
        def _():
            pltpu.make_async_copy(
                x_hbm.at[0, pl.ds(0, 1)],
                xbuf.at[sl, pl.ds(0, 1), pl.ds(1, wd)],
                sems.at[sl, 1]).wait()

        @pl.when(hh < n_h - 1)
        def _():
            pltpu.make_async_copy(
                x_hbm.at[0, pl.ds(0, 1)],
                xbuf.at[sl, pl.ds(th + 1, 1), pl.ds(1, wd)],
                sems.at[sl, 2]).wait()

    # Prime the pipeline at the first row-tile of every sample (h is the inner, sequential
    # "arbitrary" grid axis -> megacore-safe); otherwise this slab was prefetched last step.
    @pl.when(h == 0)
    def _():
        start_fetch(n, h, slot)

    # Prefetch the next row-tile into the other buffer so its HBM load overlaps this step's GEMMs.
    @pl.when(h + 1 < n_h)
    def _():
        start_fetch(n, h + 1, 1 - slot)

    wait_fetch(h, slot)

    slab = xbuf[slot]                                              # (TH+2, W+2, Cinp) f32
    if apply_input_act:
        # Fused previous-layer BN scale/bias + ReLU (conv2 reads raw conv1 output from HBM).
        slab = jnp.maximum(slab * sc_ref[...].reshape(1, 1, cpad)
                           + bi_ref[...].reshape(1, 1, cpad), 0.0)

    # Zero the spatial-padding halo (left/right columns always, top/bottom rows at the image
    # boundary).  Done after the fused activation so padding positions stay exactly zero.
    ri = lax.broadcasted_iota(jnp.int32, (slab_rows, wp, 1), 0)
    ci = lax.broadcasted_iota(jnp.int32, (slab_rows, wp, 1), 1)
    row_lo = jnp.where(h == 0, 1, 0)
    row_hi = jnp.where(h == n_h - 1, th, th + 1)
    valid = (ri >= row_lo) & (ri <= row_hi) & (ci >= 1) & (ci <= wd)
    slab = jnp.where(valid, slab, 0.0)

    # 3x3 conv = 9 accumulated MXU GEMMs over statically shifted slab views; bf16 in, f32 acc.
    acc = None
    for kh in range(3):
        for kw in range(3):
            xa = slab[kh:kh + th, kw:kw + wd, :].reshape(th * wd, cpad).astype(MXU_DTYPE)
            part = jnp.dot(xa, w_ref[kh * 3 + kw], preferred_element_type=jnp.float32)
            acc = part if acc is None else acc + part

    y_ref[...] = acc.reshape(1, th, wd, coutp).astype(y_ref.dtype)

    # Partial BatchNorm statistics (reduced over (N, row-tiles) by tiny JAX glue).
    s1 = jnp.sum(acc, axis=0, keepdims=True)
    s2 = jnp.sum(acc * acc, axis=0, keepdims=True)
    stat_ref[...] = jnp.concatenate([s1, s2], axis=0).reshape(1, 1, 2, coutp)


def conv3x3_bn_stats(x_nhwc, w_taps, in_scale, in_bias, *, apply_input_act, vmem_cap):
    """3x3 same-conv (no bias), optional fused input affine+ReLU, + per-channel [sum, sum_sq]."""
    N, H, W, Cinp = x_nhwc.shape
    _, _, Coutp = w_taps.shape
    th = _pick_row_tile(H, W, N, Cinp, Coutp, int(vmem_cap * 0.55))
    n_h = H // th

    if in_scale is None:
        in_scale = jnp.ones((Cinp,), jnp.float32)
        in_bias = jnp.zeros((Cinp,), jnp.float32)

    y, stats = pl.pallas_call(
        functools.partial(_conv3x3_bn_stats_kernel, apply_input_act),
        out_shape=(
            jax.ShapeDtypeStruct((N, H, W, Coutp), jnp.float32),
            jax.ShapeDtypeStruct((N, n_h, 2, Coutp), jnp.float32),
        ),
        grid_spec=pltpu.PrefetchScalarGridSpec(
            num_scalar_prefetch=0,
            grid=(N, n_h),
            in_specs=[
                pl.BlockSpec(memory_space=pl.ANY),                       # raw HBM input (manual DMA)
                # TODO(synk): single-buffer this constant-index block (pl.Buffered(1)) to halve
                #             resident-weight VMEM on v7x once pipeline_mode is confirmed.
                pl.BlockSpec((9, Cinp, Coutp), lambda n, h: (0, 0, 0)),  # resident per-tap weights
                pl.BlockSpec((1, Cinp), lambda n, h: (0, 0)),            # fused input-BN scale
                pl.BlockSpec((1, Cinp), lambda n, h: (0, 0)),            # fused input-BN bias
            ],
            out_specs=(
                pl.BlockSpec((1, th, W, Coutp), lambda n, h: (n, h, 0, 0)),
                pl.BlockSpec((1, 1, 2, Coutp), lambda n, h: (n, h, 0, 0)),
            ),
            scratch_shapes=[
                pltpu.VMEM((2, th + 2, W + 2, Cinp), jnp.float32),       # double-buffered halo slab
                pltpu.SemaphoreType.DMA((2, 3)),
            ],
        ),
        compiler_params=pltpu.CompilerParams(
            dimension_semantics=("parallel", "arbitrary"),
            vmem_limit_bytes=int(vmem_cap * 0.8),
        ),
    )(x_nhwc, w_taps, in_scale.reshape(1, Cinp), in_bias.reshape(1, Cinp))

    totals = jnp.sum(stats, axis=(0, 1))                                 # (2, Coutp)
    return y, totals


# ----------------------------- fused residual epilogue -----------------------------

def _residual_epilogue_kernel(y1_ref, y2_ref, s1_ref, b1_ref, s2_ref, b2_ref, out_ref):
    """out = relu(y1*s1+b1) + relu(y2*s2+b2)  (x1 recomputed, never materialized in HBM)."""
    x1 = jnp.maximum(y1_ref[...] * s1_ref[...] + b1_ref[...], 0.0)
    out_ref[...] = x1 + jnp.maximum(y2_ref[...] * s2_ref[...] + b2_ref[...], 0.0)


def residual_bn_relu_epilogue(y1, y2, s1, b1, s2, b2, *, vmem_cap):
    N, H, W, C = y1.shape
    M = N * H * W
    cap_rows = 2048 if vmem_cap > (96 << 20) else 1024      # gen-aware elementwise row tile
    tm = _elem_row_tile(M, cap_rows)

    row_spec = pl.BlockSpec((tm, C), lambda i: (i, 0))
    vec_spec = pl.BlockSpec((1, C), lambda i: (0, 0))

    out = pl.pallas_call(
        _residual_epilogue_kernel,
        out_shape=jax.ShapeDtypeStruct((M, C), jnp.float32),
        grid_spec=pltpu.PrefetchScalarGridSpec(
            num_scalar_prefetch=0,
            grid=(M // tm,),
            in_specs=[row_spec, row_spec, vec_spec, vec_spec, vec_spec, vec_spec],
            out_specs=row_spec,
        ),
        input_output_aliases={1: 0},                          # write the result over y2's buffer
        compiler_params=pltpu.CompilerParams(dimension_semantics=("parallel",)),
    )(y1.reshape(M, C), y2.reshape(M, C), s1.reshape(1, C), b1.reshape(1, C),
      s2.reshape(1, C), b2.reshape(1, C))
    return out.reshape(N, H, W, C)


# ----------------------------- DoubleConv forward -----------------------------

def double_conv(x_nchw, w1_oihw, g1, b1, w2_oihw, g2, b2, eps=1e-5):
    """DoubleConv.forward (training-mode BatchNorm): x1 + relu(bn2(conv2(x1)))."""
    N, Cin, H, W = x_nchw.shape
    Cout = w1_oihw.shape[0]
    Cpad = _round_up(Cin, LANE)
    Coutpad = _round_up(Cout, LANE)
    vmem_cap = _vmem_capacity_bytes()

    # NCHW -> NHWC (channels-last = lane dim), channels zero-padded to a multiple of 128.
    # TODO(synk): when Cin << 128 (first UNet layer) pack all 9 taps into one 128-lane K block
    #             instead of padding Cin per tap, recovering ~9x MXU time for that layer.
    # TODO(synk): optionally store inter-conv activations in bf16 to halve HBM traffic further.
    x = jnp.transpose(x_nchw, (0, 2, 3, 1))
    x = jnp.pad(x, ((0, 0), (0, 0), (0, 0), (0, Cpad - Cin)))

    def prep_w(w_oihw, cin_pad):
        w = jnp.transpose(w_oihw, (2, 3, 1, 0))               # OIHW -> HWIO
        w = jnp.pad(w, ((0, 0), (0, 0),
                        (0, cin_pad - w.shape[2]),
                        (0, Coutpad - w.shape[3])))
        return w.reshape(9, cin_pad, Coutpad).astype(MXU_DTYPE)

    def pad_c(v):
        return jnp.pad(v, (0, Coutpad - v.shape[0]))

    w1p, w2p = prep_w(w1_oihw, Cpad), prep_w(w2_oihw, Coutpad)
    g1p, b1p, g2p, b2p = pad_c(g1), pad_c(b1), pad_c(g2), pad_c(b2)

    cnt = N * H * W

    def bn_affine(totals, g, b):
        mean = totals[0] / cnt
        # Guard the E[x^2]-E[x]^2 cancellation (can go slightly negative in f32).
        var = jnp.maximum(totals[1] / cnt - mean * mean, 0.0)
        scale = g * lax.rsqrt(var + eps)
        return scale, b - mean * scale

    # conv1 -> BN1 batch stats (y1 stays raw in HBM; BN1 + ReLU is fused downstream).
    y1, st1 = conv3x3_bn_stats(x, w1p, None, None, apply_input_act=False, vmem_cap=vmem_cap)
    scale1, bias1 = bn_affine(st1, g1p, b1p)

    # conv2 with BN1 scale/bias + ReLU fused into its input path -> y2 + BN2 batch stats.
    y2, st2 = conv3x3_bn_stats(y1, w2p, scale1, bias1, apply_input_act=True, vmem_cap=vmem_cap)
    scale2, bias2 = bn_affine(st2, g2p, b2p)

    # Fused residual epilogue: out = relu(bn1(y1)) + relu(bn2(y2)).
    out = residual_bn_relu_epilogue(y1, y2, scale1, bias1, scale2, bias2, vmem_cap=vmem_cap)

    return jnp.transpose(out[..., :Cout], (0, 3, 1, 2))        # NHWC -> NCHW


# ----------------------------- pure-JAX reference -----------------------------

def double_conv_ref(x, w1, g1, b1, w2, g2, b2, eps=1e-5):
    def conv(x, w):
        return lax.conv_general_dilated(
            x, w, (1, 1), ((1, 1), (1, 1)),
            dimension_numbers=('NCHW', 'OIHW', 'NCHW'))

    def bn_relu_ref(y, g, b):
        m = y.mean(axis=(0, 2, 3), keepdims=True)
        v = y.var(axis=(0, 2, 3), keepdims=True)
        yn = (y - m) / jnp.sqrt(v + eps)
        return jnp.maximum(yn * g.reshape(1, -1, 1, 1) + b.reshape(1, -1, 1, 1), 0.0)

    x1 = bn_relu_ref(conv(x, w1), g1, b1)
    return x1 + bn_relu_ref(conv(x1, w2), g2, b2)


# ----------------------------- main -----------------------------

if __name__ == "__main__":
    key = jax.random.PRNGKey(0)
    k_x, k_w1, k_w2, k_g1, k_b1, k_g2, k_b2 = jax.random.split(key, 7)

    N, Cin, Cout, H, W = 2, 4, 8, 16, 16

    x = jax.random.normal(k_x, (N, Cin, H, W), jnp.float32)
    w1 = 0.1 * jax.random.normal(k_w1, (Cout, Cin, 3, 3), jnp.float32)    # conv1 weight (OIHW)
    w2 = 0.1 * jax.random.normal(k_w2, (Cout, Cout, 3, 3), jnp.float32)   # conv2 weight (OIHW)
    g1 = 1.0 + 0.1 * jax.random.normal(k_g1, (Cout,), jnp.float32)        # BN1 gamma
    b1 = 0.1 * jax.random.normal(k_b1, (Cout,), jnp.float32)              # BN1 beta
    g2 = 1.0 + 0.1 * jax.random.normal(k_g2, (Cout,), jnp.float32)        # BN2 gamma
    b2 = 0.1 * jax.random.normal(k_b2, (Cout,), jnp.float32)              # BN2 beta

    fwd = jax.jit(double_conv)
    out = jax.block_until_ready(fwd(x, w1, g1, b1, w2, g2, b2))

    ref = double_conv_ref(x, w1, g1, b1, w2, g2, b2)
    assert out.shape == (N, Cout, H, W)
    err = float(jnp.max(jnp.abs(out - ref)))
    # bf16 MXU operands / f32 accumulation -> tolerance loosened vs the all-f32 reference.
    assert jnp.allclose(out, ref, atol=2e-2, rtol=2e-2), f"max abs err {err}"

    print("KERNEL_OK")
</pallas_src>

<mosaic_0001>
module attributes {stable_mosaic.version = 11 : i64} {
  func.func @_residual_epilogue_kernel(%arg0: i32, %arg1: memref<512x128xf32, #tpu.memory_space<vmem>>, %arg2: memref<512x128xf32, #tpu.memory_space<vmem>>, %arg3: memref<1x128xf32, #tpu.memory_space<vmem>>, %arg4: memref<1x128xf32, #tpu.memory_space<vmem>>, %arg5: memref<1x128xf32, #tpu.memory_space<vmem>>, %arg6: memref<1x128xf32, #tpu.memory_space<vmem>>, %arg7: memref<512x128xf32, #tpu.memory_space<vmem>>) attributes {dimension_semantics = [#tpu.dimension_semantics<parallel>], iteration_bounds = array<i64: 1>, scalar_prefetch = 0 : i64, scratch_operands = 0 : i64, tpu.core_type = #tpu.core_type<tc>, window_params = [{transform_indices = @transform_0, window_bounds = array<i64: 512, 128>}, {transform_indices = @transform_1, window_bounds = array<i64: 512, 128>}, {pipeline_mode = #tpu.pipeline_mode<synchronous>, transform_indices = @transform_2, window_bounds = array<i64: 1, 128>}, {pipeline_mode = #tpu.pipeline_mode<synchronous>, transform_indices = @transform_3, window_bounds = array<i64: 1, 128>}, {pipeline_mode = #tpu.pipeline_mode<synchronous>, transform_indices = @transform_4, window_bounds = array<i64: 1, 128>}, {pipeline_mode = #tpu.pipeline_mode<synchronous>, transform_indices = @transform_5, window_bounds = array<i64: 1, 128>}, {transform_indices = @transform_6, window_bounds = array<i64: 512, 128>}]} {
    %c0 = arith.constant 0 : index
    %c0_0 = arith.constant 0 : index
    %0 = vector.load %arg1[%c0, %c0_0] : memref<512x128xf32, #tpu.memory_space<vmem>>, vector<512x128xf32>
    %c0_1 = arith.constant 0 : index
    %c0_2 = arith.constant 0 : index
    %1 = vector.load %arg3[%c0_1, %c0_2] : memref<1x128xf32, #tpu.memory_space<vmem>>, vector<1x128xf32>
    %2 = vector.broadcast %1 : vector<1x128xf32> to vector<512x128xf32>
    %3 = arith.mulf %0, %2 : vector<512x128xf32>
    %c0_3 = arith.constant 0 : index
    %c0_4 = arith.constant 0 : index
    %4 = vector.load %arg4[%c0_3, %c0_4] : memref<1x128xf32, #tpu.memory_space<vmem>>, vector<1x128xf32>
    %5 = vector.broadcast %4 : vector<1x128xf32> to vector<512x128xf32>
    %6 = arith.addf %3, %5 : vector<512x128xf32>
    %cst = arith.constant 0.000000e+00 : f32
    %7 = vector.broadcast %cst : f32 to vector<512x128xf32>
    %8 = arith.maximumf %6, %7 : vector<512x128xf32>
    %c0_5 = arith.constant 0 : index
    %c0_6 = arith.constant 0 : index
    %9 = vector.load %arg2[%c0_5, %c0_6] : memref<512x128xf32, #tpu.memory_space<vmem>>, vector<512x128xf32>
    %c0_7 = arith.constant 0 : index
    %c0_8 = arith.constant 0 : index
    %10 = vector.load %arg5[%c0_7, %c0_8] : memref<1x128xf32, #tpu.memory_space<vmem>>, vector<1x128xf32>
    %11 = vector.broadcast %10 : vector<1x128xf32> to vector<512x128xf32>
    %12 = arith.mulf %9, %11 : vector<512x128xf32>
    %c0_9 = arith.constant 0 : index
    %c0_10 = arith.constant 0 : index
    %13 = vector.load %arg6[%c0_9, %c0_10] : memref<1x128xf32, #tpu.memory_space<vmem>>, vector<1x128xf32>
    %14 = vector.broadcast %13 : vector<1x128xf32> to vector<512x128xf32>
    %15 = arith.addf %12, %14 : vector<512x128xf32>
    %cst_11 = arith.constant 0.000000e+00 : f32
    %16 = vector.broadcast %cst_11 : f32 to vector<512x128xf32>
    %17 = arith.maximumf %15, %16 : vector<512x128xf32>
    %18 = arith.addf %8, %17 : vector<512x128xf32>
    %c0_12 = arith.constant 0 : index
    %c0_13 = arith.constant 0 : index
    %19 = vector.load %arg7[%c0_12, %c0_13] : memref<512x128xf32, #tpu.memory_space<vmem>>, vector<512x128xf32>
    tpu.vector_store %arg7[%c0_12, %c0_13], %18 {strides = array<i32>} : memref<512x128xf32, #tpu.memory_space<vmem>>, vector<512x128xf32>,
    return
  }
  func.func @transform_0(%arg0: i32) -> (i32, i32) {
    %c0_i32 = arith.constant 0 : i32
    %c0_i32_0 = arith.constant 0 : i32
    return %arg0, %c0_i32 : i32, i32
  }
  func.func @transform_1(%arg0: i32) -> (i32, i32) {
    %c0_i32 = arith.constant 0 : i32
    %c0_i32_0 = arith.constant 0 : i32
    return %arg0, %c0_i32 : i32, i32
  }
  func.func @transform_2(%arg0: i32) -> (i32, i32) {
    %c0_i32 = arith.constant 0 : i32
    %c0_i32_0 = arith.constant 0 : i32
    %c0_i32_1 = arith.constant 0 : i32
    return %c0_i32, %c0_i32_0 : i32, i32
  }
  func.func @transform_3(%arg0: i32) -> (i32, i32) {
    %c0_i32 = arith.constant 0 : i32
    %c0_i32_0 = arith.constant 0 : i32
    %c0_i32_1 = arith.constant 0 : i32
    return %c0_i32, %c0_i32_0 : i32, i32
  }
  func.func @transform_4(%arg0: i32) -> (i32, i32) {
    %c0_i32 = arith.constant 0 : i32
    %c0_i32_0 = arith.constant 0 : i32
    %c0_i32_1 = arith.constant 0 : i32
    return %c0_i32, %c0_i32_0 : i32, i32
  }
  func.func @transform_5(%arg0: i32) -> (i32, i32) {
    %c0_i32 = arith.constant 0 : i32
    %c0_i32_0 = arith.constant 0 : i32
    %c0_i32_1 = arith.constant 0 : i32
    return %c0_i32, %c0_i32_0 : i32, i32
  }
  func.func @transform_6(%arg0: i32) -> (i32, i32) {
    %c0_i32 = arith.constant 0 : i32
    %c0_i32_0 = arith.constant 0 : i32
    return %arg0, %c0_i32 : i32, i32
  }
}

module attributes {stable_mosaic.version = 11 : i64} {
  func.func @_conv3x3_bn_stats_kernel(%arg0: i32, %arg1: i32, %arg2: memref<2x16x16x128xf32, #tpu.memory_space<any>>, %arg3: memref<9x128x128xbf16, #tpu.memory_space<vmem>>, %arg4: memref<1x128xf32, #tpu.memory_space<vmem>>, %arg5: memref<1x128xf32, #tpu.memory_space<vmem>>, %arg6: memref<1x16x16x128xf32, #tpu.memory_space<vmem>>, %arg7: memref<1x1x2x128xf32, #tpu.memory_space<vmem>>, %arg8: memref<2x18x18x128xf32, #tpu.memory_space<vmem>>, %arg9: memref<2x3x!tpu.dma_semaphore, #tpu.memory_space<semaphore_mem>>) attributes {dimension_semantics = [#tpu.dimension_semantics<parallel>, #tpu.dimension_semantics<arbitrary>], iteration_bounds = array<i64: 2, 1>, scalar_prefetch = 0 : i64, scratch_operands = 2 : i64, tpu.core_type = #tpu.core_type<tc>, window_params = [{}, {pipeline_mode = #tpu.pipeline_mode<synchronous>, transform_indices = @transform_1, window_bounds = array<i64: 9, 128, 128>}, {pipeline_mode = #tpu.pipeline_mode<synchronous>, transform_indices = @transform_2, window_bounds = array<i64: 1, 128>}, {pipeline_mode = #tpu.pipeline_mode<synchronous>, transform_indices = @transform_3, window_bounds = array<i64: 1, 128>}, {transform_indices = @transform_4, window_bounds = array<i64: 1, 16, 16, 128>}, {transform_indices = @transform_5, window_bounds = array<i64: 1, 1, 2, 128>}]} {
    %c2_i32 = arith.constant 2 : i32
    %c0_i32 = arith.constant 0 : i32
    %0 = arith.cmpi eq, %c2_i32, %c0_i32 : i32
    %c1_i32 = arith.constant 1 : i32
    %1 = arith.select %0, %c1_i32, %c2_i32 : i32
    %2 = arith.remsi %arg1, %1 : i32
    %c0_i32_0 = arith.constant 0 : i32
    %3 = arith.cmpi ne, %2, %c0_i32_0 : i32
    %c0_i32_1 = arith.constant 0 : i32
    %4 = arith.cmpi slt, %2, %c0_i32_1 : i32
    %c0_i32_2 = arith.constant 0 : i32
    %5 = arith.cmpi slt, %1, %c0_i32_2 : i32
    %6 = arith.xori %4, %5 : i1
    %7 = arith.andi %6, %3 : i1
    %8 = arith.addi %2, %1 : i32
    %9 = arith.select %7, %8, %2 : i32
    %c0_i32_3 = arith.constant 0 : i32
    %10 = arith.cmpi eq, %arg1, %c0_i32_3 : i32
    %11 = arith.extui %10 : i1 to i32
    %c0_i32_4 = arith.constant 0 : i32
    %12 = arith.cmpi ne, %11, %c0_i32_4 : i32
    scf.if %12 {
      %c16_i32_66 = arith.constant 16 : i32
      %125 = arith.muli %arg1, %c16_i32_66 : i32
      %c0_i32_67 = arith.constant 0 : i32
      %c0_i32_68 = arith.constant 0 : i32
      %c0_i32_69 = arith.constant 0 : i32
      %126 = tpu.memref_slice %arg2[%arg0, %125, %c0_i32_68, %c0_i32_69] : memref<2x16x16x128xf32, #tpu.memory_space<any>> -> memref<1x16x16x128xf32, #tpu.memory_space<any>>
      %127 = tpu.memref_squeeze %126 : memref<1x16x16x128xf32, #tpu.memory_space<any>> -> memref<16x16x128xf32, #tpu.memory_space<any>>
      %c1_i32_70 = arith.constant 1 : i32
      %c1_i32_71 = arith.constant 1 : i32
      %c0_i32_72 = arith.constant 0 : i32
      %128 = tpu.memref_slice %arg8[%9, %c1_i32_70, %c1_i32_71, %c0_i32_72] : memref<2x18x18x128xf32, #tpu.memory_space<vmem>> -> memref<1x16x16x128xf32, #tpu.memory_space<vmem>>
      %129 = tpu.memref_squeeze %128 : memref<1x16x16x128xf32, #tpu.memory_space<vmem>> -> memref<16x16x128xf32, #tpu.memory_space<vmem>>
      %130 = tpu.memref_slice %arg9[%9, %c0_i32_67] : memref<2x3x!tpu.dma_semaphore, #tpu.memory_space<semaphore_mem>> -> memref<1x1x!tpu.dma_semaphore, #tpu.memory_space<semaphore_mem>>
      %131 = tpu.memref_squeeze %130 : memref<1x1x!tpu.dma_semaphore, #tpu.memory_space<semaphore_mem>> -> memref<!tpu.dma_semaphore, #tpu.memory_space<semaphore_mem>>
      tpu.enqueue_dma source(%127 : memref<16x16x128xf32, #tpu.memory_space<any>>) target(%129 : memref<16x16x128xf32, #tpu.memory_space<vmem>>) target_semaphore(%131 : memref<!tpu.dma_semaphore, #tpu.memory_space<semaphore_mem>>)
      %c0_i32_73 = arith.constant 0 : i32
      %132 = arith.cmpi sgt, %arg1, %c0_i32_73 : i32
      %133 = arith.extui %132 : i1 to i32
      %c0_i32_74 = arith.constant 0 : i32
      %134 = arith.cmpi ne, %133, %c0_i32_74 : i32
      scf.if %134 {
        %c16_i32_77 = arith.constant 16 : i32
        %138 = arith.muli %arg1, %c16_i32_77 : i32
        %c1_i32_78 = arith.constant 1 : i32
        %139 = arith.subi %138, %c1_i32_78 : i32
        %c1_i32_79 = arith.constant 1 : i32
        %c0_i32_80 = arith.constant 0 : i32
        %c0_i32_81 = arith.constant 0 : i32
        %140 = tpu.memref_slice %arg2[%arg0, %139, %c0_i32_80, %c0_i32_81] : memref<2x16x16x128xf32, #tpu.memory_space<any>> -> memref<1x1x16x128xf32, #tpu.memory_space<any>>
        %141 = tpu.memref_squeeze %140 : memref<1x1x16x128xf32, #tpu.memory_space<any>> -> memref<1x16x128xf32, #tpu.memory_space<any>>
        %c0_i32_82 = arith.constant 0 : i32
        %c1_i32_83 = arith.constant 1 : i32
        %c0_i32_84 = arith.constant 0 : i32
        %142 = tpu.memref_slice %arg8[%9, %c0_i32_82, %c1_i32_83, %c0_i32_84] : memref<2x18x18x128xf32, #tpu.memory_space<vmem>> -> memref<1x1x16x128xf32, #tpu.memory_space<vmem>>
        %143 = tpu.memref_squeeze %142 : memref<1x1x16x128xf32, #tpu.memory_space<vmem>> -> memref<1x16x128xf32, #tpu.memory_space<vmem>>
        %144 = tpu.memref_slice %arg9[%9, %c1_i32_79] : memref<2x3x!tpu.dma_semaphore, #tpu.memory_space<semaphore_mem>> -> memref<1x1x!tpu.dma_semaphore, #tpu.memory_space<semaphore_mem>>
        %145 = tpu.memref_squeeze %144 : memref<1x1x!tpu.dma_semaphore, #tpu.memory_space<semaphore_mem>> -> memref<!tpu.dma_semaphore, #tpu.memory_space<semaphore_mem>>
        tpu.enqueue_dma source(%141 : memref<1x16x128xf32, #tpu.memory_space<any>>) target(%143 : memref<1x16x128xf32, #tpu.memory_space<vmem>>) target_semaphore(%145 : memref<!tpu.dma_semaphore, #tpu.memory_space<semaphore_mem>>)
      } else {
      }
      %c0_i32_75 = arith.constant 0 : i32
      %135 = arith.cmpi slt, %arg1, %c0_i32_75 : i32
      %136 = arith.extui %135 : i1 to i32
      %c0_i32_76 = arith.constant 0 : i32
      %137 = arith.cmpi ne, %136, %c0_i32_76 : i32
      scf.if %137 {
        %c1_i32_77 = arith.constant 1 : i32
        %138 = arith.addi %arg1, %c1_i32_77 : i32
        %c16_i32_78 = arith.constant 16 : i32
        %139 = arith.muli %138, %c16_i32_78 : i32
        %c2_i32_79 = arith.constant 2 : i32
        %c0_i32_80 = arith.constant 0 : i32
        %c0_i32_81 = arith.constant 0 : i32
        %140 = tpu.memref_slice %arg2[%arg0, %139, %c0_i32_80, %c0_i32_81] : memref<2x16x16x128xf32, #tpu.memory_space<any>> -> memref<1x1x16x128xf32, #tpu.memory_space<any>>
        %141 = tpu.memref_squeeze %140 : memref<1x1x16x128xf32, #tpu.memory_space<any>> -> memref<1x16x128xf32, #tpu.memory_space<any>>
        %c17_i32_82 = arith.constant 17 : i32
        %c1_i32_83 = arith.constant 1 : i32
        %c0_i32_84 = arith.constant 0 : i32
        %142 = tpu.memref_slice %arg8[%9, %c17_i32_82, %c1_i32_83, %c0_i32_84] : memref<2x18x18x128xf32, #tpu.memory_space<vmem>> -> memref<1x1x16x128xf32, #tpu.memory_space<vmem>>
        %143 = tpu.memref_squeeze %142 : memref<1x1x16x128xf32, #tpu.memory_space<vmem>> -> memref<1x16x128xf32, #tpu.memory_space<vmem>>
        %144 = tpu.memref_slice %arg9[%9, %c2_i32_79] : memref<2x3x!tpu.dma_semaphore, #tpu.memory_space<semaphore_mem>> -> memref<1x1x!tpu.dma_semaphore, #tpu.memory_space<semaphore_mem>>
        %145 = tpu.memref_squeeze %144 : memref<1x1x!tpu.dma_semaphore, #tpu.memory_space<semaphore_mem>> -> memref<!tpu.dma_semaphore, #tpu.memory_space<semaphore_mem>>
        tpu.enqueue_dma source(%141 : memref<1x16x128xf32, #tpu.memory_space<any>>) target(%143 : memref<1x16x128xf32, #tpu.memory_space<vmem>>) target_semaphore(%145 : memref<!tpu.dma_semaphore, #tpu.memory_space<semaphore_mem>>)
      } else {
      }
    } else {
    }
    %c1_i32_5 = arith.constant 1 : i32
    %13 = arith.addi %arg1, %c1_i32_5 : i32
    %c1_i32_6 = arith.constant 1 : i32
    %14 = arith.cmpi slt, %13, %c1_i32_6 : i32
    %15 = arith.extui %14 : i1 to i32
    %c0_i32_7 = arith.constant 0 : i32
    %16 = arith.cmpi ne, %15, %c0_i32_7 : i32
    scf.if %16 {
      %c1_i32_66 = arith.constant 1 : i32
      %125 = arith.addi %arg1, %c1_i32_66 : i32
      %c1_i32_67 = arith.constant 1 : i32
      %126 = arith.subi %c1_i32_67, %9 : i32
      %c16_i32_68 = arith.constant 16 : i32
      %127 = arith.muli %125, %c16_i32_68 : i32
      %c0_i32_69 = arith.constant 0 : i32
      %c0_i32_70 = arith.constant 0 : i32
      %c0_i32_71 = arith.constant 0 : i32
      %128 = tpu.memref_slice %arg2[%arg0, %127, %c0_i32_70, %c0_i32_71] : memref<2x16x16x128xf32, #tpu.memory_space<any>> -> memref<1x16x16x128xf32, #tpu.memory_space<any>>
      %129 = tpu.memref_squeeze %128 : memref<1x16x16x128xf32, #tpu.memory_space<any>> -> memref<16x16x128xf32, #tpu.memory_space<any>>
      %c1_i32_72 = arith.constant 1 : i32
      %c1_i32_73 = arith.constant 1 : i32
      %c0_i32_74 = arith.constant 0 : i32
      %130 = tpu.memref_slice %arg8[%126, %c1_i32_72, %c1_i32_73, %c0_i32_74] : memref<2x18x18x128xf32, #tpu.memory_space<vmem>> -> memref<1x16x16x128xf32, #tpu.memory_space<vmem>>
      %131 = tpu.memref_squeeze %130 : memref<1x16x16x128xf32, #tpu.memory_space<vmem>> -> memref<16x16x128xf32, #tpu.memory_space<vmem>>
      %132 = tpu.memref_slice %arg9[%126, %c0_i32_69] : memref<2x3x!tpu.dma_semaphore, #tpu.memory_space<semaphore_mem>> -> memref<1x1x!tpu.dma_semaphore, #tpu.memory_space<semaphore_mem>>
      %133 = tpu.memref_squeeze %132 : memref<1x1x!tpu.dma_semaphore, #tpu.memory_space<semaphore_mem>> -> memref<!tpu.dma_semaphore, #tpu.memory_space<semaphore_mem>>
      tpu.enqueue_dma source(%129 : memref<16x16x128xf32, #tpu.memory_space<any>>) target(%131 : memref<16x16x128xf32, #tpu.memory_space<vmem>>) target_semaphore(%133 : memref<!tpu.dma_semaphore, #tpu.memory_space<semaphore_mem>>)
      %c0_i32_75 = arith.constant 0 : i32
      %134 = arith.cmpi sgt, %125, %c0_i32_75 : i32
      %135 = arith.extui %134 : i1 to i32
      %c0_i32_76 = arith.constant 0 : i32
      %136 = arith.cmpi ne, %135, %c0_i32_76 : i32
      scf.if %136 {
        %c16_i32_79 = arith.constant 16 : i32
        %140 = arith.muli %125, %c16_i32_79 : i32
        %c1_i32_80 = arith.constant 1 : i32
        %141 = arith.subi %140, %c1_i32_80 : i32
        %c1_i32_81 = arith.constant 1 : i32
        %c0_i32_82 = arith.constant 0 : i32
        %c0_i32_83 = arith.constant 0 : i32
        %142 = tpu.memref_slice %arg2[%arg0, %141, %c0_i32_82, %c0_i32_83] : memref<2x16x16x128xf32, #tpu.memory_space<any>> -> memref<1x1x16x128xf32, #tpu.memory_space<any>>
        %143 = tpu.memref_squeeze %142 : memref<1x1x16x128xf32, #tpu.memory_space<any>> -> memref<1x16x128xf32, #tpu.memory_space<any>>
        %c0_i32_84 = arith.constant 0 : i32
        %c1_i32_85 = arith.constant 1 : i32
        %c0_i32_86 = arith.constant 0 : i32
        %144 = tpu.memref_slice %arg8[%126, %c0_i32_84, %c1_i32_85, %c0_i32_86] : memref<2x18x18x128xf32, #tpu.memory_space<vmem>> -> memref<1x1x16x128xf32, #tpu.memory_space<vmem>>
        %145 = tpu.memref_squeeze %144 : memref<1x1x16x128xf32, #tpu.memory_space<vmem>> -> memref<1x16x128xf32, #tpu.memory_space<vmem>>
        %146 = tpu.memref_slice %arg9[%126, %c1_i32_81] : memref<2x3x!tpu.dma_semaphore, #tpu.memory_space<semaphore_mem>> -> memref<1x1x!tpu.dma_semaphore, #tpu.memory_space<semaphore_mem>>
        %147 = tpu.memref_squeeze %146 : memref<1x1x!tpu.dma_semaphore, #tpu.memory_space<semaphore_mem>> -> memref<!tpu.dma_semaphore, #tpu.memory_space<semaphore_mem>>
        tpu.enqueue_dma source(%143 : memref<1x16x128xf32, #tpu.memory_space<any>>) target(%145 : memref<1x16x128xf32, #tpu.memory_space<vmem>>) target_semaphore(%147 : memref<!tpu.dma_semaphore, #tpu.memory_space<semaphore_mem>>)
      } else {
      }
      %c0_i32_77 = arith.constant 0 : i32
      %137 = arith.cmpi slt, %125, %c0_i32_77 : i32
      %138 = arith.extui %137 : i1 to i32
      %c0_i32_78 = arith.constant 0 : i32
      %139 = arith.cmpi ne, %138, %c0_i32_78 : i32
      scf.if %139 {
        %c1_i32_79 = arith.constant 1 : i32
        %140 = arith.addi %125, %c1_i32_79 : i32
        %c16_i32_80 = arith.constant 16 : i32
        %141 = arith.muli %140, %c16_i32_80 : i32
        %c2_i32_81 = arith.constant 2 : i32
        %c0_i32_82 = arith.constant 0 : i32
        %c0_i32_83 = arith.constant 0 : i32
        %142 = tpu.memref_slice %arg2[%arg0, %141, %c0_i32_82, %c0_i32_83] : memref<2x16x16x128xf32, #tpu.memory_space<any>> -> memref<1x1x16x128xf32, #tpu.memory_space<any>>
        %143 = tpu.memref_squeeze %142 : memref<1x1x16x128xf32, #tpu.memory_space<any>> -> memref<1x16x128xf32, #tpu.memory_space<any>>
        %c17_i32_84 = arith.constant 17 : i32
        %c1_i32_85 = arith.constant 1 : i32
        %c0_i32_86 = arith.constant 0 : i32
        %144 = tpu.memref_slice %arg8[%126, %c17_i32_84, %c1_i32_85, %c0_i32_86] : memref<2x18x18x128xf32, #tpu.memory_space<vmem>> -> memref<1x1x16x128xf32, #tpu.memory_space<vmem>>
        %145 = tpu.memref_squeeze %144 : memref<1x1x16x128xf32, #tpu.memory_space<vmem>> -> memref<1x16x128xf32, #tpu.memory_space<vmem>>
        %146 = tpu.memref_slice %arg9[%126, %c2_i32_81] : memref<2x3x!tpu.dma_semaphore, #tpu.memory_space<semaphore_mem>> -> memref<1x1x!tpu.dma_semaphore, #tpu.memory_space<semaphore_mem>>
        %147 = tpu.memref_squeeze %146 : memref<1x1x!tpu.dma_semaphore, #tpu.memory_space<semaphore_mem>> -> memref<!tpu.dma_semaphore, #tpu.memory_space<semaphore_mem>>
        tpu.enqueue_dma source(%143 : memref<1x16x128xf32, #tpu.memory_space<any>>) target(%145 : memref<1x16x128xf32, #tpu.memory_space<vmem>>) target_semaphore(%147 : memref<!tpu.dma_semaphore, #tpu.memory_space<semaphore_mem>>)
      } else {
      }
    } else {
    }
    %c0_i32_8 = arith.constant 0 : i32
    %c0_i32_9 = arith.constant 0 : i32
    %c0_i32_10 = arith.constant 0 : i32
    %c0_i32_11 = arith.constant 0 : i32
    %c0_i32_12 = arith.constant 0 : i32
    %17 = tpu.memref_slice %arg2[%c0_i32_8, %c0_i32_10, %c0_i32_11, %c0_i32_12] : memref<2x16x16x128xf32, #tpu.memory_space<any>> -> memref<1x16x16x128xf32, #tpu.memory_space<any>>
    %18 = tpu.memref_squeeze %17 : memref<1x16x16x128xf32, #tpu.memory_space<any>> -> memref<16x16x128xf32, #tpu.memory_space<any>>
    %c1_i32_13 = arith.constant 1 : i32
    %c1_i32_14 = arith.constant 1 : i32
    %c0_i32_15 = arith.constant 0 : i32
    %19 = tpu.memref_slice %arg8[%9, %c1_i32_13, %c1_i32_14, %c0_i32_15] : memref<2x18x18x128xf32, #tpu.memory_space<vmem>> -> memref<1x16x16x128xf32, #tpu.memory_space<vmem>>
    %20 = tpu.memref_squeeze %19 : memref<1x16x16x128xf32, #tpu.memory_space<vmem>> -> memref<16x16x128xf32, #tpu.memory_space<vmem>>
    %21 = tpu.memref_slice %arg9[%9, %c0_i32_9] : memref<2x3x!tpu.dma_semaphore, #tpu.memory_space<semaphore_mem>> -> memref<1x1x!tpu.dma_semaphore, #tpu.memory_space<semaphore_mem>>
    %22 = tpu.memref_squeeze %21 : memref<1x1x!tpu.dma_semaphore, #tpu.memory_space<semaphore_mem>> -> memref<!tpu.dma_semaphore, #tpu.memory_space<semaphore_mem>>
    tpu.wait_dma2 semaphore(%22 : memref<!tpu.dma_semaphore, #tpu.memory_space<semaphore_mem>>) src(%18 : memref<16x16x128xf32, #tpu.memory_space<any>>) dst(%20 : memref<16x16x128xf32, #tpu.memory_space<vmem>>)
    %c0_i32_16 = arith.constant 0 : i32
    %23 = arith.cmpi sgt, %arg1, %c0_i32_16 : i32
    %24 = arith.extui %23 : i1 to i32
    %c0_i32_17 = arith.constant 0 : i32
    %25 = arith.cmpi ne, %24, %c0_i32_17 : i32
    scf.if %25 {
      %c0_i32_66 = arith.constant 0 : i32
      %c1_i32_67 = arith.constant 1 : i32
      %c0_i32_68 = arith.constant 0 : i32
      %c0_i32_69 = arith.constant 0 : i32
      %c0_i32_70 = arith.constant 0 : i32
      %125 = tpu.memref_slice %arg2[%c0_i32_66, %c0_i32_68, %c0_i32_69, %c0_i32_70] : memref<2x16x16x128xf32, #tpu.memory_space<any>> -> memref<1x1x16x128xf32, #tpu.memory_space<any>>
      %126 = tpu.memref_squeeze %125 : memref<1x1x16x128xf32, #tpu.memory_space<any>> -> memref<1x16x128xf32, #tpu.memory_space<any>>
      %c0_i32_71 = arith.constant 0 : i32
      %c1_i32_72 = arith.constant 1 : i32
      %c0_i32_73 = arith.constant 0 : i32
      %127 = tpu.memref_slice %arg8[%9, %c0_i32_71, %c1_i32_72, %c0_i32_73] : memref<2x18x18x128xf32, #tpu.memory_space<vmem>> -> memref<1x1x16x128xf32, #tpu.memory_space<vmem>>
      %128 = tpu.memref_squeeze %127 : memref<1x1x16x128xf32, #tpu.memory_space<vmem>> -> memref<1x16x128xf32, #tpu.memory_space<vmem>>
      %129 = tpu.memref_slice %arg9[%9, %c1_i32_67] : memref<2x3x!tpu.dma_semaphore, #tpu.memory_space<semaphore_mem>> -> memref<1x1x!tpu.dma_semaphore, #tpu.memory_space<semaphore_mem>>
      %130 = tpu.memref_squeeze %129 : memref<1x1x!tpu.dma_semaphore, #tpu.memory_space<semaphore_mem>> -> memref<!tpu.dma_semaphore, #tpu.memory_space<semaphore_mem>>
      tpu.wait_dma2 semaphore(%130 : memref<!tpu.dma_semaphore, #tpu.memory_space<semaphore_mem>>) src(%126 : memref<1x16x128xf32, #tpu.memory_space<any>>) dst(%128 : memref<1x16x128xf32, #tpu.memory_space<vmem>>)
    } else {
    }
    %c0_i32_18 = arith.constant 0 : i32
    %26 = arith.cmpi slt, %arg1, %c0_i32_18 : i32
    %27 = arith.extui %26 : i1 to i32
    %c0_i32_19 = arith.constant 0 : i32
    %28 = arith.cmpi ne, %27, %c0_i32_19 : i32
    scf.if %28 {
      %c0_i32_66 = arith.constant 0 : i32
      %c2_i32_67 = arith.constant 2 : i32
      %c0_i32_68 = arith.constant 0 : i32
      %c0_i32_69 = arith.constant 0 : i32
      %c0_i32_70 = arith.constant 0 : i32
      %125 = tpu.memref_slice %arg2[%c0_i32_66, %c0_i32_68, %c0_i32_69, %c0_i32_70] : memref<2x16x16x128xf32, #tpu.memory_space<any>> -> memref<1x1x16x128xf32, #tpu.memory_space<any>>
      %126 = tpu.memref_squeeze %125 : memref<1x1x16x128xf32, #tpu.memory_space<any>> -> memref<1x16x128xf32, #tpu.memory_space<any>>
      %c17_i32_71 = arith.constant 17 : i32
      %c1_i32_72 = arith.constant 1 : i32
      %c0_i32_73 = arith.constant 0 : i32
      %127 = tpu.memref_slice %arg8[%9, %c17_i32_71, %c1_i32_72, %c0_i32_73] : memref<2x18x18x128xf32, #tpu.memory_space<vmem>> -> memref<1x1x16x128xf32, #tpu.memory_space<vmem>>
      %128 = tpu.memref_squeeze %127 : memref<1x1x16x128xf32, #tpu.memory_space<vmem>> -> memref<1x16x128xf32, #tpu.memory_space<vmem>>
      %129 = tpu.memref_slice %arg9[%9, %c2_i32_67] : memref<2x3x!tpu.dma_semaphore, #tpu.memory_space<semaphore_mem>> -> memref<1x1x!tpu.dma_semaphore, #tpu.memory_space<semaphore_mem>>
      %130 = tpu.memref_squeeze %129 : memref<1x1x!tpu.dma_semaphore, #tpu.memory_space<semaphore_mem>> -> memref<!tpu.dma_semaphore, #tpu.memory_space<semaphore_mem>>
      tpu.wait_dma2 semaphore(%130 : memref<!tpu.dma_semaphore, #tpu.memory_space<semaphore_mem>>) src(%126 : memref<1x16x128xf32, #tpu.memory_space<any>>) dst(%128 : memref<1x16x128xf32, #tpu.memory_space<vmem>>)
    } else {
    }
    %29 = arith.index_cast %9 : i32 to index
    %c0 = arith.constant 0 : index
    %c0_20 = arith.constant 0 : index
    %c0_21 = arith.constant 0 : index
    %30 = vector.load %arg8[%29, %c0, %c0_20, %c0_21] : memref<2x18x18x128xf32, #tpu.memory_space<vmem>>, vector<1x18x18x128xf32>
    %31 = vector.shape_cast %30 : vector<1x18x18x128xf32> to vector<18x18x128xf32>
    %32 = tpu.iota {dimensions = array<i32: 0>} : vector<18x18x1xi32>
    %33 = tpu.iota {dimensions = array<i32: 1>} : vector<18x18x1xi32>
    %c0_i32_22 = arith.constant 0 : i32
    %34 = arith.cmpi eq, %arg1, %c0_i32_22 : i32
    %c1_i32_23 = arith.constant 1 : i32
    %c0_i32_24 = arith.constant 0 : i32
    %35 = arith.select %34, %c1_i32_23, %c0_i32_24 : i32
    %c0_i32_25 = arith.constant 0 : i32
    %36 = arith.cmpi eq, %arg1, %c0_i32_25 : i32
    %c16_i32 = arith.constant 16 : i32
    %c17_i32 = arith.constant 17 : i32
    %37 = arith.select %36, %c16_i32, %c17_i32 : i32
    %38 = vector.broadcast %35 : i32 to vector<18x18x1xi32>
    %39 = arith.cmpi sge, %32, %38 : vector<18x18x1xi32>
    %40 = vector.broadcast %37 : i32 to vector<18x18x1xi32>
    %41 = arith.cmpi sle, %32, %40 : vector<18x18x1xi32>
    %42 = arith.andi %39, %41 : vector<18x18x1xi1>
    %c1_i32_26 = arith.constant 1 : i32
    %43 = vector.broadcast %c1_i32_26 : i32 to vector<18x18x1xi32>
    %44 = arith.cmpi sge, %33, %43 : vector<18x18x1xi32>
    %45 = arith.andi %42, %44 : vector<18x18x1xi1>
    %c16_i32_27 = arith.constant 16 : i32
    %46 = vector.broadcast %c16_i32_27 : i32 to vector<18x18x1xi32>
    %47 = arith.cmpi sle, %33, %46 : vector<18x18x1xi32>
    %48 = arith.andi %45, %47 : vector<18x18x1xi1>
    %cst = arith.constant 0.000000e+00 : f32
    %49 = vector.shape_cast %48 : vector<18x18x1xi1> to vector<18x18x1xi1>
    %50 = vector.broadcast %49 : vector<18x18x1xi1> to vector<18x18x128xi1>
    %51 = vector.broadcast %cst : f32 to vector<18x18x128xf32>
    %52 = arith.select %50, %31, %51 : vector<18x18x128xi1>, vector<18x18x128xf32>
    %53 = vector.extract_strided_slice %52 {offsets = [0, 0, 0], sizes = [16, 16, 128], strides = [1, 1, 1]} : vector<18x18x128xf32> to vector<16x16x128xf32>
    %54 = vector.shape_cast %53 : vector<16x16x128xf32> to vector<256x128xf32>
    %55 = arith.truncf %54 : vector<256x128xf32> to vector<256x128xbf16>
    %c0_28 = arith.constant 0 : index
    %c0_29 = arith.constant 0 : index
    %c0_30 = arith.constant 0 : index
    %56 = vector.load %arg3[%c0_28, %c0_29, %c0_30] : memref<9x128x128xbf16, #tpu.memory_space<vmem>>, vector<1x128x128xbf16>
    %57 = vector.shape_cast %56 : vector<1x128x128xbf16> to vector<128x128xbf16>
    %cst_31 = arith.constant dense<0.000000e+00> : vector<256x128xf32>
    %58 = tpu.matmul %55, %57, %cst_31 {dimension_numbers = #tpu.dot_dimension_numbers<[1], [0], [0], [1], [0, 0, 1, 1], [], []>} : vector<256x128xbf16>, vector<128x128xbf16>, vector<256x128xf32> -> vector<256x128xf32>
    %59 = vector.extract_strided_slice %52 {offsets = [0, 1, 0], sizes = [16, 16, 128], strides = [1, 1, 1]} : vector<18x18x128xf32> to vector<16x16x128xf32>
    %60 = vector.shape_cast %59 : vector<16x16x128xf32> to vector<256x128xf32>
    %61 = arith.truncf %60 : vector<256x128xf32> to vector<256x128xbf16>
    %c1 = arith.constant 1 : index
    %c0_32 = arith.constant 0 : index
    %c0_33 = arith.constant 0 : index
    %62 = vector.load %arg3[%c1, %c0_32, %c0_33] : memref<9x128x128xbf16, #tpu.memory_space<vmem>>, vector<1x128x128xbf16>
    %63 = vector.shape_cast %62 : vector<1x128x128xbf16> to vector<128x128xbf16>
    %cst_34 = arith.constant dense<0.000000e+00> : vector<256x128xf32>
    %64 = tpu.matmul %61, %63, %cst_34 {dimension_numbers = #tpu.dot_dimension_numbers<[1], [0], [0], [1], [0, 0, 1, 1], [], []>} : vector<256x128xbf16>, vector<128x128xbf16>, vector<256x128xf32> -> vector<256x128xf32>
    %65 = arith.addf %58, %64 : vector<256x128xf32>
    %66 = vector.extract_strided_slice %52 {offsets = [0, 2, 0], sizes = [16, 16, 128], strides = [1, 1, 1]} : vector<18x18x128xf32> to vector<16x16x128xf32>
    %67 = vector.shape_cast %66 : vector<16x16x128xf32> to vector<256x128xf32>
    %68 = arith.truncf %67 : vector<256x128xf32> to vector<256x128xbf16>
    %c2 = arith.constant 2 : index
    %c0_35 = arith.constant 0 : index
    %c0_36 = arith.constant 0 : index
    %69 = vector.load %arg3[%c2, %c0_35, %c0_36] : memref<9x128x128xbf16, #tpu.memory_space<vmem>>, vector<1x128x128xbf16>
    %70 = vector.shape_cast %69 : vector<1x128x128xbf16> to vector<128x128xbf16>
    %cst_37 = arith.constant dense<0.000000e+00> : vector<256x128xf32>
    %71 = tpu.matmul %68, %70, %cst_37 {dimension_numbers = #tpu.dot_dimension_numbers<[1], [0], [0], [1], [0, 0, 1, 1], [], []>} : vector<256x128xbf16>, vector<128x128xbf16>, vector<256x128xf32> -> vector<256x128xf32>
    %72 = arith.addf %65, %71 : vector<256x128xf32>
    %73 = vector.extract_strided_slice %52 {offsets = [1, 0, 0], sizes = [16, 16, 128], strides = [1, 1, 1]} : vector<18x18x128xf32> to vector<16x16x128xf32>
    %74 = vector.shape_cast %73 : vector<16x16x128xf32> to vector<256x128xf32>
    %75 = arith.truncf %74 : vector<256x128xf32> to vector<256x128xbf16>
    %c3 = arith.constant 3 : index
    %c0_38 = arith.constant 0 : index
    %c0_39 = arith.constant 0 : index
    %76 = vector.load %arg3[%c3, %c0_38, %c0_39] : memref<9x128x128xbf16, #tpu.memory_space<vmem>>, vector<1x128x128xbf16>
    %77 = vector.shape_cast %76 : vector<1x128x128xbf16> to vector<128x128xbf16>
    %cst_40 = arith.constant dense<0.000000e+00> : vector<256x128xf32>
    %78 = tpu.matmul %75, %77, %cst_40 {dimension_numbers = #tpu.dot_dimension_numbers<[1], [0], [0], [1], [0, 0, 1, 1], [], []>} : vector<256x128xbf16>, vector<128x128xbf16>, vector<256x128xf32> -> vector<256x128xf32>
    %79 = arith.addf %72, %78 : vector<256x128xf32>
    %80 = vector.extract_strided_slice %52 {offsets = [1, 1, 0], sizes = [16, 16, 128], strides = [1, 1, 1]} : vector<18x18x128xf32> to vector<16x16x128xf32>
    %81 = vector.shape_cast %80 : vector<16x16x128xf32> to vector<256x128xf32>
    %82 = arith.truncf %81 : vector<256x128xf32> to vector<256x128xbf16>
    %c4 = arith.constant 4 : index
    %c0_41 = arith.constant 0 : index
    %c0_42 = arith.constant 0 : index
    %83 = vector.load %arg3[%c4, %c0_41, %c0_42] : memref<9x128x128xbf16, #tpu.memory_space<vmem>>, vector<1x128x128xbf16>
    %84 = vector.shape_cast %83 : vector<1x128x128xbf16> to vector<128x128xbf16>
    %cst_43 = arith.constant dense<0.000000e+00> : vector<256x128xf32>
    %85 = tpu.matmul %82, %84, %cst_43 {dimension_numbers = #tpu.dot_dimension_numbers<[1], [0], [0], [1], [0, 0, 1, 1], [], []>} : vector<256x128xbf16>, vector<128x128xbf16>, vector<256x128xf32> -> vector<256x128xf32>
    %86 = arith.addf %79, %85 : vector<256x128xf32>
    %87 = vector.extract_strided_slice %52 {offsets = [1, 2, 0], sizes = [16, 16, 128], strides = [1, 1, 1]} : vector<18x18x128xf32> to vector<16x16x128xf32>
    %88 = vector.shape_cast %87 : vector<16x16x128xf32> to vector<256x128xf32>
    %89 = arith.truncf %88 : vector<256x128xf32> to vector<256x128xbf16>
    %c5 = arith.constant 5 : index
    %c0_44 = arith.constant 0 : index
    %c0_45 = arith.constant 0 : index
    %90 = vector.load %arg3[%c5, %c0_44, %c0_45] : memref<9x128x128xbf16, #tpu.memory_space<vmem>>, vector<1x128x128xbf16>
    %91 = vector.shape_cast %90 : vector<1x128x128xbf16> to vector<128x128xbf16>
    %cst_46 = arith.constant dense<0.000000e+00> : vector<256x128xf32>
    %92 = tpu.matmul %89, %91, %cst_46 {dimension_numbers = #tpu.dot_dimension_numbers<[1], [0], [0], [1], [0, 0, 1, 1], [], []>} : vector<256x128xbf16>, vector<128x128xbf16>, vector<256x128xf32> -> vector<256x128xf32>
    %93 = arith.addf %86, %92 : vector<256x128xf32>
    %94 = vector.extract_strided_slice %52 {offsets = [2, 0, 0], sizes = [16, 16, 128], strides = [1, 1, 1]} : vector<18x18x128xf32> to vector<16x16x128xf32>
    %95 = vector.shape_cast %94 : vector<16x16x128xf32> to vector<256x128xf32>
    %96 = arith.truncf %95 : vector<256x128xf32> to vector<256x128xbf16>
    %c6 = arith.constant 6 : index
    %c0_47 = arith.constant 0 : index
    %c0_48 = arith.constant 0 : index
    %97 = vector.load %arg3[%c6, %c0_47, %c0_48] : memref<9x128x128xbf16, #tpu.memory_space<vmem>>, vector<1x128x128xbf16>
    %98 = vector.shape_cast %97 : vector<1x128x128xbf16> to vector<128x128xbf16>
    %cst_49 = arith.constant dense<0.000000e+00> : vector<256x128xf32>
    %99 = tpu.matmul %96, %98, %cst_49 {dimension_numbers = #tpu.dot_dimension_numbers<[1], [0], [0], [1], [0, 0, 1, 1], [], []>} : vector<256x128xbf16>, vector<128x128xbf16>, vector<256x128xf32> -> vector<256x128xf32>
    %100 = arith.addf %93, %99 : vector<256x128xf32>
    %101 = vector.extract_strided_slice %52 {offsets = [2, 1, 0], sizes = [16, 16, 128], strides = [1, 1, 1]} : vector<18x18x128xf32> to vector<16x16x128xf32>
    %102 = vector.shape_cast %101 : vector<16x16x128xf32> to vector<256x128xf32>
    %103 = arith.truncf %102 : vector<256x128xf32> to vector<256x128xbf16>
    %c7 = arith.constant 7 : index
    %c0_50 = arith.constant 0 : index
    %c0_51 = arith.constant 0 : index
    %104 = vector.load %arg3[%c7, %c0_50, %c0_51] : memref<9x128x128xbf16, #tpu.memory_space<vmem>>, vector<1x128x128xbf16>
    %105 = vector.shape_cast %104 : vector<1x128x128xbf16> to vector<128x128xbf16>
    %cst_52 = arith.constant dense<0.000000e+00> : vector<256x128xf32>
    %106 = tpu.matmul %103, %105, %cst_52 {dimension_numbers = #tpu.dot_dimension_numbers<[1], [0], [0], [1], [0, 0, 1, 1], [], []>} : vector<256x128xbf16>, vector<128x128xbf16>, vector<256x128xf32> -> vector<256x128xf32>
    %107 = arith.addf %100, %106 : vector<256x128xf32>
    %108 = vector.extract_strided_slice %52 {offsets = [2, 2, 0], sizes = [16, 16, 128], strides = [1, 1, 1]} : vector<18x18x128xf32> to vector<16x16x128xf32>
    %109 = vector.shape_cast %108 : vector<16x16x128xf32> to vector<256x128xf32>
    %110 = arith.truncf %109 : vector<256x128xf32> to vector<256x128xbf16>
    %c8 = arith.constant 8 : index
    %c0_53 = arith.constant 0 : index
    %c0_54 = arith.constant 0 : index
    %111 = vector.load %arg3[%c8, %c0_53, %c0_54] : memref<9x128x128xbf16, #tpu.memory_space<vmem>>, vector<1x128x128xbf16>
    %112 = vector.shape_cast %111 : vector<1x128x128xbf16> to vector<128x128xbf16>
    %cst_55 = arith.constant dense<0.000000e+00> : vector<256x128xf32>
    %113 = tpu.matmul %110, %112, %cst_55 {dimension_numbers = #tpu.dot_dimension_numbers<[1], [0], [0], [1], [0, 0, 1, 1], [], []>} : vector<256x128xbf16>, vector<128x128xbf16>, vector<256x128xf32> -> vector<256x128xf32>
    %114 = arith.addf %107, %113 : vector<256x128xf32>
    %115 = vector.shape_cast %114 : vector<256x128xf32> to vector<1x16x16x128xf32>
    %c0_56 = arith.constant 0 : index
    %c0_57 = arith.constant 0 : index
    %c0_58 = arith.constant 0 : index
    %c0_59 = arith.constant 0 : index
    %116 = vector.load %arg6[%c0_56, %c0_57, %c0_58, %c0_59] : memref<1x16x16x128xf32, #tpu.memory_space<vmem>>, vector<1x16x16x128xf32>
    tpu.vector_store %arg6[%c0_56, %c0_57, %c0_58, %c0_59], %115 {strides = array<i32>} : memref<1x16x16x128xf32, #tpu.memory_space<vmem>>, vector<1x16x16x128xf32>,
    %cst_60 = arith.constant dense<0.000000e+00> : vector<128xf32>
    %117 = vector.multi_reduction <add>, %114, %cst_60 [0] : vector<256x128xf32> to vector<128xf32>
    %118 = vector.shape_cast %117 : vector<128xf32> to vector<1x128xf32>
    %119 = arith.mulf %114, %114 : vector<256x128xf32>
    %cst_61 = arith.constant dense<0.000000e+00> : vector<128xf32>
    %120 = vector.multi_reduction <add>, %119, %cst_61 [0] : vector<256x128xf32> to vector<128xf32>
    %121 = vector.shape_cast %120 : vector<128xf32> to vector<1x128xf32>
    %122 = tpu.concatenate %118, %121 in 0 : vector<1x128xf32>, vector<1x128xf32> -> vector<2x128xf32>
    %123 = vector.shape_cast %122 : vector<2x128xf32> to vector<1x1x2x128xf32>
    %c0_62 = arith.constant 0 : index
    %c0_63 = arith.constant 0 : index
    %c0_64 = arith.constant 0 : index
    %c0_65 = arith.constant 0 : index
    %124 = vector.load %arg7[%c0_62, %c0_63, %c0_64, %c0_65] : memref<1x1x2x128xf32, #tpu.memory_space<vmem>>, vector<1x1x2x128xf32>
    tpu.vector_store %arg7[%c0_62, %c0_63, %c0_64, %c0_65], %123 {strides = array<i32>} : memref<1x1x2x128xf32, #tpu.memory_space<vmem>>, vector<1x1x2x128xf32>,
    return
  }
  func.func @transform_1(%arg0: i32, %arg1: i32) -> (i32, i32, i32) {
    %c0_i32 = arith.constant 0 : i32
    %c0_i32_0 = arith.constant 0 : i32
    %c0_i32_1 = arith.constant 0 : i32
    %c0_i32_2 = arith.constant 0 : i32
    return %c0_i32, %c0_i32_0, %c0_i32_1 : i32, i32, i32
  }
  func.func @transform_2(%arg0: i32, %arg1: i32) -> (i32, i32) {
    %c0_i32 = arith.constant 0 : i32
    %c0_i32_0 = arith.constant 0 : i32
    %c0_i32_1 = arith.constant 0 : i32
    return %c0_i32, %c0_i32_0 : i32, i32
  }
  func.func @transform_3(%arg0: i32, %arg1: i32) -> (i32, i32) {
    %c0_i32 = arith.constant 0 : i32
    %c0_i32_0 = arith.constant 0 : i32
    %c0_i32_1 = arith.constant 0 : i32
    return %c0_i32, %c0_i32_0 : i32, i32
  }
  func.func @transform_4(%arg0: i32, %arg1: i32) -> (i32, i32, i32, i32) {
    %c0_i32 = arith.constant 0 : i32
    %c0_i32_0 = arith.constant 0 : i32
    %c0_i32_1 = arith.constant 0 : i32
    return %arg0, %arg1, %c0_i32, %c0_i32_0 : i32, i32, i32, i32
  }
  func.func @transform_5(%arg0: i32, %arg1: i32) -> (i32, i32, i32, i32) {
    %c0_i32 = arith.constant 0 : i32
    %c0_i32_0 = arith.constant 0 : i32
    %c0_i32_1 = arith.constant 0 : i32
    return %arg0, %arg1, %c0_i32, %c0_i32_0 : i32, i32, i32, i32
  }
}

module attributes {stable_mosaic.version = 11 : i64} {
  func.func @_conv3x3_bn_stats_kernel(%arg0: i32, %arg1: i32, %arg2: memref<2x16x16x128xf32, #tpu.memory_space<any>>, %arg3: memref<9x128x128xbf16, #tpu.memory_space<vmem>>, %arg4: memref<1x128xf32, #tpu.memory_space<vmem>>, %arg5: memref<1x128xf32, #tpu.memory_space<vmem>>, %arg6: memref<1x16x16x128xf32, #tpu.memory_space<vmem>>, %arg7: memref<1x1x2x128xf32, #tpu.memory_space<vmem>>, %arg8: memref<2x18x18x128xf32, #tpu.memory_space<vmem>>, %arg9: memref<2x3x!tpu.dma_semaphore, #tpu.memory_space<semaphore_mem>>) attributes {dimension_semantics = [#tpu.dimension_semantics<parallel>, #tpu.dimension_semantics<arbitrary>], iteration_bounds = array<i64: 2, 1>, scalar_prefetch = 0 : i64, scratch_operands = 2 : i64, tpu.core_type = #tpu.core_type<tc>, window_params = [{}, {pipeline_mode = #tpu.pipeline_mode<synchronous>, transform_indices = @transform_1, window_bounds = array<i64: 9, 128, 128>}, {pipeline_mode = #tpu.pipeline_mode<synchronous>, transform_indices = @transform_2, window_bounds = array<i64: 1, 128>}, {pipeline_mode = #tpu.pipeline_mode<synchronous>, transform_indices = @transform_3, window_bounds = array<i64: 1, 128>}, {transform_indices = @transform_4, window_bounds = array<i64: 1, 16, 16, 128>}, {transform_indices = @transform_5, window_bounds = array<i64: 1, 1, 2, 128>}]} {
    %c2_i32 = arith.constant 2 : i32
    %c0_i32 = arith.constant 0 : i32
    %0 = arith.cmpi eq, %c2_i32, %c0_i32 : i32
    %c1_i32 = arith.constant 1 : i32
    %1 = arith.select %0, %c1_i32, %c2_i32 : i32
    %2 = arith.remsi %arg1, %1 : i32
    %c0_i32_0 = arith.constant 0 : i32
    %3 = arith.cmpi ne, %2, %c0_i32_0 : i32
    %c0_i32_1 = arith.constant 0 : i32
    %4 = arith.cmpi slt, %2, %c0_i32_1 : i32
    %c0_i32_2 = arith.constant 0 : i32
    %5 = arith.cmpi slt, %1, %c0_i32_2 : i32
    %6 = arith.xori %4, %5 : i1
    %7 = arith.andi %6, %3 : i1
    %8 = arith.addi %2, %1 : i32
    %9 = arith.select %7, %8, %2 : i32
    %c0_i32_3 = arith.constant 0 : i32
    %10 = arith.cmpi eq, %arg1, %c0_i32_3 : i32
    %11 = arith.extui %10 : i1 to i32
    %c0_i32_4 = arith.constant 0 : i32
    %12 = arith.cmpi ne, %11, %c0_i32_4 : i32
    scf.if %12 {
      %c16_i32_71 = arith.constant 16 : i32
      %135 = arith.muli %arg1, %c16_i32_71 : i32
      %c0_i32_72 = arith.constant 0 : i32
      %c0_i32_73 = arith.constant 0 : i32
      %c0_i32_74 = arith.constant 0 : i32
      %136 = tpu.memref_slice %arg2[%arg0, %135, %c0_i32_73, %c0_i32_74] : memref<2x16x16x128xf32, #tpu.memory_space<any>> -> memref<1x16x16x128xf32, #tpu.memory_space<any>>
      %137 = tpu.memref_squeeze %136 : memref<1x16x16x128xf32, #tpu.memory_space<any>> -> memref<16x16x128xf32, #tpu.memory_space<any>>
      %c1_i32_75 = arith.constant 1 : i32
      %c1_i32_76 = arith.constant 1 : i32
      %c0_i32_77 = arith.constant 0 : i32
      %138 = tpu.memref_slice %arg8[%9, %c1_i32_75, %c1_i32_76, %c0_i32_77] : memref<2x18x18x128xf32, #tpu.memory_space<vmem>> -> memref<1x16x16x128xf32, #tpu.memory_space<vmem>>
      %139 = tpu.memref_squeeze %138 : memref<1x16x16x128xf32, #tpu.memory_space<vmem>> -> memref<16x16x128xf32, #tpu.memory_space<vmem>>
      %140 = tpu.memref_slice %arg9[%9, %c0_i32_72] : memref<2x3x!tpu.dma_semaphore, #tpu.memory_space<semaphore_mem>> -> memref<1x1x!tpu.dma_semaphore, #tpu.memory_space<semaphore_mem>>
      %141 = tpu.memref_squeeze %140 : memref<1x1x!tpu.dma_semaphore, #tpu.memory_space<semaphore_mem>> -> memref<!tpu.dma_semaphore, #tpu.memory_space<semaphore_mem>>
      tpu.enqueue_dma source(%137 : memref<16x16x128xf32, #tpu.memory_space<any>>) target(%139 : memref<16x16x128xf32, #tpu.memory_space<vmem>>) target_semaphore(%141 : memref<!tpu.dma_semaphore, #tpu.memory_space<semaphore_mem>>)
      %c0_i32_78 = arith.constant 0 : i32
      %142 = arith.cmpi sgt, %arg1, %c0_i32_78 : i32
      %143 = arith.extui %142 : i1 to i32
      %c0_i32_79 = arith.constant 0 : i32
      %144 = arith.cmpi ne, %143, %c0_i32_79 : i32
      scf.if %144 {
        %c16_i32_82 = arith.constant 16 : i32
        %148 = arith.muli %arg1, %c16_i32_82 : i32
        %c1_i32_83 = arith.constant 1 : i32
        %149 = arith.subi %148, %c1_i32_83 : i32
        %c1_i32_84 = arith.constant 1 : i32
        %c0_i32_85 = arith.constant 0 : i32
        %c0_i32_86 = arith.constant 0 : i32
        %150 = tpu.memref_slice %arg2[%arg0, %149, %c0_i32_85, %c0_i32_86] : memref<2x16x16x128xf32, #tpu.memory_space<any>> -> memref<1x1x16x128xf32, #tpu.memory_space<any>>
        %151 = tpu.memref_squeeze %150 : memref<1x1x16x128xf32, #tpu.memory_space<any>> -> memref<1x16x128xf32, #tpu.memory_space<any>>
        %c0_i32_87 = arith.constant 0 : i32
        %c1_i32_88 = arith.constant 1 : i32
        %c0_i32_89 = arith.constant 0 : i32
        %152 = tpu.memref_slice %arg8[%9, %c0_i32_87, %c1_i32_88, %c0_i32_89] : memref<2x18x18x128xf32, #tpu.memory_space<vmem>> -> memref<1x1x16x128xf32, #tpu.memory_space<vmem>>
        %153 = tpu.memref_squeeze %152 : memref<1x1x16x128xf32, #tpu.memory_space<vmem>> -> memref<1x16x128xf32, #tpu.memory_space<vmem>>
        %154 = tpu.memref_slice %arg9[%9, %c1_i32_84] : memref<2x3x!tpu.dma_semaphore, #tpu.memory_space<semaphore_mem>> -> memref<1x1x!tpu.dma_semaphore, #tpu.memory_space<semaphore_mem>>
        %155 = tpu.memref_squeeze %154 : memref<1x1x!tpu.dma_semaphore, #tpu.memory_space<semaphore_mem>> -> memref<!tpu.dma_semaphore, #tpu.memory_space<semaphore_mem>>
        tpu.enqueue_dma source(%151 : memref<1x16x128xf32, #tpu.memory_space<any>>) target(%153 : memref<1x16x128xf32, #tpu.memory_space<vmem>>) target_semaphore(%155 : memref<!tpu.dma_semaphore, #tpu.memory_space<semaphore_mem>>)
      } else {
      }
      %c0_i32_80 = arith.constant 0 : i32
      %145 = arith.cmpi slt, %arg1, %c0_i32_80 : i32
      %146 = arith.extui %145 : i1 to i32
      %c0_i32_81 = arith.constant 0 : i32
      %147 = arith.cmpi ne, %146, %c0_i32_81 : i32
      scf.if %147 {
        %c1_i32_82 = arith.constant 1 : i32
        %148 = arith.addi %arg1, %c1_i32_82 : i32
        %c16_i32_83 = arith.constant 16 : i32
        %149 = arith.muli %148, %c16_i32_83 : i32
        %c2_i32_84 = arith.constant 2 : i32
        %c0_i32_85 = arith.constant 0 : i32
        %c0_i32_86 = arith.constant 0 : i32
        %150 = tpu.memref_slice %arg2[%arg0, %149, %c0_i32_85, %c0_i32_86] : memref<2x16x16x128xf32, #tpu.memory_space<any>> -> memref<1x1x16x128xf32, #tpu.memory_space<any>>
        %151 = tpu.memref_squeeze %150 : memref<1x1x16x128xf32, #tpu.memory_space<any>> -> memref<1x16x128xf32, #tpu.memory_space<any>>
        %c17_i32_87 = arith.constant 17 : i32
        %c1_i32_88 = arith.constant 1 : i32
        %c0_i32_89 = arith.constant 0 : i32
        %152 = tpu.memref_slice %arg8[%9, %c17_i32_87, %c1_i32_88, %c0_i32_89] : memref<2x18x18x128xf32, #tpu.memory_space<vmem>> -> memref<1x1x16x128xf32, #tpu.memory_space<vmem>>
        %153 = tpu.memref_squeeze %152 : memref<1x1x16x128xf32, #tpu.memory_space<vmem>> -> memref<1x16x128xf32, #tpu.memory_space<vmem>>
        %154 = tpu.memref_slice %arg9[%9, %c2_i32_84] : memref<2x3x!tpu.dma_semaphore, #tpu.memory_space<semaphore_mem>> -> memref<1x1x!tpu.dma_semaphore, #tpu.memory_space<semaphore_mem>>
        %155 = tpu.memref_squeeze %154 : memref<1x1x!tpu.dma_semaphore, #tpu.memory_space<semaphore_mem>> -> memref<!tpu.dma_semaphore, #tpu.memory_space<semaphore_mem>>
        tpu.enqueue_dma source(%151 : memref<1x16x128xf32, #tpu.memory_space<any>>) target(%153 : memref<1x16x128xf32, #tpu.memory_space<vmem>>) target_semaphore(%155 : memref<!tpu.dma_semaphore, #tpu.memory_space<semaphore_mem>>)
      } else {
      }
    } else {
    }
    %c1_i32_5 = arith.constant 1 : i32
    %13 = arith.addi %arg1, %c1_i32_5 : i32
    %c1_i32_6 = arith.constant 1 : i32
    %14 = arith.cmpi slt, %13, %c1_i32_6 : i32
    %15 = arith.extui %14 : i1 to i32
    %c0_i32_7 = arith.constant 0 : i32
    %16 = arith.cmpi ne, %15, %c0_i32_7 : i32
    scf.if %16 {
      %c1_i32_71 = arith.constant 1 : i32
      %135 = arith.addi %arg1, %c1_i32_71 : i32
      %c1_i32_72 = arith.constant 1 : i32
      %136 = arith.subi %c1_i32_72, %9 : i32
      %c16_i32_73 = arith.constant 16 : i32
      %137 = arith.muli %135, %c16_i32_73 : i32
      %c0_i32_74 = arith.constant 0 : i32
      %c0_i32_75 = arith.constant 0 : i32
      %c0_i32_76 = arith.constant 0 : i32
      %138 = tpu.memref_slice %arg2[%arg0, %137, %c0_i32_75, %c0_i32_76] : memref<2x16x16x128xf32, #tpu.memory_space<any>> -> memref<1x16x16x128xf32, #tpu.memory_space<any>>
      %139 = tpu.memref_squeeze %138 : memref<1x16x16x128xf32, #tpu.memory_space<any>> -> memref<16x16x128xf32, #tpu.memory_space<any>>
      %c1_i32_77 = arith.constant 1 : i32
      %c1_i32_78 = arith.constant 1 : i32
      %c0_i32_79 = arith.constant 0 : i32
      %140 = tpu.memref_slice %arg8[%136, %c1_i32_77, %c1_i32_78, %c0_i32_79] : memref<2x18x18x128xf32, #tpu.memory_space<vmem>> -> memref<1x16x16x128xf32, #tpu.memory_space<vmem>>
      %141 = tpu.memref_squeeze %140 : memref<1x16x16x128xf32, #tpu.memory_space<vmem>> -> memref<16x16x128xf32, #tpu.memory_space<vmem>>
      %142 = tpu.memref_slice %arg9[%136, %c0_i32_74] : memref<2x3x!tpu.dma_semaphore, #tpu.memory_space<semaphore_mem>> -> memref<1x1x!tpu.dma_semaphore, #tpu.memory_space<semaphore_mem>>
      %143 = tpu.memref_squeeze %142 : memref<1x1x!tpu.dma_semaphore, #tpu.memory_space<semaphore_mem>> -> memref<!tpu.dma_semaphore, #tpu.memory_space<semaphore_mem>>
      tpu.enqueue_dma source(%139 : memref<16x16x128xf32, #tpu.memory_space<any>>) target(%141 : memref<16x16x128xf32, #tpu.memory_space<vmem>>) target_semaphore(%143 : memref<!tpu.dma_semaphore, #tpu.memory_space<semaphore_mem>>)
      %c0_i32_80 = arith.constant 0 : i32
      %144 = arith.cmpi sgt, %135, %c0_i32_80 : i32
      %145 = arith.extui %144 : i1 to i32
      %c0_i32_81 = arith.constant 0 : i32
      %146 = arith.cmpi ne, %145, %c0_i32_81 : i32
      scf.if %146 {
        %c16_i32_84 = arith.constant 16 : i32
        %150 = arith.muli %135, %c16_i32_84 : i32
        %c1_i32_85 = arith.constant 1 : i32
        %151 = arith.subi %150, %c1_i32_85 : i32
        %c1_i32_86 = arith.constant 1 : i32
        %c0_i32_87 = arith.constant 0 : i32
        %c0_i32_88 = arith.constant 0 : i32
        %152 = tpu.memref_slice %arg2[%arg0, %151, %c0_i32_87, %c0_i32_88] : memref<2x16x16x128xf32, #tpu.memory_space<any>> -> memref<1x1x16x128xf32, #tpu.memory_space<any>>
        %153 = tpu.memref_squeeze %152 : memref<1x1x16x128xf32, #tpu.memory_space<any>> -> memref<1x16x128xf32, #tpu.memory_space<any>>
        %c0_i32_89 = arith.constant 0 : i32
        %c1_i32_90 = arith.constant 1 : i32
        %c0_i32_91 = arith.constant 0 : i32
        %154 = tpu.memref_slice %arg8[%136, %c0_i32_89, %c1_i32_90, %c0_i32_91] : memref<2x18x18x128xf32, #tpu.memory_space<vmem>> -> memref<1x1x16x128xf32, #tpu.memory_space<vmem>>
        %155 = tpu.memref_squeeze %154 : memref<1x1x16x128xf32, #tpu.memory_space<vmem>> -> memref<1x16x128xf32, #tpu.memory_space<vmem>>
        %156 = tpu.memref_slice %arg9[%136, %c1_i32_86] : memref<2x3x!tpu.dma_semaphore, #tpu.memory_space<semaphore_mem>> -> memref<1x1x!tpu.dma_semaphore, #tpu.memory_space<semaphore_mem>>
        %157 = tpu.memref_squeeze %156 : memref<1x1x!tpu.dma_semaphore, #tpu.memory_space<semaphore_mem>> -> memref<!tpu.dma_semaphore, #tpu.memory_space<semaphore_mem>>
        tpu.enqueue_dma source(%153 : memref<1x16x128xf32, #tpu.memory_space<any>>) target(%155 : memref<1x16x128xf32, #tpu.memory_space<vmem>>) target_semaphore(%157 : memref<!tpu.dma_semaphore, #tpu.memory_space<semaphore_mem>>)
      } else {
      }
      %c0_i32_82 = arith.constant 0 : i32
      %147 = arith.cmpi slt, %135, %c0_i32_82 : i32
      %148 = arith.extui %147 : i1 to i32
      %c0_i32_83 = arith.constant 0 : i32
      %149 = arith.cmpi ne, %148, %c0_i32_83 : i32
      scf.if %149 {
        %c1_i32_84 = arith.constant 1 : i32
        %150 = arith.addi %135, %c1_i32_84 : i32
        %c16_i32_85 = arith.constant 16 : i32
        %151 = arith.muli %150, %c16_i32_85 : i32
        %c2_i32_86 = arith.constant 2 : i32
        %c0_i32_87 = arith.constant 0 : i32
        %c0_i32_88 = arith.constant 0 : i32
        %152 = tpu.memref_slice %arg2[%arg0, %151, %c0_i32_87, %c0_i32_88] : memref<2x16x16x128xf32, #tpu.memory_space<any>> -> memref<1x1x16x128xf32, #tpu.memory_space<any>>
        %153 = tpu.memref_squeeze %152 : memref<1x1x16x128xf32, #tpu.memory_space<any>> -> memref<1x16x128xf32, #tpu.memory_space<any>>
        %c17_i32_89 = arith.constant 17 : i32
        %c1_i32_90 = arith.constant 1 : i32
        %c0_i32_91 = arith.constant 0 : i32
        %154 = tpu.memref_slice %arg8[%136, %c17_i32_89, %c1_i32_90, %c0_i32_91] : memref<2x18x18x128xf32, #tpu.memory_space<vmem>> -> memref<1x1x16x128xf32, #tpu.memory_space<vmem>>
        %155 = tpu.memref_squeeze %154 : memref<1x1x16x128xf32, #tpu.memory_space<vmem>> -> memref<1x16x128xf32, #tpu.memory_space<vmem>>
        %156 = tpu.memref_slice %arg9[%136, %c2_i32_86] : memref<2x3x!tpu.dma_semaphore, #tpu.memory_space<semaphore_mem>> -> memref<1x1x!tpu.dma_semaphore, #tpu.memory_space<semaphore_mem>>
        %157 = tpu.memref_squeeze %156 : memref<1x1x!tpu.dma_semaphore, #tpu.memory_space<semaphore_mem>> -> memref<!tpu.dma_semaphore, #tpu.memory_space<semaphore_mem>>
        tpu.enqueue_dma source(%153 : memref<1x16x128xf32, #tpu.memory_space<any>>) target(%155 : memref<1x16x128xf32, #tpu.memory_space<vmem>>) target_semaphore(%157 : memref<!tpu.dma_semaphore, #tpu.memory_space<semaphore_mem>>)
      } else {
      }
    } else {
    }
    %c0_i32_8 = arith.constant 0 : i32
    %c0_i32_9 = arith.constant 0 : i32
    %c0_i32_10 = arith.constant 0 : i32
    %c0_i32_11 = arith.constant 0 : i32
    %c0_i32_12 = arith.constant 0 : i32
    %17 = tpu.memref_slice %arg2[%c0_i32_8, %c0_i32_10, %c0_i32_11, %c0_i32_12] : memref<2x16x16x128xf32, #tpu.memory_space<any>> -> memref<1x16x16x128xf32, #tpu.memory_space<any>>
    %18 = tpu.memref_squeeze %17 : memref<1x16x16x128xf32, #tpu.memory_space<any>> -> memref<16x16x128xf32, #tpu.memory_space<any>>
    %c1_i32_13 = arith.constant 1 : i32
    %c1_i32_14 = arith.constant 1 : i32
    %c0_i32_15 = arith.constant 0 : i32
    %19 = tpu.memref_slice %arg8[%9, %c1_i32_13, %c1_i32_14, %c0_i32_15] : memref<2x18x18x128xf32, #tpu.memory_space<vmem>> -> memref<1x16x16x128xf32, #tpu.memory_space<vmem>>
    %20 = tpu.memref_squeeze %19 : memref<1x16x16x128xf32, #tpu.memory_space<vmem>> -> memref<16x16x128xf32, #tpu.memory_space<vmem>>
    %21 = tpu.memref_slice %arg9[%9, %c0_i32_9] : memref<2x3x!tpu.dma_semaphore, #tpu.memory_space<semaphore_mem>> -> memref<1x1x!tpu.dma_semaphore, #tpu.memory_space<semaphore_mem>>
    %22 = tpu.memref_squeeze %21 : memref<1x1x!tpu.dma_semaphore, #tpu.memory_space<semaphore_mem>> -> memref<!tpu.dma_semaphore, #tpu.memory_space<semaphore_mem>>
    tpu.wait_dma2 semaphore(%22 : memref<!tpu.dma_semaphore, #tpu.memory_space<semaphore_mem>>) src(%18 : memref<16x16x128xf32, #tpu.memory_space<any>>) dst(%20 : memref<16x16x128xf32, #tpu.memory_space<vmem>>)
    %c0_i32_16 = arith.constant 0 : i32
    %23 = arith.cmpi sgt, %arg1, %c0_i32_16 : i32
    %24 = arith.extui %23 : i1 to i32
    %c0_i32_17 = arith.constant 0 : i32
    %25 = arith.cmpi ne, %24, %c0_i32_17 : i32
    scf.if %25 {
      %c0_i32_71 = arith.constant 0 : i32
      %c1_i32_72 = arith.constant 1 : i32
      %c0_i32_73 = arith.constant 0 : i32
      %c0_i32_74 = arith.constant 0 : i32
      %c0_i32_75 = arith.constant 0 : i32
      %135 = tpu.memref_slice %arg2[%c0_i32_71, %c0_i32_73, %c0_i32_74, %c0_i32_75] : memref<2x16x16x128xf32, #tpu.memory_space<any>> -> memref<1x1x16x128xf32, #tpu.memory_space<any>>
      %136 = tpu.memref_squeeze %135 : memref<1x1x16x128xf32, #tpu.memory_space<any>> -> memref<1x16x128xf32, #tpu.memory_space<any>>
      %c0_i32_76 = arith.constant 0 : i32
      %c1_i32_77 = arith.constant 1 : i32
      %c0_i32_78 = arith.constant 0 : i32
      %137 = tpu.memref_slice %arg8[%9, %c0_i32_76, %c1_i32_77, %c0_i32_78] : memref<2x18x18x128xf32, #tpu.memory_space<vmem>> -> memref<1x1x16x128xf32, #tpu.memory_space<vmem>>
      %138 = tpu.memref_squeeze %137 : memref<1x1x16x128xf32, #tpu.memory_space<vmem>> -> memref<1x16x128xf32, #tpu.memory_space<vmem>>
      %139 = tpu.memref_slice %arg9[%9, %c1_i32_72] : memref<2x3x!tpu.dma_semaphore, #tpu.memory_space<semaphore_mem>> -> memref<1x1x!tpu.dma_semaphore, #tpu.memory_space<semaphore_mem>>
      %140 = tpu.memref_squeeze %139 : memref<1x1x!tpu.dma_semaphore, #tpu.memory_space<semaphore_mem>> -> memref<!tpu.dma_semaphore, #tpu.memory_space<semaphore_mem>>
      tpu.wait_dma2 semaphore(%140 : memref<!tpu.dma_semaphore, #tpu.memory_space<semaphore_mem>>) src(%136 : memref<1x16x128xf32, #tpu.memory_space<any>>) dst(%138 : memref<1x16x128xf32, #tpu.memory_space<vmem>>)
    } else {
    }
    %c0_i32_18 = arith.constant 0 : i32
    %26 = arith.cmpi slt, %arg1, %c0_i32_18 : i32
    %27 = arith.extui %26 : i1 to i32
    %c0_i32_19 = arith.constant 0 : i32
    %28 = arith.cmpi ne, %27, %c0_i32_19 : i32
    scf.if %28 {
      %c0_i32_71 = arith.constant 0 : i32
      %c2_i32_72 = arith.constant 2 : i32
      %c0_i32_73 = arith.constant 0 : i32
      %c0_i32_74 = arith.constant 0 : i32
      %c0_i32_75 = arith.constant 0 : i32
      %135 = tpu.memref_slice %arg2[%c0_i32_71, %c0_i32_73, %c0_i32_74, %c0_i32_75] : memref<2x16x16x128xf32, #tpu.memory_space<any>> -> memref<1x1x16x128xf32, #tpu.memory_space<any>>
      %136 = tpu.memref_squeeze %135 : memref<1x1x16x128xf32, #tpu.memory_space<any>> -> memref<1x16x128xf32, #tpu.memory_space<any>>
      %c17_i32_76 = arith.constant 17 : i32
      %c1_i32_77 = arith.constant 1 : i32
      %c0_i32_78 = arith.constant 0 : i32
      %137 = tpu.memref_slice %arg8[%9, %c17_i32_76, %c1_i32_77, %c0_i32_78] : memref<2x18x18x128xf32, #tpu.memory_space<vmem>> -> memref<1x1x16x128xf32, #tpu.memory_space<vmem>>
      %138 = tpu.memref_squeeze %137 : memref<1x1x16x128xf32, #tpu.memory_space<vmem>> -> memref<1x16x128xf32, #tpu.memory_space<vmem>>
      %139 = tpu.memref_slice %arg9[%9, %c2_i32_72] : memref<2x3x!tpu.dma_semaphore, #tpu.memory_space<semaphore_mem>> -> memref<1x1x!tpu.dma_semaphore, #tpu.memory_space<semaphore_mem>>
      %140 = tpu.memref_squeeze %139 : memref<1x1x!tpu.dma_semaphore, #tpu.memory_space<semaphore_mem>> -> memref<!tpu.dma_semaphore, #tpu.memory_space<semaphore_mem>>
      tpu.wait_dma2 semaphore(%140 : memref<!tpu.dma_semaphore, #tpu.memory_space<semaphore_mem>>) src(%136 : memref<1x16x128xf32, #tpu.memory_space<any>>) dst(%138 : memref<1x16x128xf32, #tpu.memory_space<vmem>>)
    } else {
    }
    %29 = arith.index_cast %9 : i32 to index
    %c0 = arith.constant 0 : index
    %c0_20 = arith.constant 0 : index
    %c0_21 = arith.constant 0 : index
    %30 = vector.load %arg8[%29, %c0, %c0_20, %c0_21] : memref<2x18x18x128xf32, #tpu.memory_space<vmem>>, vector<1x18x18x128xf32>
    %31 = vector.shape_cast %30 : vector<1x18x18x128xf32> to vector<18x18x128xf32>
    %c0_22 = arith.constant 0 : index
    %c0_23 = arith.constant 0 : index
    %32 = vector.load %arg4[%c0_22, %c0_23] : memref<1x128xf32, #tpu.memory_space<vmem>>, vector<1x128xf32>
    %33 = vector.shape_cast %32 : vector<1x128xf32> to vector<1x1x128xf32>
    %34 = vector.broadcast %33 : vector<1x1x128xf32> to vector<18x18x128xf32>
    %35 = arith.mulf %31, %34 : vector<18x18x128xf32>
    %c0_24 = arith.constant 0 : index
    %c0_25 = arith.constant 0 : index
    %36 = vector.load %arg5[%c0_24, %c0_25] : memref<1x128xf32, #tpu.memory_space<vmem>>, vector<1x128xf32>
    %37 = vector.shape_cast %36 : vector<1x128xf32> to vector<1x1x128xf32>
    %38 = vector.broadcast %37 : vector<1x1x128xf32> to vector<18x18x128xf32>
    %39 = arith.addf %35, %38 : vector<18x18x128xf32>
    %cst = arith.constant 0.000000e+00 : f32
    %40 = vector.broadcast %cst : f32 to vector<18x18x128xf32>
    %41 = arith.maximumf %39, %40 : vector<18x18x128xf32>
    %42 = tpu.iota {dimensions = array<i32: 0>} : vector<18x18x1xi32>
    %43 = tpu.iota {dimensions = array<i32: 1>} : vector<18x18x1xi32>
    %c0_i32_26 = arith.constant 0 : i32
    %44 = arith.cmpi eq, %arg1, %c0_i32_26 : i32
    %c1_i32_27 = arith.constant 1 : i32
    %c0_i32_28 = arith.constant 0 : i32
    %45 = arith.select %44, %c1_i32_27, %c0_i32_28 : i32
    %c0_i32_29 = arith.constant 0 : i32
    %46 = arith.cmpi eq, %arg1, %c0_i32_29 : i32
    %c16_i32 = arith.constant 16 : i32
    %c17_i32 = arith.constant 17 : i32
    %47 = arith.select %46, %c16_i32, %c17_i32 : i32
    %48 = vector.broadcast %45 : i32 to vector<18x18x1xi32>
    %49 = arith.cmpi sge, %42, %48 : vector<18x18x1xi32>
    %50 = vector.broadcast %47 : i32 to vector<18x18x1xi32>
    %51 = arith.cmpi sle, %42, %50 : vector<18x18x1xi32>
    %52 = arith.andi %49, %51 : vector<18x18x1xi1>
    %c1_i32_30 = arith.constant 1 : i32
    %53 = vector.broadcast %c1_i32_30 : i32 to vector<18x18x1xi32>
    %54 = arith.cmpi sge, %43, %53 : vector<18x18x1xi32>
    %55 = arith.andi %52, %54 : vector<18x18x1xi1>
    %c16_i32_31 = arith.constant 16 : i32
    %56 = vector.broadcast %c16_i32_31 : i32 to vector<18x18x1xi32>
    %57 = arith.cmpi sle, %43, %56 : vector<18x18x1xi32>
    %58 = arith.andi %55, %57 : vector<18x18x1xi1>
    %cst_32 = arith.constant 0.000000e+00 : f32
    %59 = vector.shape_cast %58 : vector<18x18x1xi1> to vector<18x18x1xi1>
    %60 = vector.broadcast %59 : vector<18x18x1xi1> to vector<18x18x128xi1>
    %61 = vector.broadcast %cst_32 : f32 to vector<18x18x128xf32>
    %62 = arith.select %60, %41, %61 : vector<18x18x128xi1>, vector<18x18x128xf32>
    %63 = vector.extract_strided_slice %62 {offsets = [0, 0, 0], sizes = [16, 16, 128], strides = [1, 1, 1]} : vector<18x18x128xf32> to vector<16x16x128xf32>
    %64 = vector.shape_cast %63 : vector<16x16x128xf32> to vector<256x128xf32>
    %65 = arith.truncf %64 : vector<256x128xf32> to vector<256x128xbf16>
    %c0_33 = arith.constant 0 : index
    %c0_34 = arith.constant 0 : index
    %c0_35 = arith.constant 0 : index
    %66 = vector.load %arg3[%c0_33, %c0_34, %c0_35] : memref<9x128x128xbf16, #tpu.memory_space<vmem>>, vector<1x128x128xbf16>
    %67 = vector.shape_cast %66 : vector<1x128x128xbf16> to vector<128x128xbf16>
    %cst_36 = arith.constant dense<0.000000e+00> : vector<256x128xf32>
    %68 = tpu.matmul %65, %67, %cst_36 {dimension_numbers = #tpu.dot_dimension_numbers<[1], [0], [0], [1], [0, 0, 1, 1], [], []>} : vector<256x128xbf16>, vector<128x128xbf16>, vector<256x128xf32> -> vector<256x128xf32>
    %69 = vector.extract_strided_slice %62 {offsets = [0, 1, 0], sizes = [16, 16, 128], strides = [1, 1, 1]} : vector<18x18x128xf32> to vector<16x16x128xf32>
    %70 = vector.shape_cast %69 : vector<16x16x128xf32> to vector<256x128xf32>
    %71 = arith.truncf %70 : vector<256x128xf32> to vector<256x128xbf16>
    %c1 = arith.constant 1 : index
    %c0_37 = arith.constant 0 : index
    %c0_38 = arith.constant 0 : index
    %72 = vector.load %arg3[%c1, %c0_37, %c0_38] : memref<9x128x128xbf16, #tpu.memory_space<vmem>>, vector<1x128x128xbf16>
    %73 = vector.shape_cast %72 : vector<1x128x128xbf16> to vector<128x128xbf16>
    %cst_39 = arith.constant dense<0.000000e+00> : vector<256x128xf32>
    %74 = tpu.matmul %71, %73, %cst_39 {dimension_numbers = #tpu.dot_dimension_numbers<[1], [0], [0], [1], [0, 0, 1, 1], [], []>} : vector<256x128xbf16>, vector<128x128xbf16>, vector<256x128xf32> -> vector<256x128xf32>
    %75 = arith.addf %68, %74 : vector<256x128xf32>
    %76 = vector.extract_strided_slice %62 {offsets = [0, 2, 0], sizes = [16, 16, 128], strides = [1, 1, 1]} : vector<18x18x128xf32> to vector<16x16x128xf32>
    %77 = vector.shape_cast %76 : vector<16x16x128xf32> to vector<256x128xf32>
    %78 = arith.truncf %77 : vector<256x128xf32> to vector<256x128xbf16>
    %c2 = arith.constant 2 : index
    %c0_40 = arith.constant 0 : index
    %c0_41 = arith.constant 0 : index
    %79 = vector.load %arg3[%c2, %c0_40, %c0_41] : memref<9x128x128xbf16, #tpu.memory_space<vmem>>, vector<1x128x128xbf16>
    %80 = vector.shape_cast %79 : vector<1x128x128xbf16> to vector<128x128xbf16>
    %cst_42 = arith.constant dense<0.000000e+00> : vector<256x128xf32>
    %81 = tpu.matmul %78, %80, %cst_42 {dimension_numbers = #tpu.dot_dimension_numbers<[1], [0], [0], [1], [0, 0, 1, 1], [], []>} : vector<256x128xbf16>, vector<128x128xbf16>, vector<256x128xf32> -> vector<256x128xf32>
    %82 = arith.addf %75, %81 : vector<256x128xf32>
    %83 = vector.extract_strided_slice %62 {offsets = [1, 0, 0], sizes = [16, 16, 128], strides = [1, 1, 1]} : vector<18x18x128xf32> to vector<16x16x128xf32>
    %84 = vector.shape_cast %83 : vector<16x16x128xf32> to vector<256x128xf32>
    %85 = arith.truncf %84 : vector<256x128xf32> to vector<256x128xbf16>
    %c3 = arith.constant 3 : index
    %c0_43 = arith.constant 0 : index
    %c0_44 = arith.constant 0 : index
    %86 = vector.load %arg3[%c3, %c0_43, %c0_44] : memref<9x128x128xbf16, #tpu.memory_space<vmem>>, vector<1x128x128xbf16>
    %87 = vector.shape_cast %86 : vector<1x128x128xbf16> to vector<128x128xbf16>
    %cst_45 = arith.constant dense<0.000000e+00> : vector<256x128xf32>
    %88 = tpu.matmul %85, %87, %cst_45 {dimension_numbers = #tpu.dot_dimension_numbers<[1], [0], [0], [1], [0, 0, 1, 1], [], []>} : vector<256x128xbf16>, vector<128x128xbf16>, vector<256x128xf32> -> vector<256x128xf32>
    %89 = arith.addf %82, %88 : vector<256x128xf32>
    %90 = vector.extract_strided_slice %62 {offsets = [1, 1, 0], sizes = [16, 16, 128], strides = [1, 1, 1]} : vector<18x18x128xf32> to vector<16x16x128xf32>
    %91 = vector.shape_cast %90 : vector<16x16x128xf32> to vector<256x128xf32>
    %92 = arith.truncf %91 : vector<256x128xf32> to vector<256x128xbf16>
    %c4 = arith.constant 4 : index
    %c0_46 = arith.constant 0 : index
    %c0_47 = arith.constant 0 : index
    %93 = vector.load %arg3[%c4, %c0_46, %c0_47] : memref<9x128x128xbf16, #tpu.memory_space<vmem>>, vector<1x128x128xbf16>
    %94 = vector.shape_cast %93 : vector<1x128x128xbf16> to vector<128x128xbf16>
    %cst_48 = arith.constant dense<0.000000e+00> : vector<256x128xf32>
    %95 = tpu.matmul %92, %94, %cst_48 {dimension_numbers = #tpu.dot_dimension_numbers<[1], [0], [0], [1], [0, 0, 1, 1], [], []>} : vector<256x128xbf16>, vector<128x128xbf16>, vector<256x128xf32> -> vector<256x128xf32>
    %96 = arith.addf %89, %95 : vector<256x128xf32>
    %97 = vector.extract_strided_slice %62 {offsets = [1, 2, 0], sizes = [16, 16, 128], strides = [1, 1, 1]} : vector<18x18x128xf32> to vector<16x16x128xf32>
    %98 = vector.shape_cast %97 : vector<16x16x128xf32> to vector<256x128xf32>
    %99 = arith.truncf %98 : vector<256x128xf32> to vector<256x128xbf16>
    %c5 = arith.constant 5 : index
    %c0_49 = arith.constant 0 : index
    %c0_50 = arith.constant 0 : index
    %100 = vector.load %arg3[%c5, %c0_49, %c0_50] : memref<9x128x128xbf16, #tpu.memory_space<vmem>>, vector<1x128x128xbf16>
    %101 = vector.shape_cast %100 : vector<1x128x128xbf16> to vector<128x128xbf16>
    %cst_51 = arith.constant dense<0.000000e+00> : vector<256x128xf32>
    %102 = tpu.matmul %99, %101, %cst_51 {dimension_numbers = #tpu.dot_dimension_numbers<[1], [0], [0], [1], [0, 0, 1, 1], [], []>} : vector<256x128xbf16>, vector<128x128xbf16>, vector<256x128xf32> -> vector<256x128xf32>
    %103 = arith.addf %96, %102 : vector<256x128xf32>
    %104 = vector.extract_strided_slice %62 {offsets = [2, 0, 0], sizes = [16, 16, 128], strides = [1, 1, 1]} : vector<18x18x128xf32> to vector<16x16x128xf32>
    %105 = vector.shape_cast %104 : vector<16x16x128xf32> to vector<256x128xf32>
    %106 = arith.truncf %105 : vector<256x128xf32> to vector<256x128xbf16>
    %c6 = arith.constant 6 : index
    %c0_52 = arith.constant 0 : index
    %c0_53 = arith.constant 0 : index
    %107 = vector.load %arg3[%c6, %c0_52, %c0_53] : memref<9x128x128xbf16, #tpu.memory_space<vmem>>, vector<1x128x128xbf16>
    %108 = vector.shape_cast %107 : vector<1x128x128xbf16> to vector<128x128xbf16>
    %cst_54 = arith.constant dense<0.000000e+00> : vector<256x128xf32>
    %109 = tpu.matmul %106, %108, %cst_54 {dimension_numbers = #tpu.dot_dimension_numbers<[1], [0], [0], [1], [0, 0, 1, 1], [], []>} : vector<256x128xbf16>, vector<128x128xbf16>, vector<256x128xf32> -> vector<256x128xf32>
    %110 = arith.addf %103, %109 : vector<256x128xf32>
    %111 = vector.extract_strided_slice %62 {offsets = [2, 1, 0], sizes = [16, 16, 128], strides = [1, 1, 1]} : vector<18x18x128xf32> to vector<16x16x128xf32>
    %112 = vector.shape_cast %111 : vector<16x16x128xf32> to vector<256x128xf32>
    %113 = arith.truncf %112 : vector<256x128xf32> to vector<256x128xbf16>
    %c7 = arith.constant 7 : index
    %c0_55 = arith.constant 0 : index
    %c0_56 = arith.constant 0 : index
    %114 = vector.load %arg3[%c7, %c0_55, %c0_56] : memref<9x128x128xbf16, #tpu.memory_space<vmem>>, vector<1x128x128xbf16>
    %115 = vector.shape_cast %114 : vector<1x128x128xbf16> to vector<128x128xbf16>
    %cst_57 = arith.constant dense<0.000000e+00> : vector<256x128xf32>
    %116 = tpu.matmul %113, %115, %cst_57 {dimension_numbers = #tpu.dot_dimension_numbers<[1], [0], [0], [1], [0, 0, 1, 1], [], []>} : vector<256x128xbf16>, vector<128x128xbf16>, vector<256x128xf32> -> vector<256x128xf32>
    %117 = arith.addf %110, %116 : vector<256x128xf32>
    %118 = vector.extract_strided_slice %62 {offsets = [2, 2, 0], sizes = [16, 16, 128], strides = [1, 1, 1]} : vector<18x18x128xf32> to vector<16x16x128xf32>
    %119 = vector.shape_cast %118 : vector<16x16x128xf32> to vector<256x128xf32>
    %120 = arith.truncf %119 : vector<256x128xf32> to vector<256x128xbf16>
    %c8 = arith.constant 8 : index
    %c0_58 = arith.constant 0 : index
    %c0_59 = arith.constant 0 : index
    %121 = vector.load %arg3[%c8, %c0_58, %c0_59] : memref<9x128x128xbf16, #tpu.memory_space<vmem>>, vector<1x128x128xbf16>
    %122 = vector.shape_cast %121 : vector<1x128x128xbf16> to vector<128x128xbf16>
    %cst_60 = arith.constant dense<0.000000e+00> : vector<256x128xf32>
    %123 = tpu.matmul %120, %122, %cst_60 {dimension_numbers = #tpu.dot_dimension_numbers<[1], [0], [0], [1], [0, 0, 1, 1], [], []>} : vector<256x128xbf16>, vector<128x128xbf16>, vector<256x128xf32> -> vector<256x128xf32>
    %124 = arith.addf %117, %123 : vector<256x128xf32>
    %125 = vector.shape_cast %124 : vector<256x128xf32> to vector<1x16x16x128xf32>
    %c0_61 = arith.constant 0 : index
    %c0_62 = arith.constant 0 : index
    %c0_63 = arith.constant 0 : index
    %c0_64 = arith.constant 0 : index
    %126 = vector.load %arg6[%c0_61, %c0_62, %c0_63, %c0_64] : memref<1x16x16x128xf32, #tpu.memory_space<vmem>>, vector<1x16x16x128xf32>
    tpu.vector_store %arg6[%c0_61, %c0_62, %c0_63, %c0_64], %125 {strides = array<i32>} : memref<1x16x16x128xf32, #tpu.memory_space<vmem>>, vector<1x16x16x128xf32>,
    %cst_65 = arith.constant dense<0.000000e+00> : vector<128xf32>
    %127 = vector.multi_reduction <add>, %124, %cst_65 [0] : vector<256x128xf32> to vector<128xf32>
    %128 = vector.shape_cast %127 : vector<128xf32> to vector<1x128xf32>
    %129 = arith.mulf %124, %124 : vector<256x128xf32>
    %cst_66 = arith.constant dense<0.000000e+00> : vector<128xf32>
    %130 = vector.multi_reduction <add>, %129, %cst_66 [0] : vector<256x128xf32> to vector<128xf32>
    %131 = vector.shape_cast %130 : vector<128xf32> to vector<1x128xf32>
    %132 = tpu.concatenate %128, %131 in 0 : vector<1x128xf32>, vector<1x128xf32> -> vector<2x128xf32>
    %133 = vector.shape_cast %132 : vector<2x128xf32> to vector<1x1x2x128xf32>
    %c0_67 = arith.constant 0 : index
    %c0_68 = arith.constant 0 : index
    %c0_69 = arith.constant 0 : index
    %c0_70 = arith.constant 0 : index
    %134 = vector.load %arg7[%c0_67, %c0_68, %c0_69, %c0_70] : memref<1x1x2x128xf32, #tpu.memory_space<vmem>>, vector<1x1x2x128xf32>
    tpu.vector_store %arg7[%c0_67, %c0_68, %c0_69, %c0_70], %133 {strides = array<i32>} : memref<1x1x2x128xf32, #tpu.memory_space<vmem>>, vector<1x1x2x128xf32>,
    return
  }
  func.func @transform_1(%arg0: i32, %arg1: i32) -> (i32, i32, i32) {
    %c0_i32 = arith.constant 0 : i32
    %c0_i32_0 = arith.constant 0 : i32
    %c0_i32_1 = arith.constant 0 : i32
    %c0_i32_2 = arith.constant 0 : i32
    return %c0_i32, %c0_i32_0, %c0_i32_1 : i32, i32, i32
  }
  func.func @transform_2(%arg0: i32, %arg1: i32) -> (i32, i32) {
    %c0_i32 = arith.constant 0 : i32
    %c0_i32_0 = arith.constant 0 : i32
    %c0_i32_1 = arith.constant 0 : i32
    return %c0_i32, %c0_i32_0 : i32, i32
  }
  func.func @transform_3(%arg0: i32, %arg1: i32) -> (i32, i32) {
    %c0_i32 = arith.constant 0 : i32
    %c0_i32_0 = arith.constant 0 : i32
    %c0_i32_1 = arith.constant 0 : i32
    return %c0_i32, %c0_i32_0 : i32, i32
  }
  func.func @transform_4(%arg0: i32, %arg1: i32) -> (i32, i32, i32, i32) {
    %c0_i32 = arith.constant 0 : i32
    %c0_i32_0 = arith.constant 0 : i32
    %c0_i32_1 = arith.constant 0 : i32
    return %arg0, %arg1, %c0_i32, %c0_i32_0 : i32, i32, i32, i32
  }
  func.func @transform_5(%arg0: i32, %arg1: i32) -> (i32, i32, i32, i32) {
    %c0_i32 = arith.constant 0 : i32
    %c0_i32_0 = arith.constant 0 : i32
    %c0_i32_1 = arith.constant 0 : i32
    return %arg0, %arg1, %c0_i32, %c0_i32_0 : i32, i32, i32, i32
  }
}

</mosaic_0001>

<llo_original>
// kernel: double_conv.5
$region0: #{double_conv.5}
  #allocation0 [shape = 'u32[]', space=smem, size = 0x4, offset = 0x4, fixed_abs, tag = 'smem constant byte address 0x4 - core index']
  #allocation1 [shape = 'u32[72,128]{1,0:T(1,128)}', space=vmem, size = 0x9000, scoped, tag = 'internal scratch']
  %s0 = inlined_call_operand.vmem [shape: f32[512,128], index: 0, kind: input, shape index: {}]
  %s1 = inlined_call_operand.vmem [shape: f32[512,128], index: 1, kind: input, shape index: {}, may-alias: {1,6}]
  %s2 = inlined_call_operand.vmem [shape: f32[1,128], index: 2, kind: input, shape index: {}]
  %s3 = inlined_call_operand.vmem [shape: f32[1,128], index: 3, kind: input, shape index: {}]
  %s4 = inlined_call_operand.vmem [shape: f32[1,128], index: 4, kind: input, shape index: {}]
  %s5 = inlined_call_operand.vmem [shape: f32[1,128], index: 5, kind: input, shape index: {}]
  %s6 = inlined_call_operand.vmem [shape: f32[512,128], index: 6, kind: output, shape index: {}, may-alias: {1,6}]
  %s7 = sld [smem:[#allocation0]]
  $region34: #{double_conv.5} parent=0
    _
  %s9 = ssub.s32 1, %s7
  %s10 = scalar_select 0, %s9, %s7
  // Predicated region
  $region2: #{double_conv.5} parent=0 // pred_check
    _
  $region3: #{double_conv.5} parent=0 // pred_check_branch
    %12 = sbr.rel (0) target = $region5
  $region4: #{double_conv.5} parent=0 // pred_region
    _
  $region5: #{double_conv.5} parent=0 // pred_fallthru
    _
  // Predicated region
  $region6: #{double_conv.5} parent=0 // pred_check
    _
  $region7: #{double_conv.5} parent=0 // pred_check_branch
    %14 = sbr.rel (0) target = $region9
  $region8: #{double_conv.5} parent=0 // pred_region
    _
  $region9: #{double_conv.5} parent=0 // pred_fallthru
    _
  // Predicated region
  $region10: #{double_conv.5} parent=0 // pred_check
    _
  $region11: #{double_conv.5} parent=0 // pred_check_branch
    %16 = sbr.rel (0) target = $region13
  $region12: #{double_conv.5} parent=0 // pred_region
    _
  $region13: #{double_conv.5} parent=0 // pred_fallthru
    _
  // Predicated region
  $region14: #{double_conv.5} parent=0 // pred_check
    _
  $region15: #{double_conv.5} parent=0 // pred_check_branch
    %18 = sbr.rel (0) target = $region17
  $region16: #{double_conv.5} parent=0 // pred_region
    _
  $region17: #{double_conv.5} parent=0 // pred_fallthru
    _
  // Predicated region
  $region18: #{double_conv.5} parent=0 // pred_check
    _
  $region19: #{double_conv.5} parent=0 // pred_check_branch
    %20 = sbr.rel (0) target = $region21
  $region20: #{double_conv.5} parent=0 // pred_region
    _
  $region21: #{double_conv.5} parent=0 // pred_fallthru
    _
  // Predicated region
  $region22: #{double_conv.5} parent=0 // pred_check
    _
  $region23: #{double_conv.5} parent=0 // pred_check_branch
    %22 = sbr.rel (0) target = $region25
  $region24: #{double_conv.5} parent=0 // pred_region
    _
  $region25: #{double_conv.5} parent=0 // pred_fallthru
    _
  %v23 = vld [vmem:[%s0] sm:$0xff]
  %v24 = vld [vmem:[%s0 + $0x8] sm:$0xff]
  %v25 = vld [vmem:[%s0 + $0x10] sm:$0xff]
  %v26 = vld [vmem:[%s0 + $0x18] sm:$0xff]
  %v27 = vld [vmem:[%s0 + $0x20] sm:$0xff]
  %v28 = vld [vmem:[%s0 + $0x28] sm:$0xff]
  %v29 = vld [vmem:[%s0 + $0x30] sm:$0xff]
  %v30 = vld [vmem:[%s0 + $0x38] sm:$0xff]
  %v31 = vld [vmem:[%s0 + $0x40] sm:$0xff]
  %v32 = vld [vmem:[%s0 + $0x48] sm:$0xff]
  %v33 = vld [vmem:[%s0 + $0x50] sm:$0xff]
  %v34 = vld [vmem:[%s0 + $0x58] sm:$0xff]
  %v35 = vld [vmem:[%s0 + $0x60] sm:$0xff]
  %v36 = vld [vmem:[%s0 + $0x68] sm:$0xff]
  %v37 = vld [vmem:[%s0 + $0x70] sm:$0xff]
  %v38 = vld [vmem:[%s0 + $0x78] sm:$0xff]
  %v39 = vld [vmem:[%s0 + $0x80] sm:$0xff]
  %v40 = vld [vmem:[%s0 + $0x88] sm:$0xff]
  %v41 = vld [vmem:[%s0 + $0x90] sm:$0xff]
  %v42 = vld [vmem:[%s0 + $0x98] sm:$0xff]
  %v43 = vld [vmem:[%s0 + $0xa0] sm:$0xff]
  %v44 = vld [vmem:[%s0 + $0xa8] sm:$0xff]
  %v45 = vld [vmem:[%s0 + $0xb0] sm:$0xff]
  %v46 = vld [vmem:[%s0 + $0xb8] sm:$0xff]
  %v47 = vld [vmem:[%s0 + $0xc0] sm:$0xff]
  %v48 = vld [vmem:[%s0 + $0xc8] sm:$0xff]
  %v49 = vld [vmem:[%s0 + $0xd0] sm:$0xff]
  %v50 = vld [vmem:[%s0 + $0xd8] sm:$0xff]
  %v51 = vld [vmem:[%s0 + $0xe0] sm:$0xff]
  %v52 = vld [vmem:[%s0 + $0xe8] sm:$0xff]
  %v53 = vld [vmem:[%s0 + $0xf0] sm:$0xff]
  %v54 = vld [vmem:[%s0 + $0xf8] sm:$0xff]
  %v55 = vld [vmem:[%s0 + $0x100] sm:$0xff]
  %v56 = vld [vmem:[%s0 + $0x108] sm:$0xff]
  %v57 = vld [vmem:[%s0 + $0x110] sm:$0xff]
  %v58 = vld [vmem:[%s0 + $0x118] sm:$0xff]
  %v59 = vld [vmem:[%s0 + $0x120] sm:$0xff]
  %v60 = vld [vmem:[%s0 + $0x128] sm:$0xff]
  %v61 = vld [vmem:[%s0 + $0x130] sm:$0xff]
  %v62 = vld [vmem:[%s0 + $0x138] sm:$0xff]
  %v63 = vld [vmem:[%s0 + $0x140] sm:$0xff]
  %v64 = vld [vmem:[%s0 + $0x148] sm:$0xff]
  %v65 = vld [vmem:[%s0 + $0x150] sm:$0xff]
  %v66 = vld [vmem:[%s0 + $0x158] sm:$0xff]
  %v67 = vld [vmem:[%s0 + $0x160] sm:$0xff]
  %v68 = vld [vmem:[%s0 + $0x168] sm:$0xff]
  %v69 = vld [vmem:[%s0 + $0x170] sm:$0xff]
  %v70 = vld [vmem:[%s0 + $0x178] sm:$0xff]
  %v71 = vld [vmem:[%s0 + $0x180] sm:$0xff]
  %v72 = vld [vmem:[%s0 + $0x188] sm:$0xff]
  %v73 = vld [vmem:[%s0 + $0x190] sm:$0xff]
  %v74 = vld [vmem:[%s0 + $0x198] sm:$0xff]
  %v75 = vld [vmem:[%s0 + $0x1a0] sm:$0xff]
  %v76 = vld [vmem:[%s0 + $0x1a8] sm:$0xff]
  %v77 = vld [vmem:[%s0 + $0x1b0] sm:$0xff]
  %v78 = vld [vmem:[%s0 + $0x1b8] sm:$0xff]
  %v79 = vld [vmem:[%s0 + $0x1c0] sm:$0xff]
  %v80 = vld [vmem:[%s0 + $0x1c8] sm:$0xff]
  %v81 = vld [vmem:[%s0 + $0x1d0] sm:$0xff]
  %v82 = vld [vmem:[%s0 + $0x1d8] sm:$0xff]
  %v83 = vld [vmem:[%s0 + $0x1e0] sm:$0xff]
  %v84 = vld [vmem:[%s0 + $0x1e8] sm:$0xff]
  %v85 = vld [vmem:[%s0 + $0x1f0] sm:$0xff]
  %v86 = vld [vmem:[%s0 + $0x1f8] sm:$0xff]
  %v87 = vld [vmem:[%s2] sm:$0x1]
  %v89 = vperm.slane %v87, 0
  %v91 = vmul.f32 %v23, %v89
  %v92 = vmul.f32 %v24, %v89
  %v93 = vmul.f32 %v25, %v89
  %v94 = vmul.f32 %v26, %v89
  %v95 = vmul.f32 %v27, %v89
  %v96 = vmul.f32 %v28, %v89
  %v97 = vmul.f32 %v29, %v89
  %v98 = vmul.f32 %v30, %v89
  %v99 = vmul.f32 %v31, %v89
  %v100 = vmul.f32 %v32, %v89
  %v101 = vmul.f32 %v33, %v89
  %v102 = vmul.f32 %v34, %v89
  %v103 = vmul.f32 %v35, %v89
  %v104 = vmul.f32 %v36, %v89
  %v105 = vmul.f32 %v37, %v89
  %v106 = vmul.f32 %v38, %v89
  %v107 = vmul.f32 %v39, %v89
  %v108 = vmul.f32 %v40, %v89
  %v109 = vmul.f32 %v41, %v89
  %v110 = vmul.f32 %v42, %v89
  %v111 = vmul.f32 %v43, %v89
  %v112 = vmul.f32 %v44, %v89
  %v113 = vmul.f32 %v45, %v89
  %v114 = vmul.f32 %v46, %v89
  %v115 = vmul.f32 %v47, %v89
  %v116 = vmul.f32 %v48, %v89
  %v117 = vmul.f32 %v49, %v89
  %v118 = vmul.f32 %v50, %v89
  %v119 = vmul.f32 %v51, %v89
  %v120 = vmul.f32 %v52, %v89
  %v121 = vmul.f32 %v53, %v89
  %v122 = vmul.f32 %v54, %v89
  %v123 = vmul.f32 %v55, %v89
  %v124 = vmul.f32 %v56, %v89
  %v125 = vmul.f32 %v57, %v89
  %v126 = vmul.f32 %v58, %v89
  %v127 = vmul.f32 %v59, %v89
  %v128 = vmul.f32 %v60, %v89
  %v129 = vmul.f32 %v61, %v89
  %v130 = vmul.f32 %v62, %v89
  %v131 = vmul.f32 %v63, %v89
  %v132 = vmul.f32 %v64, %v89
  %v133 = vmul.f32 %v65, %v89
  %v134 = vmul.f32 %v66, %v89
  %v135 = vmul.f32 %v67, %v89
  %v136 = vmul.f32 %v68, %v89
  %v137 = vmul.f32 %v69, %v89
  %v138 = vmul.f32 %v70, %v89
  %v139 = vmul.f32 %v71, %v89
  %v140 = vmul.f32 %v72, %v89
  %v141 = vmul.f32 %v73, %v89
  %v142 = vmul.f32 %v74, %v89
  %v143 = vmul.f32 %v75, %v89
  %v144 = vmul.f32 %v76, %v89
  %v145 = vmul.f32 %v77, %v89
  %v146 = vmul.f32 %v78, %v89
  %v147 = vmul.f32 %v79, %v89
  %v148 = vmul.f32 %v80, %v89
  %v149 = vmul.f32 %v81, %v89
  %v150 = vmul.f32 %v82, %v89
  %v151 = vmul.f32 %v83, %v89
  %v152 = vmul.f32 %v84, %v89
  %v153 = vmul.f32 %v85, %v89
  %v154 = vmul.f32 %v86, %v89
  %v155 = vld [vmem:[%s3] sm:$0x1]
  %v157 = vperm.slane %v155, 0
  %v159 = vadd.f32 %v91, %v157
  %v160 = vadd.f32 %v92, %v157
  %v161 = vadd.f32 %v93, %v157
  %v162 = vadd.f32 %v94, %v157
  %v163 = vadd.f32 %v95, %v157
  %v164 = vadd.f32 %v96, %v157
  %v165 = vadd.f32 %v97, %v157
  %v166 = vadd.f32 %v98, %v157
  %v167 = vadd.f32 %v99, %v157
  %v168 = vadd.f32 %v100, %v157
  %v169 = vadd.f32 %v101, %v157
  %v170 = vadd.f32 %v102, %v157
  %v171 = vadd.f32 %v103, %v157
  %v172 = vadd.f32 %v104, %v157
  %v173 = vadd.f32 %v105, %v157
  %v174 = vadd.f32 %v106, %v157
  %v175 = vadd.f32 %v107, %v157
  %v176 = vadd.f32 %v108, %v157
  %v177 = vadd.f32 %v109, %v157
  %v178 = vadd.f32 %v110, %v157
  %v179 = vadd.f32 %v111, %v157
  %v180 = vadd.f32 %v112, %v157
  %v181 = vadd.f32 %v113, %v157
  %v182 = vadd.f32 %v114, %v157
  %v183 = vadd.f32 %v115, %v157
  %v184 = vadd.f32 %v116, %v157
  %v185 = vadd.f32 %v117, %v157
  %v186 = vadd.f32 %v118, %v157
  %v187 = vadd.f32 %v119, %v157
  %v188 = vadd.f32 %v120, %v157
  %v189 = vadd.f32 %v121, %v157
  %v190 = vadd.f32 %v122, %v157
  %v191 = vadd.f32 %v123, %v157
  %v192 = vadd.f32 %v124, %v157
  %v193 = vadd.f32 %v125, %v157
  %v194 = vadd.f32 %v126, %v157
  %v195 = vadd.f32 %v127, %v157
  %v196 = vadd.f32 %v128, %v157
  %v197 = vadd.f32 %v129, %v157
  %v198 = vadd.f32 %v130, %v157
  %v199 = vadd.f32 %v131, %v157
  %v200 = vadd.f32 %v132, %v157
  %v201 = vadd.f32 %v133, %v157
  %v202 = vadd.f32 %v134, %v157
  %v203 = vadd.f32 %v135, %v157
  %v204 = vadd.f32 %v136, %v157
  %v205 = vadd.f32 %v137, %v157
  %v206 = vadd.f32 %v138, %v157
  %v207 = vadd.f32 %v139, %v157
  %v208 = vadd.f32 %v140, %v157
  %v209 = vadd.f32 %v141, %v157
  %v210 = vadd.f32 %v142, %v157
  %v211 = vadd.f32 %v143, %v157
  %v212 = vadd.f32 %v144, %v157
  %v213 = vadd.f32 %v145, %v157
  %v214 = vadd.f32 %v146, %v157
  %v215 = vadd.f32 %v147, %v157
  %v216 = vadd.f32 %v148, %v157
  %v217 = vadd.f32 %v149, %v157
  %v218 = vadd.f32 %v150, %v157
  %v219 = vadd.f32 %v151, %v157
  %v220 = vadd.f32 %v152, %v157
  %v221 = vadd.f32 %v153, %v157
  %v222 = vadd.f32 %v154, %v157
  %v223 = vmax.f32 %v159, 0.0
  %v224 = vmax.f32 %v160, 0.0
  %v225 = vmax.f32 %v161, 0.0
  %v226 = vmax.f32 %v162, 0.0
  %v227 = vmax.f32 %v163, 0.0
  %v228 = vmax.f32 %v164, 0.0
  %v229 = vmax.f32 %v165, 0.0
  %v230 = vmax.f32 %v166, 0.0
  %v231 = vmax.f32 %v167, 0.0
  %v232 = vmax.f32 %v168, 0.0
  %v233 = vmax.f32 %v169, 0.0
  %v234 = vmax.f32 %v170, 0.0
  %v235 = vmax.f32 %v171, 0.0
  %v236 = vmax.f32 %v172, 0.0
  %v237 = vmax.f32 %v173, 0.0
  %v238 = vmax.f32 %v174, 0.0
  %v239 = vmax.f32 %v175, 0.0
  %v240 = vmax.f32 %v176, 0.0
  %v241 = vmax.f32 %v177, 0.0
  %v242 = vmax.f32 %v178, 0.0
  %v243 = vmax.f32 %v179, 0.0
  %v244 = vmax.f32 %v180, 0.0
  %v245 = vmax.f32 %v181, 0.0
  %v246 = vmax.f32 %v182, 0.0
  %v247 = vmax.f32 %v183, 0.0
  %v248 = vmax.f32 %v184, 0.0
  %v249 = vmax.f32 %v185, 0.0
  %v250 = vmax.f32 %v186, 0.0
  %v251 = vmax.f32 %v187, 0.0
  %v252 = vmax.f32 %v188, 0.0
  %v253 = vmax.f32 %v189, 0.0
  %v254 = vmax.f32 %v190, 0.0
  %v255 = vmax.f32 %v191, 0.0
  %v256 = vmax.f32 %v192, 0.0
  %v257 = vmax.f32 %v193, 0.0
  %v258 = vmax.f32 %v194, 0.0
  %v259 = vmax.f32 %v195, 0.0
  %v260 = vmax.f32 %v196, 0.0
  %v261 = vmax.f32 %v197, 0.0
  %v262 = vmax.f32 %v198, 0.0
  %v263 = vmax.f32 %v199, 0.0
  %v264 = vmax.f32 %v200, 0.0
  %v265 = vmax.f32 %v201, 0.0
  %v266 = vmax.f32 %v202, 0.0
  %v267 = vmax.f32 %v203, 0.0
  %v268 = vmax.f32 %v204, 0.0
  %v269 = vmax.f32 %v205, 0.0
  %v270 = vmax.f32 %v206, 0.0
  %v271 = vmax.f32 %v207, 0.0
  %v272 = vmax.f32 %v208, 0.0
  %v273 = vmax.f32 %v209, 0.0
  %v274 = vmax.f32 %v210, 0.0
  %v275 = vmax.f32 %v211, 0.0
  %v276 = vmax.f32 %v212, 0.0
  %v277 = vmax.f32 %v213, 0.0
  %v278 = vmax.f32 %v214, 0.0
  %v279 = vmax.f32 %v215, 0.0
  %v280 = vmax.f32 %v216, 0.0
  %v281 = vmax.f32 %v217, 0.0
  %v282 = vmax.f32 %v218, 0.0
  %v283 = vmax.f32 %v219, 0.0
  %v284 = vmax.f32 %v220, 0.0
  %v285 = vmax.f32 %v221, 0.0
  %v286 = vmax.f32 %v222, 0.0
  %v287 = vld [vmem:[%s1] sm:$0xff]
  %v288 = vld [vmem:[%s1 + $0x8] sm:$0xff]
  %v289 = vld [vmem:[%s1 + $0x10] sm:$0xff]
  %v290 = vld [vmem:[%s1 + $0x18] sm:$0xff]
  %v291 = vld [vmem:[%s1 + $0x20] sm:$0xff]
  %v292 = vld [vmem:[%s1 + $0x28] sm:$0xff]
  %v293 = vld [vmem:[%s1 + $0x30] sm:$0xff]
  %v294 = vld [vmem:[%s1 + $0x38] sm:$0xff]
  %v295 = vld [vmem:[%s1 + $0x40] sm:$0xff]
  %v296 = vld [vmem:[%s1 + $0x48] sm:$0xff]
  %v297 = vld [vmem:[%s1 + $0x50] sm:$0xff]
  %v298 = vld [vmem:[%s1 + $0x58] sm:$0xff]
  %v299 = vld [vmem:[%s1 + $0x60] sm:$0xff]
  %v300 = vld [vmem:[%s1 + $0x68] sm:$0xff]
  %v301 = vld [vmem:[%s1 + $0x70] sm:$0xff]
  %v302 = vld [vmem:[%s1 + $0x78] sm:$0xff]
  %v303 = vld [vmem:[%s1 + $0x80] sm:$0xff]
  %v304 = vld [vmem:[%s1 + $0x88] sm:$0xff]
  %v305 = vld [vmem:[%s1 + $0x90] sm:$0xff]
  %v306 = vld [vmem:[%s1 + $0x98] sm:$0xff]
  %v307 = vld [vmem:[%s1 + $0xa0] sm:$0xff]
  %v308 = vld [vmem:[%s1 + $0xa8] sm:$0xff]
  %v309 = vld [vmem:[%s1 + $0xb0] sm:$0xff]
  %v310 = vld [vmem:[%s1 + $0xb8] sm:$0xff]
  %v311 = vld [vmem:[%s1 + $0xc0] sm:$0xff]
  %v312 = vld [vmem:[%s1 + $0xc8] sm:$0xff]
  %v313 = vld [vmem:[%s1 + $0xd0] sm:$0xff]
  %v314 = vld [vmem:[%s1 + $0xd8] sm:$0xff]
  %v315 = vld [vmem:[%s1 + $0xe0] sm:$0xff]
  %v316 = vld [vmem:[%s1 + $0xe8] sm:$0xff]
  %v317 = vld [vmem:[%s1 + $0xf0] sm:$0xff]
  %v318 = vld [vmem:[%s1 + $0xf8] sm:$0xff]
  %v319 = vld [vmem:[%s1 + $0x100] sm:$0xff]
  %v320 = vld [vmem:[%s1 + $0x108] sm:$0xff]
  %v321 = vld [vmem:[%s1 + $0x110] sm:$0xff]
  %v322 = vld [vmem:[%s1 + $0x118] sm:$0xff]
  %v323 = vld [vmem:[%s1 + $0x120] sm:$0xff]
  %v324 = vld [vmem:[%s1 + $0x128] sm:$0xff]
  %v325 = vld [vmem:[%s1 + $0x130] sm:$0xff]
  %v326 = vld [vmem:[%s1 + $0x138] sm:$0xff]
  %v327 = vld [vmem:[%s1 + $0x140] sm:$0xff]
  %v328 = vld [vmem:[%s1 + $0x148] sm:$0xff]
  %v329 = vld [vmem:[%s1 + $0x150] sm:$0xff]
  %v330 = vld [vmem:[%s1 + $0x158] sm:$0xff]
  %v331 = vld [vmem:[%s1 + $0x160] sm:$0xff]
  %v332 = vld [vmem:[%s1 + $0x168] sm:$0xff]
  %v333 = vld [vmem:[%s1 + $0x170] sm:$0xff]
  %v334 = vld [vmem:[%s1 + $0x178] sm:$0xff]
  %v335 = vld [vmem:[%s1 + $0x180] sm:$0xff]
  %v336 = vld [vmem:[%s1 + $0x188] sm:$0xff]
  %v337 = vld [vmem:[%s1 + $0x190] sm:$0xff]
  %v338 = vld [vmem:[%s1 + $0x198] sm:$0xff]
  %v339 = vld [vmem:[%s1 + $0x1a0] sm:$0xff]
  %v340 = vld [vmem:[%s1 + $0x1a8] sm:$0xff]
  %v341 = vld [vmem:[%s1 + $0x1b0] sm:$0xff]
  %v342 = vld [vmem:[%s1 + $0x1b8] sm:$0xff]
  %v343 = vld [vmem:[%s1 + $0x1c0] sm:$0xff]
  %v344 = vld [vmem:[%s1 + $0x1c8] sm:$0xff]
  %v345 = vld [vmem:[%s1 + $0x1d0] sm:$0xff]
  %v346 = vld [vmem:[%s1 + $0x1d8] sm:$0xff]
  %v347 = vld [vmem:[%s1 + $0x1e0] sm:$0xff]
  %v348 = vld [vmem:[%s1 + $0x1e8] sm:$0xff]
  %v349 = vld [vmem:[%s1 + $0x1f0] sm:$0xff]
  %v350 = vld [vmem:[%s1 + $0x1f8] sm:$0xff]
  %v351 = vld [vmem:[%s4] sm:$0x1]
  %v353 = vperm.slane %v351, 0
  %v355 = vmul.f32 %v287, %v353
  %v356 = vmul.f32 %v288, %v353
  %v357 = vmul.f32 %v289, %v353
  %v358 = vmul.f32 %v290, %v353
  %v359 = vmul.f32 %v291, %v353
  %v360 = vmul.f32 %v292, %v353
  %v361 = vmul.f32 %v293, %v353
  %v362 = vmul.f32 %v294, %v353
  %v363 = vmul.f32 %v295, %v353
  %v364 = vmul.f32 %v296, %v353
  %v365 = vmul.f32 %v297, %v353
  %v366 = vmul.f32 %v298, %v353
  %v367 = vmul.f32 %v299, %v353
  %v368 = vmul.f32 %v300, %v353
  %v369 = vmul.f32 %v301, %v353
  %v370 = vmul.f32 %v302, %v353
  %v371 = vmul.f32 %v303, %v353
  %v372 = vmul.f32 %v304, %v353
  %v373 = vmul.f32 %v305, %v353
  %v374 = vmul.f32 %v306, %v353
  %v375 = vmul.f32 %v307, %v353
  %v376 = vmul.f32 %v308, %v353
  %v377 = vmul.f32 %v309, %v353
  %v378 = vmul.f32 %v310, %v353
  %v379 = vmul.f32 %v311, %v353
  %v380 = vmul.f32 %v312, %v353
  %v381 = vmul.f32 %v313, %v353
  %v382 = vmul.f32 %v314, %v353
  %v383 = vmul.f32 %v315, %v353
  %v384 = vmul.f32 %v316, %v353
  %v385 = vmul.f32 %v317, %v353
  %v386 = vmul.f32 %v318, %v353
  %v387 = vmul.f32 %v319, %v353
  %v388 = vmul.f32 %v320, %v353
  %v389 = vmul.f32 %v321, %v353
  %v390 = vmul.f32 %v322, %v353
  %v391 = vmul.f32 %v323, %v353
  %v392 = vmul.f32 %v324, %v353
  %v393 = vmul.f32 %v325, %v353
  %v394 = vmul.f32 %v326, %v353
  %v395 = vmul.f32 %v327, %v353
  %v396 = vmul.f32 %v328, %v353
  %v397 = vmul.f32 %v329, %v353
  %v398 = vmul.f32 %v330, %v353
  %v399 = vmul.f32 %v331, %v353
  %v400 = vmul.f32 %v332, %v353
  %v401 = vmul.f32 %v333, %v353
  %v402 = vmul.f32 %v334, %v353
  %v403 = vmul.f32 %v335, %v353
  %v404 = vmul.f32 %v336, %v353
  %v405 = vmul.f32 %v337, %v353
  %v406 = vmul.f32 %v338, %v353
  %v407 = vmul.f32 %v339, %v353
  %v408 = vmul.f32 %v340, %v353
  %v409 = vmul.f32 %v341, %v353
  %v410 = vmul.f32 %v342, %v353
  %v411 = vmul.f32 %v343, %v353
  %v412 = vmul.f32 %v344, %v353
  %v413 = vmul.f32 %v345, %v353
  %v414 = vmul.f32 %v346, %v353
  %v415 = vmul.f32 %v347, %v353
  %v416 = vmul.f32 %v348, %v353
  %v417 = vmul.f32 %v349, %v353
  %v418 = vmul.f32 %v350, %v353
  %v419 = vld [vmem:[%s5] sm:$0x1]
  %v421 = vperm.slane %v419, 0
  %v423 = vadd.f32 %v355, %v421
  %v424 = vadd.f32 %v356, %v421
  %v425 = vadd.f32 %v357, %v421
  %v426 = vadd.f32 %v358, %v421
  %v427 = vadd.f32 %v359, %v421
  %v428 = vadd.f32 %v360, %v421
  %v429 = vadd.f32 %v361, %v421
  %v430 = vadd.f32 %v362, %v421
  %v431 = vadd.f32 %v363, %v421
  %v432 = vadd.f32 %v364, %v421
  %v433 = vadd.f32 %v365, %v421
  %v434 = vadd.f32 %v366, %v421
  %v435 = vadd.f32 %v367, %v421
  %v436 = vadd.f32 %v368, %v421
  %v437 = vadd.f32 %v369, %v421
  %v438 = vadd.f32 %v370, %v421
  %v439 = vadd.f32 %v371, %v421
  %v440 = vadd.f32 %v372, %v421
  %v441 = vadd.f32 %v373, %v421
  %v442 = vadd.f32 %v374, %v421
  %v443 = vadd.f32 %v375, %v421
  %v444 = vadd.f32 %v376, %v421
  %v445 = vadd.f32 %v377, %v421
  %v446 = vadd.f32 %v378, %v421
  %v447 = vadd.f32 %v379, %v421
  %v448 = vadd.f32 %v380, %v421
  %v449 = vadd.f32 %v381, %v421
  %v450 = vadd.f32 %v382, %v421
  %v451 = vadd.f32 %v383, %v421
  %v452 = vadd.f32 %v384, %v421
  %v453 = vadd.f32 %v385, %v421
  %v454 = vadd.f32 %v386, %v421
  %v455 = vadd.f32 %v387, %v421
  %v456 = vadd.f32 %v388, %v421
  %v457 = vadd.f32 %v389, %v421
  %v458 = vadd.f32 %v390, %v421
  %v459 = vadd.f32 %v391, %v421
  %v460 = vadd.f32 %v392, %v421
  %v461 = vadd.f32 %v393, %v421
  %v462 = vadd.f32 %v394, %v421
  %v463 = vadd.f32 %v395, %v421
  %v464 = vadd.f32 %v396, %v421
  %v465 = vadd.f32 %v397, %v421
  %v466 = vadd.f32 %v398, %v421
  %v467 = vadd.f32 %v399, %v421
  %v468 = vadd.f32 %v400, %v421
  %v469 = vadd.f32 %v401, %v421
  %v470 = vadd.f32 %v402, %v421
  %v471 = vadd.f32 %v403, %v421
  %v472 = vadd.f32 %v404, %v421
  %v473 = vadd.f32 %v405, %v421
  %v474 = vadd.f32 %v406, %v421
  %v475 = vadd.f32 %v407, %v421
  %v476 = vadd.f32 %v408, %v421
  %v477 = vadd.f32 %v409, %v421
  %v478 = vadd.f32 %v410, %v421
  %v479 = vadd.f32 %v411, %v421
  %v480 = vadd.f32 %v412, %v421
  %v481 = vadd.f32 %v413, %v421
  %v482 = vadd.f32 %v414, %v421
  %v483 = vadd.f32 %v415, %v421
  %v484 = vadd.f32 %v416, %v421
  %v485 = vadd.f32 %v417, %v421
  %v486 = vadd.f32 %v418, %v421
  %v487 = vmax.f32 %v423, 0.0
  %v488 = vmax.f32 %v424, 0.0
  %v489 = vmax.f32 %v425, 0.0
  %v490 = vmax.f32 %v426, 0.0
  %v491 = vmax.f32 %v427, 0.0
  %v492 = vmax.f32 %v428, 0.0
  %v493 = vmax.f32 %v429, 0.0
  %v494 = vmax.f32 %v430, 0.0
  %v495 = vmax.f32 %v431, 0.0
  %v496 = vmax.f32 %v432, 0.0
  %v497 = vmax.f32 %v433, 0.0
  %v498 = vmax.f32 %v434, 0.0
  %v499 = vmax.f32 %v435, 0.0
  %v500 = vmax.f32 %v436, 0.0
  %v501 = vmax.f32 %v437, 0.0
  %v502 = vmax.f32 %v438, 0.0
  %v503 = vmax.f32 %v439, 0.0
  %v504 = vmax.f32 %v440, 0.0
  %v505 = vmax.f32 %v441, 0.0
  %v506 = vmax.f32 %v442, 0.0
  %v507 = vmax.f32 %v443, 0.0
  %v508 = vmax.f32 %v444, 0.0
  %v509 = vmax.f32 %v445, 0.0
  %v510 = vmax.f32 %v446, 0.0
  %v511 = vmax.f32 %v447, 0.0
  %v512 = vmax.f32 %v448, 0.0
  %v513 = vmax.f32 %v449, 0.0
  %v514 = vmax.f32 %v450, 0.0
  %v515 = vmax.f32 %v451, 0.0
  %v516 = vmax.f32 %v452, 0.0
  %v517 = vmax.f32 %v453, 0.0
  %v518 = vmax.f32 %v454, 0.0
  %v519 = vmax.f32 %v455, 0.0
  %v520 = vmax.f32 %v456, 0.0
  %v521 = vmax.f32 %v457, 0.0
  %v522 = vmax.f32 %v458, 0.0
  %v523 = vmax.f32 %v459, 0.0
  %v524 = vmax.f32 %v460, 0.0
  %v525 = vmax.f32 %v461, 0.0
  %v526 = vmax.f32 %v462, 0.0
  %v527 = vmax.f32 %v463, 0.0
  %v528 = vmax.f32 %v464, 0.0
  %v529 = vmax.f32 %v465, 0.0
  %v530 = vmax.f32 %v466, 0.0
  %v531 = vmax.f32 %v467, 0.0
  %v532 = vmax.f32 %v468, 0.0
  %v533 = vmax.f32 %v469, 0.0
  %v534 = vmax.f32 %v470, 0.0
  %v535 = vmax.f32 %v471, 0.0
  %v536 = vmax.f32 %v472, 0.0
  %v537 = vmax.f32 %v473, 0.0
  %v538 = vmax.f32 %v474, 0.0
  %v539 = vmax.f32 %v475, 0.0
  %v540 = vmax.f32 %v476, 0.0
  %v541 = vmax.f32 %v477, 0.0
  %v542 = vmax.f32 %v478, 0.0
  %v543 = vmax.f32 %v479, 0.0
  %v544 = vmax.f32 %v480, 0.0
  %v545 = vmax.f32 %v481, 0.0
  %v546 = vmax.f32 %v482, 0.0
  %v547 = vmax.f32 %v483, 0.0
  %v548 = vmax.f32 %v484, 0.0
  %v549 = vmax.f32 %v485, 0.0
  %v550 = vmax.f32 %v486, 0.0
  %v551 = vadd.f32 %v223, %v487
  %v552 = vadd.f32 %v224, %v488
  %v553 = vadd.f32 %v225, %v489
  %v554 = vadd.f32 %v226, %v490
  %v555 = vadd.f32 %v227, %v491
  %v556 = vadd.f32 %v228, %v492
  %v557 = vadd.f32 %v229, %v493
  %v558 = vadd.f32 %v230, %v494
  %v559 = vadd.f32 %v231, %v495
  %v560 = vadd.f32 %v232, %v496
  %v561 = vadd.f32 %v233, %v497
  %v562 = vadd.f32 %v234, %v498
  %v563 = vadd.f32 %v235, %v499
  %v564 = vadd.f32 %v236, %v500
  %v565 = vadd.f32 %v237, %v501
  %v566 = vadd.f32 %v238, %v502
  %v567 = vadd.f32 %v239, %v503
  %v568 = vadd.f32 %v240, %v504
  %v569 = vadd.f32 %v241, %v505
  %v570 = vadd.f32 %v242, %v506
  %v571 = vadd.f32 %v243, %v507
  %v572 = vadd.f32 %v244, %v508
  %v573 = vadd.f32 %v245, %v509
  %v574 = vadd.f32 %v246, %v510
  %v575 = vadd.f32 %v247, %v511
  %v576 = vadd.f32 %v248, %v512
  %v577 = vadd.f32 %v249, %v513
  %v578 = vadd.f32 %v250, %v514
  %v579 = vadd.f32 %v251, %v515
  %v580 = vadd.f32 %v252, %v516
  %v581 = vadd.f32 %v253, %v517
  %v582 = vadd.f32 %v254, %v518
  %v583 = vadd.f32 %v255, %v519
  %v584 = vadd.f32 %v256, %v520
  %v585 = vadd.f32 %v257, %v521
  %v586 = vadd.f32 %v258, %v522
  %v587 = vadd.f32 %v259, %v523
  %v588 = vadd.f32 %v260, %v524
  %v589 = vadd.f32 %v261, %v525
  %v590 = vadd.f32 %v262, %v526
  %v591 = vadd.f32 %v263, %v527
  %v592 = vadd.f32 %v264, %v528
  %v593 = vadd.f32 %v265, %v529
  %v594 = vadd.f32 %v266, %v530
  %v595 = vadd.f32 %v267, %v531
  %v596 = vadd.f32 %v268, %v532
  %v597 = vadd.f32 %v269, %v533
  %v598 = vadd.f32 %v270, %v534
  %v599 = vadd.f32 %v271, %v535
  %v600 = vadd.f32 %v272, %v536
  %v601 = vadd.f32 %v273, %v537
  %v602 = vadd.f32 %v274, %v538
  %v603 = vadd.f32 %v275, %v539
  %v604 = vadd.f32 %v276, %v540
  %v605 = vadd.f32 %v277, %v541
  %v606 = vadd.f32 %v278, %v542
  %v607 = vadd.f32 %v279, %v543
  %v608 = vadd.f32 %v280, %v544
  %v609 = vadd.f32 %v281, %v545
  %v610 = vadd.f32 %v282, %v546
  %v611 = vadd.f32 %v283, %v547
  %v612 = vadd.f32 %v284, %v548
  %v613 = vadd.f32 %v285, %v549
  %v614 = vadd.f32 %v286, %v550
  %615 = vst [vmem:[%s6] sm:$0xff] %v551
  %616 = vst [vmem:[%s6 + $0x8] sm:$0xff] %v552
  %617 = vst [vmem:[%s6 + $0x10] sm:$0xff] %v553
  %618 = vst [vmem:[%s6 + $0x18] sm:$0xff] %v554
  %619 = vst [vmem:[%s6 + $0x20] sm:$0xff] %v555
  %620 = vst [vmem:[%s6 + $0x28] sm:$0xff] %v556
  %621 = vst [vmem:[%s6 + $0x30] sm:$0xff] %v557
  %622 = vst [vmem:[%s6 + $0x38] sm:$0xff] %v558
  %623 = vst [vmem:[%s6 + $0x40] sm:$0xff] %v559
  %624 = vst [vmem:[%s6 + $0x48] sm:$0xff] %v560
  %625 = vst [vmem:[%s6 + $0x50] sm:$0xff] %v561
  %626 = vst [vmem:[%s6 + $0x58] sm:$0xff] %v562
  %627 = vst [vmem:[%s6 + $0x60] sm:$0xff] %v563
  %628 = vst [vmem:[%s6 + $0x68] sm:$0xff] %v564
  %629 = vst [vmem:[%s6 + $0x70] sm:$0xff] %v565
  %630 = vst [vmem:[%s6 + $0x78] sm:$0xff] %v566
  %631 = vst [vmem:[%s6 + $0x80] sm:$0xff] %v567
  %632 = vst [vmem:[%s6 + $0x88] sm:$0xff] %v568
  %633 = vst [vmem:[%s6 + $0x90] sm:$0xff] %v569
  %634 = vst [vmem:[%s6 + $0x98] sm:$0xff] %v570
  %635 = vst [vmem:[%s6 + $0xa0] sm:$0xff] %v571
  %636 = vst [vmem:[%s6 + $0xa8] sm:$0xff] %v572
  %637 = vst [vmem:[%s6 + $0xb0] sm:$0xff] %v573
  %638 = vst [vmem:[%s6 + $0xb8] sm:$0xff] %v574
  %639 = vst [vmem:[%s6 + $0xc0] sm:$0xff] %v575
  %640 = vst [vmem:[%s6 + $0xc8] sm:$0xff] %v576
  %641 = vst [vmem:[%s6 + $0xd0] sm:$0xff] %v577
  %642 = vst [vmem:[%s6 + $0xd8] sm:$0xff] %v578
  %643 = vst [vmem:[%s6 + $0xe0] sm:$0xff] %v579
  %644 = vst [vmem:[%s6 + $0xe8] sm:$0xff] %v580
  %645 = vst [vmem:[%s6 + $0xf0] sm:$0xff] %v581
  %646 = vst [vmem:[%s6 + $0xf8] sm:$0xff] %v582
  %647 = vst [vmem:[%s6 + $0x100] sm:$0xff] %v583
  %648 = vst [vmem:[%s6 + $0x108] sm:$0xff] %v584
  %649 = vst [vmem:[%s6 + $0x110] sm:$0xff] %v585
  %650 = vst [vmem:[%s6 + $0x118] sm:$0xff] %v586
  %651 = vst [vmem:[%s6 + $0x120] sm:$0xff] %v587
  %652 = vst [vmem:[%s6 + $0x128] sm:$0xff] %v588
  %653 = vst [vmem:[%s6 + $0x130] sm:$0xff] %v589
  %654 = vst [vmem:[%s6 + $0x138] sm:$0xff] %v590
  %655 = vst [vmem:[%s6 + $0x140] sm:$0xff] %v591
  %656 = vst [vmem:[%s6 + $0x148] sm:$0xff] %v592
  %657 = vst [vmem:[%s6 + $0x150] sm:$0xff] %v593
  %658 = vst [vmem:[%s6 + $0x158] sm:$0xff] %v594
  %659 = vst [vmem:[%s6 + $0x160] sm:$0xff] %v595
  %660 = vst [vmem:[%s6 + $0x168] sm:$0xff] %v596
  %661 = vst [vmem:[%s6 + $0x170] sm:$0xff] %v597
  %662 = vst [vmem:[%s6 + $0x178] sm:$0xff] %v598
  %663 = vst [vmem:[%s6 + $0x180] sm:$0xff] %v599
  %664 = vst [vmem:[%s6 + $0x188] sm:$0xff] %v600
  %665 = vst [vmem:[%s6 + $0x190] sm:$0xff] %v601
  %666 = vst [vmem:[%s6 + $0x198] sm:$0xff] %v602
  %667 = vst [vmem:[%s6 + $0x1a0] sm:$0xff] %v603
  %668 = vst [vmem:[%s6 + $0x1a8] sm:$0xff] %v604
  %669 = vst [vmem:[%s6 + $0x1b0] sm:$0xff] %v605
  %670 = vst [vmem:[%s6 + $0x1b8] sm:$0xff] %v606
  %671 = vst [vmem:[%s6 + $0x1c0] sm:$0xff] %v607
  %672 = vst [vmem:[%s6 + $0x1c8] sm:$0xff] %v608
  %673 = vst [vmem:[%s6 + $0x1d0] sm:$0xff] %v609
  %674 = vst [vmem:[%s6 + $0x1d8] sm:$0xff] %v610
  %675 = vst [vmem:[%s6 + $0x1e0] sm:$0xff] %v611
  %676 = vst [vmem:[%s6 + $0x1e8] sm:$0xff] %v612
  %677 = vst [vmem:[%s6 + $0x1f0] sm:$0xff] %v613
  %678 = vst [vmem:[%s6 + $0x1f8] sm:$0xff] %v614
  // Predicated region
  $region26: #{double_conv.5} parent=0 // pred_check
    _
  $region27: #{double_conv.5} parent=0 // pred_check_branch
    %680 = sbr.rel (0) target = $region29
  $region28: #{double_conv.5} parent=0 // pred_region
    _
  $region29: #{double_conv.5} parent=0 // pred_fallthru
    _
  // Predicated region
  $region30: #{double_conv.5} parent=0 // pred_check
    _
  $region31: #{double_conv.5} parent=0 // pred_check_branch
    %682 = sbr.rel (0) target = $region33
  $region32: #{double_conv.5} parent=0 // pred_region
    _
  $region33: #{double_conv.5} parent=0 // pred_fallthru
    _

// kernel: double_conv.3
$region0: #{double_conv.3}
  #allocation0 [shape = 'u32[]', space=smem, size = 0x4, offset = 0x4, fixed_abs, tag = 'smem constant byte address 0x4 - core index']
  #allocation1 [shape = 'u32[72,128]{1,0:T(1,128)}', space=vmem, size = 0x9000, scoped, tag = 'internal scratch']
  #allocation2 [shape = 'f32[2,18,18,128]{3,2,1,0:T(8,128)}', space=vmem, size = 0x6c000, scoped, tag = 'scratch operand']
  #allocation3 [shape = 's32[6]{0}', space=sflag, size = 0x18, scoped, tag = 'scratch operand']
  #allocation4 [shape = 's32[]', space=sflag, size = 0x4, offset = 0, fixed_abs, tag = 'sflag constant byte address 0x0 - dummy sync flag']
  #allocation5 [shape = 's32[]', space=sflag, size = 0x4, offset = 0, fixed_abs, tag = 'sflag constant byte address 0x0 - dummy sync flag']
  #allocation6 [shape = 's32[]', space=sflag, size = 0x4, offset = 0, fixed_abs, tag = 'sflag constant byte address 0x0 - dummy sync flag']
  #allocation7 [shape = 's32[]', space=sflag, size = 0x4, offset = 0, fixed_abs, tag = 'sflag constant byte address 0x0 - dummy sync flag']
  #allocation8 [shape = 's32[]', space=sflag, size = 0x4, offset = 0, fixed_abs, tag = 'sflag constant byte address 0x0 - dummy sync flag']
  #allocation9 [shape = 's32[]', space=sflag, size = 0x4, offset = 0, fixed_abs, tag = 'sflag constant byte address 0x0 - dummy sync flag']
  %s0 = inlined_call_operand.vmem [shape: f32[2,16,16,128], index: 0, kind: input, shape index: {}]
  %s1 = inlined_call_operand.vmem [shape: bf16[9,128,128], index: 1, kind: input, shape index: {}]
  %s2 = inlined_call_operand.vmem [shape: f32[1,128], index: 2, kind: input, shape index: {}]
  %s3 = inlined_call_operand.vmem [shape: f32[1,128], index: 3, kind: input, shape index: {}]
  %s4 = inlined_call_operand.vmem [shape: f32[2,16,16,128], index: 4, kind: output, shape index: {0}]
  %s5 = inlined_call_operand.vmem [shape: f32[2,1,2,128], index: 5, kind: output, shape index: {1}]
  %6 = xla_tuple %s4, %s5
  %s7 = sld [smem:[#allocation0]]
  $region199: #{double_conv.3} parent=0
    _
  %s9 = ssub.s32 1, %s7
  %s10 = scalar_select 0, %s9, %s7
  loop: start=0, step=1, limit=4
  $region2: #{double_conv.3} parent=0 // loop_pre_header
    _
  $region3: #{double_conv.3} parent=0 // loop_header
    %s12 = sphi 0, %s16
    %p13 = scmp.ge.s32.totalorder %s12, 4
    %s19 = sphi 0, %s31
    %s20 = sphi 0, %s27
    %s21 = sphi 0, %s19
    %s22 = sphi 0, %s20
    %s23 = sphi 0, %s21
    %s24 = sphi 0, %s22
    %s32 = sphi 0, %s32
    %s34 = sphi 0, %s32
    %s35 = sphi 0, %s34
    %s49 = sphi 0, %s35
    %s53 = sphi 0, %s53
    %s55 = sphi 0, %s53
    %s56 = sphi 0, %s55
    %s70 = sphi 0, %s56
    %s74 = sphi 0, %s74
    %s76 = sphi 0, %s74
    %s77 = sphi 0, %s76
    %s91 = sphi 0, %s77
    %s99 = sphi 0, %s101
    %s102 = sphi 0, %s99
    %s103 = sphi 0, %s102
    %s119 = sphi 0, %s103
    %s127 = sphi 0, %s129
    %s130 = sphi 0, %s127
    %s131 = sphi 0, %s130
    %s147 = sphi 0, %s131
  $region4: #{double_conv.3} parent=0 // loop_header_branch
    %15 = sbr.rel (%p13) target = $region8
  $region5: #{double_conv.3} parent=0 // loop_body
    %s17 = ssub.s32 %s12, 1
    %s18 = ssub.s32 %s12, 2
    %s25 = sadd.s32 1, %s20
    %p26 = scmp.ge.s32.totalorder %s25, 1
    %s27 = scalar_select %p26, 0, %s25
    %s28 = sadd.s32 1, %s19
    %s29 = scalar_select %p26, %s28, %s19
    %p30 = scmp.ge.s32.totalorder %s29, 2
    %s31 = scalar_select %p30, 0, %s29
    %s33 = sadd.s32 %s32, 1
    %p36 = scmp.eq.s32.totalorder %s12, 1
    %p37 = scmp.ne.s32.totalorder %s32, %s34
    %p38 = scmp.eq.s32.totalorder %s12, 0
    %p39 = por %p37, %p38
    %p40 = scmp.ne.s32.totalorder %s32, %s34
    %p41 = scmp.eq.s32.totalorder %s17, 1
    %p42 = por %p40, %p41
    %p43 = scmp.ne.s32.totalorder %s34, %s35
    %p44 = scmp.eq.s32.totalorder %s17, 0
    %p45 = por %p43, %p44
    %p46 = scmp.ne.s32.totalorder %s34, %s35
    %p47 = scmp.eq.s32.totalorder %s18, 1
    %p48 = por %p46, %p47
    %p50 = scmp.ne.s32.totalorder %s35, %s49
    %p51 = scmp.eq.s32.totalorder %s18, 0
    %p52 = por %p50, %p51
    %s54 = sadd.s32 %s53, 1
    %p57 = scmp.eq.s32.totalorder %s12, 1
    %p58 = scmp.ne.s32.totalorder %s53, %s55
    %p59 = scmp.eq.s32.totalorder %s12, 0
    %p60 = por %p58, %p59
    %p61 = scmp.ne.s32.totalorder %s53, %s55
    %p62 = scmp.eq.s32.totalorder %s17, 1
    %p63 = por %p61, %p62
    %p64 = scmp.ne.s32.totalorder %s55, %s56
    %p65 = scmp.eq.s32.totalorder %s17, 0
    %p66 = por %p64, %p65
    %p67 = scmp.ne.s32.totalorder %s55, %s56
    %p68 = scmp.eq.s32.totalorder %s18, 1
    %p69 = por %p67, %p68
    %p71 = scmp.ne.s32.totalorder %s56, %s70
    %p72 = scmp.eq.s32.totalorder %s18, 0
    %p73 = por %p71, %p72
    %s75 = sadd.s32 %s74, 1
    %p78 = scmp.eq.s32.totalorder %s12, 1
    %p79 = scmp.ne.s32.totalorder %s74, %s76
    %p80 = scmp.eq.s32.totalorder %s12, 0
    %p81 = por %p79, %p80
    %p82 = scmp.ne.s32.totalorder %s74, %s76
    %p83 = scmp.eq.s32.totalorder %s17, 1
    %p84 = por %p82, %p83
    %p85 = scmp.ne.s32.totalorder %s76, %s77
    %p86 = scmp.eq.s32.totalorder %s17, 0
    %p87 = por %p85, %p86
    %p88 = scmp.ne.s32.totalorder %s76, %s77
    %p89 = scmp.eq.s32.totalorder %s18, 1
    %p90 = por %p88, %p89
    %p92 = scmp.ne.s32.totalorder %s77, %s91
    %p93 = scmp.eq.s32.totalorder %s18, 0
    %p94 = por %p92, %p93
    %s95 = ssub.s32 %s19, %s31
    %s96 = ssub.s32 %s20, %s27
    %s97 = sor.u32 %s95, %s96
    %p98 = scmp.eq.s32.totalorder %s97, 0
    %s100 = sadd.s32 %s99, 1
    %s101 = scalar_select %p98, %s99, %s100
    %p104 = pneg %p98
    %p105 = scmp.eq.s32.totalorder %s12, 1
    %p106 = por %p104, %p105
    %p107 = scmp.ne.s32.totalorder %s99, %s102
    %p108 = scmp.eq.s32.totalorder %s12, 0
    %p109 = por %p107, %p108
    %p110 = scmp.ne.s32.totalorder %s99, %s102
    %p111 = scmp.eq.s32.totalorder %s17, 1
    %p112 = por %p110, %p111
    %p113 = scmp.ne.s32.totalorder %s102, %s103
    %p114 = scmp.eq.s32.totalorder %s17, 0
    %p115 = por %p113, %p114
    %p116 = scmp.ne.s32.totalorder %s102, %s103
    %p117 = scmp.eq.s32.totalorder %s18, 1
    %p118 = por %p116, %p117
    %p120 = scmp.ne.s32.totalorder %s103, %s119
    %p121 = scmp.eq.s32.totalorder %s18, 0
    %p122 = por %p120, %p121
    %s123 = ssub.s32 %s19, %s31
    %s124 = ssub.s32 %s20, %s27
    %s125 = sor.u32 %s123, %s124
    %p126 = scmp.eq.s32.totalorder %s125, 0
    %s128 = sadd.s32 %s127, 1
    %s129 = scalar_select %p126, %s127, %s128
    %p132 = pneg %p126
    %p133 = scmp.eq.s32.totalorder %s12, 1
    %p134 = por %p132, %p133
    %p135 = scmp.ne.s32.totalorder %s127, %s130
    %p136 = scmp.eq.s32.totalorder %s12, 0
    %p137 = por %p135, %p136
    %p138 = scmp.ne.s32.totalorder %s127, %s130
    %p139 = scmp.eq.s32.totalorder %s17, 1
    %p140 = por %p138, %p139
    %p141 = scmp.ne.s32.totalorder %s130, %s131
    %p142 = scmp.eq.s32.totalorder %s17, 0
    %p143 = por %p141, %p142
    %p144 = scmp.ne.s32.totalorder %s130, %s131
    %p145 = scmp.eq.s32.totalorder %s18, 1
    %p146 = por %p144, %p145
    %p148 = scmp.ne.s32.totalorder %s131, %s147
    %p149 = scmp.eq.s32.totalorder %s18, 0
    %p150 = por %p148, %p149
    %p151 = scmp.le.s32.totalorder 1, %s12
    %p152 = scmp.lt.s32.totalorder %s12, 3
    %p153 = pnand %p151, %p152
    %p154 = pneg %p153
    // Predicated region
    $region9: #{double_conv.3} parent=5 // pred_check
      _
    $region10: #{double_conv.3} parent=5 // pred_check_branch
      %156 = sbr.rel (%p153) target = $region12
    $region11: #{double_conv.3} parent=5 // pred_region
      %s157 = ssub.s32 %s12, 1
      // Predicated region
      $region13: #{double_conv.3} parent=11 // pred_check
        %p158 = pneg %p45
      $region14: #{double_conv.3} parent=11 // pred_check_branch
        %160 = sbr.rel (%p158) target = $region16
      $region15: #{double_conv.3} parent=11 // pred_region
        _
      $region16: #{double_conv.3} parent=11 // pred_fallthru
        _
      // Predicated region
      $region17: #{double_conv.3} parent=11 // pred_check
        %p161 = pneg %p66
      $region18: #{double_conv.3} parent=11 // pred_check_branch
        %163 = sbr.rel (%p161) target = $region20
      $region19: #{double_conv.3} parent=11 // pred_region
        _
      $region20: #{double_conv.3} parent=11 // pred_fallthru
        _
      // Predicated region
      $region21: #{double_conv.3} parent=11 // pred_check
        %p164 = pneg %p87
      $region22: #{double_conv.3} parent=11 // pred_check_branch
        %166 = sbr.rel (%p164) target = $region24
      $region23: #{double_conv.3} parent=11 // pred_region
        _
      $region24: #{double_conv.3} parent=11 // pred_fallthru
        _
    $region12: #{double_conv.3} parent=5 // pred_fallthru
      _
    %p167 = scmp.lt.s32.totalorder %s12, 2
    // Predicated region
    $region25: #{double_conv.3} parent=5 // pred_check
      %p168 = pneg %p167
    $region26: #{double_conv.3} parent=5 // pred_check_branch
      %170 = sbr.rel (%p168) target = $region28
    $region27: #{double_conv.3} parent=5 // pred_region
      _
    $region28: #{double_conv.3} parent=5 // pred_fallthru
      _
    %p171 = scmp.le.s32.totalorder 1, %s12
    %p172 = scmp.lt.s32.totalorder %s12, 3
    %p173 = pnand %p171, %p172
    %p174 = pneg %p173
    // Predicated region
    $region29: #{double_conv.3} parent=5 // pred_check
      _
    $region30: #{double_conv.3} parent=5 // pred_check_branch
      %176 = sbr.rel (%p173) target = $region32
    $region31: #{double_conv.3} parent=5 // pred_region
      %s177 = ssub.s32 %s12, 1
      %p178 = pneg %p45
      %p179 = pneg %p42
      %p180 = pneg %p66
      %p181 = pneg %p63
      %p182 = pneg %p87
      %p183 = pneg %p84
      %p184 = pneg %p115
      %p185 = pneg %p112
      %s186 = smul.u32 16, %s22
      %p187 = scmp.lt.s32.totalorder %s21, 1
      %s188 = scalar_select %p187, %s21, 1
      %p189 = scmp.lt.s32.totalorder %s186, 15
      %s190 = scalar_select %p189, %s186, 15
      %s191 = smul.addr %s190, 2
      %s192 = smul.addr %s188, 32
      %s193 = sadd.s32 %s191, %s192
      %s194 = smul.addr %s193, 8
      %s195 = scalar_lea.vmem %s4, %s194
      %p196 = pneg %p143
      %p197 = pneg %p140
      %p198 = scmp.lt.s32.totalorder %s21, 1
      %s199 = scalar_select %p198, %s21, 1
      %p200 = scmp.lt.s32.totalorder %s22, 0
      %s201 = scalar_select %p200, %s22, 0
      %s202 = sadd.s32 %s201, %s199
      %s203 = smul.addr %s202, 2
      %s204 = scalar_lea.vmem %s5, %s203
      %s205 = smul.u32 16, %s22
      %p206 = scmp.lt.s32.totalorder %s21, 1
      %s207 = scalar_select %p206, %s21, 1
      %p208 = scmp.lt.s32.totalorder %s205, 15
      %s209 = scalar_select %p208, %s205, 15
      %s210 = smul.addr %s209, 2
      %s211 = smul.addr %s207, 32
      %s212 = sadd.s32 %s210, %s211
      %s213 = smul.addr %s212, 8
      %s214 = scalar_lea.vmem %s4, %s213
      %s215 = smul.u32 16, %s22
      %p216 = scmp.lt.s32.totalorder %s21, 1
      %s217 = scalar_select %p216, %s21, 1
      %p218 = scmp.lt.s32.totalorder %s22, 0
      %s219 = scalar_select %p218, %s22, 0
      %s220 = sadd.s32 %s219, %s217
      %s221 = smul.addr %s220, 2
      %s222 = scalar_lea.vmem %s5, %s221
      %p223 = scmp.lt.s32.totalorder %s22, 0
      %s224 = ssub.s32 0, %s22
      %s225 = scalar_select %p223, %s224, %s22
      %s226 = sand.u32 %s225, 1
      %s227 = ssub.s32 0, %s226
      %s228 = scalar_select %p223, %s227, %s226
      %p229 = scmp.ne.s32.totalorder %s228, 0
      %p230 = scmp.lt.s32.totalorder %s228, 0
      %p231 = pnand %p230, %p229
      %p232 = pneg %p231
      %s233 = sadd.s32 %s228, 2
      %s234 = scalar_select %p232, %s233, %s228
      %p235 = scmp.eq.s32.totalorder %s22, 0
      // Predicated region
      $region33: #{double_conv.3} parent=31 // pred_check
        %p236 = pneg %p235
      $region34: #{double_conv.3} parent=31 // pred_check_branch
        %238 = sbr.rel (%p236) target = $region36
      $region35: #{double_conv.3} parent=31 // pred_region
        %s239 = smul.u32 %s22, 16
        %s240 = smul.u32 %s239, 16
        %s241 = smul.u32 %s21, 256
        %s242 = sadd.s32 %s240, %s241
        %s243 = scalar_lea.vmem %s0, %s242
        %s244 = smul.u32 %s234, 432
        %s245 = sadd.s32 25, %s244
        %s246 = scalar_lea.vmem [#allocation2], %s245
        %s247 = smul.u32 %s234, 3
        %s248 = scalar_lea.sflag [#allocation3], %s247
        // Predicated region
        $region37: #{double_conv.3} parent=35 // pred_check
          _
        $region38: #{double_conv.3} parent=35 // pred_check_branch
          %250 = sbr.rel (0) target = $region40
        $region39: #{double_conv.3} parent=35 // pred_region
          loop: start=0, step=1, limit=1
          $region41: #{double_conv.3} parent=39 // loop_pre_header
            _
          $region42: #{double_conv.3} parent=39 // loop_header
            %s252 = sphi 0, %s256
            %p253 = scmp.ge.s32.totalorder %s252, 1
            %s257 = sphi %s243, %s243
            %s258 = sphi %s246, %s246
          $region43: #{double_conv.3} parent=39 // loop_header_branch
            %255 = sbr.rel (%p253) target = $region47
          $region44: #{double_conv.3} parent=39 // loop_body
            %v259 = vld [vmem:[%s257] sm:$0xff]
            %260 = vst [vmem:[%s258] sm:$0xff] %v259
            %v261 = vld [vmem:[%s257 + $0x8] sm:$0xff]
            %262 = vst [vmem:[%s258 + $0x8] sm:$0xff] %v261
            %v263 = vld [vmem:[%s257 + $0x10] sm:$0xff]
            %264 = vst [vmem:[%s258 + $0x18] sm:$0xff] %v263
            %v265 = vld [vmem:[%s257 + $0x18] sm:$0xff]
            %266 = vst [vmem:[%s258 + $0x20] sm:$0xff] %v265
            %v267 = vld [vmem:[%s257 + $0x20] sm:$0xff]
            %268 = vst [vmem:[%s258 + $0x30] sm:$0xff] %v267
            %v269 = vld [vmem:[%s257 + $0x28] sm:$0xff]
            %270 = vst [vmem:[%s258 + $0x38] sm:$0xff] %v269
            %v271 = vld [vmem:[%s257 + $0x30] sm:$0xff]
            %272 = vst [vmem:[%s258 + $0x48] sm:$0xff] %v271
            %v273 = vld [vmem:[%s257 + $0x38] sm:$0xff]
            %274 = vst [vmem:[%s258 + $0x50] sm:$0xff] %v273
            %v275 = vld [vmem:[%s257 + $0x40] sm:$0xff]
            %276 = vst [vmem:[%s258 + $0x60] sm:$0xff] %v275
            %v277 = vld [vmem:[%s257 + $0x48] sm:$0xff]
            %278 = vst [vmem:[%s258 + $0x68] sm:$0xff] %v277
            %v279 = vld [vmem:[%s257 + $0x50] sm:$0xff]
            %280 = vst [vmem:[%s258 + $0x78] sm:$0xff] %v279
            %v281 = vld [vmem:[%s257 + $0x58] sm:$0xff]
            %282 = vst [vmem:[%s258 + $0x80] sm:$0xff] %v281
            %v283 = vld [vmem:[%s257 + $0x60] sm:$0xff]
            %284 = vst [vmem:[%s258 + $0x90] sm:$0xff] %v283
            %v285 = vld [vmem:[%s257 + $0x68] sm:$0xff]
            %286 = vst [vmem:[%s258 + $0x98] sm:$0xff] %v285
            %v287 = vld [vmem:[%s257 + $0x70] sm:$0xff]
            %288 = vst [vmem:[%s258 + $0xa8] sm:$0xff] %v287
            %v289 = vld [vmem:[%s257 + $0x78] sm:$0xff]
            %290 = vst [vmem:[%s258 + $0xb0] sm:$0xff] %v289
            %v291 = vld [vmem:[%s257 + $0x80] sm:$0xff]
            %292 = vst [vmem:[%s258 + $0xc0] sm:$0xff] %v291
            %v293 = vld [vmem:[%s257 + $0x88] sm:$0xff]
            %294 = vst [vmem:[%s258 + $0xc8] sm:$0xff] %v293
            %v295 = vld [vmem:[%s257 + $0x90] sm:$0xff]
            %296 = vst [vmem:[%s258 + $0xd8] sm:$0xff] %v295
            %v297 = vld [vmem:[%s257 + $0x98] sm:$0xff]
            %298 = vst [vmem:[%s258 + $0xe0] sm:$0xff] %v297
            %v299 = vld [vmem:[%s257 + $0xa0] sm:$0xff]
            %300 = vst [vmem:[%s258 + $0xf0] sm:$0xff] %v299
            %v301 = vld [vmem:[%s257 + $0xa8] sm:$0xff]
            %302 = vst [vmem:[%s258 + $0xf8] sm:$0xff] %v301
            %v303 = vld [vmem:[%s257 + $0xb0] sm:$0xff]
            %304 = vst [vmem:[%s258 + $0x108] sm:$0xff] %v303
            %v305 = vld [vmem:[%s257 + $0xb8] sm:$0xff]
            %306 = vst [vmem:[%s258 + $0x110] sm:$0xff] %v305
            %v307 = vld [vmem:[%s257 + $0xc0] sm:$0xff]
            %308 = vst [vmem:[%s258 + $0x120] sm:$0xff] %v307
            %v309 = vld [vmem:[%s257 + $0xc8] sm:$0xff]
            %310 = vst [vmem:[%s258 + $0x128] sm:$0xff] %v309
            %v311 = vld [vmem:[%s257 + $0xd0] sm:$0xff]
            %312 = vst [vmem:[%s258 + $0x138] sm:$0xff] %v311
            %v313 = vld [vmem:[%s257 + $0xd8] sm:$0xff]
            %314 = vst [vmem:[%s258 + $0x140] sm:$0xff] %v313
            %v315 = vld [vmem:[%s257 + $0xe0] sm:$0xff]
            %316 = vst [vmem:[%s258 + $0x150] sm:$0xff] %v315
            %v317 = vld [vmem:[%s257 + $0xe8] sm:$0xff]
            %318 = vst [vmem:[%s258 + $0x158] sm:$0xff] %v317
            %v319 = vld [vmem:[%s257 + $0xf0] sm:$0xff]
            %320 = vst [vmem:[%s258 + $0x168] sm:$0xff] %v319
            %v321 = vld [vmem:[%s257 + $0xf8] sm:$0xff]
            %322 = vst [vmem:[%s258 + $0x170] sm:$0xff] %v321
          $region45: #{double_conv.3} parent=39 // loop_footer
            %s256 = sadd.s32 1, %s252
          $region46: #{double_conv.3} parent=39 // loop_footer_branch
            %251 = sbr.rel target = $region42
          $region47: #{double_conv.3} parent=39 // loop_exit
            _
        $region40: #{double_conv.3} parent=35 // pred_fallthru
          _
        // Predicated region
        $region48: #{double_conv.3} parent=35 // pred_check
          _
        $region49: #{double_conv.3} parent=35 // pred_check_branch
          %324 = sbr.rel target = $region51
        $region50: #{double_conv.3} parent=35 // pred_region
          _
        $region51: #{double_conv.3} parent=35 // pred_fallthru
          _
        // Predicated region
        $region52: #{double_conv.3} parent=35 // pred_check
          _
        $region53: #{double_conv.3} parent=35 // pred_check_branch
          %327 = sbr.rel (0) target = $region55
        $region54: #{double_conv.3} parent=35 // pred_region
          %328 = vsyncadd %s248, 4096
        $region55: #{double_conv.3} parent=35 // pred_fallthru
          _
        %p329 = scmp.gt.s32.totalorder %s22, 0
        // Predicated region
        $region56: #{double_conv.3} parent=35 // pred_check
          %p330 = pneg %p329
        $region57: #{double_conv.3} parent=35 // pred_check_branch
          %332 = sbr.rel (%p330) target = $region59
        $region58: #{double_conv.3} parent=35 // pred_region
          %s333 = ssub.s32 %s239, 1
          %s334 = smul.u32 %s333, 16
          %s335 = sadd.s32 %s334, %s241
          %s336 = scalar_lea.vmem %s0, %s335
          %s337 = sadd.s32 1, %s244
          %s338 = scalar_lea.vmem [#allocation2], %s337
          %s339 = sadd.s32 1, %s247
          %s340 = scalar_lea.sflag [#allocation3], %s339
          // Predicated region
          $region60: #{double_conv.3} parent=58 // pred_check
            _
          $region61: #{double_conv.3} parent=58 // pred_check_branch
            %342 = sbr.rel (0) target = $region63
          $region62: #{double_conv.3} parent=58 // pred_region
            loop: start=0, step=1, limit=1
            $region64: #{double_conv.3} parent=62 // loop_pre_header
              _
            $region65: #{double_conv.3} parent=62 // loop_header
              %s344 = sphi 0, %s348
              %p345 = scmp.ge.s32.totalorder %s344, 1
              %s349 = sphi %s336, %s336
              %s350 = sphi %s338, %s338
            $region66: #{double_conv.3} parent=62 // loop_header_branch
              %347 = sbr.rel (%p345) target = $region70
            $region67: #{double_conv.3} parent=62 // loop_body
              %v351 = vld [vmem:[%s349] sm:$0xff]
              %352 = vst [vmem:[%s350] sm:$0xff] %v351
              %v353 = vld [vmem:[%s349 + $0x8] sm:$0xff]
              %354 = vst [vmem:[%s350 + $0x8] sm:$0xff] %v353
            $region68: #{double_conv.3} parent=62 // loop_footer
              %s348 = sadd.s32 1, %s344
            $region69: #{double_conv.3} parent=62 // loop_footer_branch
              %343 = sbr.rel target = $region65
            $region70: #{double_conv.3} parent=62 // loop_exit
              _
          $region63: #{double_conv.3} parent=58 // pred_fallthru
            _
          // Predicated region
          $region71: #{double_conv.3} parent=58 // pred_check
            _
          $region72: #{double_conv.3} parent=58 // pred_check_branch
            %356 = sbr.rel target = $region74
          $region73: #{double_conv.3} parent=58 // pred_region
            _
          $region74: #{double_conv.3} parent=58 // pred_fallthru
            _
          // Predicated region
          $region75: #{double_conv.3} parent=58 // pred_check
            _
          $region76: #{double_conv.3} parent=58 // pred_check_branch
            %359 = sbr.rel (0) target = $region78
          $region77: #{double_conv.3} parent=58 // pred_region
            %360 = vsyncadd %s340, 256
          $region78: #{double_conv.3} parent=58 // pred_fallthru
            _
        $region59: #{double_conv.3} parent=35 // pred_fallthru
          _
        %p361 = scmp.lt.s32.totalorder %s22, 0
        // Predicated region
        $region79: #{double_conv.3} parent=35 // pred_check
          %p362 = pneg %p361
        $region80: #{double_conv.3} parent=35 // pred_check_branch
          %364 = sbr.rel (%p362) target = $region82
        $region81: #{double_conv.3} parent=35 // pred_region
          %s365 = sadd.s32 %s22, 1
          %s366 = smul.u32 %s365, 16
          %s367 = smul.u32 %s366, 16
          %s368 = sadd.s32 %s367, %s241
          %s369 = scalar_lea.vmem %s0, %s368
          %s370 = sadd.s32 409, %s244
          %s371 = scalar_lea.vmem [#allocation2], %s370
          %s372 = sadd.s32 2, %s247
          %s373 = scalar_lea.sflag [#allocation3], %s372
          // Predicated region
          $region83: #{double_conv.3} parent=81 // pred_check
            _
          $region84: #{double_conv.3} parent=81 // pred_check_branch
            %375 = sbr.rel (0) target = $region86
          $region85: #{double_conv.3} parent=81 // pred_region
            loop: start=0, step=1, limit=1
            $region87: #{double_conv.3} parent=85 // loop_pre_header
              _
            $region88: #{double_conv.3} parent=85 // loop_header
              %s377 = sphi 0, %s381
              %p378 = scmp.ge.s32.totalorder %s377, 1
              %s382 = sphi %s369, %s369
              %s383 = sphi %s371, %s371
            $region89: #{double_conv.3} parent=85 // loop_header_branch
              %380 = sbr.rel (%p378) target = $region93
            $region90: #{double_conv.3} parent=85 // loop_body
              %v384 = vld [vmem:[%s382] sm:$0xff]
              %385 = vst [vmem:[%s383] sm:$0xff] %v384
              %v386 = vld [vmem:[%s382 + $0x8] sm:$0xff]
              %387 = vst [vmem:[%s383 + $0x8] sm:$0xff] %v386
            $region91: #{double_conv.3} parent=85 // loop_footer
              %s381 = sadd.s32 1, %s377
            $region92: #{double_conv.3} parent=85 // loop_footer_branch
              %376 = sbr.rel target = $region88
            $region93: #{double_conv.3} parent=85 // loop_exit
              _
          $region86: #{double_conv.3} parent=81 // pred_fallthru
            _
          // Predicated region
          $region94: #{double_conv.3} parent=81 // pred_check
            _
          $region95: #{double_conv.3} parent=81 // pred_check_branch
            %389 = sbr.rel target = $region97
          $region96: #{double_conv.3} parent=81 // pred_region
            _
          $region97: #{double_conv.3} parent=81 // pred_fallthru
            _
          // Predicated region
          $region98: #{double_conv.3} parent=81 // pred_check
            _
          $region99: #{double_conv.3} parent=81 // pred_check_branch
            %392 = sbr.rel (0) target = $region101
          $region100: #{double_conv.3} parent=81 // pred_region
            %393 = vsyncadd %s373, 256
          $region101: #{double_conv.3} parent=81 // pred_fallthru
            _
        $region82: #{double_conv.3} parent=35 // pred_fallthru
          _
      $region36: #{double_conv.3} parent=31 // pred_fallthru
        _
      %s394 = sadd.s32 %s22, 1
      %p395 = scmp.lt.s32.totalorder %s394, 1
      // Predicated region
      $region102: #{double_conv.3} parent=31 // pred_check
        %p396 = pneg %p395
      $region103: #{double_conv.3} parent=31 // pred_check_branch
        %398 = sbr.rel (%p396) target = $region105
      $region104: #{double_conv.3} parent=31 // pred_region
        %s399 = ssub.s32 1, %s234
        %s400 = smul.u32 %s394, 16
        %s401 = smul.u32 %s400, 16
        %s402 = smul.u32 %s21, 256
        %s403 = sadd.s32 %s401, %s402
        %s404 = scalar_lea.vmem %s0, %s403
        %s405 = smul.u32 %s399, 432
        %s406 = sadd.s32 25, %s405
        %s407 = scalar_lea.vmem [#allocation2], %s406
        %s408 = smul.u32 %s399, 3
        %s409 = scalar_lea.sflag [#allocation3], %s408
        // Predicated region
        $region106: #{double_conv.3} parent=104 // pred_check
          _
        $region107: #{double_conv.3} parent=104 // pred_check_branch
          %411 = sbr.rel (0) target = $region109
        $region108: #{double_conv.3} parent=104 // pred_region
          loop: start=0, step=1, limit=1
          $region110: #{double_conv.3} parent=108 // loop_pre_header
            _
          $region111: #{double_conv.3} parent=108 // loop_header
            %s413 = sphi 0, %s417
            %p414 = scmp.ge.s32.totalorder %s413, 1
            %s418 = sphi %s404, %s404
            %s419 = sphi %s407, %s407
          $region112: #{double_conv.3} parent=108 // loop_header_branch
            %416 = sbr.rel (%p414) target = $region116
          $region113: #{double_conv.3} parent=108 // loop_body
            %v420 = vld [vmem:[%s418] sm:$0xff]
            %421 = vst [vmem:[%s419] sm:$0xff] %v420
            %v422 = vld [vmem:[%s418 + $0x8] sm:$0xff]
            %423 = vst [vmem:[%s419 + $0x8] sm:$0xff] %v422
            %v424 = vld [vmem:[%s418 + $0x10] sm:$0xff]
            %425 = vst [vmem:[%s419 + $0x18] sm:$0xff] %v424
            %v426 = vld [vmem:[%s418 + $0x18] sm:$0xff]
            %427 = vst [vmem:[%s419 + $0x20] sm:$0xff] %v426
            %v428 = vld [vmem:[%s418 + $0x20] sm:$0xff]
            %429 = vst [vmem:[%s419 + $0x30] sm:$0xff] %v428
            %v430 = vld [vmem:[%s418 + $0x28] sm:$0xff]
            %431 = vst [vmem:[%s419 + $0x38] sm:$0xff] %v430
            %v432 = vld [vmem:[%s418 + $0x30] sm:$0xff]
            %433 = vst [vmem:[%s419 + $0x48] sm:$0xff] %v432
            %v434 = vld [vmem:[%s418 + $0x38] sm:$0xff]
            %435 = vst [vmem:[%s419 + $0x50] sm:$0xff] %v434
            %v436 = vld [vmem:[%s418 + $0x40] sm:$0xff]
            %437 = vst [vmem:[%s419 + $0x60] sm:$0xff] %v436
            %v438 = vld [vmem:[%s418 + $0x48] sm:$0xff]
            %439 = vst [vmem:[%s419 + $0x68] sm:$0xff] %v438
            %v440 = vld [vmem:[%s418 + $0x50] sm:$0xff]
            %441 = vst [vmem:[%s419 + $0x78] sm:$0xff] %v440
            %v442 = vld [vmem:[%s418 + $0x58] sm:$0xff]
            %443 = vst [vmem:[%s419 + $0x80] sm:$0xff] %v442
            %v444 = vld [vmem:[%s418 + $0x60] sm:$0xff]
            %445 = vst [vmem:[%s419 + $0x90] sm:$0xff] %v444
            %v446 = vld [vmem:[%s418 + $0x68] sm:$0xff]
            %447 = vst [vmem:[%s419 + $0x98] sm:$0xff] %v446
            %v448 = vld [vmem:[%s418 + $0x70] sm:$0xff]
            %449 = vst [vmem:[%s419 + $0xa8] sm:$0xff] %v448
            %v450 = vld [vmem:[%s418 + $0x78] sm:$0xff]
            %451 = vst [vmem:[%s419 + $0xb0] sm:$0xff] %v450
            %v452 = vld [vmem:[%s418 + $0x80] sm:$0xff]
            %453 = vst [vmem:[%s419 + $0xc0] sm:$0xff] %v452
            %v454 = vld [vmem:[%s418 + $0x88] sm:$0xff]
            %455 = vst [vmem:[%s419 + $0xc8] sm:$0xff] %v454
            %v456 = vld [vmem:[%s418 + $0x90] sm:$0xff]
            %457 = vst [vmem:[%s419 + $0xd8] sm:$0xff] %v456
            %v458 = vld [vmem:[%s418 + $0x98] sm:$0xff]
            %459 = vst [vmem:[%s419 + $0xe0] sm:$0xff] %v458
            %v460 = vld [vmem:[%s418 + $0xa0] sm:$0xff]
            %461 = vst [vmem:[%s419 + $0xf0] sm:$0xff] %v460
            %v462 = vld [vmem:[%s418 + $0xa8] sm:$0xff]
            %463 = vst [vmem:[%s419 + $0xf8] sm:$0xff] %v462
            %v464 = vld [vmem:[%s418 + $0xb0] sm:$0xff]
            %465 = vst [vmem:[%s419 + $0x108] sm:$0xff] %v464
            %v466 = vld [vmem:[%s418 + $0xb8] sm:$0xff]
            %467 = vst [vmem:[%s419 + $0x110] sm:$0xff] %v466
            %v468 = vld [vmem:[%s418 + $0xc0] sm:$0xff]
            %469 = vst [vmem:[%s419 + $0x120] sm:$0xff] %v468
            %v470 = vld [vmem:[%s418 + $0xc8] sm:$0xff]
            %471 = vst [vmem:[%s419 + $0x128] sm:$0xff] %v470
            %v472 = vld [vmem:[%s418 + $0xd0] sm:$0xff]
            %473 = vst [vmem:[%s419 + $0x138] sm:$0xff] %v472
            %v474 = vld [vmem:[%s418 + $0xd8] sm:$0xff]
            %475 = vst [vmem:[%s419 + $0x140] sm:$0xff] %v474
            %v476 = vld [vmem:[%s418 + $0xe0] sm:$0xff]
            %477 = vst [vmem:[%s419 + $0x150] sm:$0xff] %v476
            %v478 = vld [vmem:[%s418 + $0xe8] sm:$0xff]
            %479 = vst [vmem:[%s419 + $0x158] sm:$0xff] %v478
            %v480 = vld [vmem:[%s418 + $0xf0] sm:$0xff]
            %481 = vst [vmem:[%s419 + $0x168] sm:$0xff] %v480
            %v482 = vld [vmem:[%s418 + $0xf8] sm:$0xff]
            %483 = vst [vmem:[%s419 + $0x170] sm:$0xff] %v482
          $region114: #{double_conv.3} parent=108 // loop_footer
            %s417 = sadd.s32 1, %s413
          $region115: #{double_conv.3} parent=108 // loop_footer_branch
            %412 = sbr.rel target = $region111
          $region116: #{double_conv.3} parent=108 // loop_exit
            _
        $region109: #{double_conv.3} parent=104 // pred_fallthru
          _
        // Predicated region
        $region117: #{double_conv.3} parent=104 // pred_check
          _
        $region118: #{double_conv.3} parent=104 // pred_check_branch
          %485 = sbr.rel target = $region120
        $region119: #{double_conv.3} parent=104 // pred_region
          _
        $region120: #{double_conv.3} parent=104 // pred_fallthru
          _
        // Predicated region
        $region121: #{double_conv.3} parent=104 // pred_check
          _
        $region122: #{double_conv.3} parent=104 // pred_check_branch
          %488 = sbr.rel (0) target = $region124
        $region123: #{double_conv.3} parent=104 // pred_region
          %489 = vsyncadd %s409, 4096
        $region124: #{double_conv.3} parent=104 // pred_fallthru
          _
        %p490 = scmp.gt.s32.totalorder %s394, 0
        // Predicated region
        $region125: #{double_conv.3} parent=104 // pred_check
          %p491 = pneg %p490
        $region126: #{double_conv.3} parent=104 // pred_check_branch
          %493 = sbr.rel (%p491) target = $region128
        $region127: #{double_conv.3} parent=104 // pred_region
          %s494 = ssub.s32 %s400, 1
          %s495 = smul.u32 %s494, 16
          %s496 = sadd.s32 %s495, %s402
          %s497 = scalar_lea.vmem %s0, %s496
          %s498 = sadd.s32 1, %s405
          %s499 = scalar_lea.vmem [#allocation2], %s498
          %s500 = sadd.s32 1, %s408
          %s501 = scalar_lea.sflag [#allocation3], %s500
          // Predicated region
          $region129: #{double_conv.3} parent=127 // pred_check
            _
          $region130: #{double_conv.3} parent=127 // pred_check_branch
            %503 = sbr.rel (0) target = $region132
          $region131: #{double_conv.3} parent=127 // pred_region
            loop: start=0, step=1, limit=1
            $region133: #{double_conv.3} parent=131 // loop_pre_header
              _
            $region134: #{double_conv.3} parent=131 // loop_header
              %s505 = sphi 0, %s509
              %p506 = scmp.ge.s32.totalorder %s505, 1
              %s510 = sphi %s497, %s497
              %s511 = sphi %s499, %s499
            $region135: #{double_conv.3} parent=131 // loop_header_branch
              %508 = sbr.rel (%p506) target = $region139
            $region136: #{double_conv.3} parent=131 // loop_body
              %v512 = vld [vmem:[%s510] sm:$0xff]
              %513 = vst [vmem:[%s511] sm:$0xff] %v512
              %v514 = vld [vmem:[%s510 + $0x8] sm:$0xff]
              %515 = vst [vmem:[%s511 + $0x8] sm:$0xff] %v514
            $region137: #{double_conv.3} parent=131 // loop_footer
              %s509 = sadd.s32 1, %s505
            $region138: #{double_conv.3} parent=131 // loop_footer_branch
              %504 = sbr.rel target = $region134
            $region139: #{double_conv.3} parent=131 // loop_exit
              _
          $region132: #{double_conv.3} parent=127 // pred_fallthru
            _
          // Predicated region
          $region140: #{double_conv.3} parent=127 // pred_check
            _
          $region141: #{double_conv.3} parent=127 // pred_check_branch
            %517 = sbr.rel target = $region143
          $region142: #{double_conv.3} parent=127 // pred_region
            _
          $region143: #{double_conv.3} parent=127 // pred_fallthru
            _
          // Predicated region
          $region144: #{double_conv.3} parent=127 // pred_check
            _
          $region145: #{double_conv.3} parent=127 // pred_check_branch
            %520 = sbr.rel (0) target = $region147
          $region146: #{double_conv.3} parent=127 // pred_region
            %521 = vsyncadd %s501, 256
          $region147: #{double_conv.3} parent=127 // pred_fallthru
            _
        $region128: #{double_conv.3} parent=104 // pred_fallthru
          _
        %p522 = scmp.lt.s32.totalorder %s394, 0
        // Predicated region
        $region148: #{double_conv.3} parent=104 // pred_check
          %p523 = pneg %p522
        $region149: #{double_conv.3} parent=104 // pred_check_branch
          %525 = sbr.rel (%p523) target = $region151
        $region150: #{double_conv.3} parent=104 // pred_region
          %s526 = sadd.s32 %s22, 2
          %s527 = smul.u32 %s526, 16
          %s528 = smul.u32 %s527, 16
          %s529 = sadd.s32 %s528, %s402
          %s530 = scalar_lea.vmem %s0, %s529
          %s531 = sadd.s32 409, %s405
          %s532 = scalar_lea.vmem [#allocation2], %s531
          %s533 = sadd.s32 2, %s408
          %s534 = scalar_lea.sflag [#allocation3], %s533
          // Predicated region
          $region152: #{double_conv.3} parent=150 // pred_check
            _
          $region153: #{double_conv.3} parent=150 // pred_check_branch
            %536 = sbr.rel (0) target = $region155
          $region154: #{double_conv.3} parent=150 // pred_region
            loop: start=0, step=1, limit=1
            $region156: #{double_conv.3} parent=154 // loop_pre_header
              _
            $region157: #{double_conv.3} parent=154 // loop_header
              %s538 = sphi 0, %s542
              %p539 = scmp.ge.s32.totalorder %s538, 1
              %s543 = sphi %s530, %s530
              %s544 = sphi %s532, %s532
            $region158: #{double_conv.3} parent=154 // loop_header_branch
              %541 = sbr.rel (%p539) target = $region162
            $region159: #{double_conv.3} parent=154 // loop_body
              %v545 = vld [vmem:[%s543] sm:$0xff]
              %546 = vst [vmem:[%s544] sm:$0xff] %v545
              %v547 = vld [vmem:[%s543 + $0x8] sm:$0xff]
              %548 = vst [vmem:[%s544 + $0x8] sm:$0xff] %v547
            $region160: #{double_conv.3} parent=154 // loop_footer
              %s542 = sadd.s32 1, %s538
            $region161: #{double_conv.3} parent=154 // loop_footer_branch
              %537 = sbr.rel target = $region157
            $region162: #{double_conv.3} parent=154 // loop_exit
              _
          $region155: #{double_conv.3} parent=150 // pred_fallthru
            _
          // Predicated region
          $region163: #{double_conv.3} parent=150 // pred_check
            _
          $region164: #{double_conv.3} parent=150 // pred_check_branch
            %550 = sbr.rel target = $region166
          $region165: #{double_conv.3} parent=150 // pred_region
            _
          $region166: #{double_conv.3} parent=150 // pred_fallthru
            _
          // Predicated region
          $region167: #{double_conv.3} parent=150 // pred_check
            _
          $region168: #{double_conv.3} parent=150 // pred_check_branch
            %553 = sbr.rel (0) target = $region170
          $region169: #{double_conv.3} parent=150 // pred_region
            %554 = vsyncadd %s534, 256
          $region170: #{double_conv.3} parent=150 // pred_fallthru
            _
        $region151: #{double_conv.3} parent=104 // pred_fallthru
          _
      $region105: #{double_conv.3} parent=31 // pred_fallthru
        _
      %s555 = smul.u32 %s234, 3
      %s556 = scalar_lea.sflag [#allocation3], %s555
      %s557 = smul.u32 16, 16
      %s558 = smul.u32 %s557, 1
      %s559 = sshll.u32 %s558, 4
      %560 = dma.done %s556, %s559
      %p561 = scmp.gt.s32.totalorder %s22, 0
      // Predicated region
      $region171: #{double_conv.3} parent=31 // pred_check
        %p562 = pneg %p561
      $region172: #{double_conv.3} parent=31 // pred_check_branch
        %564 = sbr.rel (%p562) target = $region174
      $region173: #{double_conv.3} parent=31 // pred_region
        %s565 = sadd.s32 1, %s555
        %s566 = scalar_lea.sflag [#allocation3], %s565
        %s567 = smul.u32 1, 16
        %s568 = smul.u32 %s567, 1
        %s569 = sshll.u32 %s568, 4
        %570 = dma.done %s566, %s569
      $region174: #{double_conv.3} parent=31 // pred_fallthru
        _
      %p571 = scmp.lt.s32.totalorder %s22, 0
      // Predicated region
      $region175: #{double_conv.3} parent=31 // pred_check
        %p572 = pneg %p571
      $region176: #{double_conv.3} parent=31 // pred_check_branch
        %574 = sbr.rel (%p572) target = $region178
      $region177: #{double_conv.3} parent=31 // pred_region
        %s575 = sadd.s32 2, %s555
        %s576 = scalar_lea.sflag [#allocation3], %s575
        %s577 = smul.u32 1, 16
        %s578 = smul.u32 %s577, 1
        %s579 = sshll.u32 %s578, 4
        %580 = dma.done %s576, %s579
      $region178: #{double_conv.3} parent=31 // pred_fallthru
        _
      %s581 = smul.u32 %s234, 432
      %s582 = scalar_lea.vmem [#allocation2], %s581
      %v583 = vld [vmem:[%s582] sm:$0xff]
      %v584 = vld [vmem:[%s582 + $0x8] sm:$0xff]
      %v585 = vld [vmem:[%s582 + $0x10] sm:$0x3]
      %v586 = vld [vmem:[%s582 + $0x18] sm:$0xff]
      %v587 = vld [vmem:[%s582 + $0x20] sm:$0xff]
      %v588 = vld [vmem:[%s582 + $0x28] sm:$0x3]
      %v589 = vld [vmem:[%s582 + $0x30] sm:$0xff]
      %v590 = vld [vmem:[%s582 + $0x38] sm:$0xff]
      %v591 = vld [vmem:[%s582 + $0x40] sm:$0x3]
      %v592 = vld [vmem:[%s582 + $0x48] sm:$0xff]
      %v593 = vld [vmem:[%s582 + $0x50] sm:$0xff]
      %v594 = vld [vmem:[%s582 + $0x58] sm:$0x3]
      %v595 = vld [vmem:[%s582 + $0x60] sm:$0xff]
      %v596 = vld [vmem:[%s582 + $0x68] sm:$0xff]
      %v597 = vld [vmem:[%s582 + $0x70] sm:$0x3]
      %v598 = vld [vmem:[%s582 + $0x78] sm:$0xff]
      %v599 = vld [vmem:[%s582 + $0x80] sm:$0xff]
      %v600 = vld [vmem:[%s582 + $0x88] sm:$0x3]
      %v601 = vld [vmem:[%s582 + $0x90] sm:$0xff]
      %v602 = vld [vmem:[%s582 + $0x98] sm:$0xff]
      %v603 = vld [vmem:[%s582 + $0xa0] sm:$0x3]
      %v604 = vld [vmem:[%s582 + $0xa8] sm:$0xff]
      %v605 = vld [vmem:[%s582 + $0xb0] sm:$0xff]
      %v606 = vld [vmem:[%s582 + $0xb8] sm:$0x3]
      %v607 = vld [vmem:[%s582 + $0xc0] sm:$0xff]
      %v608 = vld [vmem:[%s582 + $0xc8] sm:$0xff]
      %v609 = vld [vmem:[%s582 + $0xd0] sm:$0x3]
      %v610 = vld [vmem:[%s582 + $0xd8] sm:$0xff]
      %v611 = vld [vmem:[%s582 + $0xe0] sm:$0xff]
      %v612 = vld [vmem:[%s582 + $0xe8] sm:$0x3]
      %v613 = vld [vmem:[%s582 + $0xf0] sm:$0xff]
      %v614 = vld [vmem:[%s582 + $0xf8] sm:$0xff]
      %v615 = vld [vmem:[%s582 + $0x100] sm:$0x3]
      %v616 = vld [vmem:[%s582 + $0x108] sm:$0xff]
      %v617 = vld [vmem:[%s582 + $0x110] sm:$0xff]
      %v618 = vld [vmem:[%s582 + $0x118] sm:$0x3]
      %v619 = vld [vmem:[%s582 + $0x120] sm:$0xff]
      %v620 = vld [vmem:[%s582 + $0x128] sm:$0xff]
      %v621 = vld [vmem:[%s582 + $0x130] sm:$0x3]
      %v622 = vld [vmem:[%s582 + $0x138] sm:$0xff]
      %v623 = vld [vmem:[%s582 + $0x140] sm:$0xff]
      %v624 = vld [vmem:[%s582 + $0x148] sm:$0x3]
      %v625 = vld [vmem:[%s582 + $0x150] sm:$0xff]
      %v626 = vld [vmem:[%s582 + $0x158] sm:$0xff]
      %v627 = vld [vmem:[%s582 + $0x160] sm:$0x3]
      %v628 = vld [vmem:[%s582 + $0x168] sm:$0xff]
      %v629 = vld [vmem:[%s582 + $0x170] sm:$0xff]
      %v630 = vld [vmem:[%s582 + $0x178] sm:$0x3]
      %v631 = vld [vmem:[%s582 + $0x180] sm:$0xff]
      %v632 = vld [vmem:[%s582 + $0x188] sm:$0xff]
      %v633 = vld [vmem:[%s582 + $0x190] sm:$0x3]
      %v634 = vld [vmem:[%s582 + $0x198] sm:$0xff]
      %v635 = vld [vmem:[%s582 + $0x1a0] sm:$0xff]
      %v636 = vld [vmem:[%s582 + $0x1a8] sm:$0x3]
      %v637 = vlaneseq
      %v638 = vshrl.u32 %v637, 7
      %v639 = vadd.s32 %v638, 8
      %v640 = vadd.s32 %v638, 16
      %s641 = scalar_select %p235, 1, 0
      %s642 = scalar_select %p235, 16, 17
      %v643 = vstv %s641
      %vm644 = vcmp.le.s32.totalorder %v643, 0
      %vm645 = vcmp.le.s32.totalorder %v643, 1
      %vm646 = vcmp.le.s32.totalorder %v643, 2
      %vm647 = vcmp.le.s32.totalorder %v643, 3
      %vm648 = vcmp.le.s32.totalorder %v643, 4
      %vm649 = vcmp.le.s32.totalorder %v643, 5
      %vm650 = vcmp.le.s32.totalorder %v643, 6
      %vm651 = vcmp.le.s32.totalorder %v643, 7
      %vm652 = vcmp.le.s32.totalorder %v643, 8
      %vm653 = vcmp.le.s32.totalorder %v643, 9
      %vm654 = vcmp.le.s32.totalorder %v643, 10
      %vm655 = vcmp.le.s32.totalorder %v643, 11
      %vm656 = vcmp.le.s32.totalorder %v643, 12
      %vm657 = vcmp.le.s32.totalorder %v643, 13
      %vm658 = vcmp.le.s32.totalorder %v643, 14
      %vm659 = vcmp.le.s32.totalorder %v643, 15
      %vm660 = vcmp.le.s32.totalorder %v643, 16
      %vm661 = vcmp.le.s32.totalorder %v643, 17
      %v662 = vstv %s642
      %vm663 = vcmp.ge.s32.totalorder %v662, 0
      %vm664 = vcmp.ge.s32.totalorder %v662, 1
      %vm665 = vcmp.ge.s32.totalorder %v662, 2
      %vm666 = vcmp.ge.s32.totalorder %v662, 3
      %vm667 = vcmp.ge.s32.totalorder %v662, 4
      %vm668 = vcmp.ge.s32.totalorder %v662, 5
      %vm669 = vcmp.ge.s32.totalorder %v662, 6
      %vm670 = vcmp.ge.s32.totalorder %v662, 7
      %vm671 = vcmp.ge.s32.totalorder %v662, 8
      %vm672 = vcmp.ge.s32.totalorder %v662, 9
      %vm673 = vcmp.ge.s32.totalorder %v662, 10
      %vm674 = vcmp.ge.s32.totalorder %v662, 11
      %vm675 = vcmp.ge.s32.totalorder %v662, 12
      %vm676 = vcmp.ge.s32.totalorder %v662, 13
      %vm677 = vcmp.ge.s32.totalorder %v662, 14
      %vm678 = vcmp.ge.s32.totalorder %v662, 15
      %vm679 = vcmp.ge.s32.totalorder %v662, 16
      %vm680 = vcmp.ge.s32.totalorder %v662, 17
      %vm681 = vmand %vm644, %vm663
      %vm682 = vmand %vm645, %vm664
      %vm683 = vmand %vm646, %vm665
      %vm684 = vmand %vm647, %vm666
      %vm685 = vmand %vm648, %vm667
      %vm686 = vmand %vm649, %vm668
      %vm687 = vmand %vm650, %vm669
      %vm688 = vmand %vm651, %vm670
      %vm689 = vmand %vm652, %vm671
      %vm690 = vmand %vm653, %vm672
      %vm691 = vmand %vm654, %vm673
      %vm692 = vmand %vm655, %vm674
      %vm693 = vmand %vm656, %vm675
      %vm694 = vmand %vm657, %vm676
      %vm695 = vmand %vm658, %vm677
      %vm696 = vmand %vm659, %vm678
      %vm697 = vmand %vm660, %vm679
      %vm698 = vmand %vm661, %vm680
      %vm699 = vcmp.ge.s32.totalorder %v638, 1
      %vm700 = vcmp.ge.s32.totalorder %v639, 1
      %vm701 = vcmp.ge.s32.totalorder %v640, 1
      %vm702 = vmand %vm681, %vm699
      %vm703 = vmand %vm681, %vm700
      %vm704 = vmand %vm681, %vm701
      %vm705 = vmand %vm682, %vm699
      %vm706 = vmand %vm682, %vm700
      %vm707 = vmand %vm682, %vm701
      %vm708 = vmand %vm683, %vm699
      %vm709 = vmand %vm683, %vm700
      %vm710 = vmand %vm683, %vm701
      %vm711 = vmand %vm684, %vm699
      %vm712 = vmand %vm684, %vm700
      %vm713 = vmand %vm684, %vm701
      %vm714 = vmand %vm685, %vm699
      %vm715 = vmand %vm685, %vm700
      %vm716 = vmand %vm685, %vm701
      %vm717 = vmand %vm686, %vm699
      %vm718 = vmand %vm686, %vm700
      %vm719 = vmand %vm686, %vm701
      %vm720 = vmand %vm687, %vm699
      %vm721 = vmand %vm687, %vm700
      %vm722 = vmand %vm687, %vm701
      %vm723 = vmand %vm688, %vm699
      %vm724 = vmand %vm688, %vm700
      %vm725 = vmand %vm688, %vm701
      %vm726 = vmand %vm689, %vm699
      %vm727 = vmand %vm689, %vm700
      %vm728 = vmand %vm689, %vm701
      %vm729 = vmand %vm690, %vm699
      %vm730 = vmand %vm690, %vm700
      %vm731 = vmand %vm690, %vm701
      %vm732 = vmand %vm691, %vm699
      %vm733 = vmand %vm691, %vm700
      %vm734 = vmand %vm691, %vm701
      %vm735 = vmand %vm692, %vm699
      %vm736 = vmand %vm692, %vm700
      %vm737 = vmand %vm692, %vm701
      %vm738 = vmand %vm693, %vm699
      %vm739 = vmand %vm693, %vm700
      %vm740 = vmand %vm693, %vm701
      %vm741 = vmand %vm694, %vm699
      %vm742 = vmand %vm694, %vm700
      %vm743 = vmand %vm694, %vm701
      %vm744 = vmand %vm695, %vm699
      %vm745 = vmand %vm695, %vm700
      %vm746 = vmand %vm695, %vm701
      %vm747 = vmand %vm696, %vm699
      %vm748 = vmand %vm696, %vm700
      %vm749 = vmand %vm696, %vm701
      %vm750 = vmand %vm697, %vm699
      %vm751 = vmand %vm697, %vm700
      %vm752 = vmand %vm697, %vm701
      %vm753 = vmand %vm698, %vm699
      %vm754 = vmand %vm698, %vm700
      %vm755 = vmand %vm698, %vm701
      %vm756 = vcmp.le.s32.totalorder %v638, 16
      %vm757 = vcmp.le.s32.totalorder %v639, 16
      %vm758 = vcmp.le.s32.totalorder %v640, 16
      %vm759 = vmand %vm702, %vm756
      %vm760 = vmand %vm703, %vm757
      %vm761 = vmand %vm704, %vm758
      %vm762 = vmand %vm705, %vm756
      %vm763 = vmand %vm706, %vm757
      %vm764 = vmand %vm707, %vm758
      %vm765 = vmand %vm708, %vm756
      %vm766 = vmand %vm709, %vm757
      %vm767 = vmand %vm710, %vm758
      %vm768 = vmand %vm711, %vm756
      %vm769 = vmand %vm712, %vm757
      %vm770 = vmand %vm713, %vm758
      %vm771 = vmand %vm714, %vm756
      %vm772 = vmand %vm715, %vm757
      %vm773 = vmand %vm716, %vm758
      %vm774 = vmand %vm717, %vm756
      %vm775 = vmand %vm718, %vm757
      %vm776 = vmand %vm719, %vm758
      %vm777 = vmand %vm720, %vm756
      %vm778 = vmand %vm721, %vm757
      %vm779 = vmand %vm722, %vm758
      %vm780 = vmand %vm723, %vm756
      %vm781 = vmand %vm724, %vm757
      %vm782 = vmand %vm725, %vm758
      %vm783 = vmand %vm726, %vm756
      %vm784 = vmand %vm727, %vm757
      %vm785 = vmand %vm728, %vm758
      %vm786 = vmand %vm729, %vm756
      %vm787 = vmand %vm730, %vm757
      %vm788 = vmand %vm731, %vm758
      %vm789 = vmand %vm732, %vm756
      %vm790 = vmand %vm733, %vm757
      %vm791 = vmand %vm734, %vm758
      %vm792 = vmand %vm735, %vm756
      %vm793 = vmand %vm736, %vm757
      %vm794 = vmand %vm737, %vm758
      %vm795 = vmand %vm738, %vm756
      %vm796 = vmand %vm739, %vm757
      %vm797 = vmand %vm740, %vm758
      %vm798 = vmand %vm741, %vm756
      %vm799 = vmand %vm742, %vm757
      %vm800 = vmand %vm743, %vm758
      %vm801 = vmand %vm744, %vm756
      %vm802 = vmand %vm745, %vm757
      %vm803 = vmand %vm746, %vm758
      %vm804 = vmand %vm747, %vm756
      %vm805 = vmand %vm748, %vm757
      %vm806 = vmand %vm749, %vm758
      %vm807 = vmand %vm750, %vm756
      %vm808 = vmand %vm751, %vm757
      %vm809 = vmand %vm752, %vm758
      %vm810 = vmand %vm753, %vm756
      %vm811 = vmand %vm754, %vm757
      %vm812 = vmand %vm755, %vm758
      %v813 = vsel %vm759, 1, 0
      %v814 = vsel %vm760, 1, 0
      %v815 = vsel %vm761, 1, 0
      %v816 = vsel %vm762, 1, 0
      %v817 = vsel %vm763, 1, 0
      %v818 = vsel %vm764, 1, 0
      %v819 = vsel %vm765, 1, 0
      %v820 = vsel %vm766, 1, 0
      %v821 = vsel %vm767, 1, 0
      %v822 = vsel %vm768, 1, 0
      %v823 = vsel %vm769, 1, 0
      %v824 = vsel %vm770, 1, 0
      %v825 = vsel %vm771, 1, 0
      %v826 = vsel %vm772, 1, 0
      %v827 = vsel %vm773, 1, 0
      %v828 = vsel %vm774, 1, 0
      %v829 = vsel %vm775, 1, 0
      %v830 = vsel %vm776, 1, 0
      %v831 = vsel %vm777, 1, 0
      %v832 = vsel %vm778, 1, 0
      %v833 = vsel %vm779, 1, 0
      %v834 = vsel %vm780, 1, 0
      %v835 = vsel %vm781, 1, 0
      %v836 = vsel %vm782, 1, 0
      %v837 = vsel %vm783, 1, 0
      %v838 = vsel %vm784, 1, 0
      %v839 = vsel %vm785, 1, 0
      %v840 = vsel %vm786, 1, 0
      %v841 = vsel %vm787, 1, 0
      %v842 = vsel %vm788, 1, 0
      %v843 = vsel %vm789, 1, 0
      %v844 = vsel %vm790, 1, 0
      %v845 = vsel %vm791, 1, 0
      %v846 = vsel %vm792, 1, 0
      %v847 = vsel %vm793, 1, 0
      %v848 = vsel %vm794, 1, 0
      %v849 = vsel %vm795, 1, 0
      %v850 = vsel %vm796, 1, 0
      %v851 = vsel %vm797, 1, 0
      %v852 = vsel %vm798, 1, 0
      %v853 = vsel %vm799, 1, 0
      %v854 = vsel %vm800, 1, 0
      %v855 = vsel %vm801, 1, 0
      %v856 = vsel %vm802, 1, 0
      %v857 = vsel %vm803, 1, 0
      %v858 = vsel %vm804, 1, 0
      %v859 = vsel %vm805, 1, 0
      %v860 = vsel %vm806, 1, 0
      %v861 = vsel %vm807, 1, 0
      %v862 = vsel %vm808, 1, 0
      %v863 = vsel %vm809, 1, 0
      %v864 = vsel %vm810, 1, 0
      %v865 = vsel %vm811, 1, 0
      %v866 = vsel %vm812, 1, 0
      %vm867 = vcmp.eq.s32.totalorder %v813, 1
      %vm868 = vcmp.eq.s32.totalorder %v814, 1
      %vm869 = vcmp.eq.s32.totalorder %v815, 1
      %vm870 = vcmp.eq.s32.totalorder %v816, 1
      %vm871 = vcmp.eq.s32.totalorder %v817, 1
      %vm872 = vcmp.eq.s32.totalorder %v818, 1
      %vm873 = vcmp.eq.s32.totalorder %v819, 1
      %vm874 = vcmp.eq.s32.totalorder %v820, 1
      %vm875 = vcmp.eq.s32.totalorder %v821, 1
      %vm876 = vcmp.eq.s32.totalorder %v822, 1
      %vm877 = vcmp.eq.s32.totalorder %v823, 1
      %vm878 = vcmp.eq.s32.totalorder %v824, 1
      %vm879 = vcmp.eq.s32.totalorder %v825, 1
      %vm880 = vcmp.eq.s32.totalorder %v826, 1
      %vm881 = vcmp.eq.s32.totalorder %v827, 1
      %vm882 = vcmp.eq.s32.totalorder %v828, 1
      %vm883 = vcmp.eq.s32.totalorder %v829, 1
      %vm884 = vcmp.eq.s32.totalorder %v830, 1
      %vm885 = vcmp.eq.s32.totalorder %v831, 1
      %vm886 = vcmp.eq.s32.totalorder %v832, 1
      %vm887 = vcmp.eq.s32.totalorder %v833, 1
      %vm888 = vcmp.eq.s32.totalorder %v834, 1
      %vm889 = vcmp.eq.s32.totalorder %v835, 1
      %vm890 = vcmp.eq.s32.totalorder %v836, 1
      %vm891 = vcmp.eq.s32.totalorder %v837, 1
      %vm892 = vcmp.eq.s32.totalorder %v838, 1
      %vm893 = vcmp.eq.s32.totalorder %v839, 1
      %vm894 = vcmp.eq.s32.totalorder %v840, 1
      %vm895 = vcmp.eq.s32.totalorder %v841, 1
      %vm896 = vcmp.eq.s32.totalorder %v842, 1
      %vm897 = vcmp.eq.s32.totalorder %v843, 1
      %vm898 = vcmp.eq.s32.totalorder %v844, 1
      %vm899 = vcmp.eq.s32.totalorder %v845, 1
      %vm900 = vcmp.eq.s32.totalorder %v846, 1
      %vm901 = vcmp.eq.s32.totalorder %v847, 1
      %vm902 = vcmp.eq.s32.totalorder %v848, 1
      %vm903 = vcmp.eq.s32.totalorder %v849, 1
      %vm904 = vcmp.eq.s32.totalorder %v850, 1
      %vm905 = vcmp.eq.s32.totalorder %v851, 1
      %vm906 = vcmp.eq.s32.totalorder %v852, 1
      %vm907 = vcmp.eq.s32.totalorder %v853, 1
      %vm908 = vcmp.eq.s32.totalorder %v854, 1
      %vm909 = vcmp.eq.s32.totalorder %v855, 1
      %vm910 = vcmp.eq.s32.totalorder %v856, 1
      %vm911 = vcmp.eq.s32.totalorder %v857, 1
      %vm912 = vcmp.eq.s32.totalorder %v858, 1
      %vm913 = vcmp.eq.s32.totalorder %v859, 1
      %vm914 = vcmp.eq.s32.totalorder %v860, 1
      %vm915 = vcmp.eq.s32.totalorder %v861, 1
      %vm916 = vcmp.eq.s32.totalorder %v862, 1
      %vm917 = vcmp.eq.s32.totalorder %v863, 1
      %vm918 = vcmp.eq.s32.totalorder %v864, 1
      %vm919 = vcmp.eq.s32.totalorder %v865, 1
      %vm920 = vcmp.eq.s32.totalorder %v866, 1
      %v921 = vsel %vm867, %v583, 0.0
      %v922 = vsel %vm868, %v584, 0.0
      %v923 = vsel %vm869, %v585, 0.0
      %v924 = vsel %vm870, %v586, 0.0
      %v925 = vsel %vm871, %v587, 0.0
      %v926 = vsel %vm872, %v588, 0.0
      %v927 = vsel %vm873, %v589, 0.0
      %v928 = vsel %vm874, %v590, 0.0
      %v929 = vsel %vm875, %v591, 0.0
      %v930 = vsel %vm876, %v592, 0.0
      %v931 = vsel %vm877, %v593, 0.0
      %v932 = vsel %vm878, %v594, 0.0
      %v933 = vsel %vm879, %v595, 0.0
      %v934 = vsel %vm880, %v596, 0.0
      %v935 = vsel %vm881, %v597, 0.0
      %v936 = vsel %vm882, %v598, 0.0
      %v937 = vsel %vm883, %v599, 0.0
      %v938 = vsel %vm884, %v600, 0.0
      %v939 = vsel %vm885, %v601, 0.0
      %v940 = vsel %vm886, %v602, 0.0
      %v941 = vsel %vm887, %v603, 0.0
      %v942 = vsel %vm888, %v604, 0.0
      %v943 = vsel %vm889, %v605, 0.0
      %v944 = vsel %vm890, %v606, 0.0
      %v945 = vsel %vm891, %v607, 0.0
      %v946 = vsel %vm892, %v608, 0.0
      %v947 = vsel %vm893, %v609, 0.0
      %v948 = vsel %vm894, %v610, 0.0
      %v949 = vsel %vm895, %v611, 0.0
      %v950 = vsel %vm896, %v612, 0.0
      %v951 = vsel %vm897, %v613, 0.0
      %v952 = vsel %vm898, %v614, 0.0
      %v953 = vsel %vm899, %v615, 0.0
      %v954 = vsel %vm900, %v616, 0.0
      %v955 = vsel %vm901, %v617, 0.0
      %v956 = vsel %vm902, %v618, 0.0
      %v957 = vsel %vm903, %v619, 0.0
      %v958 = vsel %vm904, %v620, 0.0
      %v959 = vsel %vm905, %v621, 0.0
      %v960 = vsel %vm906, %v622, 0.0
      %v961 = vsel %vm907, %v623, 0.0
      %v962 = vsel %vm908, %v624, 0.0
      %v963 = vsel %vm909, %v625, 0.0
      %v964 = vsel %vm910, %v626, 0.0
      %v965 = vsel %vm911, %v627, 0.0
      %v966 = vsel %vm912, %v628, 0.0
      %v967 = vsel %vm913, %v629, 0.0
      %v968 = vsel %vm914, %v630, 0.0
      %v969 = vsel %vm915, %v631, 0.0
      %v970 = vsel %vm916, %v632, 0.0
      %v971 = vsel %vm917, %v633, 0.0
      %v972 = vsel %vm918, %v634, 0.0
      %v973 = vsel %vm919, %v635, 0.0
      %v974 = vsel %vm920, %v636, 0.0
      %v975 = vpack.c.bf16 %v922, %v921
      %v976 = vpack.c.bf16 %v925, %v924
      %v977 = vpack.c.bf16 %v928, %v927
      %v978 = vpack.c.bf16 %v931, %v930
      %v979 = vpack.c.bf16 %v934, %v933
      %v980 = vpack.c.bf16 %v937, %v936
      %v981 = vpack.c.bf16 %v940, %v939
      %v982 = vpack.c.bf16 %v943, %v942
      %v983 = vpack.c.bf16 %v946, %v945
      %v984 = vpack.c.bf16 %v949, %v948
      %v985 = vpack.c.bf16 %v952, %v951
      %v986 = vpack.c.bf16 %v955, %v954
      %v987 = vpack.c.bf16 %v958, %v957
      %v988 = vpack.c.bf16 %v961, %v960
      %v989 = vpack.c.bf16 %v964, %v963
      %v990 = vpack.c.bf16 %v967, %v966
      %v991 = vld [vmem:[%s1] sm:$0xf]
      %v992 = vld [vmem:[%s1 + $0x4] sm:$0xf]
      %v993 = vld [vmem:[%s1 + $0x8] sm:$0xf]
      %v994 = vld [vmem:[%s1 + $0xc] sm:$0xf]
      %v995 = vld [vmem:[%s1 + $0x10] sm:$0xf]
      %v996 = vld [vmem:[%s1 + $0x14] sm:$0xf]
      %v997 = vld [vmem:[%s1 + $0x18] sm:$0xf]
      %v998 = vld [vmem:[%s1 + $0x1c] sm:$0xf]
      %v999 = vld [vmem:[%s1 + $0x20] sm:$0xf]
      %v1000 = vld [vmem:[%s1 + $0x24] sm:$0xf]
      %v1001 = vld [vmem:[%s1 + $0x28] sm:$0xf]
      %v1002 = vld [vmem:[%s1 + $0x2c] sm:$0xf]
      %v1003 = vld [vmem:[%s1 + $0x30] sm:$0xf]
      %v1004 = vld [vmem:[%s1 + $0x34] sm:$0xf]
      %v1005 = vld [vmem:[%s1 + $0x38] sm:$0xf]
      %v1006 = vld [vmem:[%s1 + $0x3c] sm:$0xf]
      %vm1055 = vcmask 1046528
      %v1056 = vrot.slane %v921, 1
      %v1057 = vrot.slane %v922, 1
      %v1058 = vsel %vm1055, %v1056, %v1057
      %v1059 = vrot.slane %v923, 1
      %v1060 = vsel %vm1055, %v1057, %v1059
      %v1061 = vrot.slane %v924, 1
      %v1062 = vrot.slane %v925, 1
      %v1063 = vsel %vm1055, %v1061, %v1062
      %v1064 = vrot.slane %v926, 1
      %v1065 = vsel %vm1055, %v1062, %v1064
      %v1066 = vrot.slane %v927, 1
      %v1067 = vrot.slane %v928, 1
      %v1068 = vsel %vm1055, %v1066, %v1067
      %v1069 = vrot.slane %v929, 1
      %v1070 = vsel %vm1055, %v1067, %v1069
      %v1071 = vrot.slane %v930, 1
      %v1072 = vrot.slane %v931, 1
      %v1073 = vsel %vm1055, %v1071, %v1072
      %v1074 = vrot.slane %v932, 1
      %v1075 = vsel %vm1055, %v1072, %v1074
      %v1076 = vrot.slane %v933, 1
      %v1077 = vrot.slane %v934, 1
      %v1078 = vsel %vm1055, %v1076, %v1077
      %v1079 = vrot.slane %v935, 1
      %v1080 = vsel %vm1055, %v1077, %v1079
      %v1081 = vrot.slane %v936, 1
      %v1082 = vrot.slane %v937, 1
      %v1083 = vsel %vm1055, %v1081, %v1082
      %v1084 = vrot.slane %v938, 1
      %v1085 = vsel %vm1055, %v1082, %v1084
      %v1086 = vrot.slane %v939, 1
      %v1087 = vrot.slane %v940, 1
      %v1088 = vsel %vm1055, %v1086, %v1087
      %v1089 = vrot.slane %v941, 1
      %v1090 = vsel %vm1055, %v1087, %v1089
      %v1091 = vrot.slane %v942, 1
      %v1092 = vrot.slane %v943, 1
      %v1093 = vsel %vm1055, %v1091, %v1092
      %v1094 = vrot.slane %v944, 1
      %v1095 = vsel %vm1055, %v1092, %v1094
      %v1096 = vrot.slane %v945, 1
      %v1097 = vrot.slane %v946, 1
      %v1098 = vsel %vm1055, %v1096, %v1097
      %v1099 = vrot.slane %v947, 1
      %v1100 = vsel %vm1055, %v1097, %v1099
      %v1101 = vrot.slane %v948, 1
      %v1102 = vrot.slane %v949, 1
      %v1103 = vsel %vm1055, %v1101, %v1102
      %v1104 = vrot.slane %v950, 1
      %v1105 = vsel %vm1055, %v1102, %v1104
      %v1106 = vrot.slane %v951, 1
      %v1107 = vrot.slane %v952, 1
      %v1108 = vsel %vm1055, %v1106, %v1107
      %v1109 = vrot.slane %v953, 1
      %v1110 = vsel %vm1055, %v1107, %v1109
      %v1111 = vrot.slane %v954, 1
      %v1112 = vrot.slane %v955, 1
      %v1113 = vsel %vm1055, %v1111, %v1112
      %v1114 = vrot.slane %v956, 1
      %v1115 = vsel %vm1055, %v1112, %v1114
      %v1116 = vrot.slane %v957, 1
      %v1117 = vrot.slane %v958, 1
      %v1118 = vsel %vm1055, %v1116, %v1117
      %v1119 = vrot.slane %v959, 1
      %v1120 = vsel %vm1055, %v1117, %v1119
      %v1121 = vrot.slane %v960, 1
      %v1122 = vrot.slane %v961, 1
      %v1123 = vsel %vm1055, %v1121, %v1122
      %v1124 = vrot.slane %v962, 1
      %v1125 = vsel %vm1055, %v1122, %v1124
      %v1126 = vrot.slane %v963, 1
      %v1127 = vrot.slane %v964, 1
      %v1128 = vsel %vm1055, %v1126, %v1127
      %v1129 = vrot.slane %v965, 1
      %v1130 = vsel %vm1055, %v1127, %v1129
      %v1131 = vrot.slane %v966, 1
      %v1132 = vrot.slane %v967, 1
      %v1133 = vsel %vm1055, %v1131, %v1132
      %v1134 = vrot.slane %v968, 1
      %v1135 = vsel %vm1055, %v1132, %v1134
      %v1168 = vpack.c.bf16 %v1060, %v1058
      %v1169 = vpack.c.bf16 %v1065, %v1063
      %v1170 = vpack.c.bf16 %v1070, %v1068
      %v1171 = vpack.c.bf16 %v1075, %v1073
      %v1172 = vpack.c.bf16 %v1080, %v1078
      %v1173 = vpack.c.bf16 %v1085, %v1083
      %v1174 = vpack.c.bf16 %v1090, %v1088
      %v1175 = vpack.c.bf16 %v1095, %v1093
      %v1176 = vpack.c.bf16 %v1100, %v1098
      %v1177 = vpack.c.bf16 %v1105, %v1103
      %v1178 = vpack.c.bf16 %v1110, %v1108
      %v1179 = vpack.c.bf16 %v1115, %v1113
      %v1180 = vpack.c.bf16 %v1120, %v1118
      %v1181 = vpack.c.bf16 %v1125, %v1123
      %v1182 = vpack.c.bf16 %v1130, %v1128
      %v1183 = vpack.c.bf16 %v1135, %v1133
      %s1184 = scalar_lea.vmem %s1, 64
      %v1185 = vld [vmem:[%s1184] sm:$0xf]
      %v1186 = vld [vmem:[%s1184 + $0x4] sm:$0xf]
      %v1187 = vld [vmem:[%s1184 + $0x8] sm:$0xf]
      %v1188 = vld [vmem:[%s1184 + $0xc] sm:$0xf]
      %v1189 = vld [vmem:[%s1184 + $0x10] sm:$0xf]
      %v1190 = vld [vmem:[%s1184 + $0x14] sm:$0xf]
      %v1191 = vld [vmem:[%s1184 + $0x18] sm:$0xf]
      %v1192 = vld [vmem:[%s1184 + $0x1c] sm:$0xf]
      %v1193 = vld [vmem:[%s1184 + $0x20] sm:$0xf]
      %v1194 = vld [vmem:[%s1184 + $0x24] sm:$0xf]
      %v1195 = vld [vmem:[%s1184 + $0x28] sm:$0xf]
      %v1196 = vld [vmem:[%s1184 + $0x2c] sm:$0xf]
      %v1197 = vld [vmem:[%s1184 + $0x30] sm:$0xf]
      %v1198 = vld [vmem:[%s1184 + $0x34] sm:$0xf]
      %v1199 = vld [vmem:[%s1184 + $0x38] sm:$0xf]
      %v1200 = vld [vmem:[%s1184 + $0x3c] sm:$0xf]
      %v1217 = vunpack.c.l.b16 %v1185
      %v1218 = vunpack.c.l.b16 %v1186
      %v1219 = vunpack.c.l.b16 %v1187
      %v1220 = vunpack.c.l.b16 %v1188
      %v1221 = vunpack.c.l.b16 %v1189
      %v1222 = vunpack.c.l.b16 %v1190
      %v1223 = vunpack.c.l.b16 %v1191
      %v1224 = vunpack.c.l.b16 %v1192
      %v1225 = vunpack.c.l.b16 %v1193
      %v1226 = vunpack.c.l.b16 %v1194
      %v1227 = vunpack.c.l.b16 %v1195
      %v1228 = vunpack.c.l.b16 %v1196
      %v1229 = vunpack.c.l.b16 %v1197
      %v1230 = vunpack.c.l.b16 %v1198
      %v1231 = vunpack.c.l.b16 %v1199
      %v1232 = vunpack.c.l.b16 %v1200
      %v1233 = vpack.c.b16 %v1218, %v1217
      %v1234 = vpack.c.b16 %v1220, %v1219
      %v1235 = vpack.c.b16 %v1222, %v1221
      %v1236 = vpack.c.b16 %v1224, %v1223
      %v1237 = vpack.c.b16 %v1226, %v1225
      %v1238 = vpack.c.b16 %v1228, %v1227
      %v1239 = vpack.c.b16 %v1230, %v1229
      %v1240 = vpack.c.b16 %v1232, %v1231
      %1249 = vmatpush.bf16.msra.mxu0 %v1240
      %1250 = vmatpush.bf16.msra.mxu0 %v1239
      %1251 = vmatpush.bf16.msra.mxu0 %v1238
      %1252 = vmatpush.bf16.msra.mxu0 %v1237
      %1253 = vmatpush.bf16.msra.mxu0 %v1236
      %1254 = vmatpush.bf16.msra.mxu0 %v1235
      %1255 = vmatpush.bf16.msra.mxu0 %v1234
      %1256 = vmatpush.bf16.msra.mxu0 %v1233
      %1257 = vmatmul.bf16.gmra.mxu0 %v1168
      %v1258 = vpop.f32.mrf.mxu0
      %v1259 = vadd.f32 0.0, %v1258
      %v1260 = vpop.f32.mrf.mxu0
      %v1261 = vadd.f32 0.0, %v1260
      %1262 = vmatmul.bf16.gmra.mxu0 %v1169
      %v1263 = vpop.f32.mrf.mxu0
      %v1264 = vadd.f32 0.0, %v1263
      %v1265 = vpop.f32.mrf.mxu0
      %v1266 = vadd.f32 0.0, %v1265
      %1267 = vmatmul.bf16.gmra.mxu0 %v1170
      %v1268 = vpop.f32.mrf.mxu0
      %v1269 = vadd.f32 0.0, %v1268
      %v1270 = vpop.f32.mrf.mxu0
      %v1271 = vadd.f32 0.0, %v1270
      %1272 = vmatmul.bf16.gmra.mxu0 %v1171
      %v1273 = vpop.f32.mrf.mxu0
      %v1274 = vadd.f32 0.0, %v1273
      %v1275 = vpop.f32.mrf.mxu0
      %v1276 = vadd.f32 0.0, %v1275
      %1277 = vmatmul.bf16.gmra.mxu0 %v1172
      %v1278 = vpop.f32.mrf.mxu0
      %v1279 = vadd.f32 0.0, %v1278
      %v1280 = vpop.f32.mrf.mxu0
      %v1281 = vadd.f32 0.0, %v1280
      %1282 = vmatmul.bf16.gmra.mxu0 %v1173
      %v1283 = vpop.f32.mrf.mxu0
      %v1284 = vadd.f32 0.0, %v1283
      %v1285 = vpop.f32.mrf.mxu0
      %v1286 = vadd.f32 0.0, %v1285
      %1287 = vmatmul.bf16.gmra.mxu0 %v1174
      %v1288 = vpop.f32.mrf.mxu0
      %v1289 = vadd.f32 0.0, %v1288
      %v1290 = vpop.f32.mrf.mxu0
      %v1291 = vadd.f32 0.0, %v1290
      %1292 = vmatmul.bf16.gmra.mxu0 %v1175
      %v1293 = vpop.f32.mrf.mxu0
      %v1294 = vadd.f32 0.0, %v1293
      %v1295 = vpop.f32.mrf.mxu0
      %v1296 = vadd.f32 0.0, %v1295
      %1297 = vmatmul.bf16.gmra.mxu0 %v1176
      %v1298 = vpop.f32.mrf.mxu0
      %v1299 = vadd.f32 0.0, %v1298
      %v1300 = vpop.f32.mrf.mxu0
      %v1301 = vadd.f32 0.0, %v1300
      %1302 = vmatmul.bf16.gmra.mxu0 %v1177
      %v1303 = vpop.f32.mrf.mxu0
      %v1304 = vadd.f32 0.0, %v1303
      %v1305 = vpop.f32.mrf.mxu0
      %v1306 = vadd.f32 0.0, %v1305
      %1307 = vmatmul.bf16.gmra.mxu0 %v1178
      %v1308 = vpop.f32.mrf.mxu0
      %v1309 = vadd.f32 0.0, %v1308
      %v1310 = vpop.f32.mrf.mxu0
      %v1311 = vadd.f32 0.0, %v1310
      %1312 = vmatmul.bf16.gmra.mxu0 %v1179
      %v1313 = vpop.f32.mrf.mxu0
      %v1314 = vadd.f32 0.0, %v1313
      %v1315 = vpop.f32.mrf.mxu0
      %v1316 = vadd.f32 0.0, %v1315
      %1317 = vmatmul.bf16.gmra.mxu0 %v1180
      %v1318 = vpop.f32.mrf.mxu0
      %v1319 = vadd.f32 0.0, %v1318
      %v1320 = vpop.f32.mrf.mxu0
      %v1321 = vadd.f32 0.0, %v1320
      %1322 = vmatmul.bf16.gmra.mxu0 %v1181
      %v1323 = vpop.f32.mrf.mxu0
      %v1324 = vadd.f32 0.0, %v1323
      %v1325 = vpop.f32.mrf.mxu0
      %v1326 = vadd.f32 0.0, %v1325
      %1327 = vmatmul.bf16.gmra.mxu0 %v1182
      %v1328 = vpop.f32.mrf.mxu0
      %v1329 = vadd.f32 0.0, %v1328
      %v1330 = vpop.f32.mrf.mxu0
      %v1331 = vadd.f32 0.0, %v1330
      %1332 = vmatmul.bf16.gmra.mxu0 %v1183
      %v1333 = vpop.f32.mrf.mxu0
      %v1334 = vadd.f32 0.0, %v1333
      %v1335 = vpop.f32.mrf.mxu0
      %v1336 = vadd.f32 0.0, %v1335
      %1337 = vdwg.mxu0
      %v1354 = vunpack.c.l.b16 %v991
      %v1355 = vunpack.c.l.b16 %v992
      %v1356 = vunpack.c.l.b16 %v993
      %v1357 = vunpack.c.l.b16 %v994
      %v1358 = vunpack.c.l.b16 %v995
      %v1359 = vunpack.c.l.b16 %v996
      %v1360 = vunpack.c.l.b16 %v997
      %v1361 = vunpack.c.l.b16 %v998
      %v1362 = vunpack.c.l.b16 %v999
      %v1363 = vunpack.c.l.b16 %v1000
      %v1364 = vunpack.c.l.b16 %v1001
      %v1365 = vunpack.c.l.b16 %v1002
      %v1366 = vunpack.c.l.b16 %v1003
      %v1367 = vunpack.c.l.b16 %v1004
      %v1368 = vunpack.c.l.b16 %v1005
      %v1369 = vunpack.c.l.b16 %v1006
      %v1370 = vpack.c.b16 %v1355, %v1354
      %v1371 = vpack.c.b16 %v1357, %v1356
      %v1372 = vpack.c.b16 %v1359, %v1358
      %v1373 = vpack.c.b16 %v1361, %v1360
      %v1374 = vpack.c.b16 %v1363, %v1362
      %v1375 = vpack.c.b16 %v1365, %v1364
      %v1376 = vpack.c.b16 %v1367, %v1366
      %v1377 = vpack.c.b16 %v1369, %v1368
      %1386 = vmatpush.bf16.msra.mxu0 %v1377
      %1387 = vmatpush.bf16.msra.mxu0 %v1376
      %1388 = vmatpush.bf16.msra.mxu0 %v1375
      %1389 = vmatpush.bf16.msra.mxu0 %v1374
      %1390 = vmatpush.bf16.msra.mxu0 %v1373
      %1391 = vmatpush.bf16.msra.mxu0 %v1372
      %1392 = vmatpush.bf16.msra.mxu0 %v1371
      %1393 = vmatpush.bf16.msra.mxu0 %v1370
      %1394 = vmatmul.bf16.gmra.mxu0 %v975
      %v1395 = vpop.f32.mrf.mxu0
      %v1396 = vadd.f32 %v1259, %v1395
      %v1397 = vpop.f32.mrf.mxu0
      %v1398 = vadd.f32 %v1261, %v1397
      %1399 = vmatmul.bf16.gmra.mxu0 %v976
      %v1400 = vpop.f32.mrf.mxu0
      %v1401 = vadd.f32 %v1264, %v1400
      %v1402 = vpop.f32.mrf.mxu0
      %v1403 = vadd.f32 %v1266, %v1402
      %1404 = vmatmul.bf16.gmra.mxu0 %v977
      %v1405 = vpop.f32.mrf.mxu0
      %v1406 = vadd.f32 %v1269, %v1405
      %v1407 = vpop.f32.mrf.mxu0
      %v1408 = vadd.f32 %v1271, %v1407
      %1409 = vmatmul.bf16.gmra.mxu0 %v978
      %v1410 = vpop.f32.mrf.mxu0
      %v1411 = vadd.f32 %v1274, %v1410
      %v1412 = vpop.f32.mrf.mxu0
      %v1413 = vadd.f32 %v1276, %v1412
      %1414 = vmatmul.bf16.gmra.mxu0 %v979
      %v1415 = vpop.f32.mrf.mxu0
      %v1416 = vadd.f32 %v1279, %v1415
      %v1417 = vpop.f32.mrf.mxu0
      %v1418 = vadd.f32 %v1281, %v1417
      %1419 = vmatmul.bf16.gmra.mxu0 %v980
      %v1420 = vpop.f32.mrf.mxu0
      %v1421 = vadd.f32 %v1284, %v1420
      %v1422 = vpop.f32.mrf.mxu0
      %v1423 = vadd.f32 %v1286, %v1422
      %1424 = vmatmul.bf16.gmra.mxu0 %v981
      %v1425 = vpop.f32.mrf.mxu0
      %v1426 = vadd.f32 %v1289, %v1425
      %v1427 = vpop.f32.mrf.mxu0
      %v1428 = vadd.f32 %v1291, %v1427
      %1429 = vmatmul.bf16.gmra.mxu0 %v982
      %v1430 = vpop.f32.mrf.mxu0
      %v1431 = vadd.f32 %v1294, %v1430
      %v1432 = vpop.f32.mrf.mxu0
      %v1433 = vadd.f32 %v1296, %v1432
      %1434 = vmatmul.bf16.gmra.mxu0 %v983
      %v1435 = vpop.f32.mrf.mxu0
      %v1436 = vadd.f32 %v1299, %v1435
      %v1437 = vpop.f32.mrf.mxu0
      %v1438 = vadd.f32 %v1301, %v1437
      %1439 = vmatmul.bf16.gmra.mxu0 %v984
      %v1440 = vpop.f32.mrf.mxu0
      %v1441 = vadd.f32 %v1304, %v1440
      %v1442 = vpop.f32.mrf.mxu0
      %v1443 = vadd.f32 %v1306, %v1442
      %1444 = vmatmul.bf16.gmra.mxu0 %v985
      %v1445 = vpop.f32.mrf.mxu0
      %v1446 = vadd.f32 %v1309, %v1445
      %v1447 = vpop.f32.mrf.mxu0
      %v1448 = vadd.f32 %v1311, %v1447
      %1449 = vmatmul.bf16.gmra.mxu0 %v986
      %v1450 = vpop.f32.mrf.mxu0
      %v1451 = vadd.f32 %v1314, %v1450
      %v1452 = vpop.f32.mrf.mxu0
      %v1453 = vadd.f32 %v1316, %v1452
      %1454 = vmatmul.bf16.gmra.mxu0 %v987
      %v1455 = vpop.f32.mrf.mxu0
      %v1456 = vadd.f32 %v1319, %v1455
      %v1457 = vpop.f32.mrf.mxu0
      %v1458 = vadd.f32 %v1321, %v1457
      %1459 = vmatmul.bf16.gmra.mxu0 %v988
      %v1460 = vpop.f32.mrf.mxu0
      %v1461 = vadd.f32 %v1324, %v1460
      %v1462 = vpop.f32.mrf.mxu0
      %v1463 = vadd.f32 %v1326, %v1462
      %1464 = vmatmul.bf16.gmra.mxu0 %v989
      %v1465 = vpop.f32.mrf.mxu0
      %v1466 = vadd.f32 %v1329, %v1465
      %v1467 = vpop.f32.mrf.mxu0
      %v1468 = vadd.f32 %v1331, %v1467
      %1469 = vmatmul.bf16.gmra.mxu0 %v990
      %v1470 = vpop.f32.mrf.mxu0
      %v1471 = vadd.f32 %v1334, %v1470
      %v1472 = vpop.f32.mrf.mxu0
      %v1473 = vadd.f32 %v1336, %v1472
      %1474 = vdwg.mxu0
      %vm1475 = vcmask 1045504
      %v1476 = vrot.slane %v921, 2
      %v1477 = vrot.slane %v922, 2
      %v1478 = vsel %vm1475, %v1476, %v1477
      %v1479 = vrot.slane %v923, 2
      %v1480 = vsel %vm1475, %v1477, %v1479
      %v1481 = vrot.slane %v924, 2
      %v1482 = vrot.slane %v925, 2
      %v1483 = vsel %vm1475, %v1481, %v1482
      %v1484 = vrot.slane %v926, 2
      %v1485 = vsel %vm1475, %v1482, %v1484
      %v1486 = vrot.slane %v927, 2
      %v1487 = vrot.slane %v928, 2
      %v1488 = vsel %vm1475, %v1486, %v1487
      %v1489 = vrot.slane %v929, 2
      %v1490 = vsel %vm1475, %v1487, %v1489
      %v1491 = vrot.slane %v930, 2
      %v1492 = vrot.slane %v931, 2
      %v1493 = vsel %vm1475, %v1491, %v1492
      %v1494 = vrot.slane %v932, 2
      %v1495 = vsel %vm1475, %v1492, %v1494
      %v1496 = vrot.slane %v933, 2
      %v1497 = vrot.slane %v934, 2
      %v1498 = vsel %vm1475, %v1496, %v1497
      %v1499 = vrot.slane %v935, 2
      %v1500 = vsel %vm1475, %v1497, %v1499
      %v1501 = vrot.slane %v936, 2
      %v1502 = vrot.slane %v937, 2
      %v1503 = vsel %vm1475, %v1501, %v1502
      %v1504 = vrot.slane %v938, 2
      %v1505 = vsel %vm1475, %v1502, %v1504
      %v1506 = vrot.slane %v939, 2
      %v1507 = vrot.slane %v940, 2
      %v1508 = vsel %vm1475, %v1506, %v1507
      %v1509 = vrot.slane %v941, 2
      %v1510 = vsel %vm1475, %v1507, %v1509
      %v1511 = vrot.slane %v942, 2
      %v1512 = vrot.slane %v943, 2
      %v1513 = vsel %vm1475, %v1511, %v1512
      %v1514 = vrot.slane %v944, 2
      %v1515 = vsel %vm1475, %v1512, %v1514
      %v1516 = vrot.slane %v945, 2
      %v1517 = vrot.slane %v946, 2
      %v1518 = vsel %vm1475, %v1516, %v1517
      %v1519 = vrot.slane %v947, 2
      %v1520 = vsel %vm1475, %v1517, %v1519
      %v1521 = vrot.slane %v948, 2
      %v1522 = vrot.slane %v949, 2
      %v1523 = vsel %vm1475, %v1521, %v1522
      %v1524 = vrot.slane %v950, 2
      %v1525 = vsel %vm1475, %v1522, %v1524
      %v1526 = vrot.slane %v951, 2
      %v1527 = vrot.slane %v952, 2
      %v1528 = vsel %vm1475, %v1526, %v1527
      %v1529 = vrot.slane %v953, 2
      %v1530 = vsel %vm1475, %v1527, %v1529
      %v1531 = vrot.slane %v954, 2
      %v1532 = vrot.slane %v955, 2
      %v1533 = vsel %vm1475, %v1531, %v1532
      %v1534 = vrot.slane %v956, 2
      %v1535 = vsel %vm1475, %v1532, %v1534
      %v1536 = vrot.slane %v957, 2
      %v1537 = vrot.slane %v958, 2
      %v1538 = vsel %vm1475, %v1536, %v1537
      %v1539 = vrot.slane %v959, 2
      %v1540 = vsel %vm1475, %v1537, %v1539
      %v1541 = vrot.slane %v960, 2
      %v1542 = vrot.slane %v961, 2
      %v1543 = vsel %vm1475, %v1541, %v1542
      %v1544 = vrot.slane %v962, 2
      %v1545 = vsel %vm1475, %v1542, %v1544
      %v1546 = vrot.slane %v963, 2
      %v1547 = vrot.slane %v964, 2
      %v1548 = vsel %vm1475, %v1546, %v1547
      %v1549 = vrot.slane %v965, 2
      %v1550 = vsel %vm1475, %v1547, %v1549
      %v1551 = vrot.slane %v966, 2
      %v1552 = vrot.slane %v967, 2
      %v1553 = vsel %vm1475, %v1551, %v1552
      %v1554 = vrot.slane %v968, 2
      %v1555 = vsel %vm1475, %v1552, %v1554
      %v1588 = vpack.c.bf16 %v1480, %v1478
      %v1589 = vpack.c.bf16 %v1485, %v1483
      %v1590 = vpack.c.bf16 %v1490, %v1488
      %v1591 = vpack.c.bf16 %v1495, %v1493
      %v1592 = vpack.c.bf16 %v1500, %v1498
      %v1593 = vpack.c.bf16 %v1505, %v1503
      %v1594 = vpack.c.bf16 %v1510, %v1508
      %v1595 = vpack.c.bf16 %v1515, %v1513
      %v1596 = vpack.c.bf16 %v1520, %v1518
      %v1597 = vpack.c.bf16 %v1525, %v1523
      %v1598 = vpack.c.bf16 %v1530, %v1528
      %v1599 = vpack.c.bf16 %v1535, %v1533
      %v1600 = vpack.c.bf16 %v1540, %v1538
      %v1601 = vpack.c.bf16 %v1545, %v1543
      %v1602 = vpack.c.bf16 %v1550, %v1548
      %v1603 = vpack.c.bf16 %v1555, %v1553
      %s1604 = scalar_lea.vmem %s1, 128
      %v1605 = vld [vmem:[%s1604] sm:$0xf]
      %v1606 = vld [vmem:[%s1604 + $0x4] sm:$0xf]
      %v1607 = vld [vmem:[%s1604 + $0x8] sm:$0xf]
      %v1608 = vld [vmem:[%s1604 + $0xc] sm:$0xf]
      %v1609 = vld [vmem:[%s1604 + $0x10] sm:$0xf]
      %v1610 = vld [vmem:[%s1604 + $0x14] sm:$0xf]
      %v1611 = vld [vmem:[%s1604 + $0x18] sm:$0xf]
      %v1612 = vld [vmem:[%s1604 + $0x1c] sm:$0xf]
      %v1613 = vld [vmem:[%s1604 + $0x20] sm:$0xf]
      %v1614 = vld [vmem:[%s1604 + $0x24] sm:$0xf]
      %v1615 = vld [vmem:[%s1604 + $0x28] sm:$0xf]
      %v1616 = vld [vmem:[%s1604 + $0x2c] sm:$0xf]
      %v1617 = vld [vmem:[%s1604 + $0x30] sm:$0xf]
      %v1618 = vld [vmem:[%s1604 + $0x34] sm:$0xf]
      %v1619 = vld [vmem:[%s1604 + $0x38] sm:$0xf]
      %v1620 = vld [vmem:[%s1604 + $0x3c] sm:$0xf]
      %v1637 = vunpack.c.l.b16 %v1605
      %v1638 = vunpack.c.l.b16 %v1606
      %v1639 = vunpack.c.l.b16 %v1607
      %v1640 = vunpack.c.l.b16 %v1608
      %v1641 = vunpack.c.l.b16 %v1609
      %v1642 = vunpack.c.l.b16 %v1610
      %v1643 = vunpack.c.l.b16 %v1611
      %v1644 = vunpack.c.l.b16 %v1612
      %v1645 = vunpack.c.l.b16 %v1613
      %v1646 = vunpack.c.l.b16 %v1614
      %v1647 = vunpack.c.l.b16 %v1615
      %v1648 = vunpack.c.l.b16 %v1616
      %v1649 = vunpack.c.l.b16 %v1617
      %v1650 = vunpack.c.l.b16 %v1618
      %v1651 = vunpack.c.l.b16 %v1619
      %v1652 = vunpack.c.l.b16 %v1620
      %v1653 = vpack.c.b16 %v1638, %v1637
      %v1654 = vpack.c.b16 %v1640, %v1639
      %v1655 = vpack.c.b16 %v1642, %v1641
      %v1656 = vpack.c.b16 %v1644, %v1643
      %v1657 = vpack.c.b16 %v1646, %v1645
      %v1658 = vpack.c.b16 %v1648, %v1647
      %v1659 = vpack.c.b16 %v1650, %v1649
      %v1660 = vpack.c.b16 %v1652, %v1651
      %1669 = vmatpush.bf16.msra.mxu0 %v1660
      %1670 = vmatpush.bf16.msra.mxu0 %v1659
      %1671 = vmatpush.bf16.msra.mxu0 %v1658
      %1672 = vmatpush.bf16.msra.mxu0 %v1657
      %1673 = vmatpush.bf16.msra.mxu0 %v1656
      %1674 = vmatpush.bf16.msra.mxu0 %v1655
      %1675 = vmatpush.bf16.msra.mxu0 %v1654
      %1676 = vmatpush.bf16.msra.mxu0 %v1653
      %1677 = vmatmul.bf16.gmra.mxu0 %v1588
      %v1678 = vpop.f32.mrf.mxu0
      %v1679 = vadd.f32 0.0, %v1678
      %v1680 = vpop.f32.mrf.mxu0
      %v1681 = vadd.f32 0.0, %v1680
      %1682 = vmatmul.bf16.gmra.mxu0 %v1589
      %v1683 = vpop.f32.mrf.mxu0
      %v1684 = vadd.f32 0.0, %v1683
      %v1685 = vpop.f32.mrf.mxu0
      %v1686 = vadd.f32 0.0, %v1685
      %1687 = vmatmul.bf16.gmra.mxu0 %v1590
      %v1688 = vpop.f32.mrf.mxu0
      %v1689 = vadd.f32 0.0, %v1688
      %v1690 = vpop.f32.mrf.mxu0
      %v1691 = vadd.f32 0.0, %v1690
      %1692 = vmatmul.bf16.gmra.mxu0 %v1591
      %v1693 = vpop.f32.mrf.mxu0
      %v1694 = vadd.f32 0.0, %v1693
      %v1695 = vpop.f32.mrf.mxu0
      %v1696 = vadd.f32 0.0, %v1695
      %1697 = vmatmul.bf16.gmra.mxu0 %v1592
      %v1698 = vpop.f32.mrf.mxu0
      %v1699 = vadd.f32 0.0, %v1698
      %v1700 = vpop.f32.mrf.mxu0
      %v1701 = vadd.f32 0.0, %v1700
      %1702 = vmatmul.bf16.gmra.mxu0 %v1593
      %v1703 = vpop.f32.mrf.mxu0
      %v1704 = vadd.f32 0.0, %v1703
      %v1705 = vpop.f32.mrf.mxu0
      %v1706 = vadd.f32 0.0, %v1705
      %1707 = vmatmul.bf16.gmra.mxu0 %v1594
      %v1708 = vpop.f32.mrf.mxu0
      %v1709 = vadd.f32 0.0, %v1708
      %v1710 = vpop.f32.mrf.mxu0
      %v1711 = vadd.f32 0.0, %v1710
      %1712 = vmatmul.bf16.gmra.mxu0 %v1595
      %v1713 = vpop.f32.mrf.mxu0
      %v1714 = vadd.f32 0.0, %v1713
      %v1715 = vpop.f32.mrf.mxu0
      %v1716 = vadd.f32 0.0, %v1715
      %1717 = vmatmul.bf16.gmra.mxu0 %v1596
      %v1718 = vpop.f32.mrf.mxu0
      %v1719 = vadd.f32 0.0, %v1718
      %v1720 = vpop.f32.mrf.mxu0
      %v1721 = vadd.f32 0.0, %v1720
      %1722 = vmatmul.bf16.gmra.mxu0 %v1597
      %v1723 = vpop.f32.mrf.mxu0
      %v1724 = vadd.f32 0.0, %v1723
      %v1725 = vpop.f32.mrf.mxu0
      %v1726 = vadd.f32 0.0, %v1725
      %1727 = vmatmul.bf16.gmra.mxu0 %v1598
      %v1728 = vpop.f32.mrf.mxu0
      %v1729 = vadd.f32 0.0, %v1728
      %v1730 = vpop.f32.mrf.mxu0
      %v1731 = vadd.f32 0.0, %v1730
      %1732 = vmatmul.bf16.gmra.mxu0 %v1599
      %v1733 = vpop.f32.mrf.mxu0
      %v1734 = vadd.f32 0.0, %v1733
      %v1735 = vpop.f32.mrf.mxu0
      %v1736 = vadd.f32 0.0, %v1735
      %1737 = vmatmul.bf16.gmra.mxu0 %v1600
      %v1738 = vpop.f32.mrf.mxu0
      %v1739 = vadd.f32 0.0, %v1738
      %v1740 = vpop.f32.mrf.mxu0
      %v1741 = vadd.f32 0.0, %v1740
      %1742 = vmatmul.bf16.gmra.mxu0 %v1601
      %v1743 = vpop.f32.mrf.mxu0
      %v1744 = vadd.f32 0.0, %v1743
      %v1745 = vpop.f32.mrf.mxu0
      %v1746 = vadd.f32 0.0, %v1745
      %1747 = vmatmul.bf16.gmra.mxu0 %v1602
      %v1748 = vpop.f32.mrf.mxu0
      %v1749 = vadd.f32 0.0, %v1748
      %v1750 = vpop.f32.mrf.mxu0
      %v1751 = vadd.f32 0.0, %v1750
      %1752 = vmatmul.bf16.gmra.mxu0 %v1603
      %v1753 = vpop.f32.mrf.mxu0
      %v1754 = vadd.f32 0.0, %v1753
      %v1755 = vpop.f32.mrf.mxu0
      %v1756 = vadd.f32 0.0, %v1755
      %1757 = vdwg.mxu0
      %v1758 = vadd.f32 %v1396, %v1679
      %v1759 = vadd.f32 %v1398, %v1681
      %v1760 = vadd.f32 %v1401, %v1684
      %v1761 = vadd.f32 %v1403, %v1686
      %v1762 = vadd.f32 %v1406, %v1689
      %v1763 = vadd.f32 %v1408, %v1691
      %v1764 = vadd.f32 %v1411, %v1694
      %v1765 = vadd.f32 %v1413, %v1696
      %v1766 = vadd.f32 %v1416, %v1699
      %v1767 = vadd.f32 %v1418, %v1701
      %v1768 = vadd.f32 %v1421, %v1704
      %v1769 = vadd.f32 %v1423, %v1706
      %v1770 = vadd.f32 %v1426, %v1709
      %v1771 = vadd.f32 %v1428, %v1711
      %v1772 = vadd.f32 %v1431, %v1714
      %v1773 = vadd.f32 %v1433, %v1716
      %v1774 = vadd.f32 %v1436, %v1719
      %v1775 = vadd.f32 %v1438, %v1721
      %v1776 = vadd.f32 %v1441, %v1724
      %v1777 = vadd.f32 %v1443, %v1726
      %v1778 = vadd.f32 %v1446, %v1729
      %v1779 = vadd.f32 %v1448, %v1731
      %v1780 = vadd.f32 %v1451, %v1734
      %v1781 = vadd.f32 %v1453, %v1736
      %v1782 = vadd.f32 %v1456, %v1739
      %v1783 = vadd.f32 %v1458, %v1741
      %v1784 = vadd.f32 %v1461, %v1744
      %v1785 = vadd.f32 %v1463, %v1746
      %v1786 = vadd.f32 %v1466, %v1749
      %v1787 = vadd.f32 %v1468, %v1751
      %v1788 = vadd.f32 %v1471, %v1754
      %v1789 = vadd.f32 %v1473, %v1756
      %v1790 = vpack.c.bf16 %v970, %v969
      %s1791 = scalar_lea.vmem %s1, 192
      %v1792 = vld [vmem:[%s1791] sm:$0xf]
      %v1793 = vld [vmem:[%s1791 + $0x4] sm:$0xf]
      %v1794 = vld [vmem:[%s1791 + $0x8] sm:$0xf]
      %v1795 = vld [vmem:[%s1791 + $0xc] sm:$0xf]
      %v1796 = vld [vmem:[%s1791 + $0x10] sm:$0xf]
      %v1797 = vld [vmem:[%s1791 + $0x14] sm:$0xf]
      %v1798 = vld [vmem:[%s1791 + $0x18] sm:$0xf]
      %v1799 = vld [vmem:[%s1791 + $0x1c] sm:$0xf]
      %v1800 = vld [vmem:[%s1791 + $0x20] sm:$0xf]
      %v1801 = vld [vmem:[%s1791 + $0x24] sm:$0xf]
      %v1802 = vld [vmem:[%s1791 + $0x28] sm:$0xf]
      %v1803 = vld [vmem:[%s1791 + $0x2c] sm:$0xf]
      %v1804 = vld [vmem:[%s1791 + $0x30] sm:$0xf]
      %v1805 = vld [vmem:[%s1791 + $0x34] sm:$0xf]
      %v1806 = vld [vmem:[%s1791 + $0x38] sm:$0xf]
      %v1807 = vld [vmem:[%s1791 + $0x3c] sm:$0xf]
      %v1824 = vunpack.c.l.b16 %v1792
      %v1825 = vunpack.c.l.b16 %v1793
      %v1826 = vunpack.c.l.b16 %v1794
      %v1827 = vunpack.c.l.b16 %v1795
      %v1828 = vunpack.c.l.b16 %v1796
      %v1829 = vunpack.c.l.b16 %v1797
      %v1830 = vunpack.c.l.b16 %v1798
      %v1831 = vunpack.c.l.b16 %v1799
      %v1832 = vunpack.c.l.b16 %v1800
      %v1833 = vunpack.c.l.b16 %v1801
      %v1834 = vunpack.c.l.b16 %v1802
      %v1835 = vunpack.c.l.b16 %v1803
      %v1836 = vunpack.c.l.b16 %v1804
      %v1837 = vunpack.c.l.b16 %v1805
      %v1838 = vunpack.c.l.b16 %v1806
      %v1839 = vunpack.c.l.b16 %v1807
      %v1840 = vpack.c.b16 %v1825, %v1824
      %v1841 = vpack.c.b16 %v1827, %v1826
      %v1842 = vpack.c.b16 %v1829, %v1828
      %v1843 = vpack.c.b16 %v1831, %v1830
      %v1844 = vpack.c.b16 %v1833, %v1832
      %v1845 = vpack.c.b16 %v1835, %v1834
      %v1846 = vpack.c.b16 %v1837, %v1836
      %v1847 = vpack.c.b16 %v1839, %v1838
      %1856 = vmatpush.bf16.msra.mxu0 %v1847
      %1857 = vmatpush.bf16.msra.mxu0 %v1846
      %1858 = vmatpush.bf16.msra.mxu0 %v1845
      %1859 = vmatpush.bf16.msra.mxu0 %v1844
      %1860 = vmatpush.bf16.msra.mxu0 %v1843
      %1861 = vmatpush.bf16.msra.mxu0 %v1842
      %1862 = vmatpush.bf16.msra.mxu0 %v1841
      %1863 = vmatpush.bf16.msra.mxu0 %v1840
      %1864 = vmatmul.bf16.gmra.mxu0 %v976
      %v1865 = vpop.f32.mrf.mxu0
      %v1866 = vadd.f32 0.0, %v1865
      %v1867 = vpop.f32.mrf.mxu0
      %v1868 = vadd.f32 0.0, %v1867
      %1869 = vmatmul.bf16.gmra.mxu0 %v977
      %v1870 = vpop.f32.mrf.mxu0
      %v1871 = vadd.f32 0.0, %v1870
      %v1872 = vpop.f32.mrf.mxu0
      %v1873 = vadd.f32 0.0, %v1872
      %1874 = vmatmul.bf16.gmra.mxu0 %v978
      %v1875 = vpop.f32.mrf.mxu0
      %v1876 = vadd.f32 0.0, %v1875
      %v1877 = vpop.f32.mrf.mxu0
      %v1878 = vadd.f32 0.0, %v1877
      %1879 = vmatmul.bf16.gmra.mxu0 %v979
      %v1880 = vpop.f32.mrf.mxu0
      %v1881 = vadd.f32 0.0, %v1880
      %v1882 = vpop.f32.mrf.mxu0
      %v1883 = vadd.f32 0.0, %v1882
      %1884 = vmatmul.bf16.gmra.mxu0 %v980
      %v1885 = vpop.f32.mrf.mxu0
      %v1886 = vadd.f32 0.0, %v1885
      %v1887 = vpop.f32.mrf.mxu0
      %v1888 = vadd.f32 0.0, %v1887
      %1889 = vmatmul.bf16.gmra.mxu0 %v981
      %v1890 = vpop.f32.mrf.mxu0
      %v1891 = vadd.f32 0.0, %v1890
      %v1892 = vpop.f32.mrf.mxu0
      %v1893 = vadd.f32 0.0, %v1892
      %1894 = vmatmul.bf16.gmra.mxu0 %v982
      %v1895 = vpop.f32.mrf.mxu0
      %v1896 = vadd.f32 0.0, %v1895
      %v1897 = vpop.f32.mrf.mxu0
      %v1898 = vadd.f32 0.0, %v1897
      %1899 = vmatmul.bf16.gmra.mxu0 %v983
      %v1900 = vpop.f32.mrf.mxu0
      %v1901 = vadd.f32 0.0, %v1900
      %v1902 = vpop.f32.mrf.mxu0
      %v1903 = vadd.f32 0.0, %v1902
      %1904 = vmatmul.bf16.gmra.mxu0 %v984
      %v1905 = vpop.f32.mrf.mxu0
      %v1906 = vadd.f32 0.0, %v1905
      %v1907 = vpop.f32.mrf.mxu0
      %v1908 = vadd.f32 0.0, %v1907
      %1909 = vmatmul.bf16.gmra.mxu0 %v985
      %v1910 = vpop.f32.mrf.mxu0
      %v1911 = vadd.f32 0.0, %v1910
      %v1912 = vpop.f32.mrf.mxu0
      %v1913 = vadd.f32 0.0, %v1912
      %1914 = vmatmul.bf16.gmra.mxu0 %v986
      %v1915 = vpop.f32.mrf.mxu0
      %v1916 = vadd.f32 0.0, %v1915
      %v1917 = vpop.f32.mrf.mxu0
      %v1918 = vadd.f32 0.0, %v1917
      %1919 = vmatmul.bf16.gmra.mxu0 %v987
      %v1920 = vpop.f32.mrf.mxu0
      %v1921 = vadd.f32 0.0, %v1920
      %v1922 = vpop.f32.mrf.mxu0
      %v1923 = vadd.f32 0.0, %v1922
      %1924 = vmatmul.bf16.gmra.mxu0 %v988
      %v1925 = vpop.f32.mrf.mxu0
      %v1926 = vadd.f32 0.0, %v1925
      %v1927 = vpop.f32.mrf.mxu0
      %v1928 = vadd.f32 0.0, %v1927
      %1929 = vmatmul.bf16.gmra.mxu0 %v989
      %v1930 = vpop.f32.mrf.mxu0
      %v1931 = vadd.f32 0.0, %v1930
      %v1932 = vpop.f32.mrf.mxu0
      %v1933 = vadd.f32 0.0, %v1932
      %1934 = vmatmul.bf16.gmra.mxu0 %v990
      %v1935 = vpop.f32.mrf.mxu0
      %v1936 = vadd.f32 0.0, %v1935
      %v1937 = vpop.f32.mrf.mxu0
      %v1938 = vadd.f32 0.0, %v1937
      %1939 = vmatmul.bf16.gmra.mxu0 %v1790
      %v1940 = vpop.f32.mrf.mxu0
      %v1941 = vadd.f32 0.0, %v1940
      %v1942 = vpop.f32.mrf.mxu0
      %v1943 = vadd.f32 0.0, %v1942
      %1944 = vdwg.mxu0
      %v1945 = vadd.f32 %v1758, %v1866
      %v1946 = vadd.f32 %v1759, %v1868
      %v1947 = vadd.f32 %v1760, %v1871
      %v1948 = vadd.f32 %v1761, %v1873
      %v1949 = vadd.f32 %v1762, %v1876
      %v1950 = vadd.f32 %v1763, %v1878
      %v1951 = vadd.f32 %v1764, %v1881
      %v1952 = vadd.f32 %v1765, %v1883
      %v1953 = vadd.f32 %v1766, %v1886
      %v1954 = vadd.f32 %v1767, %v1888
      %v1955 = vadd.f32 %v1768, %v1891
      %v1956 = vadd.f32 %v1769, %v1893
      %v1957 = vadd.f32 %v1770, %v1896
      %v1958 = vadd.f32 %v1771, %v1898
      %v1959 = vadd.f32 %v1772, %v1901
      %v1960 = vadd.f32 %v1773, %v1903
      %v1961 = vadd.f32 %v1774, %v1906
      %v1962 = vadd.f32 %v1775, %v1908
      %v1963 = vadd.f32 %v1776, %v1911
      %v1964 = vadd.f32 %v1777, %v1913
      %v1965 = vadd.f32 %v1778, %v1916
      %v1966 = vadd.f32 %v1779, %v1918
      %v1967 = vadd.f32 %v1780, %v1921
      %v1968 = vadd.f32 %v1781, %v1923
      %v1969 = vadd.f32 %v1782, %v1926
      %v1970 = vadd.f32 %v1783, %v1928
      %v1971 = vadd.f32 %v1784, %v1931
      %v1972 = vadd.f32 %v1785, %v1933
      %v1973 = vadd.f32 %v1786, %v1936
      %v1974 = vadd.f32 %v1787, %v1938
      %v1975 = vadd.f32 %v1788, %v1941
      %v1976 = vadd.f32 %v1789, %v1943
      %v1980 = vrot.slane %v969, 1
      %v1981 = vrot.slane %v970, 1
      %v1982 = vsel %vm1055, %v1980, %v1981
      %v1983 = vrot.slane %v971, 1
      %v1984 = vsel %vm1055, %v1981, %v1983
      %v1987 = vpack.c.bf16 %v1984, %v1982
      %s1988 = scalar_lea.vmem %s1, 256
      %v1989 = vld [vmem:[%s1988] sm:$0xf]
      %v1990 = vld [vmem:[%s1988 + $0x4] sm:$0xf]
      %v1991 = vld [vmem:[%s1988 + $0x8] sm:$0xf]
      %v1992 = vld [vmem:[%s1988 + $0xc] sm:$0xf]
      %v1993 = vld [vmem:[%s1988 + $0x10] sm:$0xf]
      %v1994 = vld [vmem:[%s1988 + $0x14] sm:$0xf]
      %v1995 = vld [vmem:[%s1988 + $0x18] sm:$0xf]
      %v1996 = vld [vmem:[%s1988 + $0x1c] sm:$0xf]
      %v1997 = vld [vmem:[%s1988 + $0x20] sm:$0xf]
      %v1998 = vld [vmem:[%s1988 + $0x24] sm:$0xf]
      %v1999 = vld [vmem:[%s1988 + $0x28] sm:$0xf]
      %v2000 = vld [vmem:[%s1988 + $0x2c] sm:$0xf]
      %v2001 = vld [vmem:[%s1988 + $0x30] sm:$0xf]
      %v2002 = vld [vmem:[%s1988 + $0x34] sm:$0xf]
      %v2003 = vld [vmem:[%s1988 + $0x38] sm:$0xf]
      %v2004 = vld [vmem:[%s1988 + $0x3c] sm:$0xf]
      %v2021 = vunpack.c.l.b16 %v1989
      %v2022 = vunpack.c.l.b16 %v1990
      %v2023 = vunpack.c.l.b16 %v1991
      %v2024 = vunpack.c.l.b16 %v1992
      %v2025 = vunpack.c.l.b16 %v1993
      %v2026 = vunpack.c.l.b16 %v1994
      %v2027 = vunpack.c.l.b16 %v1995
      %v2028 = vunpack.c.l.b16 %v1996
      %v2029 = vunpack.c.l.b16 %v1997
      %v2030 = vunpack.c.l.b16 %v1998
      %v2031 = vunpack.c.l.b16 %v1999
      %v2032 = vunpack.c.l.b16 %v2000
      %v2033 = vunpack.c.l.b16 %v2001
      %v2034 = vunpack.c.l.b16 %v2002
      %v2035 = vunpack.c.l.b16 %v2003
      %v2036 = vunpack.c.l.b16 %v2004
      %v2037 = vpack.c.b16 %v2022, %v2021
      %v2038 = vpack.c.b16 %v2024, %v2023
      %v2039 = vpack.c.b16 %v2026, %v2025
      %v2040 = vpack.c.b16 %v2028, %v2027
      %v2041 = vpack.c.b16 %v2030, %v2029
      %v2042 = vpack.c.b16 %v2032, %v2031
      %v2043 = vpack.c.b16 %v2034, %v2033
      %v2044 = vpack.c.b16 %v2036, %v2035
      %2053 = vmatpush.bf16.msra.mxu0 %v2044
      %2054 = vmatpush.bf16.msra.mxu0 %v2043
      %2055 = vmatpush.bf16.msra.mxu0 %v2042
      %2056 = vmatpush.bf16.msra.mxu0 %v2041
      %2057 = vmatpush.bf16.msra.mxu0 %v2040
      %2058 = vmatpush.bf16.msra.mxu0 %v2039
      %2059 = vmatpush.bf16.msra.mxu0 %v2038
      %2060 = vmatpush.bf16.msra.mxu0 %v2037
      %2061 = vmatmul.bf16.gmra.mxu0 %v1169
      %v2062 = vpop.f32.mrf.mxu0
      %v2063 = vadd.f32 0.0, %v2062
      %v2064 = vpop.f32.mrf.mxu0
      %v2065 = vadd.f32 0.0, %v2064
      %2066 = vmatmul.bf16.gmra.mxu0 %v1170
      %v2067 = vpop.f32.mrf.mxu0
      %v2068 = vadd.f32 0.0, %v2067
      %v2069 = vpop.f32.mrf.mxu0
      %v2070 = vadd.f32 0.0, %v2069
      %2071 = vmatmul.bf16.gmra.mxu0 %v1171
      %v2072 = vpop.f32.mrf.mxu0
      %v2073 = vadd.f32 0.0, %v2072
      %v2074 = vpop.f32.mrf.mxu0
      %v2075 = vadd.f32 0.0, %v2074
      %2076 = vmatmul.bf16.gmra.mxu0 %v1172
      %v2077 = vpop.f32.mrf.mxu0
      %v2078 = vadd.f32 0.0, %v2077
      %v2079 = vpop.f32.mrf.mxu0
      %v2080 = vadd.f32 0.0, %v2079
      %2081 = vmatmul.bf16.gmra.mxu0 %v1173
      %v2082 = vpop.f32.mrf.mxu0
      %v2083 = vadd.f32 0.0, %v2082
      %v2084 = vpop.f32.mrf.mxu0
      %v2085 = vadd.f32 0.0, %v2084
      %2086 = vmatmul.bf16.gmra.mxu0 %v1174
      %v2087 = vpop.f32.mrf.mxu0
      %v2088 = vadd.f32 0.0, %v2087
      %v2089 = vpop.f32.mrf.mxu0
      %v2090 = vadd.f32 0.0, %v2089
      %2091 = vmatmul.bf16.gmra.mxu0 %v1175
      %v2092 = vpop.f32.mrf.mxu0
      %v2093 = vadd.f32 0.0, %v2092
      %v2094 = vpop.f32.mrf.mxu0
      %v2095 = vadd.f32 0.0, %v2094
      %2096 = vmatmul.bf16.gmra.mxu0 %v1176
      %v2097 = vpop.f32.mrf.mxu0
      %v2098 = vadd.f32 0.0, %v2097
      %v2099 = vpop.f32.mrf.mxu0
      %v2100 = vadd.f32 0.0, %v2099
      %2101 = vmatmul.bf16.gmra.mxu0 %v1177
      %v2102 = vpop.f32.mrf.mxu0
      %v2103 = vadd.f32 0.0, %v2102
      %v2104 = vpop.f32.mrf.mxu0
      %v2105 = vadd.f32 0.0, %v2104
      %2106 = vmatmul.bf16.gmra.mxu0 %v1178
      %v2107 = vpop.f32.mrf.mxu0
      %v2108 = vadd.f32 0.0, %v2107
      %v2109 = vpop.f32.mrf.mxu0
      %v2110 = vadd.f32 0.0, %v2109
      %2111 = vmatmul.bf16.gmra.mxu0 %v1179
      %v2112 = vpop.f32.mrf.mxu0
      %v2113 = vadd.f32 0.0, %v2112
      %v2114 = vpop.f32.mrf.mxu0
      %v2115 = vadd.f32 0.0, %v2114
      %2116 = vmatmul.bf16.gmra.mxu0 %v1180
      %v2117 = vpop.f32.mrf.mxu0
      %v2118 = vadd.f32 0.0, %v2117
      %v2119 = vpop.f32.mrf.mxu0
      %v2120 = vadd.f32 0.0, %v2119
      %2121 = vmatmul.bf16.gmra.mxu0 %v1181
      %v2122 = vpop.f32.mrf.mxu0
      %v2123 = vadd.f32 0.0, %v2122
      %v2124 = vpop.f32.mrf.mxu0
      %v2125 = vadd.f32 0.0, %v2124
      %2126 = vmatmul.bf16.gmra.mxu0 %v1182
      %v2127 = vpop.f32.mrf.mxu0
      %v2128 = vadd.f32 0.0, %v2127
      %v2129 = vpop.f32.mrf.mxu0
      %v2130 = vadd.f32 0.0, %v2129
      %2131 = vmatmul.bf16.gmra.mxu0 %v1183
      %v2132 = vpop.f32.mrf.mxu0
      %v2133 = vadd.f32 0.0, %v2132
      %v2134 = vpop.f32.mrf.mxu0
      %v2135 = vadd.f32 0.0, %v2134
      %2136 = vmatmul.bf16.gmra.mxu0 %v1987
      %v2137 = vpop.f32.mrf.mxu0
      %v2138 = vadd.f32 0.0, %v2137
      %v2139 = vpop.f32.mrf.mxu0
      %v2140 = vadd.f32 0.0, %v2139
      %2141 = vdwg.mxu0
      %v2142 = vadd.f32 %v1945, %v2063
      %v2143 = vadd.f32 %v1946, %v2065
      %v2144 = vadd.f32 %v1947, %v2068
      %v2145 = vadd.f32 %v1948, %v2070
      %v2146 = vadd.f32 %v1949, %v2073
      %v2147 = vadd.f32 %v1950, %v2075
      %v2148 = vadd.f32 %v1951, %v2078
      %v2149 = vadd.f32 %v1952, %v2080
      %v2150 = vadd.f32 %v1953, %v2083
      %v2151 = vadd.f32 %v1954, %v2085
      %v2152 = vadd.f32 %v1955, %v2088
      %v2153 = vadd.f32 %v1956, %v2090
      %v2154 = vadd.f32 %v1957, %v2093
      %v2155 = vadd.f32 %v1958, %v2095
      %v2156 = vadd.f32 %v1959, %v2098
      %v2157 = vadd.f32 %v1960, %v2100
      %v2158 = vadd.f32 %v1961, %v2103
      %v2159 = vadd.f32 %v1962, %v2105
      %v2160 = vadd.f32 %v1963, %v2108
      %v2161 = vadd.f32 %v1964, %v2110
      %v2162 = vadd.f32 %v1965, %v2113
      %v2163 = vadd.f32 %v1966, %v2115
      %v2164 = vadd.f32 %v1967, %v2118
      %v2165 = vadd.f32 %v1968, %v2120
      %v2166 = vadd.f32 %v1969, %v2123
      %v2167 = vadd.f32 %v1970, %v2125
      %v2168 = vadd.f32 %v1971, %v2128
      %v2169 = vadd.f32 %v1972, %v2130
      %v2170 = vadd.f32 %v1973, %v2133
      %v2171 = vadd.f32 %v1974, %v2135
      %v2172 = vadd.f32 %v1975, %v2138
      %v2173 = vadd.f32 %v1976, %v2140
      %v2174 = vrot.slane %v969, 2
      %v2175 = vrot.slane %v970, 2
      %v2176 = vsel %vm1475, %v2174, %v2175
      %v2177 = vrot.slane %v971, 2
      %v2178 = vsel %vm1475, %v2175, %v2177
      %v2181 = vpack.c.bf16 %v2178, %v2176
      %s2182 = scalar_lea.vmem %s1, 320
      %v2183 = vld [vmem:[%s2182] sm:$0xf]
      %v2184 = vld [vmem:[%s2182 + $0x4] sm:$0xf]
      %v2185 = vld [vmem:[%s2182 + $0x8] sm:$0xf]
      %v2186 = vld [vmem:[%s2182 + $0xc] sm:$0xf]
      %v2187 = vld [vmem:[%s2182 + $0x10] sm:$0xf]
      %v2188 = vld [vmem:[%s2182 + $0x14] sm:$0xf]
      %v2189 = vld [vmem:[%s2182 + $0x18] sm:$0xf]
      %v2190 = vld [vmem:[%s2182 + $0x1c] sm:$0xf]
      %v2191 = vld [vmem:[%s2182 + $0x20] sm:$0xf]
      %v2192 = vld [vmem:[%s2182 + $0x24] sm:$0xf]
      %v2193 = vld [vmem:[%s2182 + $0x28] sm:$0xf]
      %v2194 = vld [vmem:[%s2182 + $0x2c] sm:$0xf]
      %v2195 = vld [vmem:[%s2182 + $0x30] sm:$0xf]
      %v2196 = vld [vmem:[%s2182 + $0x34] sm:$0xf]
      %v2197 = vld [vmem:[%s2182 + $0x38] sm:$0xf]
      %v2198 = vld [vmem:[%s2182 + $0x3c] sm:$0xf]
      %v2215 = vunpack.c.l.b16 %v2183
      %v2216 = vunpack.c.l.b16 %v2184
      %v2217 = vunpack.c.l.b16 %v2185
      %v2218 = vunpack.c.l.b16 %v2186
      %v2219 = vunpack.c.l.b16 %v2187
      %v2220 = vunpack.c.l.b16 %v2188
      %v2221 = vunpack.c.l.b16 %v2189
      %v2222 = vunpack.c.l.b16 %v2190
      %v2223 = vunpack.c.l.b16 %v2191
      %v2224 = vunpack.c.l.b16 %v2192
      %v2225 = vunpack.c.l.b16 %v2193
      %v2226 = vunpack.c.l.b16 %v2194
      %v2227 = vunpack.c.l.b16 %v2195
      %v2228 = vunpack.c.l.b16 %v2196
      %v2229 = vunpack.c.l.b16 %v2197
      %v2230 = vunpack.c.l.b16 %v2198
      %v2231 = vpack.c.b16 %v2216, %v2215
      %v2232 = vpack.c.b16 %v2218, %v2217
      %v2233 = vpack.c.b16 %v2220, %v2219
      %v2234 = vpack.c.b16 %v2222, %v2221
      %v2235 = vpack.c.b16 %v2224, %v2223
      %v2236 = vpack.c.b16 %v2226, %v2225
      %v2237 = vpack.c.b16 %v2228, %v2227
      %v2238 = vpack.c.b16 %v2230, %v2229
      %2247 = vmatpush.bf16.msra.mxu0 %v2238
      %2248 = vmatpush.bf16.msra.mxu0 %v2237
      %2249 = vmatpush.bf16.msra.mxu0 %v2236
      %2250 = vmatpush.bf16.msra.mxu0 %v2235
      %2251 = vmatpush.bf16.msra.mxu0 %v2234
      %2252 = vmatpush.bf16.msra.mxu0 %v2233
      %2253 = vmatpush.bf16.msra.mxu0 %v2232
      %2254 = vmatpush.bf16.msra.mxu0 %v2231
      %2255 = vmatmul.bf16.gmra.mxu0 %v1589
      %v2256 = vpop.f32.mrf.mxu0
      %v2257 = vadd.f32 0.0, %v2256
      %v2258 = vpop.f32.mrf.mxu0
      %v2259 = vadd.f32 0.0, %v2258
      %2260 = vmatmul.bf16.gmra.mxu0 %v1590
      %v2261 = vpop.f32.mrf.mxu0
      %v2262 = vadd.f32 0.0, %v2261
      %v2263 = vpop.f32.mrf.mxu0
      %v2264 = vadd.f32 0.0, %v2263
      %2265 = vmatmul.bf16.gmra.mxu0 %v1591
      %v2266 = vpop.f32.mrf.mxu0
      %v2267 = vadd.f32 0.0, %v2266
      %v2268 = vpop.f32.mrf.mxu0
      %v2269 = vadd.f32 0.0, %v2268
      %2270 = vmatmul.bf16.gmra.mxu0 %v1592
      %v2271 = vpop.f32.mrf.mxu0
      %v2272 = vadd.f32 0.0, %v2271
      %v2273 = vpop.f32.mrf.mxu0
      %v2274 = vadd.f32 0.0, %v2273
      %2275 = vmatmul.bf16.gmra.mxu0 %v1593
      %v2276 = vpop.f32.mrf.mxu0
      %v2277 = vadd.f32 0.0, %v2276
      %v2278 = vpop.f32.mrf.mxu0
      %v2279 = vadd.f32 0.0, %v2278
      %2280 = vmatmul.bf16.gmra.mxu0 %v1594
      %v2281 = vpop.f32.mrf.mxu0
      %v2282 = vadd.f32 0.0, %v2281
      %v2283 = vpop.f32.mrf.mxu0
      %v2284 = vadd.f32 0.0, %v2283
      %2285 = vmatmul.bf16.gmra.mxu0 %v1595
      %v2286 = vpop.f32.mrf.mxu0
      %v2287 = vadd.f32 0.0, %v2286
      %v2288 = vpop.f32.mrf.mxu0
      %v2289 = vadd.f32 0.0, %v2288
      %2290 = vmatmul.bf16.gmra.mxu0 %v1596
      %v2291 = vpop.f32.mrf.mxu0
      %v2292 = vadd.f32 0.0, %v2291
      %v2293 = vpop.f32.mrf.mxu0
      %v2294 = vadd.f32 0.0, %v2293
      %2295 = vmatmul.bf16.gmra.mxu0 %v1597
      %v2296 = vpop.f32.mrf.mxu0
      %v2297 = vadd.f32 0.0, %v2296
      %v2298 = vpop.f32.mrf.mxu0
      %v2299 = vadd.f32 0.0, %v2298
      %2300 = vmatmul.bf16.gmra.mxu0 %v1598
      %v2301 = vpop.f32.mrf.mxu0
      %v2302 = vadd.f32 0.0, %v2301
      %v2303 = vpop.f32.mrf.mxu0
      %v2304 = vadd.f32 0.0, %v2303
      %2305 = vmatmul.bf16.gmra.mxu0 %v1599
      %v2306 = vpop.f32.mrf.mxu0
      %v2307 = vadd.f32 0.0, %v2306
      %v2308 = vpop.f32.mrf.mxu0
      %v2309 = vadd.f32 0.0, %v2308
      %2310 = vmatmul.bf16.gmra.mxu0 %v1600
      %v2311 = vpop.f32.mrf.mxu0
      %v2312 = vadd.f32 0.0, %v2311
      %v2313 = vpop.f32.mrf.mxu0
      %v2314 = vadd.f32 0.0, %v2313
      %2315 = vmatmul.bf16.gmra.mxu0 %v1601
      %v2316 = vpop.f32.mrf.mxu0
      %v2317 = vadd.f32 0.0, %v2316
      %v2318 = vpop.f32.mrf.mxu0
      %v2319 = vadd.f32 0.0, %v2318
      %2320 = vmatmul.bf16.gmra.mxu0 %v1602
      %v2321 = vpop.f32.mrf.mxu0
      %v2322 = vadd.f32 0.0, %v2321
      %v2323 = vpop.f32.mrf.mxu0
      %v2324 = vadd.f32 0.0, %v2323
      %2325 = vmatmul.bf16.gmra.mxu0 %v1603
      %v2326 = vpop.f32.mrf.mxu0
      %v2327 = vadd.f32 0.0, %v2326
      %v2328 = vpop.f32.mrf.mxu0
      %v2329 = vadd.f32 0.0, %v2328
      %2330 = vmatmul.bf16.gmra.mxu0 %v2181
      %v2331 = vpop.f32.mrf.mxu0
      %v2332 = vadd.f32 0.0, %v2331
      %v2333 = vpop.f32.mrf.mxu0
      %v2334 = vadd.f32 0.0, %v2333
      %2335 = vdwg.mxu0
      %v2336 = vadd.f32 %v2142, %v2257
      %v2337 = vadd.f32 %v2143, %v2259
      %v2338 = vadd.f32 %v2144, %v2262
      %v2339 = vadd.f32 %v2145, %v2264
      %v2340 = vadd.f32 %v2146, %v2267
      %v2341 = vadd.f32 %v2147, %v2269
      %v2342 = vadd.f32 %v2148, %v2272
      %v2343 = vadd.f32 %v2149, %v2274
      %v2344 = vadd.f32 %v2150, %v2277
      %v2345 = vadd.f32 %v2151, %v2279
      %v2346 = vadd.f32 %v2152, %v2282
      %v2347 = vadd.f32 %v2153, %v2284
      %v2348 = vadd.f32 %v2154, %v2287
      %v2349 = vadd.f32 %v2155, %v2289
      %v2350 = vadd.f32 %v2156, %v2292
      %v2351 = vadd.f32 %v2157, %v2294
      %v2352 = vadd.f32 %v2158, %v2297
      %v2353 = vadd.f32 %v2159, %v2299
      %v2354 = vadd.f32 %v2160, %v2302
      %v2355 = vadd.f32 %v2161, %v2304
      %v2356 = vadd.f32 %v2162, %v2307
      %v2357 = vadd.f32 %v2163, %v2309
      %v2358 = vadd.f32 %v2164, %v2312
      %v2359 = vadd.f32 %v2165, %v2314
      %v2360 = vadd.f32 %v2166, %v2317
      %v2361 = vadd.f32 %v2167, %v2319
      %v2362 = vadd.f32 %v2168, %v2322
      %v2363 = vadd.f32 %v2169, %v2324
      %v2364 = vadd.f32 %v2170, %v2327
      %v2365 = vadd.f32 %v2171, %v2329
      %v2366 = vadd.f32 %v2172, %v2332
      %v2367 = vadd.f32 %v2173, %v2334
      %v2368 = vpack.c.bf16 %v973, %v972
      %s2369 = scalar_lea.vmem %s1, 384
      %v2370 = vld [vmem:[%s2369] sm:$0xf]
      %v2371 = vld [vmem:[%s2369 + $0x4] sm:$0xf]
      %v2372 = vld [vmem:[%s2369 + $0x8] sm:$0xf]
      %v2373 = vld [vmem:[%s2369 + $0xc] sm:$0xf]
      %v2374 = vld [vmem:[%s2369 + $0x10] sm:$0xf]
      %v2375 = vld [vmem:[%s2369 + $0x14] sm:$0xf]
      %v2376 = vld [vmem:[%s2369 + $0x18] sm:$0xf]
      %v2377 = vld [vmem:[%s2369 + $0x1c] sm:$0xf]
      %v2378 = vld [vmem:[%s2369 + $0x20] sm:$0xf]
      %v2379 = vld [vmem:[%s2369 + $0x24] sm:$0xf]
      %v2380 = vld [vmem:[%s2369 + $0x28] sm:$0xf]
      %v2381 = vld [vmem:[%s2369 + $0x2c] sm:$0xf]
      %v2382 = vld [vmem:[%s2369 + $0x30] sm:$0xf]
      %v2383 = vld [vmem:[%s2369 + $0x34] sm:$0xf]
      %v2384 = vld [vmem:[%s2369 + $0x38] sm:$0xf]
      %v2385 = vld [vmem:[%s2369 + $0x3c] sm:$0xf]
      %v2402 = vunpack.c.l.b16 %v2370
      %v2403 = vunpack.c.l.b16 %v2371
      %v2404 = vunpack.c.l.b16 %v2372
      %v2405 = vunpack.c.l.b16 %v2373
      %v2406 = vunpack.c.l.b16 %v2374
      %v2407 = vunpack.c.l.b16 %v2375
      %v2408 = vunpack.c.l.b16 %v2376
      %v2409 = vunpack.c.l.b16 %v2377
      %v2410 = vunpack.c.l.b16 %v2378
      %v2411 = vunpack.c.l.b16 %v2379
      %v2412 = vunpack.c.l.b16 %v2380
      %v2413 = vunpack.c.l.b16 %v2381
      %v2414 = vunpack.c.l.b16 %v2382
      %v2415 = vunpack.c.l.b16 %v2383
      %v2416 = vunpack.c.l.b16 %v2384
      %v2417 = vunpack.c.l.b16 %v2385
      %v2418 = vpack.c.b16 %v2403, %v2402
      %v2419 = vpack.c.b16 %v2405, %v2404
      %v2420 = vpack.c.b16 %v2407, %v2406
      %v2421 = vpack.c.b16 %v2409, %v2408
      %v2422 = vpack.c.b16 %v2411, %v2410
      %v2423 = vpack.c.b16 %v2413, %v2412
      %v2424 = vpack.c.b16 %v2415, %v2414
      %v2425 = vpack.c.b16 %v2417, %v2416
      %2434 = vmatpush.bf16.msra.mxu0 %v2425
      %2435 = vmatpush.bf16.msra.mxu0 %v2424
      %2436 = vmatpush.bf16.msra.mxu0 %v2423
      %2437 = vmatpush.bf16.msra.mxu0 %v2422
      %2438 = vmatpush.bf16.msra.mxu0 %v2421
      %2439 = vmatpush.bf16.msra.mxu0 %v2420
      %2440 = vmatpush.bf16.msra.mxu0 %v2419
      %2441 = vmatpush.bf16.msra.mxu0 %v2418
      %2442 = vmatmul.bf16.gmra.mxu0 %v977
      %v2443 = vpop.f32.mrf.mxu0
      %v2444 = vadd.f32 0.0, %v2443
      %v2445 = vpop.f32.mrf.mxu0
      %v2446 = vadd.f32 0.0, %v2445
      %2447 = vmatmul.bf16.gmra.mxu0 %v978
      %v2448 = vpop.f32.mrf.mxu0
      %v2449 = vadd.f32 0.0, %v2448
      %v2450 = vpop.f32.mrf.mxu0
      %v2451 = vadd.f32 0.0, %v2450
      %2452 = vmatmul.bf16.gmra.mxu0 %v979
      %v2453 = vpop.f32.mrf.mxu0
      %v2454 = vadd.f32 0.0, %v2453
      %v2455 = vpop.f32.mrf.mxu0
      %v2456 = vadd.f32 0.0, %v2455
      %2457 = vmatmul.bf16.gmra.mxu0 %v980
      %v2458 = vpop.f32.mrf.mxu0
      %v2459 = vadd.f32 0.0, %v2458
      %v2460 = vpop.f32.mrf.mxu0
      %v2461 = vadd.f32 0.0, %v2460
      %2462 = vmatmul.bf16.gmra.mxu0 %v981
      %v2463 = vpop.f32.mrf.mxu0
      %v2464 = vadd.f32 0.0, %v2463
      %v2465 = vpop.f32.mrf.mxu0
      %v2466 = vadd.f32 0.0, %v2465
      %2467 = vmatmul.bf16.gmra.mxu0 %v982
      %v2468 = vpop.f32.mrf.mxu0
      %v2469 = vadd.f32 0.0, %v2468
      %v2470 = vpop.f32.mrf.mxu0
      %v2471 = vadd.f32 0.0, %v2470
      %2472 = vmatmul.bf16.gmra.mxu0 %v983
      %v2473 = vpop.f32.mrf.mxu0
      %v2474 = vadd.f32 0.0, %v2473
      %v2475 = vpop.f32.mrf.mxu0
      %v2476 = vadd.f32 0.0, %v2475
      %2477 = vmatmul.bf16.gmra.mxu0 %v984
      %v2478 = vpop.f32.mrf.mxu0
      %v2479 = vadd.f32 0.0, %v2478
      %v2480 = vpop.f32.mrf.mxu0
      %v2481 = vadd.f32 0.0, %v2480
      %2482 = vmatmul.bf16.gmra.mxu0 %v985
      %v2483 = vpop.f32.mrf.mxu0
      %v2484 = vadd.f32 0.0, %v2483
      %v2485 = vpop.f32.mrf.mxu0
      %v2486 = vadd.f32 0.0, %v2485
      %2487 = vmatmul.bf16.gmra.mxu0 %v986
      %v2488 = vpop.f32.mrf.mxu0
      %v2489 = vadd.f32 0.0, %v2488
      %v2490 = vpop.f32.mrf.mxu0
      %v2491 = vadd.f32 0.0, %v2490
      %2492 = vmatmul.bf16.gmra.mxu0 %v987
      %v2493 = vpop.f32.mrf.mxu0
      %v2494 = vadd.f32 0.0, %v2493
      %v2495 = vpop.f32.mrf.mxu0
      %v2496 = vadd.f32 0.0, %v2495
      %2497 = vmatmul.bf16.gmra.mxu0 %v988
      %v2498 = vpop.f32.mrf.mxu0
      %v2499 = vadd.f32 0.0, %v2498
      %v2500 = vpop.f32.mrf.mxu0
      %v2501 = vadd.f32 0.0, %v2500
      %2502 = vmatmul.bf16.gmra.mxu0 %v989
      %v2503 = vpop.f32.mrf.mxu0
      %v2504 = vadd.f32 0.0, %v2503
      %v2505 = vpop.f32.mrf.mxu0
      %v2506 = vadd.f32 0.0, %v2505
      %2507 = vmatmul.bf16.gmra.mxu0 %v990
      %v2508 = vpop.f32.mrf.mxu0
      %v2509 = vadd.f32 0.0, %v2508
      %v2510 = vpop.f32.mrf.mxu0
      %v2511 = vadd.f32 0.0, %v2510
      %2512 = vmatmul.bf16.gmra.mxu0 %v1790
      %v2513 = vpop.f32.mrf.mxu0
      %v2514 = vadd.f32 0.0, %v2513
      %v2515 = vpop.f32.mrf.mxu0
      %v2516 = vadd.f32 0.0, %v2515
      %2517 = vmatmul.bf16.gmra.mxu0 %v2368
      %v2518 = vpop.f32.mrf.mxu0
      %v2519 = vadd.f32 0.0, %v2518
      %v2520 = vpop.f32.mrf.mxu0
      %v2521 = vadd.f32 0.0, %v2520
      %2522 = vdwg.mxu0
      %v2523 = vadd.f32 %v2336, %v2444
      %v2524 = vadd.f32 %v2337, %v2446
      %v2525 = vadd.f32 %v2338, %v2449
      %v2526 = vadd.f32 %v2339, %v2451
      %v2527 = vadd.f32 %v2340, %v2454
      %v2528 = vadd.f32 %v2341, %v2456
      %v2529 = vadd.f32 %v2342, %v2459
      %v2530 = vadd.f32 %v2343, %v2461
      %v2531 = vadd.f32 %v2344, %v2464
      %v2532 = vadd.f32 %v2345, %v2466
      %v2533 = vadd.f32 %v2346, %v2469
      %v2534 = vadd.f32 %v2347, %v2471
      %v2535 = vadd.f32 %v2348, %v2474
      %v2536 = vadd.f32 %v2349, %v2476
      %v2537 = vadd.f32 %v2350, %v2479
      %v2538 = vadd.f32 %v2351, %v2481
      %v2539 = vadd.f32 %v2352, %v2484
      %v2540 = vadd.f32 %v2353, %v2486
      %v2541 = vadd.f32 %v2354, %v2489
      %v2542 = vadd.f32 %v2355, %v2491
      %v2543 = vadd.f32 %v2356, %v2494
      %v2544 = vadd.f32 %v2357, %v2496
      %v2545 = vadd.f32 %v2358, %v2499
      %v2546 = vadd.f32 %v2359, %v2501
      %v2547 = vadd.f32 %v2360, %v2504
      %v2548 = vadd.f32 %v2361, %v2506
      %v2549 = vadd.f32 %v2362, %v2509
      %v2550 = vadd.f32 %v2363, %v2511
      %v2551 = vadd.f32 %v2364, %v2514
      %v2552 = vadd.f32 %v2365, %v2516
      %v2553 = vadd.f32 %v2366, %v2519
      %v2554 = vadd.f32 %v2367, %v2521
      %v2558 = vrot.slane %v972, 1
      %v2559 = vrot.slane %v973, 1
      %v2560 = vsel %vm1055, %v2558, %v2559
      %v2561 = vrot.slane %v974, 1
      %v2562 = vsel %vm1055, %v2559, %v2561
      %v2565 = vpack.c.bf16 %v2562, %v2560
      %s2566 = scalar_lea.vmem %s1, 448
      %v2567 = vld [vmem:[%s2566] sm:$0xf]
      %v2568 = vld [vmem:[%s2566 + $0x4] sm:$0xf]
      %v2569 = vld [vmem:[%s2566 + $0x8] sm:$0xf]
      %v2570 = vld [vmem:[%s2566 + $0xc] sm:$0xf]
      %v2571 = vld [vmem:[%s2566 + $0x10] sm:$0xf]
      %v2572 = vld [vmem:[%s2566 + $0x14] sm:$0xf]
      %v2573 = vld [vmem:[%s2566 + $0x18] sm:$0xf]
      %v2574 = vld [vmem:[%s2566 + $0x1c] sm:$0xf]
      %v2575 = vld [vmem:[%s2566 + $0x20] sm:$0xf]
      %v2576 = vld [vmem:[%s2566 + $0x24] sm:$0xf]
      %v2577 = vld [vmem:[%s2566 + $0x28] sm:$0xf]
      %v2578 = vld [vmem:[%s2566 + $0x2c] sm:$0xf]
      %v2579 = vld [vmem:[%s2566 + $0x30] sm:$0xf]
      %v2580 = vld [vmem:[%s2566 + $0x34] sm:$0xf]
      %v2581 = vld [vmem:[%s2566 + $0x38] sm:$0xf]
      %v2582 = vld [vmem:[%s2566 + $0x3c] sm:$0xf]
      %v2599 = vunpack.c.l.b16 %v2567
      %v2600 = vunpack.c.l.b16 %v2568
      %v2601 = vunpack.c.l.b16 %v2569
      %v2602 = vunpack.c.l.b16 %v2570
      %v2603 = vunpack.c.l.b16 %v2571
      %v2604 = vunpack.c.l.b16 %v2572
      %v2605 = vunpack.c.l.b16 %v2573
      %v2606 = vunpack.c.l.b16 %v2574
      %v2607 = vunpack.c.l.b16 %v2575
      %v2608 = vunpack.c.l.b16 %v2576
      %v2609 = vunpack.c.l.b16 %v2577
      %v2610 = vunpack.c.l.b16 %v2578
      %v2611 = vunpack.c.l.b16 %v2579
      %v2612 = vunpack.c.l.b16 %v2580
      %v2613 = vunpack.c.l.b16 %v2581
      %v2614 = vunpack.c.l.b16 %v2582
      %v2615 = vpack.c.b16 %v2600, %v2599
      %v2616 = vpack.c.b16 %v2602, %v2601
      %v2617 = vpack.c.b16 %v2604, %v2603
      %v2618 = vpack.c.b16 %v2606, %v2605
      %v2619 = vpack.c.b16 %v2608, %v2607
      %v2620 = vpack.c.b16 %v2610, %v2609
      %v2621 = vpack.c.b16 %v2612, %v2611
      %v2622 = vpack.c.b16 %v2614, %v2613
      %2631 = vmatpush.bf16.msra.mxu0 %v2622
      %2632 = vmatpush.bf16.msra.mxu0 %v2621
      %2633 = vmatpush.bf16.msra.mxu0 %v2620
      %2634 = vmatpush.bf16.msra.mxu0 %v2619
      %2635 = vmatpush.bf16.msra.mxu0 %v2618
      %2636 = vmatpush.bf16.msra.mxu0 %v2617
      %2637 = vmatpush.bf16.msra.mxu0 %v2616
      %2638 = vmatpush.bf16.msra.mxu0 %v2615
      %2639 = vmatmul.bf16.gmra.mxu0 %v1170
      %v2640 = vpop.f32.mrf.mxu0
      %v2641 = vadd.f32 0.0, %v2640
      %v2642 = vpop.f32.mrf.mxu0
      %v2643 = vadd.f32 0.0, %v2642
      %2644 = vmatmul.bf16.gmra.mxu0 %v1171
      %v2645 = vpop.f32.mrf.mxu0
      %v2646 = vadd.f32 0.0, %v2645
      %v2647 = vpop.f32.mrf.mxu0
      %v2648 = vadd.f32 0.0, %v2647
      %2649 = vmatmul.bf16.gmra.mxu0 %v1172
      %v2650 = vpop.f32.mrf.mxu0
      %v2651 = vadd.f32 0.0, %v2650
      %v2652 = vpop.f32.mrf.mxu0
      %v2653 = vadd.f32 0.0, %v2652
      %2654 = vmatmul.bf16.gmra.mxu0 %v1173
      %v2655 = vpop.f32.mrf.mxu0
      %v2656 = vadd.f32 0.0, %v2655
      %v2657 = vpop.f32.mrf.mxu0
      %v2658 = vadd.f32 0.0, %v2657
      %2659 = vmatmul.bf16.gmra.mxu0 %v1174
      %v2660 = vpop.f32.mrf.mxu0
      %v2661 = vadd.f32 0.0, %v2660
      %v2662 = vpop.f32.mrf.mxu0
      %v2663 = vadd.f32 0.0, %v2662
      %2664 = vmatmul.bf16.gmra.mxu0 %v1175
      %v2665 = vpop.f32.mrf.mxu0
      %v2666 = vadd.f32 0.0, %v2665
      %v2667 = vpop.f32.mrf.mxu0
      %v2668 = vadd.f32 0.0, %v2667
      %2669 = vmatmul.bf16.gmra.mxu0 %v1176
      %v2670 = vpop.f32.mrf.mxu0
      %v2671 = vadd.f32 0.0, %v2670
      %v2672 = vpop.f32.mrf.mxu0
      %v2673 = vadd.f32 0.0, %v2672
      %2674 = vmatmul.bf16.gmra.mxu0 %v1177
      %v2675 = vpop.f32.mrf.mxu0
      %v2676 = vadd.f32 0.0, %v2675
      %v2677 = vpop.f32.mrf.mxu0
      %v2678 = vadd.f32 0.0, %v2677
      %2679 = vmatmul.bf16.gmra.mxu0 %v1178
      %v2680 = vpop.f32.mrf.mxu0
      %v2681 = vadd.f32 0.0, %v2680
      %v2682 = vpop.f32.mrf.mxu0
      %v2683 = vadd.f32 0.0, %v2682
      %2684 = vmatmul.bf16.gmra.mxu0 %v1179
      %v2685 = vpop.f32.mrf.mxu0
      %v2686 = vadd.f32 0.0, %v2685
      %v2687 = vpop.f32.mrf.mxu0
      %v2688 = vadd.f32 0.0, %v2687
      %2689 = vmatmul.bf16.gmra.mxu0 %v1180
      %v2690 = vpop.f32.mrf.mxu0
      %v2691 = vadd.f32 0.0, %v2690
      %v2692 = vpop.f32.mrf.mxu0
      %v2693 = vadd.f32 0.0, %v2692
      %2694 = vmatmul.bf16.gmra.mxu0 %v1181
      %v2695 = vpop.f32.mrf.mxu0
      %v2696 = vadd.f32 0.0, %v2695
      %v2697 = vpop.f32.mrf.mxu0
      %v2698 = vadd.f32 0.0, %v2697
      %2699 = vmatmul.bf16.gmra.mxu0 %v1182
      %v2700 = vpop.f32.mrf.mxu0
      %v2701 = vadd.f32 0.0, %v2700
      %v2702 = vpop.f32.mrf.mxu0
      %v2703 = vadd.f32 0.0, %v2702
      %2704 = vmatmul.bf16.gmra.mxu0 %v1183
      %v2705 = vpop.f32.mrf.mxu0
      %v2706 = vadd.f32 0.0, %v2705
      %v2707 = vpop.f32.mrf.mxu0
      %v2708 = vadd.f32 0.0, %v2707
      %2709 = vmatmul.bf16.gmra.mxu0 %v1987
      %v2710 = vpop.f32.mrf.mxu0
      %v2711 = vadd.f32 0.0, %v2710
      %v2712 = vpop.f32.mrf.mxu0
      %v2713 = vadd.f32 0.0, %v2712
      %2714 = vmatmul.bf16.gmra.mxu0 %v2565
      %v2715 = vpop.f32.mrf.mxu0
      %v2716 = vadd.f32 0.0, %v2715
      %v2717 = vpop.f32.mrf.mxu0
      %v2718 = vadd.f32 0.0, %v2717
      %2719 = vdwg.mxu0
      %v2720 = vadd.f32 %v2523, %v2641
      %v2721 = vadd.f32 %v2524, %v2643
      %v2722 = vadd.f32 %v2525, %v2646
      %v2723 = vadd.f32 %v2526, %v2648
      %v2724 = vadd.f32 %v2527, %v2651
      %v2725 = vadd.f32 %v2528, %v2653
      %v2726 = vadd.f32 %v2529, %v2656
      %v2727 = vadd.f32 %v2530, %v2658
      %v2728 = vadd.f32 %v2531, %v2661
      %v2729 = vadd.f32 %v2532, %v2663
      %v2730 = vadd.f32 %v2533, %v2666
      %v2731 = vadd.f32 %v2534, %v2668
      %v2732 = vadd.f32 %v2535, %v2671
      %v2733 = vadd.f32 %v2536, %v2673
      %v2734 = vadd.f32 %v2537, %v2676
      %v2735 = vadd.f32 %v2538, %v2678
      %v2736 = vadd.f32 %v2539, %v2681
      %v2737 = vadd.f32 %v2540, %v2683
      %v2738 = vadd.f32 %v2541, %v2686
      %v2739 = vadd.f32 %v2542, %v2688
      %v2740 = vadd.f32 %v2543, %v2691
      %v2741 = vadd.f32 %v2544, %v2693
      %v2742 = vadd.f32 %v2545, %v2696
      %v2743 = vadd.f32 %v2546, %v2698
      %v2744 = vadd.f32 %v2547, %v2701
      %v2745 = vadd.f32 %v2548, %v2703
      %v2746 = vadd.f32 %v2549, %v2706
      %v2747 = vadd.f32 %v2550, %v2708
      %v2748 = vadd.f32 %v2551, %v2711
      %v2749 = vadd.f32 %v2552, %v2713
      %v2750 = vadd.f32 %v2553, %v2716
      %v2751 = vadd.f32 %v2554, %v2718
      %v2752 = vrot.slane %v972, 2
      %v2753 = vrot.slane %v973, 2
      %v2754 = vsel %vm1475, %v2752, %v2753
      %v2755 = vrot.slane %v974, 2
      %v2756 = vsel %vm1475, %v2753, %v2755
      %v2759 = vpack.c.bf16 %v2756, %v2754
      %s2760 = scalar_lea.vmem %s1, 512
      %v2761 = vld [vmem:[%s2760] sm:$0xf]
      %v2762 = vld [vmem:[%s2760 + $0x4] sm:$0xf]
      %v2763 = vld [vmem:[%s2760 + $0x8] sm:$0xf]
      %v2764 = vld [vmem:[%s2760 + $0xc] sm:$0xf]
      %v2765 = vld [vmem:[%s2760 + $0x10] sm:$0xf]
      %v2766 = vld [vmem:[%s2760 + $0x14] sm:$0xf]
      %v2767 = vld [vmem:[%s2760 + $0x18] sm:$0xf]
      %v2768 = vld [vmem:[%s2760 + $0x1c] sm:$0xf]
      %v2769 = vld [vmem:[%s2760 + $0x20] sm:$0xf]
      %v2770 = vld [vmem:[%s2760 + $0x24] sm:$0xf]
      %v2771 = vld [vmem:[%s2760 + $0x28] sm:$0xf]
      %v2772 = vld [vmem:[%s2760 + $0x2c] sm:$0xf]
      %v2773 = vld [vmem:[%s2760 + $0x30] sm:$0xf]
      %v2774 = vld [vmem:[%s2760 + $0x34] sm:$0xf]
      %v2775 = vld [vmem:[%s2760 + $0x38] sm:$0xf]
      %v2776 = vld [vmem:[%s2760 + $0x3c] sm:$0xf]
      %v2793 = vunpack.c.l.b16 %v2761
      %v2794 = vunpack.c.l.b16 %v2762
      %v2795 = vunpack.c.l.b16 %v2763
      %v2796 = vunpack.c.l.b16 %v2764
      %v2797 = vunpack.c.l.b16 %v2765
      %v2798 = vunpack.c.l.b16 %v2766
      %v2799 = vunpack.c.l.b16 %v2767
      %v2800 = vunpack.c.l.b16 %v2768
      %v2801 = vunpack.c.l.b16 %v2769
      %v2802 = vunpack.c.l.b16 %v2770
      %v2803 = vunpack.c.l.b16 %v2771
      %v2804 = vunpack.c.l.b16 %v2772
      %v2805 = vunpack.c.l.b16 %v2773
      %v2806 = vunpack.c.l.b16 %v2774
      %v2807 = vunpack.c.l.b16 %v2775
      %v2808 = vunpack.c.l.b16 %v2776
      %v2809 = vpack.c.b16 %v2794, %v2793
      %v2810 = vpack.c.b16 %v2796, %v2795
      %v2811 = vpack.c.b16 %v2798, %v2797
      %v2812 = vpack.c.b16 %v2800, %v2799
      %v2813 = vpack.c.b16 %v2802, %v2801
      %v2814 = vpack.c.b16 %v2804, %v2803
      %v2815 = vpack.c.b16 %v2806, %v2805
      %v2816 = vpack.c.b16 %v2808, %v2807
      %2825 = vmatpush.bf16.msra.mxu0 %v2816
      %2826 = vmatpush.bf16.msra.mxu0 %v2815
      %2827 = vmatpush.bf16.msra.mxu0 %v2814
      %2828 = vmatpush.bf16.msra.mxu0 %v2813
      %2829 = vmatpush.bf16.msra.mxu0 %v2812
      %2830 = vmatpush.bf16.msra.mxu0 %v2811
      %2831 = vmatpush.bf16.msra.mxu0 %v2810
      %2832 = vmatpush.bf16.msra.mxu0 %v2809
      %2833 = vmatmul.bf16.gmra.mxu0 %v1590
      %v2834 = vpop.f32.mrf.mxu0
      %v2835 = vadd.f32 0.0, %v2834
      %v2836 = vpop.f32.mrf.mxu0
      %v2837 = vadd.f32 0.0, %v2836
      %2838 = vmatmul.bf16.gmra.mxu0 %v1591
      %v2839 = vpop.f32.mrf.mxu0
      %v2840 = vadd.f32 0.0, %v2839
      %v2841 = vpop.f32.mrf.mxu0
      %v2842 = vadd.f32 0.0, %v2841
      %2843 = vmatmul.bf16.gmra.mxu0 %v1592
      %v2844 = vpop.f32.mrf.mxu0
      %v2845 = vadd.f32 0.0, %v2844
      %v2846 = vpop.f32.mrf.mxu0
      %v2847 = vadd.f32 0.0, %v2846
      %2848 = vmatmul.bf16.gmra.mxu0 %v1593
      %v2849 = vpop.f32.mrf.mxu0
      %v2850 = vadd.f32 0.0, %v2849
      %v2851 = vpop.f32.mrf.mxu0
      %v2852 = vadd.f32 0.0, %v2851
      %2853 = vmatmul.bf16.gmra.mxu0 %v1594
      %v2854 = vpop.f32.mrf.mxu0
      %v2855 = vadd.f32 0.0, %v2854
      %v2856 = vpop.f32.mrf.mxu0
      %v2857 = vadd.f32 0.0, %v2856
      %2858 = vmatmul.bf16.gmra.mxu0 %v1595
      %v2859 = vpop.f32.mrf.mxu0
      %v2860 = vadd.f32 0.0, %v2859
      %v2861 = vpop.f32.mrf.mxu0
      %v2862 = vadd.f32 0.0, %v2861
      %2863 = vmatmul.bf16.gmra.mxu0 %v1596
      %v2864 = vpop.f32.mrf.mxu0
      %v2865 = vadd.f32 0.0, %v2864
      %v2866 = vpop.f32.mrf.mxu0
      %v2867 = vadd.f32 0.0, %v2866
      %2868 = vmatmul.bf16.gmra.mxu0 %v1597
      %v2869 = vpop.f32.mrf.mxu0
      %v2870 = vadd.f32 0.0, %v2869
      %v2871 = vpop.f32.mrf.mxu0
      %v2872 = vadd.f32 0.0, %v2871
      %2873 = vmatmul.bf16.gmra.mxu0 %v1598
      %v2874 = vpop.f32.mrf.mxu0
      %v2875 = vadd.f32 0.0, %v2874
      %v2876 = vpop.f32.mrf.mxu0
      %v2877 = vadd.f32 0.0, %v2876
      %2878 = vmatmul.bf16.gmra.mxu0 %v1599
      %v2879 = vpop.f32.mrf.mxu0
      %v2880 = vadd.f32 0.0, %v2879
      %v2881 = vpop.f32.mrf.mxu0
      %v2882 = vadd.f32 0.0, %v2881
      %2883 = vmatmul.bf16.gmra.mxu0 %v1600
      %v2884 = vpop.f32.mrf.mxu0
      %v2885 = vadd.f32 0.0, %v2884
      %v2886 = vpop.f32.mrf.mxu0
      %v2887 = vadd.f32 0.0, %v2886
      %2888 = vmatmul.bf16.gmra.mxu0 %v1601
      %v2889 = vpop.f32.mrf.mxu0
      %v2890 = vadd.f32 0.0, %v2889
      %v2891 = vpop.f32.mrf.mxu0
      %v2892 = vadd.f32 0.0, %v2891
      %2893 = vmatmul.bf16.gmra.mxu0 %v1602
      %v2894 = vpop.f32.mrf.mxu0
      %v2895 = vadd.f32 0.0, %v2894
      %v2896 = vpop.f32.mrf.mxu0
      %v2897 = vadd.f32 0.0, %v2896
      %2898 = vmatmul.bf16.gmra.mxu0 %v1603
      %v2899 = vpop.f32.mrf.mxu0
      %v2900 = vadd.f32 0.0, %v2899
      %v2901 = vpop.f32.mrf.mxu0
      %v2902 = vadd.f32 0.0, %v2901
      %2903 = vmatmul.bf16.gmra.mxu0 %v2181
      %v2904 = vpop.f32.mrf.mxu0
      %v2905 = vadd.f32 0.0, %v2904
      %v2906 = vpop.f32.mrf.mxu0
      %v2907 = vadd.f32 0.0, %v2906
      %2908 = vmatmul.bf16.gmra.mxu0 %v2759
      %v2909 = vpop.f32.mrf.mxu0
      %v2910 = vadd.f32 0.0, %v2909
      %v2911 = vpop.f32.mrf.mxu0
      %v2912 = vadd.f32 0.0, %v2911
      %2913 = vdwg.mxu0
      %v2914 = vadd.f32 %v2720, %v2835
      %v2915 = vadd.f32 %v2721, %v2837
      %v2916 = vadd.f32 %v2722, %v2840
      %v2917 = vadd.f32 %v2723, %v2842
      %v2918 = vadd.f32 %v2724, %v2845
      %v2919 = vadd.f32 %v2725, %v2847
      %v2920 = vadd.f32 %v2726, %v2850
      %v2921 = vadd.f32 %v2727, %v2852
      %v2922 = vadd.f32 %v2728, %v2855
      %v2923 = vadd.f32 %v2729, %v2857
      %v2924 = vadd.f32 %v2730, %v2860
      %v2925 = vadd.f32 %v2731, %v2862
      %v2926 = vadd.f32 %v2732, %v2865
      %v2927 = vadd.f32 %v2733, %v2867
      %v2928 = vadd.f32 %v2734, %v2870
      %v2929 = vadd.f32 %v2735, %v2872
      %v2930 = vadd.f32 %v2736, %v2875
      %v2931 = vadd.f32 %v2737, %v2877
      %v2932 = vadd.f32 %v2738, %v2880
      %v2933 = vadd.f32 %v2739, %v2882
      %v2934 = vadd.f32 %v2740, %v2885
      %v2935 = vadd.f32 %v2741, %v2887
      %v2936 = vadd.f32 %v2742, %v2890
      %v2937 = vadd.f32 %v2743, %v2892
      %v2938 = vadd.f32 %v2744, %v2895
      %v2939 = vadd.f32 %v2745, %v2897
      %v2940 = vadd.f32 %v2746, %v2900
      %v2941 = vadd.f32 %v2747, %v2902
      %v2942 = vadd.f32 %v2748, %v2905
      %v2943 = vadd.f32 %v2749, %v2907
      %v2944 = vadd.f32 %v2750, %v2910
      %v2945 = vadd.f32 %v2751, %v2912
      %2946 = vst [vmem:[%s214] sm:$0xff] %v2914
      %2947 = vst [vmem:[%s214 + $0x8] sm:$0xff] %v2915
      %2948 = vst [vmem:[%s214 + $0x10] sm:$0xff] %v2916
      %2949 = vst [vmem:[%s214 + $0x18] sm:$0xff] %v2917
      %2950 = vst [vmem:[%s214 + $0x20] sm:$0xff] %v2918
      %2951 = vst [vmem:[%s214 + $0x28] sm:$0xff] %v2919
      %2952 = vst [vmem:[%s214 + $0x30] sm:$0xff] %v2920
      %2953 = vst [vmem:[%s214 + $0x38] sm:$0xff] %v2921
      %2954 = vst [vmem:[%s214 + $0x40] sm:$0xff] %v2922
      %2955 = vst [vmem:[%s214 + $0x48] sm:$0xff] %v2923
      %2956 = vst [vmem:[%s214 + $0x50] sm:$0xff] %v2924
      %2957 = vst [vmem:[%s214 + $0x58] sm:$0xff] %v2925
      %2958 = vst [vmem:[%s214 + $0x60] sm:$0xff] %v2926
      %2959 = vst [vmem:[%s214 + $0x68] sm:$0xff] %v2927
      %2960 = vst [vmem:[%s214 + $0x70] sm:$0xff] %v2928
      %2961 = vst [vmem:[%s214 + $0x78] sm:$0xff] %v2929
      %2962 = vst [vmem:[%s214 + $0x80] sm:$0xff] %v2930
      %2963 = vst [vmem:[%s214 + $0x88] sm:$0xff] %v2931
      %2964 = vst [vmem:[%s214 + $0x90] sm:$0xff] %v2932
      %2965 = vst [vmem:[%s214 + $0x98] sm:$0xff] %v2933
      %2966 = vst [vmem:[%s214 + $0xa0] sm:$0xff] %v2934
      %2967 = vst [vmem:[%s214 + $0xa8] sm:$0xff] %v2935
      %2968 = vst [vmem:[%s214 + $0xb0] sm:$0xff] %v2936
      %2969 = vst [vmem:[%s214 + $0xb8] sm:$0xff] %v2937
      %2970 = vst [vmem:[%s214 + $0xc0] sm:$0xff] %v2938
      %2971 = vst [vmem:[%s214 + $0xc8] sm:$0xff] %v2939
      %2972 = vst [vmem:[%s214 + $0xd0] sm:$0xff] %v2940
      %2973 = vst [vmem:[%s214 + $0xd8] sm:$0xff] %v2941
      %2974 = vst [vmem:[%s214 + $0xe0] sm:$0xff] %v2942
      %2975 = vst [vmem:[%s214 + $0xe8] sm:$0xff] %v2943
      %2976 = vst [vmem:[%s214 + $0xf0] sm:$0xff] %v2944
      %2977 = vst [vmem:[%s214 + $0xf8] sm:$0xff] %v2945
      %v2978 = vadd.f32 %v2914, %v2915
      %v2979 = vadd.f32 %v2978, %v2916
      %v2980 = vadd.f32 %v2979, %v2917
      %v2981 = vadd.f32 %v2980, %v2918
      %v2982 = vadd.f32 %v2981, %v2919
      %v2983 = vadd.f32 %v2982, %v2920
      %v2984 = vadd.f32 %v2983, %v2921
      %v2985 = vadd.f32 %v2984, %v2922
      %v2986 = vadd.f32 %v2985, %v2923
      %v2987 = vadd.f32 %v2986, %v2924
      %v2988 = vadd.f32 %v2987, %v2925
      %v2989 = vadd.f32 %v2988, %v2926
      %v2990 = vadd.f32 %v2989, %v2927
      %v2991 = vadd.f32 %v2990, %v2928
      %v2992 = vadd.f32 %v2991, %v2929
      %v2993 = vadd.f32 %v2992, %v2930
      %v2994 = vadd.f32 %v2993, %v2931
      %v2995 = vadd.f32 %v2994, %v2932
      %v2996 = vadd.f32 %v2995, %v2933
      %v2997 = vadd.f32 %v2996, %v2934
      %v2998 = vadd.f32 %v2997, %v2935
      %v2999 = vadd.f32 %v2998, %v2936
      %v3000 = vadd.f32 %v2999, %v2937
      %v3001 = vadd.f32 %v3000, %v2938
      %v3002 = vadd.f32 %v3001, %v2939
      %v3003 = vadd.f32 %v3002, %v2940
      %v3004 = vadd.f32 %v3003, %v2941
      %v3005 = vadd.f32 %v3004, %v2942
      %v3006 = vadd.f32 %v3005, %v2943
      %v3007 = vadd.f32 %v3006, %v2944
      %v3008 = vadd.f32 %v3007, %v2945
      %v3009 = vrot.slane %v3008, 4
      %v3010 = vadd.f32 %v3008, %v3009
      %v3011 = vrot.slane %v3010, 2
      %v3012 = vadd.f32 %v3010, %v3011
      %v3013 = vrot.slane %v3012, 1
      %v3014 = vadd.f32 %v3012, %v3013
      %v3015 = vmul.f32 %v2914, %v2914
      %v3016 = vmul.f32 %v2915, %v2915
      %v3017 = vmul.f32 %v2916, %v2916
      %v3018 = vmul.f32 %v2917, %v2917
      %v3019 = vmul.f32 %v2918, %v2918
      %v3020 = vmul.f32 %v2919, %v2919
      %v3021 = vmul.f32 %v2920, %v2920
      %v3022 = vmul.f32 %v2921, %v2921
      %v3023 = vmul.f32 %v2922, %v2922
      %v3024 = vmul.f32 %v2923, %v2923
      %v3025 = vmul.f32 %v2924, %v2924
      %v3026 = vmul.f32 %v2925, %v2925
      %v3027 = vmul.f32 %v2926, %v2926
      %v3028 = vmul.f32 %v2927, %v2927
      %v3029 = vmul.f32 %v2928, %v2928
      %v3030 = vmul.f32 %v2929, %v2929
      %v3031 = vmul.f32 %v2930, %v2930
      %v3032 = vmul.f32 %v2931, %v2931
      %v3033 = vmul.f32 %v2932, %v2932
      %v3034 = vmul.f32 %v2933, %v2933
      %v3035 = vmul.f32 %v2934, %v2934
      %v3036 = vmul.f32 %v2935, %v2935
      %v3037 = vmul.f32 %v2936, %v2936
      %v3038 = vmul.f32 %v2937, %v2937
      %v3039 = vmul.f32 %v2938, %v2938
      %v3040 = vmul.f32 %v2939, %v2939
      %v3041 = vmul.f32 %v2940, %v2940
      %v3042 = vmul.f32 %v2941, %v2941
      %v3043 = vmul.f32 %v2942, %v2942
      %v3044 = vmul.f32 %v2943, %v2943
      %v3045 = vmul.f32 %v2944, %v2944
      %v3046 = vmul.f32 %v2945, %v2945
      %v3047 = vadd.f32 %v3015, %v3016
      %v3048 = vadd.f32 %v3047, %v3017
      %v3049 = vadd.f32 %v3048, %v3018
      %v3050 = vadd.f32 %v3049, %v3019
      %v3051 = vadd.f32 %v3050, %v3020
      %v3052 = vadd.f32 %v3051, %v3021
      %v3053 = vadd.f32 %v3052, %v3022
      %v3054 = vadd.f32 %v3053, %v3023
      %v3055 = vadd.f32 %v3054, %v3024
      %v3056 = vadd.f32 %v3055, %v3025
      %v3057 = vadd.f32 %v3056, %v3026
      %v3058 = vadd.f32 %v3057, %v3027
      %v3059 = vadd.f32 %v3058, %v3028
      %v3060 = vadd.f32 %v3059, %v3029
      %v3061 = vadd.f32 %v3060, %v3030
      %v3062 = vadd.f32 %v3061, %v3031
      %v3063 = vadd.f32 %v3062, %v3032
      %v3064 = vadd.f32 %v3063, %v3033
      %v3065 = vadd.f32 %v3064, %v3034
      %v3066 = vadd.f32 %v3065, %v3035
      %v3067 = vadd.f32 %v3066, %v3036
      %v3068 = vadd.f32 %v3067, %v3037
      %v3069 = vadd.f32 %v3068, %v3038
      %v3070 = vadd.f32 %v3069, %v3039
      %v3071 = vadd.f32 %v3070, %v3040
      %v3072 = vadd.f32 %v3071, %v3041
      %v3073 = vadd.f32 %v3072, %v3042
      %v3074 = vadd.f32 %v3073, %v3043
      %v3075 = vadd.f32 %v3074, %v3044
      %v3076 = vadd.f32 %v3075, %v3045
      %v3077 = vadd.f32 %v3076, %v3046
      %v3078 = vrot.slane %v3077, 4
      %v3079 = vadd.f32 %v3077, %v3078
      %v3080 = vrot.slane %v3079, 2
      %v3081 = vadd.f32 %v3079, %v3080
      %v3082 = vrot.slane %v3081, 1
      %v3083 = vadd.f32 %v3081, %v3082
      %vm3084 = vcmask 1040384
      %v3085 = vsel %vm3084, %v3014, %v3083
      %3086 = vst [vmem:[%s222] sm:$0x3] %v3085
      %s3087 = smul.u32 16, %s22
      %p3088 = scmp.lt.s32.totalorder %s21, 1
      %s3089 = scalar_select %p3088, %s21, 1
      %p3090 = scmp.lt.s32.totalorder %s3087, 15
      %s3091 = scalar_select %p3090, %s3087, 15
      %s3092 = smul.addr %s3091, 2
      %s3093 = smul.addr %s3089, 32
      %s3094 = sadd.s32 %s3092, %s3093
      %s3095 = smul.addr %s3094, 8
      %s3096 = scalar_lea.vmem %s4, %s3095
      %p3097 = scmp.lt.s32.totalorder %s21, 1
      %s3098 = scalar_select %p3097, %s21, 1
      %p3099 = scmp.lt.s32.totalorder %s22, 0
      %s3100 = scalar_select %p3099, %s22, 0
      %s3101 = sadd.s32 %s3100, %s3098
      %s3102 = smul.addr %s3101, 2
      %s3103 = scalar_lea.vmem %s5, %s3102
      // Predicated region
      $region179: #{double_conv.3} parent=31 // pred_check
        %p3104 = pneg %p112
      $region180: #{double_conv.3} parent=31 // pred_check_branch
        %3106 = sbr.rel (%p3104) target = $region182
      $region181: #{double_conv.3} parent=31 // pred_region
        %s3107 = smul.u32 16, %s22
      $region182: #{double_conv.3} parent=31 // pred_fallthru
        _
      // Predicated region
      $region183: #{double_conv.3} parent=31 // pred_check
        %p3108 = pneg %p140
      $region184: #{double_conv.3} parent=31 // pred_check_branch
        %3110 = sbr.rel (%p3108) target = $region186
      $region185: #{double_conv.3} parent=31 // pred_region
        _
      $region186: #{double_conv.3} parent=31 // pred_fallthru
        _
    $region32: #{double_conv.3} parent=5 // pred_fallthru
      _
    %p3111 = scmp.le.s32.totalorder 2, %s12
    // Predicated region
    $region187: #{double_conv.3} parent=5 // pred_check
      %p3112 = pneg %p3111
    $region188: #{double_conv.3} parent=5 // pred_check_branch
      %3114 = sbr.rel (%p3112) target = $region190
    $region189: #{double_conv.3} parent=5 // pred_region
      %s3115 = ssub.s32 %s12, 2
      // Predicated region
      $region191: #{double_conv.3} parent=189 // pred_check
        %p3116 = pneg %p118
      $region192: #{double_conv.3} parent=189 // pred_check_branch
        %3118 = sbr.rel (%p3116) target = $region194
      $region193: #{double_conv.3} parent=189 // pred_region
        %s3119 = smul.u32 16, %s24
        %p3120 = scmp.lt.s32.totalorder %s23, 1
        %s3121 = scalar_select %p3120, %s23, 1
        %p3122 = scmp.lt.s32.totalorder %s3119, 15
        %s3123 = scalar_select %p3122, %s3119, 15
        %s3124 = smul.addr %s3123, 2
        %s3125 = smul.addr %s3121, 32
        %s3126 = sadd.s32 %s3124, %s3125
        %s3127 = smul.addr %s3126, 8
        %s3128 = scalar_lea.vmem %s4, %s3127
      $region194: #{double_conv.3} parent=189 // pred_fallthru
        _
      // Predicated region
      $region195: #{double_conv.3} parent=189 // pred_check
        %p3129 = pneg %p146
      $region196: #{double_conv.3} parent=189 // pred_check_branch
        %3131 = sbr.rel (%p3129) target = $region198
      $region197: #{double_conv.3} parent=189 // pred_region
        %p3132 = scmp.lt.s32.totalorder %s23, 1
        %s3133 = scalar_select %p3132, %s23, 1
        %p3134 = scmp.lt.s32.totalorder %s24, 0
        %s3135 = scalar_select %p3134, %s24, 0
        %s3136 = sadd.s32 %s3135, %s3133
        %s3137 = smul.addr %s3136, 2
        %s3138 = scalar_lea.vmem %s5, %s3137
      $region198: #{double_conv.3} parent=189 // pred_fallthru
        _
    $region190: #{double_conv.3} parent=5 // pred_fallthru
      _
  $region6: #{double_conv.3} parent=0 // loop_footer
    %s16 = sadd.s32 1, %s12
  $region7: #{double_conv.3} parent=0 // loop_footer_branch
    %11 = sbr.rel target = $region3
  $region8: #{double_conv.3} parent=0 // loop_exit
    _
  %3139 = vsyncmov [#allocation3]
  %s3140 = vpop.sfrf %3139
  %p3141 = scmp.eq.s32.totalorder %s3140, 0
  %p3142 = pneg %p3141
  %3144 = shalt.err (%p3142)
  %s3145 = scalar_lea.sflag [#allocation3], 1
  %3146 = vsyncmov %s3145
  %s3147 = vpop.sfrf %3146
  %p3148 = scmp.eq.s32.totalorder %s3147, 0
  %p3149 = pneg %p3148
  %3151 = shalt.err (%p3149)
  %s3152 = scalar_lea.sflag [#allocation3], 2
  %3153 = vsyncmov %s3152
  %s3154 = vpop.sfrf %3153
  %p3155 = scmp.eq.s32.totalorder %s3154, 0
  %p3156 = pneg %p3155
  %3158 = shalt.err (%p3156)
  %s3159 = scalar_lea.sflag [#allocation3], 3
  %3160 = vsyncmov %s3159
  %s3161 = vpop.sfrf %3160
  %p3162 = scmp.eq.s32.totalorder %s3161, 0
  %p3163 = pneg %p3162
  %3165 = shalt.err (%p3163)
  %s3166 = scalar_lea.sflag [#allocation3], 4
  %3167 = vsyncmov %s3166
  %s3168 = vpop.sfrf %3167
  %p3169 = scmp.eq.s32.totalorder %s3168, 0
  %p3170 = pneg %p3169
  %3172 = shalt.err (%p3170)
  %s3173 = scalar_lea.sflag [#allocation3], 5
  %3174 = vsyncmov %s3173
  %s3175 = vpop.sfrf %3174
  %p3176 = scmp.eq.s32.totalorder %s3175, 0
  %p3177 = pneg %p3176
  %3179 = shalt.err (%p3177)

// kernel: double_conv.4
$region0: #{double_conv.4}
  #allocation0 [shape = 'u32[]', space=smem, size = 0x4, offset = 0x4, fixed_abs, tag = 'smem constant byte address 0x4 - core index']
  #allocation1 [shape = 'u32[72,128]{1,0:T(1,128)}', space=vmem, size = 0x9000, scoped, tag = 'internal scratch']
  #allocation2 [shape = 'f32[2,18,18,128]{3,2,1,0:T(8,128)}', space=vmem, size = 0x6c000, scoped, tag = 'scratch operand']
  #allocation3 [shape = 's32[6]{0}', space=sflag, size = 0x18, scoped, tag = 'scratch operand']
  #allocation4 [shape = 's32[]', space=sflag, size = 0x4, offset = 0, fixed_abs, tag = 'sflag constant byte address 0x0 - dummy sync flag']
  #allocation5 [shape = 's32[]', space=sflag, size = 0x4, offset = 0, fixed_abs, tag = 'sflag constant byte address 0x0 - dummy sync flag']
  #allocation6 [shape = 's32[]', space=sflag, size = 0x4, offset = 0, fixed_abs, tag = 'sflag constant byte address 0x0 - dummy sync flag']
  #allocation7 [shape = 's32[]', space=sflag, size = 0x4, offset = 0, fixed_abs, tag = 'sflag constant byte address 0x0 - dummy sync flag']
  #allocation8 [shape = 's32[]', space=sflag, size = 0x4, offset = 0, fixed_abs, tag = 'sflag constant byte address 0x0 - dummy sync flag']
  #allocation9 [shape = 's32[]', space=sflag, size = 0x4, offset = 0, fixed_abs, tag = 'sflag constant byte address 0x0 - dummy sync flag']
  %s0 = inlined_call_operand.vmem [shape: f32[2,16,16,128], index: 0, kind: input, shape index: {}]
  %s1 = inlined_call_operand.vmem [shape: bf16[9,128,128], index: 1, kind: input, shape index: {}]
  %s2 = inlined_call_operand.vmem [shape: f32[1,128], index: 2, kind: input, shape index: {}]
  %s3 = inlined_call_operand.vmem [shape: f32[1,128], index: 3, kind: input, shape index: {}]
  %s4 = inlined_call_operand.vmem [shape: f32[2,16,16,128], index: 4, kind: output, shape index: {0}]
  %s5 = inlined_call_operand.vmem [shape: f32[2,1,2,128], index: 5, kind: output, shape index: {1}]
  %6 = xla_tuple %s4, %s5
  %s7 = sld [smem:[#allocation0]]
  $region199: #{double_conv.4} parent=0
    _
  %s9 = ssub.s32 1, %s7
  %s10 = scalar_select 0, %s9, %s7
  loop: start=0, step=1, limit=4
  $region2: #{double_conv.4} parent=0 // loop_pre_header
    _
  $region3: #{double_conv.4} parent=0 // loop_header
    %s12 = sphi 0, %s16
    %p13 = scmp.ge.s32.totalorder %s12, 4
    %s19 = sphi 0, %s31
    %s20 = sphi 0, %s27
    %s21 = sphi 0, %s19
    %s22 = sphi 0, %s20
    %s23 = sphi 0, %s21
    %s24 = sphi 0, %s22
    %s32 = sphi 0, %s32
    %s34 = sphi 0, %s32
    %s35 = sphi 0, %s34
    %s49 = sphi 0, %s35
    %s53 = sphi 0, %s53
    %s55 = sphi 0, %s53
    %s56 = sphi 0, %s55
    %s70 = sphi 0, %s56
    %s74 = sphi 0, %s74
    %s76 = sphi 0, %s74
    %s77 = sphi 0, %s76
    %s91 = sphi 0, %s77
    %s99 = sphi 0, %s101
    %s102 = sphi 0, %s99
    %s103 = sphi 0, %s102
    %s119 = sphi 0, %s103
    %s127 = sphi 0, %s129
    %s130 = sphi 0, %s127
    %s131 = sphi 0, %s130
    %s147 = sphi 0, %s131
  $region4: #{double_conv.4} parent=0 // loop_header_branch
    %15 = sbr.rel (%p13) target = $region8
  $region5: #{double_conv.4} parent=0 // loop_body
    %s17 = ssub.s32 %s12, 1
    %s18 = ssub.s32 %s12, 2
    %s25 = sadd.s32 1, %s20
    %p26 = scmp.ge.s32.totalorder %s25, 1
    %s27 = scalar_select %p26, 0, %s25
    %s28 = sadd.s32 1, %s19
    %s29 = scalar_select %p26, %s28, %s19
    %p30 = scmp.ge.s32.totalorder %s29, 2
    %s31 = scalar_select %p30, 0, %s29
    %s33 = sadd.s32 %s32, 1
    %p36 = scmp.eq.s32.totalorder %s12, 1
    %p37 = scmp.ne.s32.totalorder %s32, %s34
    %p38 = scmp.eq.s32.totalorder %s12, 0
    %p39 = por %p37, %p38
    %p40 = scmp.ne.s32.totalorder %s32, %s34
    %p41 = scmp.eq.s32.totalorder %s17, 1
    %p42 = por %p40, %p41
    %p43 = scmp.ne.s32.totalorder %s34, %s35
    %p44 = scmp.eq.s32.totalorder %s17, 0
    %p45 = por %p43, %p44
    %p46 = scmp.ne.s32.totalorder %s34, %s35
    %p47 = scmp.eq.s32.totalorder %s18, 1
    %p48 = por %p46, %p47
    %p50 = scmp.ne.s32.totalorder %s35, %s49
    %p51 = scmp.eq.s32.totalorder %s18, 0
    %p52 = por %p50, %p51
    %s54 = sadd.s32 %s53, 1
    %p57 = scmp.eq.s32.totalorder %s12, 1
    %p58 = scmp.ne.s32.totalorder %s53, %s55
    %p59 = scmp.eq.s32.totalorder %s12, 0
    %p60 = por %p58, %p59
    %p61 = scmp.ne.s32.totalorder %s53, %s55
    %p62 = scmp.eq.s32.totalorder %s17, 1
    %p63 = por %p61, %p62
    %p64 = scmp.ne.s32.totalorder %s55, %s56
    %p65 = scmp.eq.s32.totalorder %s17, 0
    %p66 = por %p64, %p65
    %p67 = scmp.ne.s32.totalorder %s55, %s56
    %p68 = scmp.eq.s32.totalorder %s18, 1
    %p69 = por %p67, %p68
    %p71 = scmp.ne.s32.totalorder %s56, %s70
    %p72 = scmp.eq.s32.totalorder %s18, 0
    %p73 = por %p71, %p72
    %s75 = sadd.s32 %s74, 1
    %p78 = scmp.eq.s32.totalorder %s12, 1
    %p79 = scmp.ne.s32.totalorder %s74, %s76
    %p80 = scmp.eq.s32.totalorder %s12, 0
    %p81 = por %p79, %p80
    %p82 = scmp.ne.s32.totalorder %s74, %s76
    %p83 = scmp.eq.s32.totalorder %s17, 1
    %p84 = por %p82, %p83
    %p85 = scmp.ne.s32.totalorder %s76, %s77
    %p86 = scmp.eq.s32.totalorder %s17, 0
    %p87 = por %p85, %p86
    %p88 = scmp.ne.s32.totalorder %s76, %s77
    %p89 = scmp.eq.s32.totalorder %s18, 1
    %p90 = por %p88, %p89
    %p92 = scmp.ne.s32.totalorder %s77, %s91
    %p93 = scmp.eq.s32.totalorder %s18, 0
    %p94 = por %p92, %p93
    %s95 = ssub.s32 %s19, %s31
    %s96 = ssub.s32 %s20, %s27
    %s97 = sor.u32 %s95, %s96
    %p98 = scmp.eq.s32.totalorder %s97, 0
    %s100 = sadd.s32 %s99, 1
    %s101 = scalar_select %p98, %s99, %s100
    %p104 = pneg %p98
    %p105 = scmp.eq.s32.totalorder %s12, 1
    %p106 = por %p104, %p105
    %p107 = scmp.ne.s32.totalorder %s99, %s102
    %p108 = scmp.eq.s32.totalorder %s12, 0
    %p109 = por %p107, %p108
    %p110 = scmp.ne.s32.totalorder %s99, %s102
    %p111 = scmp.eq.s32.totalorder %s17, 1
    %p112 = por %p110, %p111
    %p113 = scmp.ne.s32.totalorder %s102, %s103
    %p114 = scmp.eq.s32.totalorder %s17, 0
    %p115 = por %p113, %p114
    %p116 = scmp.ne.s32.totalorder %s102, %s103
    %p117 = scmp.eq.s32.totalorder %s18, 1
    %p118 = por %p116, %p117
    %p120 = scmp.ne.s32.totalorder %s103, %s119
    %p121 = scmp.eq.s32.totalorder %s18, 0
    %p122 = por %p120, %p121
    %s123 = ssub.s32 %s19, %s31
    %s124 = ssub.s32 %s20, %s27
    %s125 = sor.u32 %s123, %s124
    %p126 = scmp.eq.s32.totalorder %s125, 0
    %s128 = sadd.s32 %s127, 1
    %s129 = scalar_select %p126, %s127, %s128
    %p132 = pneg %p126
    %p133 = scmp.eq.s32.totalorder %s12, 1
    %p134 = por %p132, %p133
    %p135 = scmp.ne.s32.totalorder %s127, %s130
    %p136 = scmp.eq.s32.totalorder %s12, 0
    %p137 = por %p135, %p136
    %p138 = scmp.ne.s32.totalorder %s127, %s130
    %p139 = scmp.eq.s32.totalorder %s17, 1
    %p140 = por %p138, %p139
    %p141 = scmp.ne.s32.totalorder %s130, %s131
    %p142 = scmp.eq.s32.totalorder %s17, 0
    %p143 = por %p141, %p142
    %p144 = scmp.ne.s32.totalorder %s130, %s131
    %p145 = scmp.eq.s32.totalorder %s18, 1
    %p146 = por %p144, %p145
    %p148 = scmp.ne.s32.totalorder %s131, %s147
    %p149 = scmp.eq.s32.totalorder %s18, 0
    %p150 = por %p148, %p149
    %p151 = scmp.le.s32.totalorder 1, %s12
    %p152 = scmp.lt.s32.totalorder %s12, 3
    %p153 = pnand %p151, %p152
    %p154 = pneg %p153
    // Predicated region
    $region9: #{double_conv.4} parent=5 // pred_check
      _
    $region10: #{double_conv.4} parent=5 // pred_check_branch
      %156 = sbr.rel (%p153) target = $region12
    $region11: #{double_conv.4} parent=5 // pred_region
      %s157 = ssub.s32 %s12, 1
      // Predicated region
      $region13: #{double_conv.4} parent=11 // pred_check
        %p158 = pneg %p45
      $region14: #{double_conv.4} parent=11 // pred_check_branch
        %160 = sbr.rel (%p158) target = $region16
      $region15: #{double_conv.4} parent=11 // pred_region
        _
      $region16: #{double_conv.4} parent=11 // pred_fallthru
        _
      // Predicated region
      $region17: #{double_conv.4} parent=11 // pred_check
        %p161 = pneg %p66
      $region18: #{double_conv.4} parent=11 // pred_check_branch
        %163 = sbr.rel (%p161) target = $region20
      $region19: #{double_conv.4} parent=11 // pred_region
        _
      $region20: #{double_conv.4} parent=11 // pred_fallthru
        _
      // Predicated region
      $region21: #{double_conv.4} parent=11 // pred_check
        %p164 = pneg %p87
      $region22: #{double_conv.4} parent=11 // pred_check_branch
        %166 = sbr.rel (%p164) target = $region24
      $region23: #{double_conv.4} parent=11 // pred_region
        _
      $region24: #{double_conv.4} parent=11 // pred_fallthru
        _
    $region12: #{double_conv.4} parent=5 // pred_fallthru
      _
    %p167 = scmp.lt.s32.totalorder %s12, 2
    // Predicated region
    $region25: #{double_conv.4} parent=5 // pred_check
      %p168 = pneg %p167
    $region26: #{double_conv.4} parent=5 // pred_check_branch
      %170 = sbr.rel (%p168) target = $region28
    $region27: #{double_conv.4} parent=5 // pred_region
      _
    $region28: #{double_conv.4} parent=5 // pred_fallthru
      _
    %p171 = scmp.le.s32.totalorder 1, %s12
    %p172 = scmp.lt.s32.totalorder %s12, 3
    %p173 = pnand %p171, %p172
    %p174 = pneg %p173
    // Predicated region
    $region29: #{double_conv.4} parent=5 // pred_check
      _
    $region30: #{double_conv.4} parent=5 // pred_check_branch
      %176 = sbr.rel (%p173) target = $region32
    $region31: #{double_conv.4} parent=5 // pred_region
      %s177 = ssub.s32 %s12, 1
      %p178 = pneg %p45
      %p179 = pneg %p42
      %p180 = pneg %p66
      %p181 = pneg %p63
      %p182 = pneg %p87
      %p183 = pneg %p84
      %p184 = pneg %p115
      %p185 = pneg %p112
      %s186 = smul.u32 16, %s22
      %p187 = scmp.lt.s32.totalorder %s21, 1
      %s188 = scalar_select %p187, %s21, 1
      %p189 = scmp.lt.s32.totalorder %s186, 15
      %s190 = scalar_select %p189, %s186, 15
      %s191 = smul.addr %s190, 2
      %s192 = smul.addr %s188, 32
      %s193 = sadd.s32 %s191, %s192
      %s194 = smul.addr %s193, 8
      %s195 = scalar_lea.vmem %s4, %s194
      %p196 = pneg %p143
      %p197 = pneg %p140
      %p198 = scmp.lt.s32.totalorder %s21, 1
      %s199 = scalar_select %p198, %s21, 1
      %p200 = scmp.lt.s32.totalorder %s22, 0
      %s201 = scalar_select %p200, %s22, 0
      %s202 = sadd.s32 %s201, %s199
      %s203 = smul.addr %s202, 2
      %s204 = scalar_lea.vmem %s5, %s203
      %s205 = smul.u32 16, %s22
      %p206 = scmp.lt.s32.totalorder %s21, 1
      %s207 = scalar_select %p206, %s21, 1
      %p208 = scmp.lt.s32.totalorder %s205, 15
      %s209 = scalar_select %p208, %s205, 15
      %s210 = smul.addr %s209, 2
      %s211 = smul.addr %s207, 32
      %s212 = sadd.s32 %s210, %s211
      %s213 = smul.addr %s212, 8
      %s214 = scalar_lea.vmem %s4, %s213
      %s215 = smul.u32 16, %s22
      %p216 = scmp.lt.s32.totalorder %s21, 1
      %s217 = scalar_select %p216, %s21, 1
      %p218 = scmp.lt.s32.totalorder %s22, 0
      %s219 = scalar_select %p218, %s22, 0
      %s220 = sadd.s32 %s219, %s217
      %s221 = smul.addr %s220, 2
      %s222 = scalar_lea.vmem %s5, %s221
      %p223 = scmp.lt.s32.totalorder %s22, 0
      %s224 = ssub.s32 0, %s22
      %s225 = scalar_select %p223, %s224, %s22
      %s226 = sand.u32 %s225, 1
      %s227 = ssub.s32 0, %s226
      %s228 = scalar_select %p223, %s227, %s226
      %p229 = scmp.ne.s32.totalorder %s228, 0
      %p230 = scmp.lt.s32.totalorder %s228, 0
      %p231 = pnand %p230, %p229
      %p232 = pneg %p231
      %s233 = sadd.s32 %s228, 2
      %s234 = scalar_select %p232, %s233, %s228
      %p235 = scmp.eq.s32.totalorder %s22, 0
      // Predicated region
      $region33: #{double_conv.4} parent=31 // pred_check
        %p236 = pneg %p235
      $region34: #{double_conv.4} parent=31 // pred_check_branch
        %238 = sbr.rel (%p236) target = $region36
      $region35: #{double_conv.4} parent=31 // pred_region
        %s239 = smul.u32 %s22, 16
        %s240 = smul.u32 %s239, 16
        %s241 = smul.u32 %s21, 256
        %s242 = sadd.s32 %s240, %s241
        %s243 = scalar_lea.vmem %s0, %s242
        %s244 = smul.u32 %s234, 432
        %s245 = sadd.s32 25, %s244
        %s246 = scalar_lea.vmem [#allocation2], %s245
        %s247 = smul.u32 %s234, 3
        %s248 = scalar_lea.sflag [#allocation3], %s247
        // Predicated region
        $region37: #{double_conv.4} parent=35 // pred_check
          _
        $region38: #{double_conv.4} parent=35 // pred_check_branch
          %250 = sbr.rel (0) target = $region40
        $region39: #{double_conv.4} parent=35 // pred_region
          loop: start=0, step=1, limit=1
          $region41: #{double_conv.4} parent=39 // loop_pre_header
            _
          $region42: #{double_conv.4} parent=39 // loop_header
            %s252 = sphi 0, %s256
            %p253 = scmp.ge.s32.totalorder %s252, 1
            %s257 = sphi %s243, %s243
            %s258 = sphi %s246, %s246
          $region43: #{double_conv.4} parent=39 // loop_header_branch
            %255 = sbr.rel (%p253) target = $region47
          $region44: #{double_conv.4} parent=39 // loop_body
            %v259 = vld [vmem:[%s257] sm:$0xff]
            %260 = vst [vmem:[%s258] sm:$0xff] %v259
            %v261 = vld [vmem:[%s257 + $0x8] sm:$0xff]
            %262 = vst [vmem:[%s258 + $0x8] sm:$0xff] %v261
            %v263 = vld [vmem:[%s257 + $0x10] sm:$0xff]
            %264 = vst [vmem:[%s258 + $0x18] sm:$0xff] %v263
            %v265 = vld [vmem:[%s257 + $0x18] sm:$0xff]
            %266 = vst [vmem:[%s258 + $0x20] sm:$0xff] %v265
            %v267 = vld [vmem:[%s257 + $0x20] sm:$0xff]
            %268 = vst [vmem:[%s258 + $0x30] sm:$0xff] %v267
            %v269 = vld [vmem:[%s257 + $0x28] sm:$0xff]
            %270 = vst [vmem:[%s258 + $0x38] sm:$0xff] %v269
            %v271 = vld [vmem:[%s257 + $0x30] sm:$0xff]
            %272 = vst [vmem:[%s258 + $0x48] sm:$0xff] %v271
            %v273 = vld [vmem:[%s257 + $0x38] sm:$0xff]
            %274 = vst [vmem:[%s258 + $0x50] sm:$0xff] %v273
            %v275 = vld [vmem:[%s257 + $0x40] sm:$0xff]
            %276 = vst [vmem:[%s258 + $0x60] sm:$0xff] %v275
            %v277 = vld [vmem:[%s257 + $0x48] sm:$0xff]
            %278 = vst [vmem:[%s258 + $0x68] sm:$0xff] %v277
            %v279 = vld [vmem:[%s257 + $0x50] sm:$0xff]
            %280 = vst [vmem:[%s258 + $0x78] sm:$0xff] %v279
            %v281 = vld [vmem:[%s257 + $0x58] sm:$0xff]
            %282 = vst [vmem:[%s258 + $0x80] sm:$0xff] %v281
            %v283 = vld [vmem:[%s257 + $0x60] sm:$0xff]
            %284 = vst [vmem:[%s258 + $0x90] sm:$0xff] %v283
            %v285 = vld [vmem:[%s257 + $0x68] sm:$0xff]
            %286 = vst [vmem:[%s258 + $0x98] sm:$0xff] %v285
            %v287 = vld [vmem:[%s257 + $0x70] sm:$0xff]
            %288 = vst [vmem:[%s258 + $0xa8] sm:$0xff] %v287
            %v289 = vld [vmem:[%s257 + $0x78] sm:$0xff]
            %290 = vst [vmem:[%s258 + $0xb0] sm:$0xff] %v289
            %v291 = vld [vmem:[%s257 + $0x80] sm:$0xff]
            %292 = vst [vmem:[%s258 + $0xc0] sm:$0xff] %v291
            %v293 = vld [vmem:[%s257 + $0x88] sm:$0xff]
            %294 = vst [vmem:[%s258 + $0xc8] sm:$0xff] %v293
            %v295 = vld [vmem:[%s257 + $0x90] sm:$0xff]
            %296 = vst [vmem:[%s258 + $0xd8] sm:$0xff] %v295
            %v297 = vld [vmem:[%s257 + $0x98] sm:$0xff]
            %298 = vst [vmem:[%s258 + $0xe0] sm:$0xff] %v297
            %v299 = vld [vmem:[%s257 + $0xa0] sm:$0xff]
            %300 = vst [vmem:[%s258 + $0xf0] sm:$0xff] %v299
            %v301 = vld [vmem:[%s257 + $0xa8] sm:$0xff]
            %302 = vst [vmem:[%s258 + $0xf8] sm:$0xff] %v301
            %v303 = vld [vmem:[%s257 + $0xb0] sm:$0xff]
            %304 = vst [vmem:[%s258 + $0x108] sm:$0xff] %v303
            %v305 = vld [vmem:[%s257 + $0xb8] sm:$0xff]
            %306 = vst [vmem:[%s258 + $0x110] sm:$0xff] %v305
            %v307 = vld [vmem:[%s257 + $0xc0] sm:$0xff]
            %308 = vst [vmem:[%s258 + $0x120] sm:$0xff] %v307
            %v309 = vld [vmem:[%s257 + $0xc8] sm:$0xff]
            %310 = vst [vmem:[%s258 + $0x128] sm:$0xff] %v309
            %v311 = vld [vmem:[%s257 + $0xd0] sm:$0xff]
            %312 = vst [vmem:[%s258 + $0x138] sm:$0xff] %v311
            %v313 = vld [vmem:[%s257 + $0xd8] sm:$0xff]
            %314 = vst [vmem:[%s258 + $0x140] sm:$0xff] %v313
            %v315 = vld [vmem:[%s257 + $0xe0] sm:$0xff]
            %316 = vst [vmem:[%s258 + $0x150] sm:$0xff] %v315
            %v317 = vld [vmem:[%s257 + $0xe8] sm:$0xff]
            %318 = vst [vmem:[%s258 + $0x158] sm:$0xff] %v317
            %v319 = vld [vmem:[%s257 + $0xf0] sm:$0xff]
            %320 = vst [vmem:[%s258 + $0x168] sm:$0xff] %v319
            %v321 = vld [vmem:[%s257 + $0xf8] sm:$0xff]
            %322 = vst [vmem:[%s258 + $0x170] sm:$0xff] %v321
          $region45: #{double_conv.4} parent=39 // loop_footer
            %s256 = sadd.s32 1, %s252
          $region46: #{double_conv.4} parent=39 // loop_footer_branch
            %251 = sbr.rel target = $region42
          $region47: #{double_conv.4} parent=39 // loop_exit
            _
        $region40: #{double_conv.4} parent=35 // pred_fallthru
          _
        // Predicated region
        $region48: #{double_conv.4} parent=35 // pred_check
          _
        $region49: #{double_conv.4} parent=35 // pred_check_branch
          %324 = sbr.rel target = $region51
        $region50: #{double_conv.4} parent=35 // pred_region
          _
        $region51: #{double_conv.4} parent=35 // pred_fallthru
          _
        // Predicated region
        $region52: #{double_conv.4} parent=35 // pred_check
          _
        $region53: #{double_conv.4} parent=35 // pred_check_branch
          %327 = sbr.rel (0) target = $region55
        $region54: #{double_conv.4} parent=35 // pred_region
          %328 = vsyncadd %s248, 4096
        $region55: #{double_conv.4} parent=35 // pred_fallthru
          _
        %p329 = scmp.gt.s32.totalorder %s22, 0
        // Predicated region
        $region56: #{double_conv.4} parent=35 // pred_check
          %p330 = pneg %p329
        $region57: #{double_conv.4} parent=35 // pred_check_branch
          %332 = sbr.rel (%p330) target = $region59
        $region58: #{double_conv.4} parent=35 // pred_region
          %s333 = ssub.s32 %s239, 1
          %s334 = smul.u32 %s333, 16
          %s335 = sadd.s32 %s334, %s241
          %s336 = scalar_lea.vmem %s0, %s335
          %s337 = sadd.s32 1, %s244
          %s338 = scalar_lea.vmem [#allocation2], %s337
          %s339 = sadd.s32 1, %s247
          %s340 = scalar_lea.sflag [#allocation3], %s339
          // Predicated region
          $region60: #{double_conv.4} parent=58 // pred_check
            _
          $region61: #{double_conv.4} parent=58 // pred_check_branch
            %342 = sbr.rel (0) target = $region63
          $region62: #{double_conv.4} parent=58 // pred_region
            loop: start=0, step=1, limit=1
            $region64: #{double_conv.4} parent=62 // loop_pre_header
              _
            $region65: #{double_conv.4} parent=62 // loop_header
              %s344 = sphi 0, %s348
              %p345 = scmp.ge.s32.totalorder %s344, 1
              %s349 = sphi %s336, %s336
              %s350 = sphi %s338, %s338
            $region66: #{double_conv.4} parent=62 // loop_header_branch
              %347 = sbr.rel (%p345) target = $region70
            $region67: #{double_conv.4} parent=62 // loop_body
              %v351 = vld [vmem:[%s349] sm:$0xff]
              %352 = vst [vmem:[%s350] sm:$0xff] %v351
              %v353 = vld [vmem:[%s349 + $0x8] sm:$0xff]
              %354 = vst [vmem:[%s350 + $0x8] sm:$0xff] %v353
            $region68: #{double_conv.4} parent=62 // loop_footer
              %s348 = sadd.s32 1, %s344
            $region69: #{double_conv.4} parent=62 // loop_footer_branch
              %343 = sbr.rel target = $region65
            $region70: #{double_conv.4} parent=62 // loop_exit
              _
          $region63: #{double_conv.4} parent=58 // pred_fallthru
            _
          // Predicated region
          $region71: #{double_conv.4} parent=58 // pred_check
            _
          $region72: #{double_conv.4} parent=58 // pred_check_branch
            %356 = sbr.rel target = $region74
          $region73: #{double_conv.4} parent=58 // pred_region
            _
          $region74: #{double_conv.4} parent=58 // pred_fallthru
            _
          // Predicated region
          $region75: #{double_conv.4} parent=58 // pred_check
            _
          $region76: #{double_conv.4} parent=58 // pred_check_branch
            %359 = sbr.rel (0) target = $region78
          $region77: #{double_conv.4} parent=58 // pred_region
            %360 = vsyncadd %s340, 256
          $region78: #{double_conv.4} parent=58 // pred_fallthru
            _
        $region59: #{double_conv.4} parent=35 // pred_fallthru
          _
        %p361 = scmp.lt.s32.totalorder %s22, 0
        // Predicated region
        $region79: #{double_conv.4} parent=35 // pred_check
          %p362 = pneg %p361
        $region80: #{double_conv.4} parent=35 // pred_check_branch
          %364 = sbr.rel (%p362) target = $region82
        $region81: #{double_conv.4} parent=35 // pred_region
          %s365 = sadd.s32 %s22, 1
          %s366 = smul.u32 %s365, 16
          %s367 = smul.u32 %s366, 16
          %s368 = sadd.s32 %s367, %s241
          %s369 = scalar_lea.vmem %s0, %s368
          %s370 = sadd.s32 409, %s244
          %s371 = scalar_lea.vmem [#allocation2], %s370
          %s372 = sadd.s32 2, %s247
          %s373 = scalar_lea.sflag [#allocation3], %s372
          // Predicated region
          $region83: #{double_conv.4} parent=81 // pred_check
            _
          $region84: #{double_conv.4} parent=81 // pred_check_branch
            %375 = sbr.rel (0) target = $region86
          $region85: #{double_conv.4} parent=81 // pred_region
            loop: start=0, step=1, limit=1
            $region87: #{double_conv.4} parent=85 // loop_pre_header
              _
            $region88: #{double_conv.4} parent=85 // loop_header
              %s377 = sphi 0, %s381
              %p378 = scmp.ge.s32.totalorder %s377, 1
              %s382 = sphi %s369, %s369
              %s383 = sphi %s371, %s371
            $region89: #{double_conv.4} parent=85 // loop_header_branch
              %380 = sbr.rel (%p378) target = $region93
            $region90: #{double_conv.4} parent=85 // loop_body
              %v384 = vld [vmem:[%s382] sm:$0xff]
              %385 = vst [vmem:[%s383] sm:$0xff] %v384
              %v386 = vld [vmem:[%s382 + $0x8] sm:$0xff]
              %387 = vst [vmem:[%s383 + $0x8] sm:$0xff] %v386
            $region91: #{double_conv.4} parent=85 // loop_footer
              %s381 = sadd.s32 1, %s377
            $region92: #{double_conv.4} parent=85 // loop_footer_branch
              %376 = sbr.rel target = $region88
            $region93: #{double_conv.4} parent=85 // loop_exit
              _
          $region86: #{double_conv.4} parent=81 // pred_fallthru
            _
          // Predicated region
          $region94: #{double_conv.4} parent=81 // pred_check
            _
          $region95: #{double_conv.4} parent=81 // pred_check_branch
            %389 = sbr.rel target = $region97
          $region96: #{double_conv.4} parent=81 // pred_region
            _
          $region97: #{double_conv.4} parent=81 // pred_fallthru
            _
          // Predicated region
          $region98: #{double_conv.4} parent=81 // pred_check
            _
          $region99: #{double_conv.4} parent=81 // pred_check_branch
            %392 = sbr.rel (0) target = $region101
          $region100: #{double_conv.4} parent=81 // pred_region
            %393 = vsyncadd %s373, 256
          $region101: #{double_conv.4} parent=81 // pred_fallthru
            _
        $region82: #{double_conv.4} parent=35 // pred_fallthru
          _
      $region36: #{double_conv.4} parent=31 // pred_fallthru
        _
      %s394 = sadd.s32 %s22, 1
      %p395 = scmp.lt.s32.totalorder %s394, 1
      // Predicated region
      $region102: #{double_conv.4} parent=31 // pred_check
        %p396 = pneg %p395
      $region103: #{double_conv.4} parent=31 // pred_check_branch
        %398 = sbr.rel (%p396) target = $region105
      $region104: #{double_conv.4} parent=31 // pred_region
        %s399 = ssub.s32 1, %s234
        %s400 = smul.u32 %s394, 16
        %s401 = smul.u32 %s400, 16
        %s402 = smul.u32 %s21, 256
        %s403 = sadd.s32 %s401, %s402
        %s404 = scalar_lea.vmem %s0, %s403
        %s405 = smul.u32 %s399, 432
        %s406 = sadd.s32 25, %s405
        %s407 = scalar_lea.vmem [#allocation2], %s406
        %s408 = smul.u32 %s399, 3
        %s409 = scalar_lea.sflag [#allocation3], %s408
        // Predicated region
        $region106: #{double_conv.4} parent=104 // pred_check
          _
        $region107: #{double_conv.4} parent=104 // pred_check_branch
          %411 = sbr.rel (0) target = $region109
        $region108: #{double_conv.4} parent=104 // pred_region
          loop: start=0, step=1, limit=1
          $region110: #{double_conv.4} parent=108 // loop_pre_header
            _
          $region111: #{double_conv.4} parent=108 // loop_header
            %s413 = sphi 0, %s417
            %p414 = scmp.ge.s32.totalorder %s413, 1
            %s418 = sphi %s404, %s404
            %s419 = sphi %s407, %s407
          $region112: #{double_conv.4} parent=108 // loop_header_branch
            %416 = sbr.rel (%p414) target = $region116
          $region113: #{double_conv.4} parent=108 // loop_body
            %v420 = vld [vmem:[%s418] sm:$0xff]
            %421 = vst [vmem:[%s419] sm:$0xff] %v420
            %v422 = vld [vmem:[%s418 + $0x8] sm:$0xff]
            %423 = vst [vmem:[%s419 + $0x8] sm:$0xff] %v422
            %v424 = vld [vmem:[%s418 + $0x10] sm:$0xff]
            %425 = vst [vmem:[%s419 + $0x18] sm:$0xff] %v424
            %v426 = vld [vmem:[%s418 + $0x18] sm:$0xff]
            %427 = vst [vmem:[%s419 + $0x20] sm:$0xff] %v426
            %v428 = vld [vmem:[%s418 + $0x20] sm:$0xff]
            %429 = vst [vmem:[%s419 + $0x30] sm:$0xff] %v428
            %v430 = vld [vmem:[%s418 + $0x28] sm:$0xff]
            %431 = vst [vmem:[%s419 + $0x38] sm:$0xff] %v430
            %v432 = vld [vmem:[%s418 + $0x30] sm:$0xff]
            %433 = vst [vmem:[%s419 + $0x48] sm:$0xff] %v432
            %v434 = vld [vmem:[%s418 + $0x38] sm:$0xff]
            %435 = vst [vmem:[%s419 + $0x50] sm:$0xff] %v434
            %v436 = vld [vmem:[%s418 + $0x40] sm:$0xff]
            %437 = vst [vmem:[%s419 + $0x60] sm:$0xff] %v436
            %v438 = vld [vmem:[%s418 + $0x48] sm:$0xff]
            %439 = vst [vmem:[%s419 + $0x68] sm:$0xff] %v438
            %v440 = vld [vmem:[%s418 + $0x50] sm:$0xff]
            %441 = vst [vmem:[%s419 + $0x78] sm:$0xff] %v440
            %v442 = vld [vmem:[%s418 + $0x58] sm:$0xff]
            %443 = vst [vmem:[%s419 + $0x80] sm:$0xff] %v442
            %v444 = vld [vmem:[%s418 + $0x60] sm:$0xff]
            %445 = vst [vmem:[%s419 + $0x90] sm:$0xff] %v444
            %v446 = vld [vmem:[%s418 + $0x68] sm:$0xff]
            %447 = vst [vmem:[%s419 + $0x98] sm:$0xff] %v446
            %v448 = vld [vmem:[%s418 + $0x70] sm:$0xff]
            %449 = vst [vmem:[%s419 + $0xa8] sm:$0xff] %v448
            %v450 = vld [vmem:[%s418 + $0x78] sm:$0xff]
            %451 = vst [vmem:[%s419 + $0xb0] sm:$0xff] %v450
            %v452 = vld [vmem:[%s418 + $0x80] sm:$0xff]
            %453 = vst [vmem:[%s419 + $0xc0] sm:$0xff] %v452
            %v454 = vld [vmem:[%s418 + $0x88] sm:$0xff]
            %455 = vst [vmem:[%s419 + $0xc8] sm:$0xff] %v454
            %v456 = vld [vmem:[%s418 + $0x90] sm:$0xff]
            %457 = vst [vmem:[%s419 + $0xd8] sm:$0xff] %v456
            %v458 = vld [vmem:[%s418 + $0x98] sm:$0xff]
            %459 = vst [vmem:[%s419 + $0xe0] sm:$0xff] %v458
            %v460 = vld [vmem:[%s418 + $0xa0] sm:$0xff]
            %461 = vst [vmem:[%s419 + $0xf0] sm:$0xff] %v460
            %v462 = vld [vmem:[%s418 + $0xa8] sm:$0xff]
            %463 = vst [vmem:[%s419 + $0xf8] sm:$0xff] %v462
            %v464 = vld [vmem:[%s418 + $0xb0] sm:$0xff]
            %465 = vst [vmem:[%s419 + $0x108] sm:$0xff] %v464
            %v466 = vld [vmem:[%s418 + $0xb8] sm:$0xff]
            %467 = vst [vmem:[%s419 + $0x110] sm:$0xff] %v466
            %v468 = vld [vmem:[%s418 + $0xc0] sm:$0xff]
            %469 = vst [vmem:[%s419 + $0x120] sm:$0xff] %v468
            %v470 = vld [vmem:[%s418 + $0xc8] sm:$0xff]
            %471 = vst [vmem:[%s419 + $0x128] sm:$0xff] %v470
            %v472 = vld [vmem:[%s418 + $0xd0] sm:$0xff]
            %473 = vst [vmem:[%s419 + $0x138] sm:$0xff] %v472
            %v474 = vld [vmem:[%s418 + $0xd8] sm:$0xff]
            %475 = vst [vmem:[%s419 + $0x140] sm:$0xff] %v474
            %v476 = vld [vmem:[%s418 + $0xe0] sm:$0xff]
            %477 = vst [vmem:[%s419 + $0x150] sm:$0xff] %v476
            %v478 = vld [vmem:[%s418 + $0xe8] sm:$0xff]
            %479 = vst [vmem:[%s419 + $0x158] sm:$0xff] %v478
            %v480 = vld [vmem:[%s418 + $0xf0] sm:$0xff]
            %481 = vst [vmem:[%s419 + $0x168] sm:$0xff] %v480
            %v482 = vld [vmem:[%s418 + $0xf8] sm:$0xff]
            %483 = vst [vmem:[%s419 + $0x170] sm:$0xff] %v482
          $region114: #{double_conv.4} parent=108 // loop_footer
            %s417 = sadd.s32 1, %s413
          $region115: #{double_conv.4} parent=108 // loop_footer_branch
            %412 = sbr.rel target = $region111
          $region116: #{double_conv.4} parent=108 // loop_exit
            _
        $region109: #{double_conv.4} parent=104 // pred_fallthru
          _
        // Predicated region
        $region117: #{double_conv.4} parent=104 // pred_check
          _
        $region118: #{double_conv.4} parent=104 // pred_check_branch
          %485 = sbr.rel target = $region120
        $region119: #{double_conv.4} parent=104 // pred_region
          _
        $region120: #{double_conv.4} parent=104 // pred_fallthru
          _
        // Predicated region
        $region121: #{double_conv.4} parent=104 // pred_check
          _
        $region122: #{double_conv.4} parent=104 // pred_check_branch
          %488 = sbr.rel (0) target = $region124
        $region123: #{double_conv.4} parent=104 // pred_region
          %489 = vsyncadd %s409, 4096
        $region124: #{double_conv.4} parent=104 // pred_fallthru
          _
        %p490 = scmp.gt.s32.totalorder %s394, 0
        // Predicated region
        $region125: #{double_conv.4} parent=104 // pred_check
          %p491 = pneg %p490
        $region126: #{double_conv.4} parent=104 // pred_check_branch
          %493 = sbr.rel (%p491) target = $region128
        $region127: #{double_conv.4} parent=104 // pred_region
          %s494 = ssub.s32 %s400, 1
          %s495 = smul.u32 %s494, 16
          %s496 = sadd.s32 %s495, %s402
          %s497 = scalar_lea.vmem %s0, %s496
          %s498 = sadd.s32 1, %s405
          %s499 = scalar_lea.vmem [#allocation2], %s498
          %s500 = sadd.s32 1, %s408
          %s501 = scalar_lea.sflag [#allocation3], %s500
          // Predicated region
          $region129: #{double_conv.4} parent=127 // pred_check
            _
          $region130: #{double_conv.4} parent=127 // pred_check_branch
            %503 = sbr.rel (0) target = $region132
          $region131: #{double_conv.4} parent=127 // pred_region
            loop: start=0, step=1, limit=1
            $region133: #{double_conv.4} parent=131 // loop_pre_header
              _
            $region134: #{double_conv.4} parent=131 // loop_header
              %s505 = sphi 0, %s509
              %p506 = scmp.ge.s32.totalorder %s505, 1
              %s510 = sphi %s497, %s497
              %s511 = sphi %s499, %s499
            $region135: #{double_conv.4} parent=131 // loop_header_branch
              %508 = sbr.rel (%p506) target = $region139
            $region136: #{double_conv.4} parent=131 // loop_body
              %v512 = vld [vmem:[%s510] sm:$0xff]
              %513 = vst [vmem:[%s511] sm:$0xff] %v512
              %v514 = vld [vmem:[%s510 + $0x8] sm:$0xff]
              %515 = vst [vmem:[%s511 + $0x8] sm:$0xff] %v514
            $region137: #{double_conv.4} parent=131 // loop_footer
              %s509 = sadd.s32 1, %s505
            $region138: #{double_conv.4} parent=131 // loop_footer_branch
              %504 = sbr.rel target = $region134
            $region139: #{double_conv.4} parent=131 // loop_exit
              _
          $region132: #{double_conv.4} parent=127 // pred_fallthru
            _
          // Predicated region
          $region140: #{double_conv.4} parent=127 // pred_check
            _
          $region141: #{double_conv.4} parent=127 // pred_check_branch
            %517 = sbr.rel target = $region143
          $region142: #{double_conv.4} parent=127 // pred_region
            _
          $region143: #{double_conv.4} parent=127 // pred_fallthru
            _
          // Predicated region
          $region144: #{double_conv.4} parent=127 // pred_check
            _
          $region145: #{double_conv.4} parent=127 // pred_check_branch
            %520 = sbr.rel (0) target = $region147
          $region146: #{double_conv.4} parent=127 // pred_region
            %521 = vsyncadd %s501, 256
          $region147: #{double_conv.4} parent=127 // pred_fallthru
            _
        $region128: #{double_conv.4} parent=104 // pred_fallthru
          _
        %p522 = scmp.lt.s32.totalorder %s394, 0
        // Predicated region
        $region148: #{double_conv.4} parent=104 // pred_check
          %p523 = pneg %p522
        $region149: #{double_conv.4} parent=104 // pred_check_branch
          %525 = sbr.rel (%p523) target = $region151
        $region150: #{double_conv.4} parent=104 // pred_region
          %s526 = sadd.s32 %s22, 2
          %s527 = smul.u32 %s526, 16
          %s528 = smul.u32 %s527, 16
          %s529 = sadd.s32 %s528, %s402
          %s530 = scalar_lea.vmem %s0, %s529
          %s531 = sadd.s32 409, %s405
          %s532 = scalar_lea.vmem [#allocation2], %s531
          %s533 = sadd.s32 2, %s408
          %s534 = scalar_lea.sflag [#allocation3], %s533
          // Predicated region
          $region152: #{double_conv.4} parent=150 // pred_check
            _
          $region153: #{double_conv.4} parent=150 // pred_check_branch
            %536 = sbr.rel (0) target = $region155
          $region154: #{double_conv.4} parent=150 // pred_region
            loop: start=0, step=1, limit=1
            $region156: #{double_conv.4} parent=154 // loop_pre_header
              _
            $region157: #{double_conv.4} parent=154 // loop_header
              %s538 = sphi 0, %s542
              %p539 = scmp.ge.s32.totalorder %s538, 1
              %s543 = sphi %s530, %s530
              %s544 = sphi %s532, %s532
            $region158: #{double_conv.4} parent=154 // loop_header_branch
              %541 = sbr.rel (%p539) target = $region162
            $region159: #{double_conv.4} parent=154 // loop_body
              %v545 = vld [vmem:[%s543] sm:$0xff]
              %546 = vst [vmem:[%s544] sm:$0xff] %v545
              %v547 = vld [vmem:[%s543 + $0x8] sm:$0xff]
              %548 = vst [vmem:[%s544 + $0x8] sm:$0xff] %v547
            $region160: #{double_conv.4} parent=154 // loop_footer
              %s542 = sadd.s32 1, %s538
            $region161: #{double_conv.4} parent=154 // loop_footer_branch
              %537 = sbr.rel target = $region157
            $region162: #{double_conv.4} parent=154 // loop_exit
              _
          $region155: #{double_conv.4} parent=150 // pred_fallthru
            _
          // Predicated region
          $region163: #{double_conv.4} parent=150 // pred_check
            _
          $region164: #{double_conv.4} parent=150 // pred_check_branch
            %550 = sbr.rel target = $region166
          $region165: #{double_conv.4} parent=150 // pred_region
            _
          $region166: #{double_conv.4} parent=150 // pred_fallthru
            _
          // Predicated region
          $region167: #{double_conv.4} parent=150 // pred_check
            _
          $region168: #{double_conv.4} parent=150 // pred_check_branch
            %553 = sbr.rel (0) target = $region170
          $region169: #{double_conv.4} parent=150 // pred_region
            %554 = vsyncadd %s534, 256
          $region170: #{double_conv.4} parent=150 // pred_fallthru
            _
        $region151: #{double_conv.4} parent=104 // pred_fallthru
          _
      $region105: #{double_conv.4} parent=31 // pred_fallthru
        _
      %s555 = smul.u32 %s234, 3
      %s556 = scalar_lea.sflag [#allocation3], %s555
      %s557 = smul.u32 16, 16
      %s558 = smul.u32 %s557, 1
      %s559 = sshll.u32 %s558, 4
      %560 = dma.done %s556, %s559
      %p561 = scmp.gt.s32.totalorder %s22, 0
      // Predicated region
      $region171: #{double_conv.4} parent=31 // pred_check
        %p562 = pneg %p561
      $region172: #{double_conv.4} parent=31 // pred_check_branch
        %564 = sbr.rel (%p562) target = $region174
      $region173: #{double_conv.4} parent=31 // pred_region
        %s565 = sadd.s32 1, %s555
        %s566 = scalar_lea.sflag [#allocation3], %s565
        %s567 = smul.u32 1, 16
        %s568 = smul.u32 %s567, 1
        %s569 = sshll.u32 %s568, 4
        %570 = dma.done %s566, %s569
      $region174: #{double_conv.4} parent=31 // pred_fallthru
        _
      %p571 = scmp.lt.s32.totalorder %s22, 0
      // Predicated region
      $region175: #{double_conv.4} parent=31 // pred_check
        %p572 = pneg %p571
      $region176: #{double_conv.4} parent=31 // pred_check_branch
        %574 = sbr.rel (%p572) target = $region178
      $region177: #{double_conv.4} parent=31 // pred_region
        %s575 = sadd.s32 2, %s555
        %s576 = scalar_lea.sflag [#allocation3], %s575
        %s577 = smul.u32 1, 16
        %s578 = smul.u32 %s577, 1
        %s579 = sshll.u32 %s578, 4
        %580 = dma.done %s576, %s579
      $region178: #{double_conv.4} parent=31 // pred_fallthru
        _
      %s581 = smul.u32 %s234, 432
      %s582 = scalar_lea.vmem [#allocation2], %s581
      %v583 = vld [vmem:[%s582] sm:$0xff]
      %v584 = vld [vmem:[%s582 + $0x8] sm:$0xff]
      %v585 = vld [vmem:[%s582 + $0x10] sm:$0x3]
      %v586 = vld [vmem:[%s582 + $0x18] sm:$0xff]
      %v587 = vld [vmem:[%s582 + $0x20] sm:$0xff]
      %v588 = vld [vmem:[%s582 + $0x28] sm:$0x3]
      %v589 = vld [vmem:[%s582 + $0x30] sm:$0xff]
      %v590 = vld [vmem:[%s582 + $0x38] sm:$0xff]
      %v591 = vld [vmem:[%s582 + $0x40] sm:$0x3]
      %v592 = vld [vmem:[%s582 + $0x48] sm:$0xff]
      %v593 = vld [vmem:[%s582 + $0x50] sm:$0xff]
      %v594 = vld [vmem:[%s582 + $0x58] sm:$0x3]
      %v595 = vld [vmem:[%s582 + $0x60] sm:$0xff]
      %v596 = vld [vmem:[%s582 + $0x68] sm:$0xff]
      %v597 = vld [vmem:[%s582 + $0x70] sm:$0x3]
      %v598 = vld [vmem:[%s582 + $0x78] sm:$0xff]
      %v599 = vld [vmem:[%s582 + $0x80] sm:$0xff]
      %v600 = vld [vmem:[%s582 + $0x88] sm:$0x3]
      %v601 = vld [vmem:[%s582 + $0x90] sm:$0xff]
      %v602 = vld [vmem:[%s582 + $0x98] sm:$0xff]
      %v603 = vld [vmem:[%s582 + $0xa0] sm:$0x3]
      %v604 = vld [vmem:[%s582 + $0xa8] sm:$0xff]
      %v605 = vld [vmem:[%s582 + $0xb0] sm:$0xff]
      %v606 = vld [vmem:[%s582 + $0xb8] sm:$0x3]
      %v607 = vld [vmem:[%s582 + $0xc0] sm:$0xff]
      %v608 = vld [vmem:[%s582 + $0xc8] sm:$0xff]
      %v609 = vld [vmem:[%s582 + $0xd0] sm:$0x3]
      %v610 = vld [vmem:[%s582 + $0xd8] sm:$0xff]
      %v611 = vld [vmem:[%s582 + $0xe0] sm:$0xff]
      %v612 = vld [vmem:[%s582 + $0xe8] sm:$0x3]
      %v613 = vld [vmem:[%s582 + $0xf0] sm:$0xff]
      %v614 = vld [vmem:[%s582 + $0xf8] sm:$0xff]
      %v615 = vld [vmem:[%s582 + $0x100] sm:$0x3]
      %v616 = vld [vmem:[%s582 + $0x108] sm:$0xff]
      %v617 = vld [vmem:[%s582 + $0x110] sm:$0xff]
      %v618 = vld [vmem:[%s582 + $0x118] sm:$0x3]
      %v619 = vld [vmem:[%s582 + $0x120] sm:$0xff]
      %v620 = vld [vmem:[%s582 + $0x128] sm:$0xff]
      %v621 = vld [vmem:[%s582 + $0x130] sm:$0x3]
      %v622 = vld [vmem:[%s582 + $0x138] sm:$0xff]
      %v623 = vld [vmem:[%s582 + $0x140] sm:$0xff]
      %v624 = vld [vmem:[%s582 + $0x148] sm:$0x3]
      %v625 = vld [vmem:[%s582 + $0x150] sm:$0xff]
      %v626 = vld [vmem:[%s582 + $0x158] sm:$0xff]
      %v627 = vld [vmem:[%s582 + $0x160] sm:$0x3]
      %v628 = vld [vmem:[%s582 + $0x168] sm:$0xff]
      %v629 = vld [vmem:[%s582 + $0x170] sm:$0xff]
      %v630 = vld [vmem:[%s582 + $0x178] sm:$0x3]
      %v631 = vld [vmem:[%s582 + $0x180] sm:$0xff]
      %v632 = vld [vmem:[%s582 + $0x188] sm:$0xff]
      %v633 = vld [vmem:[%s582 + $0x190] sm:$0x3]
      %v634 = vld [vmem:[%s582 + $0x198] sm:$0xff]
      %v635 = vld [vmem:[%s582 + $0x1a0] sm:$0xff]
      %v636 = vld [vmem:[%s582 + $0x1a8] sm:$0x3]
      %v637 = vld [vmem:[%s2] sm:$0x1]
      %v639 = vperm.slane %v637, 0
      %v641 = vmul.f32 %v583, %v639
      %v642 = vmul.f32 %v584, %v639
      %v643 = vmul.f32 %v585, %v639
      %v644 = vmul.f32 %v586, %v639
      %v645 = vmul.f32 %v587, %v639
      %v646 = vmul.f32 %v588, %v639
      %v647 = vmul.f32 %v589, %v639
      %v648 = vmul.f32 %v590, %v639
      %v649 = vmul.f32 %v591, %v639
      %v650 = vmul.f32 %v592, %v639
      %v651 = vmul.f32 %v593, %v639
      %v652 = vmul.f32 %v594, %v639
      %v653 = vmul.f32 %v595, %v639
      %v654 = vmul.f32 %v596, %v639
      %v655 = vmul.f32 %v597, %v639
      %v656 = vmul.f32 %v598, %v639
      %v657 = vmul.f32 %v599, %v639
      %v658 = vmul.f32 %v600, %v639
      %v659 = vmul.f32 %v601, %v639
      %v660 = vmul.f32 %v602, %v639
      %v661 = vmul.f32 %v603, %v639
      %v662 = vmul.f32 %v604, %v639
      %v663 = vmul.f32 %v605, %v639
      %v664 = vmul.f32 %v606, %v639
      %v665 = vmul.f32 %v607, %v639
      %v666 = vmul.f32 %v608, %v639
      %v667 = vmul.f32 %v609, %v639
      %v668 = vmul.f32 %v610, %v639
      %v669 = vmul.f32 %v611, %v639
      %v670 = vmul.f32 %v612, %v639
      %v671 = vmul.f32 %v613, %v639
      %v672 = vmul.f32 %v614, %v639
      %v673 = vmul.f32 %v615, %v639
      %v674 = vmul.f32 %v616, %v639
      %v675 = vmul.f32 %v617, %v639
      %v676 = vmul.f32 %v618, %v639
      %v677 = vmul.f32 %v619, %v639
      %v678 = vmul.f32 %v620, %v639
      %v679 = vmul.f32 %v621, %v639
      %v680 = vmul.f32 %v622, %v639
      %v681 = vmul.f32 %v623, %v639
      %v682 = vmul.f32 %v624, %v639
      %v683 = vmul.f32 %v625, %v639
      %v684 = vmul.f32 %v626, %v639
      %v685 = vmul.f32 %v627, %v639
      %v686 = vmul.f32 %v628, %v639
      %v687 = vmul.f32 %v629, %v639
      %v688 = vmul.f32 %v630, %v639
      %v689 = vmul.f32 %v631, %v639
      %v690 = vmul.f32 %v632, %v639
      %v691 = vmul.f32 %v633, %v639
      %v692 = vmul.f32 %v634, %v639
      %v693 = vmul.f32 %v635, %v639
      %v694 = vmul.f32 %v636, %v639
      %v695 = vld [vmem:[%s3] sm:$0x1]
      %v697 = vperm.slane %v695, 0
      %v699 = vadd.f32 %v641, %v697
      %v700 = vadd.f32 %v642, %v697
      %v701 = vadd.f32 %v643, %v697
      %v702 = vadd.f32 %v644, %v697
      %v703 = vadd.f32 %v645, %v697
      %v704 = vadd.f32 %v646, %v697
      %v705 = vadd.f32 %v647, %v697
      %v706 = vadd.f32 %v648, %v697
      %v707 = vadd.f32 %v649, %v697
      %v708 = vadd.f32 %v650, %v697
      %v709 = vadd.f32 %v651, %v697
      %v710 = vadd.f32 %v652, %v697
      %v711 = vadd.f32 %v653, %v697
      %v712 = vadd.f32 %v654, %v697
      %v713 = vadd.f32 %v655, %v697
      %v714 = vadd.f32 %v656, %v697
      %v715 = vadd.f32 %v657, %v697
      %v716 = vadd.f32 %v658, %v697
      %v717 = vadd.f32 %v659, %v697
      %v718 = vadd.f32 %v660, %v697
      %v719 = vadd.f32 %v661, %v697
      %v720 = vadd.f32 %v662, %v697
      %v721 = vadd.f32 %v663, %v697
      %v722 = vadd.f32 %v664, %v697
      %v723 = vadd.f32 %v665, %v697
      %v724 = vadd.f32 %v666, %v697
      %v725 = vadd.f32 %v667, %v697
      %v726 = vadd.f32 %v668, %v697
      %v727 = vadd.f32 %v669, %v697
      %v728 = vadd.f32 %v670, %v697
      %v729 = vadd.f32 %v671, %v697
      %v730 = vadd.f32 %v672, %v697
      %v731 = vadd.f32 %v673, %v697
      %v732 = vadd.f32 %v674, %v697
      %v733 = vadd.f32 %v675, %v697
      %v734 = vadd.f32 %v676, %v697
      %v735 = vadd.f32 %v677, %v697
      %v736 = vadd.f32 %v678, %v697
      %v737 = vadd.f32 %v679, %v697
      %v738 = vadd.f32 %v680, %v697
      %v739 = vadd.f32 %v681, %v697
      %v740 = vadd.f32 %v682, %v697
      %v741 = vadd.f32 %v683, %v697
      %v742 = vadd.f32 %v684, %v697
      %v743 = vadd.f32 %v685, %v697
      %v744 = vadd.f32 %v686, %v697
      %v745 = vadd.f32 %v687, %v697
      %v746 = vadd.f32 %v688, %v697
      %v747 = vadd.f32 %v689, %v697
      %v748 = vadd.f32 %v690, %v697
      %v749 = vadd.f32 %v691, %v697
      %v750 = vadd.f32 %v692, %v697
      %v751 = vadd.f32 %v693, %v697
      %v752 = vadd.f32 %v694, %v697
      %v753 = vmax.f32 %v699, 0.0
      %v754 = vmax.f32 %v700, 0.0
      %v755 = vmax.f32 %v701, 0.0
      %v756 = vmax.f32 %v702, 0.0
      %v757 = vmax.f32 %v703, 0.0
      %v758 = vmax.f32 %v704, 0.0
      %v759 = vmax.f32 %v705, 0.0
      %v760 = vmax.f32 %v706, 0.0
      %v761 = vmax.f32 %v707, 0.0
      %v762 = vmax.f32 %v708, 0.0
      %v763 = vmax.f32 %v709, 0.0
      %v764 = vmax.f32 %v710, 0.0
      %v765 = vmax.f32 %v711, 0.0
      %v766 = vmax.f32 %v712, 0.0
      %v767 = vmax.f32 %v713, 0.0
      %v768 = vmax.f32 %v714, 0.0
      %v769 = vmax.f32 %v715, 0.0
      %v770 = vmax.f32 %v716, 0.0
      %v771 = vmax.f32 %v717, 0.0
      %v772 = vmax.f32 %v718, 0.0
      %v773 = vmax.f32 %v719, 0.0
      %v774 = vmax.f32 %v720, 0.0
      %v775 = vmax.f32 %v721, 0.0
      %v776 = vmax.f32 %v722, 0.0
      %v777 = vmax.f32 %v723, 0.0
      %v778 = vmax.f32 %v724, 0.0
      %v779 = vmax.f32 %v725, 0.0
      %v780 = vmax.f32 %v726, 0.0
      %v781 = vmax.f32 %v727, 0.0
      %v782 = vmax.f32 %v728, 0.0
      %v783 = vmax.f32 %v729, 0.0
      %v784 = vmax.f32 %v730, 0.0
      %v785 = vmax.f32 %v731, 0.0
      %v786 = vmax.f32 %v732, 0.0
      %v787 = vmax.f32 %v733, 0.0
      %v788 = vmax.f32 %v734, 0.0
      %v789 = vmax.f32 %v735, 0.0
      %v790 = vmax.f32 %v736, 0.0
      %v791 = vmax.f32 %v737, 0.0
      %v792 = vmax.f32 %v738, 0.0
      %v793 = vmax.f32 %v739, 0.0
      %v794 = vmax.f32 %v740, 0.0
      %v795 = vmax.f32 %v741, 0.0
      %v796 = vmax.f32 %v742, 0.0
      %v797 = vmax.f32 %v743, 0.0
      %v798 = vmax.f32 %v744, 0.0
      %v799 = vmax.f32 %v745, 0.0
      %v800 = vmax.f32 %v746, 0.0
      %v801 = vmax.f32 %v747, 0.0
      %v802 = vmax.f32 %v748, 0.0
      %v803 = vmax.f32 %v749, 0.0
      %v804 = vmax.f32 %v750, 0.0
      %v805 = vmax.f32 %v751, 0.0
      %v806 = vmax.f32 %v752, 0.0
      %v807 = vlaneseq
      %v808 = vshrl.u32 %v807, 7
      %v809 = vadd.s32 %v808, 8
      %v810 = vadd.s32 %v808, 16
      %s811 = scalar_select %p235, 1, 0
      %s812 = scalar_select %p235, 16, 17
      %v813 = vstv %s811
      %vm814 = vcmp.le.s32.totalorder %v813, 0
      %vm815 = vcmp.le.s32.totalorder %v813, 1
      %vm816 = vcmp.le.s32.totalorder %v813, 2
      %vm817 = vcmp.le.s32.totalorder %v813, 3
      %vm818 = vcmp.le.s32.totalorder %v813, 4
      %vm819 = vcmp.le.s32.totalorder %v813, 5
      %vm820 = vcmp.le.s32.totalorder %v813, 6
      %vm821 = vcmp.le.s32.totalorder %v813, 7
      %vm822 = vcmp.le.s32.totalorder %v813, 8
      %vm823 = vcmp.le.s32.totalorder %v813, 9
      %vm824 = vcmp.le.s32.totalorder %v813, 10
      %vm825 = vcmp.le.s32.totalorder %v813, 11
      %vm826 = vcmp.le.s32.totalorder %v813, 12
      %vm827 = vcmp.le.s32.totalorder %v813, 13
      %vm828 = vcmp.le.s32.totalorder %v813, 14
      %vm829 = vcmp.le.s32.totalorder %v813, 15
      %vm830 = vcmp.le.s32.totalorder %v813, 16
      %vm831 = vcmp.le.s32.totalorder %v813, 17
      %v832 = vstv %s812
      %vm833 = vcmp.ge.s32.totalorder %v832, 0
      %vm834 = vcmp.ge.s32.totalorder %v832, 1
      %vm835 = vcmp.ge.s32.totalorder %v832, 2
      %vm836 = vcmp.ge.s32.totalorder %v832, 3
      %vm837 = vcmp.ge.s32.totalorder %v832, 4
      %vm838 = vcmp.ge.s32.totalorder %v832, 5
      %vm839 = vcmp.ge.s32.totalorder %v832, 6
      %vm840 = vcmp.ge.s32.totalorder %v832, 7
      %vm841 = vcmp.ge.s32.totalorder %v832, 8
      %vm842 = vcmp.ge.s32.totalorder %v832, 9
      %vm843 = vcmp.ge.s32.totalorder %v832, 10
      %vm844 = vcmp.ge.s32.totalorder %v832, 11
      %vm845 = vcmp.ge.s32.totalorder %v832, 12
      %vm846 = vcmp.ge.s32.totalorder %v832, 13
      %vm847 = vcmp.ge.s32.totalorder %v832, 14
      %vm848 = vcmp.ge.s32.totalorder %v832, 15
      %vm849 = vcmp.ge.s32.totalorder %v832, 16
      %vm850 = vcmp.ge.s32.totalorder %v832, 17
      %vm851 = vmand %vm814, %vm833
      %vm852 = vmand %vm815, %vm834
      %vm853 = vmand %vm816, %vm835
      %vm854 = vmand %vm817, %vm836
      %vm855 = vmand %vm818, %vm837
      %vm856 = vmand %vm819, %vm838
      %vm857 = vmand %vm820, %vm839
      %vm858 = vmand %vm821, %vm840
      %vm859 = vmand %vm822, %vm841
      %vm860 = vmand %vm823, %vm842
      %vm861 = vmand %vm824, %vm843
      %vm862 = vmand %vm825, %vm844
      %vm863 = vmand %vm826, %vm845
      %vm864 = vmand %vm827, %vm846
      %vm865 = vmand %vm828, %vm847
      %vm866 = vmand %vm829, %vm848
      %vm867 = vmand %vm830, %vm849
      %vm868 = vmand %vm831, %vm850
      %vm869 = vcmp.ge.s32.totalorder %v808, 1
      %vm870 = vcmp.ge.s32.totalorder %v809, 1
      %vm871 = vcmp.ge.s32.totalorder %v810, 1
      %vm872 = vmand %vm851, %vm869
      %vm873 = vmand %vm851, %vm870
      %vm874 = vmand %vm851, %vm871
      %vm875 = vmand %vm852, %vm869
      %vm876 = vmand %vm852, %vm870
      %vm877 = vmand %vm852, %vm871
      %vm878 = vmand %vm853, %vm869
      %vm879 = vmand %vm853, %vm870
      %vm880 = vmand %vm853, %vm871
      %vm881 = vmand %vm854, %vm869
      %vm882 = vmand %vm854, %vm870
      %vm883 = vmand %vm854, %vm871
      %vm884 = vmand %vm855, %vm869
      %vm885 = vmand %vm855, %vm870
      %vm886 = vmand %vm855, %vm871
      %vm887 = vmand %vm856, %vm869
      %vm888 = vmand %vm856, %vm870
      %vm889 = vmand %vm856, %vm871
      %vm890 = vmand %vm857, %vm869
      %vm891 = vmand %vm857, %vm870
      %vm892 = vmand %vm857, %vm871
      %vm893 = vmand %vm858, %vm869
      %vm894 = vmand %vm858, %vm870
      %vm895 = vmand %vm858, %vm871
      %vm896 = vmand %vm859, %vm869
      %vm897 = vmand %vm859, %vm870
      %vm898 = vmand %vm859, %vm871
      %vm899 = vmand %vm860, %vm869
      %vm900 = vmand %vm860, %vm870
      %vm901 = vmand %vm860, %vm871
      %vm902 = vmand %vm861, %vm869
      %vm903 = vmand %vm861, %vm870
      %vm904 = vmand %vm861, %vm871
      %vm905 = vmand %vm862, %vm869
      %vm906 = vmand %vm862, %vm870
      %vm907 = vmand %vm862, %vm871
      %vm908 = vmand %vm863, %vm869
      %vm909 = vmand %vm863, %vm870
      %vm910 = vmand %vm863, %vm871
      %vm911 = vmand %vm864, %vm869
      %vm912 = vmand %vm864, %vm870
      %vm913 = vmand %vm864, %vm871
      %vm914 = vmand %vm865, %vm869
      %vm915 = vmand %vm865, %vm870
      %vm916 = vmand %vm865, %vm871
      %vm917 = vmand %vm866, %vm869
      %vm918 = vmand %vm866, %vm870
      %vm919 = vmand %vm866, %vm871
      %vm920 = vmand %vm867, %vm869
      %vm921 = vmand %vm867, %vm870
      %vm922 = vmand %vm867, %vm871
      %vm923 = vmand %vm868, %vm869
      %vm924 = vmand %vm868, %vm870
      %vm925 = vmand %vm868, %vm871
      %vm926 = vcmp.le.s32.totalorder %v808, 16
      %vm927 = vcmp.le.s32.totalorder %v809, 16
      %vm928 = vcmp.le.s32.totalorder %v810, 16
      %vm929 = vmand %vm872, %vm926
      %vm930 = vmand %vm873, %vm927
      %vm931 = vmand %vm874, %vm928
      %vm932 = vmand %vm875, %vm926
      %vm933 = vmand %vm876, %vm927
      %vm934 = vmand %vm877, %vm928
      %vm935 = vmand %vm878, %vm926
      %vm936 = vmand %vm879, %vm927
      %vm937 = vmand %vm880, %vm928
      %vm938 = vmand %vm881, %vm926
      %vm939 = vmand %vm882, %vm927
      %vm940 = vmand %vm883, %vm928
      %vm941 = vmand %vm884, %vm926
      %vm942 = vmand %vm885, %vm927
      %vm943 = vmand %vm886, %vm928
      %vm944 = vmand %vm887, %vm926
      %vm945 = vmand %vm888, %vm927
      %vm946 = vmand %vm889, %vm928
      %vm947 = vmand %vm890, %vm926
      %vm948 = vmand %vm891, %vm927
      %vm949 = vmand %vm892, %vm928
      %vm950 = vmand %vm893, %vm926
      %vm951 = vmand %vm894, %vm927
      %vm952 = vmand %vm895, %vm928
      %vm953 = vmand %vm896, %vm926
      %vm954 = vmand %vm897, %vm927
      %vm955 = vmand %vm898, %vm928
      %vm956 = vmand %vm899, %vm926
      %vm957 = vmand %vm900, %vm927
      %vm958 = vmand %vm901, %vm928
      %vm959 = vmand %vm902, %vm926
      %vm960 = vmand %vm903, %vm927
      %vm961 = vmand %vm904, %vm928
      %vm962 = vmand %vm905, %vm926
      %vm963 = vmand %vm906, %vm927
      %vm964 = vmand %vm907, %vm928
      %vm965 = vmand %vm908, %vm926
      %vm966 = vmand %vm909, %vm927
      %vm967 = vmand %vm910, %vm928
      %vm968 = vmand %vm911, %vm926
      %vm969 = vmand %vm912, %vm927
      %vm970 = vmand %vm913, %vm928
      %vm971 = vmand %vm914, %vm926
      %vm972 = vmand %vm915, %vm927
      %vm973 = vmand %vm916, %vm928
      %vm974 = vmand %vm917, %vm926
      %vm975 = vmand %vm918, %vm927
      %vm976 = vmand %vm919, %vm928
      %vm977 = vmand %vm920, %vm926
      %vm978 = vmand %vm921, %vm927
      %vm979 = vmand %vm922, %vm928
      %vm980 = vmand %vm923, %vm926
      %vm981 = vmand %vm924, %vm927
      %vm982 = vmand %vm925, %vm928
      %v983 = vsel %vm929, 1, 0
      %v984 = vsel %vm930, 1, 0
      %v985 = vsel %vm931, 1, 0
      %v986 = vsel %vm932, 1, 0
      %v987 = vsel %vm933, 1, 0
      %v988 = vsel %vm934, 1, 0
      %v989 = vsel %vm935, 1, 0
      %v990 = vsel %vm936, 1, 0
      %v991 = vsel %vm937, 1, 0
      %v992 = vsel %vm938, 1, 0
      %v993 = vsel %vm939, 1, 0
      %v994 = vsel %vm940, 1, 0
      %v995 = vsel %vm941, 1, 0
      %v996 = vsel %vm942, 1, 0
      %v997 = vsel %vm943, 1, 0
      %v998 = vsel %vm944, 1, 0
      %v999 = vsel %vm945, 1, 0
      %v1000 = vsel %vm946, 1, 0
      %v1001 = vsel %vm947, 1, 0
      %v1002 = vsel %vm948, 1, 0
      %v1003 = vsel %vm949, 1, 0
      %v1004 = vsel %vm950, 1, 0
      %v1005 = vsel %vm951, 1, 0
      %v1006 = vsel %vm952, 1, 0
      %v1007 = vsel %vm953, 1, 0
      %v1008 = vsel %vm954, 1, 0
      %v1009 = vsel %vm955, 1, 0
      %v1010 = vsel %vm956, 1, 0
      %v1011 = vsel %vm957, 1, 0
      %v1012 = vsel %vm958, 1, 0
      %v1013 = vsel %vm959, 1, 0
      %v1014 = vsel %vm960, 1, 0
      %v1015 = vsel %vm961, 1, 0
      %v1016 = vsel %vm962, 1, 0
      %v1017 = vsel %vm963, 1, 0
      %v1018 = vsel %vm964, 1, 0
      %v1019 = vsel %vm965, 1, 0
      %v1020 = vsel %vm966, 1, 0
      %v1021 = vsel %vm967, 1, 0
      %v1022 = vsel %vm968, 1, 0
      %v1023 = vsel %vm969, 1, 0
      %v1024 = vsel %vm970, 1, 0
      %v1025 = vsel %vm971, 1, 0
      %v1026 = vsel %vm972, 1, 0
      %v1027 = vsel %vm973, 1, 0
      %v1028 = vsel %vm974, 1, 0
      %v1029 = vsel %vm975, 1, 0
      %v1030 = vsel %vm976, 1, 0
      %v1031 = vsel %vm977, 1, 0
      %v1032 = vsel %vm978, 1, 0
      %v1033 = vsel %vm979, 1, 0
      %v1034 = vsel %vm980, 1, 0
      %v1035 = vsel %vm981, 1, 0
      %v1036 = vsel %vm982, 1, 0
      %vm1037 = vcmp.eq.s32.totalorder %v983, 1
      %vm1038 = vcmp.eq.s32.totalorder %v984, 1
      %vm1039 = vcmp.eq.s32.totalorder %v985, 1
      %vm1040 = vcmp.eq.s32.totalorder %v986, 1
      %vm1041 = vcmp.eq.s32.totalorder %v987, 1
      %vm1042 = vcmp.eq.s32.totalorder %v988, 1
      %vm1043 = vcmp.eq.s32.totalorder %v989, 1
      %vm1044 = vcmp.eq.s32.totalorder %v990, 1
      %vm1045 = vcmp.eq.s32.totalorder %v991, 1
      %vm1046 = vcmp.eq.s32.totalorder %v992, 1
      %vm1047 = vcmp.eq.s32.totalorder %v993, 1
      %vm1048 = vcmp.eq.s32.totalorder %v994, 1
      %vm1049 = vcmp.eq.s32.totalorder %v995, 1
      %vm1050 = vcmp.eq.s32.totalorder %v996, 1
      %vm1051 = vcmp.eq.s32.totalorder %v997, 1
      %vm1052 = vcmp.eq.s32.totalorder %v998, 1
      %vm1053 = vcmp.eq.s32.totalorder %v999, 1
      %vm1054 = vcmp.eq.s32.totalorder %v1000, 1
      %vm1055 = vcmp.eq.s32.totalorder %v1001, 1
      %vm1056 = vcmp.eq.s32.totalorder %v1002, 1
      %vm1057 = vcmp.eq.s32.totalorder %v1003, 1
      %vm1058 = vcmp.eq.s32.totalorder %v1004, 1
      %vm1059 = vcmp.eq.s32.totalorder %v1005, 1
      %vm1060 = vcmp.eq.s32.totalorder %v1006, 1
      %vm1061 = vcmp.eq.s32.totalorder %v1007, 1
      %vm1062 = vcmp.eq.s32.totalorder %v1008, 1
      %vm1063 = vcmp.eq.s32.totalorder %v1009, 1
      %vm1064 = vcmp.eq.s32.totalorder %v1010, 1
      %vm1065 = vcmp.eq.s32.totalorder %v1011, 1
      %vm1066 = vcmp.eq.s32.totalorder %v1012, 1
      %vm1067 = vcmp.eq.s32.totalorder %v1013, 1
      %vm1068 = vcmp.eq.s32.totalorder %v1014, 1
      %vm1069 = vcmp.eq.s32.totalorder %v1015, 1
      %vm1070 = vcmp.eq.s32.totalorder %v1016, 1
      %vm1071 = vcmp.eq.s32.totalorder %v1017, 1
      %vm1072 = vcmp.eq.s32.totalorder %v1018, 1
      %vm1073 = vcmp.eq.s32.totalorder %v1019, 1
      %vm1074 = vcmp.eq.s32.totalorder %v1020, 1
      %vm1075 = vcmp.eq.s32.totalorder %v1021, 1
      %vm1076 = vcmp.eq.s32.totalorder %v1022, 1
      %vm1077 = vcmp.eq.s32.totalorder %v1023, 1
      %vm1078 = vcmp.eq.s32.totalorder %v1024, 1
      %vm1079 = vcmp.eq.s32.totalorder %v1025, 1
      %vm1080 = vcmp.eq.s32.totalorder %v1026, 1
      %vm1081 = vcmp.eq.s32.totalorder %v1027, 1
      %vm1082 = vcmp.eq.s32.totalorder %v1028, 1
      %vm1083 = vcmp.eq.s32.totalorder %v1029, 1
      %vm1084 = vcmp.eq.s32.totalorder %v1030, 1
      %vm1085 = vcmp.eq.s32.totalorder %v1031, 1
      %vm1086 = vcmp.eq.s32.totalorder %v1032, 1
      %vm1087 = vcmp.eq.s32.totalorder %v1033, 1
      %vm1088 = vcmp.eq.s32.totalorder %v1034, 1
      %vm1089 = vcmp.eq.s32.totalorder %v1035, 1
      %vm1090 = vcmp.eq.s32.totalorder %v1036, 1
      %v1091 = vsel %vm1037, %v753, 0.0
      %v1092 = vsel %vm1038, %v754, 0.0
      %v1093 = vsel %vm1039, %v755, 0.0
      %v1094 = vsel %vm1040, %v756, 0.0
      %v1095 = vsel %vm1041, %v757, 0.0
      %v1096 = vsel %vm1042, %v758, 0.0
      %v1097 = vsel %vm1043, %v759, 0.0
      %v1098 = vsel %vm1044, %v760, 0.0
      %v1099 = vsel %vm1045, %v761, 0.0
      %v1100 = vsel %vm1046, %v762, 0.0
      %v1101 = vsel %vm1047, %v763, 0.0
      %v1102 = vsel %vm1048, %v764, 0.0
      %v1103 = vsel %vm1049, %v765, 0.0
      %v1104 = vsel %vm1050, %v766, 0.0
      %v1105 = vsel %vm1051, %v767, 0.0
      %v1106 = vsel %vm1052, %v768, 0.0
      %v1107 = vsel %vm1053, %v769, 0.0
      %v1108 = vsel %vm1054, %v770, 0.0
      %v1109 = vsel %vm1055, %v771, 0.0
      %v1110 = vsel %vm1056, %v772, 0.0
      %v1111 = vsel %vm1057, %v773, 0.0
      %v1112 = vsel %vm1058, %v774, 0.0
      %v1113 = vsel %vm1059, %v775, 0.0
      %v1114 = vsel %vm1060, %v776, 0.0
      %v1115 = vsel %vm1061, %v777, 0.0
      %v1116 = vsel %vm1062, %v778, 0.0
      %v1117 = vsel %vm1063, %v779, 0.0
      %v1118 = vsel %vm1064, %v780, 0.0
      %v1119 = vsel %vm1065, %v781, 0.0
      %v1120 = vsel %vm1066, %v782, 0.0
      %v1121 = vsel %vm1067, %v783, 0.0
      %v1122 = vsel %vm1068, %v784, 0.0
      %v1123 = vsel %vm1069, %v785, 0.0
      %v1124 = vsel %vm1070, %v786, 0.0
      %v1125 = vsel %vm1071, %v787, 0.0
      %v1126 = vsel %vm1072, %v788, 0.0
      %v1127 = vsel %vm1073, %v789, 0.0
      %v1128 = vsel %vm1074, %v790, 0.0
      %v1129 = vsel %vm1075, %v791, 0.0
      %v1130 = vsel %vm1076, %v792, 0.0
      %v1131 = vsel %vm1077, %v793, 0.0
      %v1132 = vsel %vm1078, %v794, 0.0
      %v1133 = vsel %vm1079, %v795, 0.0
      %v1134 = vsel %vm1080, %v796, 0.0
      %v1135 = vsel %vm1081, %v797, 0.0
      %v1136 = vsel %vm1082, %v798, 0.0
      %v1137 = vsel %vm1083, %v799, 0.0
      %v1138 = vsel %vm1084, %v800, 0.0
      %v1139 = vsel %vm1085, %v801, 0.0
      %v1140 = vsel %vm1086, %v802, 0.0
      %v1141 = vsel %vm1087, %v803, 0.0
      %v1142 = vsel %vm1088, %v804, 0.0
      %v1143 = vsel %vm1089, %v805, 0.0
      %v1144 = vsel %vm1090, %v806, 0.0
      %v1145 = vpack.c.bf16 %v1092, %v1091
      %v1146 = vpack.c.bf16 %v1095, %v1094
      %v1147 = vpack.c.bf16 %v1098, %v1097
      %v1148 = vpack.c.bf16 %v1101, %v1100
      %v1149 = vpack.c.bf16 %v1104, %v1103
      %v1150 = vpack.c.bf16 %v1107, %v1106
      %v1151 = vpack.c.bf16 %v1110, %v1109
      %v1152 = vpack.c.bf16 %v1113, %v1112
      %v1153 = vpack.c.bf16 %v1116, %v1115
      %v1154 = vpack.c.bf16 %v1119, %v1118
      %v1155 = vpack.c.bf16 %v1122, %v1121
      %v1156 = vpack.c.bf16 %v1125, %v1124
      %v1157 = vpack.c.bf16 %v1128, %v1127
      %v1158 = vpack.c.bf16 %v1131, %v1130
      %v1159 = vpack.c.bf16 %v1134, %v1133
      %v1160 = vpack.c.bf16 %v1137, %v1136
      %v1161 = vld [vmem:[%s1] sm:$0xf]
      %v1162 = vld [vmem:[%s1 + $0x4] sm:$0xf]
      %v1163 = vld [vmem:[%s1 + $0x8] sm:$0xf]
      %v1164 = vld [vmem:[%s1 + $0xc] sm:$0xf]
      %v1165 = vld [vmem:[%s1 + $0x10] sm:$0xf]
      %v1166 = vld [vmem:[%s1 + $0x14] sm:$0xf]
      %v1167 = vld [vmem:[%s1 + $0x18] sm:$0xf]
      %v1168 = vld [vmem:[%s1 + $0x1c] sm:$0xf]
      %v1169 = vld [vmem:[%s1 + $0x20] sm:$0xf]
      %v1170 = vld [vmem:[%s1 + $0x24] sm:$0xf]
      %v1171 = vld [vmem:[%s1 + $0x28] sm:$0xf]
      %v1172 = vld [vmem:[%s1 + $0x2c] sm:$0xf]
      %v1173 = vld [vmem:[%s1 + $0x30] sm:$0xf]
      %v1174 = vld [vmem:[%s1 + $0x34] sm:$0xf]
      %v1175 = vld [vmem:[%s1 + $0x38] sm:$0xf]
      %v1176 = vld [vmem:[%s1 + $0x3c] sm:$0xf]
      %vm1225 = vcmask 1046528
      %v1226 = vrot.slane %v1091, 1
      %v1227 = vrot.slane %v1092, 1
      %v1228 = vsel %vm1225, %v1226, %v1227
      %v1229 = vrot.slane %v1093, 1
      %v1230 = vsel %vm1225, %v1227, %v1229
      %v1231 = vrot.slane %v1094, 1
      %v1232 = vrot.slane %v1095, 1
      %v1233 = vsel %vm1225, %v1231, %v1232
      %v1234 = vrot.slane %v1096, 1
      %v1235 = vsel %vm1225, %v1232, %v1234
      %v1236 = vrot.slane %v1097, 1
      %v1237 = vrot.slane %v1098, 1
      %v1238 = vsel %vm1225, %v1236, %v1237
      %v1239 = vrot.slane %v1099, 1
      %v1240 = vsel %vm1225, %v1237, %v1239
      %v1241 = vrot.slane %v1100, 1
      %v1242 = vrot.slane %v1101, 1
      %v1243 = vsel %vm1225, %v1241, %v1242
      %v1244 = vrot.slane %v1102, 1
      %v1245 = vsel %vm1225, %v1242, %v1244
      %v1246 = vrot.slane %v1103, 1
      %v1247 = vrot.slane %v1104, 1
      %v1248 = vsel %vm1225, %v1246, %v1247
      %v1249 = vrot.slane %v1105, 1
      %v1250 = vsel %vm1225, %v1247, %v1249
      %v1251 = vrot.slane %v1106, 1
      %v1252 = vrot.slane %v1107, 1
      %v1253 = vsel %vm1225, %v1251, %v1252
      %v1254 = vrot.slane %v1108, 1
      %v1255 = vsel %vm1225, %v1252, %v1254
      %v1256 = vrot.slane %v1109, 1
      %v1257 = vrot.slane %v1110, 1
      %v1258 = vsel %vm1225, %v1256, %v1257
      %v1259 = vrot.slane %v1111, 1
      %v1260 = vsel %vm1225, %v1257, %v1259
      %v1261 = vrot.slane %v1112, 1
      %v1262 = vrot.slane %v1113, 1
      %v1263 = vsel %vm1225, %v1261, %v1262
      %v1264 = vrot.slane %v1114, 1
      %v1265 = vsel %vm1225, %v1262, %v1264
      %v1266 = vrot.slane %v1115, 1
      %v1267 = vrot.slane %v1116, 1
      %v1268 = vsel %vm1225, %v1266, %v1267
      %v1269 = vrot.slane %v1117, 1
      %v1270 = vsel %vm1225, %v1267, %v1269
      %v1271 = vrot.slane %v1118, 1
      %v1272 = vrot.slane %v1119, 1
      %v1273 = vsel %vm1225, %v1271, %v1272
      %v1274 = vrot.slane %v1120, 1
      %v1275 = vsel %vm1225, %v1272, %v1274
      %v1276 = vrot.slane %v1121, 1
      %v1277 = vrot.slane %v1122, 1
      %v1278 = vsel %vm1225, %v1276, %v1277
      %v1279 = vrot.slane %v1123, 1
      %v1280 = vsel %vm1225, %v1277, %v1279
      %v1281 = vrot.slane %v1124, 1
      %v1282 = vrot.slane %v1125, 1
      %v1283 = vsel %vm1225, %v1281, %v1282
      %v1284 = vrot.slane %v1126, 1
      %v1285 = vsel %vm1225, %v1282, %v1284
      %v1286 = vrot.slane %v1127, 1
      %v1287 = vrot.slane %v1128, 1
      %v1288 = vsel %vm1225, %v1286, %v1287
      %v1289 = vrot.slane %v1129, 1
      %v1290 = vsel %vm1225, %v1287, %v1289
      %v1291 = vrot.slane %v1130, 1
      %v1292 = vrot.slane %v1131, 1
      %v1293 = vsel %vm1225, %v1291, %v1292
      %v1294 = vrot.slane %v1132, 1
      %v1295 = vsel %vm1225, %v1292, %v1294
      %v1296 = vrot.slane %v1133, 1
      %v1297 = vrot.slane %v1134, 1
      %v1298 = vsel %vm1225, %v1296, %v1297
      %v1299 = vrot.slane %v1135, 1
      %v1300 = vsel %vm1225, %v1297, %v1299
      %v1301 = vrot.slane %v1136, 1
      %v1302 = vrot.slane %v1137, 1
      %v1303 = vsel %vm1225, %v1301, %v1302
      %v1304 = vrot.slane %v1138, 1
      %v1305 = vsel %vm1225, %v1302, %v1304
      %v1338 = vpack.c.bf16 %v1230, %v1228
      %v1339 = vpack.c.bf16 %v1235, %v1233
      %v1340 = vpack.c.bf16 %v1240, %v1238
      %v1341 = vpack.c.bf16 %v1245, %v1243
      %v1342 = vpack.c.bf16 %v1250, %v1248
      %v1343 = vpack.c.bf16 %v1255, %v1253
      %v1344 = vpack.c.bf16 %v1260, %v1258
      %v1345 = vpack.c.bf16 %v1265, %v1263
      %v1346 = vpack.c.bf16 %v1270, %v1268
      %v1347 = vpack.c.bf16 %v1275, %v1273
      %v1348 = vpack.c.bf16 %v1280, %v1278
      %v1349 = vpack.c.bf16 %v1285, %v1283
      %v1350 = vpack.c.bf16 %v1290, %v1288
      %v1351 = vpack.c.bf16 %v1295, %v1293
      %v1352 = vpack.c.bf16 %v1300, %v1298
      %v1353 = vpack.c.bf16 %v1305, %v1303
      %s1354 = scalar_lea.vmem %s1, 64
      %v1355 = vld [vmem:[%s1354] sm:$0xf]
      %v1356 = vld [vmem:[%s1354 + $0x4] sm:$0xf]
      %v1357 = vld [vmem:[%s1354 + $0x8] sm:$0xf]
      %v1358 = vld [vmem:[%s1354 + $0xc] sm:$0xf]
      %v1359 = vld [vmem:[%s1354 + $0x10] sm:$0xf]
      %v1360 = vld [vmem:[%s1354 + $0x14] sm:$0xf]
      %v1361 = vld [vmem:[%s1354 + $0x18] sm:$0xf]
      %v1362 = vld [vmem:[%s1354 + $0x1c] sm:$0xf]
      %v1363 = vld [vmem:[%s1354 + $0x20] sm:$0xf]
      %v1364 = vld [vmem:[%s1354 + $0x24] sm:$0xf]
      %v1365 = vld [vmem:[%s1354 + $0x28] sm:$0xf]
      %v1366 = vld [vmem:[%s1354 + $0x2c] sm:$0xf]
      %v1367 = vld [vmem:[%s1354 + $0x30] sm:$0xf]
      %v1368 = vld [vmem:[%s1354 + $0x34] sm:$0xf]
      %v1369 = vld [vmem:[%s1354 + $0x38] sm:$0xf]
      %v1370 = vld [vmem:[%s1354 + $0x3c] sm:$0xf]
      %v1387 = vunpack.c.l.b16 %v1355
      %v1388 = vunpack.c.l.b16 %v1356
      %v1389 = vunpack.c.l.b16 %v1357
      %v1390 = vunpack.c.l.b16 %v1358
      %v1391 = vunpack.c.l.b16 %v1359
      %v1392 = vunpack.c.l.b16 %v1360
      %v1393 = vunpack.c.l.b16 %v1361
      %v1394 = vunpack.c.l.b16 %v1362
      %v1395 = vunpack.c.l.b16 %v1363
      %v1396 = vunpack.c.l.b16 %v1364
      %v1397 = vunpack.c.l.b16 %v1365
      %v1398 = vunpack.c.l.b16 %v1366
      %v1399 = vunpack.c.l.b16 %v1367
      %v1400 = vunpack.c.l.b16 %v1368
      %v1401 = vunpack.c.l.b16 %v1369
      %v1402 = vunpack.c.l.b16 %v1370
      %v1403 = vpack.c.b16 %v1388, %v1387
      %v1404 = vpack.c.b16 %v1390, %v1389
      %v1405 = vpack.c.b16 %v1392, %v1391
      %v1406 = vpack.c.b16 %v1394, %v1393
      %v1407 = vpack.c.b16 %v1396, %v1395
      %v1408 = vpack.c.b16 %v1398, %v1397
      %v1409 = vpack.c.b16 %v1400, %v1399
      %v1410 = vpack.c.b16 %v1402, %v1401
      %1419 = vmatpush.bf16.msra.mxu0 %v1410
      %1420 = vmatpush.bf16.msra.mxu0 %v1409
      %1421 = vmatpush.bf16.msra.mxu0 %v1408
      %1422 = vmatpush.bf16.msra.mxu0 %v1407
      %1423 = vmatpush.bf16.msra.mxu0 %v1406
      %1424 = vmatpush.bf16.msra.mxu0 %v1405
      %1425 = vmatpush.bf16.msra.mxu0 %v1404
      %1426 = vmatpush.bf16.msra.mxu0 %v1403
      %1427 = vmatmul.bf16.gmra.mxu0 %v1338
      %v1428 = vpop.f32.mrf.mxu0
      %v1429 = vadd.f32 0.0, %v1428
      %v1430 = vpop.f32.mrf.mxu0
      %v1431 = vadd.f32 0.0, %v1430
      %1432 = vmatmul.bf16.gmra.mxu0 %v1339
      %v1433 = vpop.f32.mrf.mxu0
      %v1434 = vadd.f32 0.0, %v1433
      %v1435 = vpop.f32.mrf.mxu0
      %v1436 = vadd.f32 0.0, %v1435
      %1437 = vmatmul.bf16.gmra.mxu0 %v1340
      %v1438 = vpop.f32.mrf.mxu0
      %v1439 = vadd.f32 0.0, %v1438
      %v1440 = vpop.f32.mrf.mxu0
      %v1441 = vadd.f32 0.0, %v1440
      %1442 = vmatmul.bf16.gmra.mxu0 %v1341
      %v1443 = vpop.f32.mrf.mxu0
      %v1444 = vadd.f32 0.0, %v1443
      %v1445 = vpop.f32.mrf.mxu0
      %v1446 = vadd.f32 0.0, %v1445
      %1447 = vmatmul.bf16.gmra.mxu0 %v1342
      %v1448 = vpop.f32.mrf.mxu0
      %v1449 = vadd.f32 0.0, %v1448
      %v1450 = vpop.f32.mrf.mxu0
      %v1451 = vadd.f32 0.0, %v1450
      %1452 = vmatmul.bf16.gmra.mxu0 %v1343
      %v1453 = vpop.f32.mrf.mxu0
      %v1454 = vadd.f32 0.0, %v1453
      %v1455 = vpop.f32.mrf.mxu0
      %v1456 = vadd.f32 0.0, %v1455
      %1457 = vmatmul.bf16.gmra.mxu0 %v1344
      %v1458 = vpop.f32.mrf.mxu0
      %v1459 = vadd.f32 0.0, %v1458
      %v1460 = vpop.f32.mrf.mxu0
      %v1461 = vadd.f32 0.0, %v1460
      %1462 = vmatmul.bf16.gmra.mxu0 %v1345
      %v1463 = vpop.f32.mrf.mxu0
      %v1464 = vadd.f32 0.0, %v1463
      %v1465 = vpop.f32.mrf.mxu0
      %v1466 = vadd.f32 0.0, %v1465
      %1467 = vmatmul.bf16.gmra.mxu0 %v1346
      %v1468 = vpop.f32.mrf.mxu0
      %v1469 = vadd.f32 0.0, %v1468
      %v1470 = vpop.f32.mrf.mxu0
      %v1471 = vadd.f32 0.0, %v1470
      %1472 = vmatmul.bf16.gmra.mxu0 %v1347
      %v1473 = vpop.f32.mrf.mxu0
      %v1474 = vadd.f32 0.0, %v1473
      %v1475 = vpop.f32.mrf.mxu0
      %v1476 = vadd.f32 0.0, %v1475
      %1477 = vmatmul.bf16.gmra.mxu0 %v1348
      %v1478 = vpop.f32.mrf.mxu0
      %v1479 = vadd.f32 0.0, %v1478
      %v1480 = vpop.f32.mrf.mxu0
      %v1481 = vadd.f32 0.0, %v1480
      %1482 = vmatmul.bf16.gmra.mxu0 %v1349
      %v1483 = vpop.f32.mrf.mxu0
      %v1484 = vadd.f32 0.0, %v1483
      %v1485 = vpop.f32.mrf.mxu0
      %v1486 = vadd.f32 0.0, %v1485
      %1487 = vmatmul.bf16.gmra.mxu0 %v1350
      %v1488 = vpop.f32.mrf.mxu0
      %v1489 = vadd.f32 0.0, %v1488
      %v1490 = vpop.f32.mrf.mxu0
      %v1491 = vadd.f32 0.0, %v1490
      %1492 = vmatmul.bf16.gmra.mxu0 %v1351
      %v1493 = vpop.f32.mrf.mxu0
      %v1494 = vadd.f32 0.0, %v1493
      %v1495 = vpop.f32.mrf.mxu0
      %v1496 = vadd.f32 0.0, %v1495
      %1497 = vmatmul.bf16.gmra.mxu0 %v1352
      %v1498 = vpop.f32.mrf.mxu0
      %v1499 = vadd.f32 0.0, %v1498
      %v1500 = vpop.f32.mrf.mxu0
      %v1501 = vadd.f32 0.0, %v1500
      %1502 = vmatmul.bf16.gmra.mxu0 %v1353
      %v1503 = vpop.f32.mrf.mxu0
      %v1504 = vadd.f32 0.0, %v1503
      %v1505 = vpop.f32.mrf.mxu0
      %v1506 = vadd.f32 0.0, %v1505
      %1507 = vdwg.mxu0
      %v1524 = vunpack.c.l.b16 %v1161
      %v1525 = vunpack.c.l.b16 %v1162
      %v1526 = vunpack.c.l.b16 %v1163
      %v1527 = vunpack.c.l.b16 %v1164
      %v1528 = vunpack.c.l.b16 %v1165
      %v1529 = vunpack.c.l.b16 %v1166
      %v1530 = vunpack.c.l.b16 %v1167
      %v1531 = vunpack.c.l.b16 %v1168
      %v1532 = vunpack.c.l.b16 %v1169
      %v1533 = vunpack.c.l.b16 %v1170
      %v1534 = vunpack.c.l.b16 %v1171
      %v1535 = vunpack.c.l.b16 %v1172
      %v1536 = vunpack.c.l.b16 %v1173
      %v1537 = vunpack.c.l.b16 %v1174
      %v1538 = vunpack.c.l.b16 %v1175
      %v1539 = vunpack.c.l.b16 %v1176
      %v1540 = vpack.c.b16 %v1525, %v1524
      %v1541 = vpack.c.b16 %v1527, %v1526
      %v1542 = vpack.c.b16 %v1529, %v1528
      %v1543 = vpack.c.b16 %v1531, %v1530
      %v1544 = vpack.c.b16 %v1533, %v1532
      %v1545 = vpack.c.b16 %v1535, %v1534
      %v1546 = vpack.c.b16 %v1537, %v1536
      %v1547 = vpack.c.b16 %v1539, %v1538
      %1556 = vmatpush.bf16.msra.mxu0 %v1547
      %1557 = vmatpush.bf16.msra.mxu0 %v1546
      %1558 = vmatpush.bf16.msra.mxu0 %v1545
      %1559 = vmatpush.bf16.msra.mxu0 %v1544
      %1560 = vmatpush.bf16.msra.mxu0 %v1543
      %1561 = vmatpush.bf16.msra.mxu0 %v1542
      %1562 = vmatpush.bf16.msra.mxu0 %v1541
      %1563 = vmatpush.bf16.msra.mxu0 %v1540
      %1564 = vmatmul.bf16.gmra.mxu0 %v1145
      %v1565 = vpop.f32.mrf.mxu0
      %v1566 = vadd.f32 %v1429, %v1565
      %v1567 = vpop.f32.mrf.mxu0
      %v1568 = vadd.f32 %v1431, %v1567
      %1569 = vmatmul.bf16.gmra.mxu0 %v1146
      %v1570 = vpop.f32.mrf.mxu0
      %v1571 = vadd.f32 %v1434, %v1570
      %v1572 = vpop.f32.mrf.mxu0
      %v1573 = vadd.f32 %v1436, %v1572
      %1574 = vmatmul.bf16.gmra.mxu0 %v1147
      %v1575 = vpop.f32.mrf.mxu0
      %v1576 = vadd.f32 %v1439, %v1575
      %v1577 = vpop.f32.mrf.mxu0
      %v1578 = vadd.f32 %v1441, %v1577
      %1579 = vmatmul.bf16.gmra.mxu0 %v1148
      %v1580 = vpop.f32.mrf.mxu0
      %v1581 = vadd.f32 %v1444, %v1580
      %v1582 = vpop.f32.mrf.mxu0
      %v1583 = vadd.f32 %v1446, %v1582
      %1584 = vmatmul.bf16.gmra.mxu0 %v1149
      %v1585 = vpop.f32.mrf.mxu0
      %v1586 = vadd.f32 %v1449, %v1585
      %v1587 = vpop.f32.mrf.mxu0
      %v1588 = vadd.f32 %v1451, %v1587
      %1589 = vmatmul.bf16.gmra.mxu0 %v1150
      %v1590 = vpop.f32.mrf.mxu0
      %v1591 = vadd.f32 %v1454, %v1590
      %v1592 = vpop.f32.mrf.mxu0
      %v1593 = vadd.f32 %v1456, %v1592
      %1594 = vmatmul.bf16.gmra.mxu0 %v1151
      %v1595 = vpop.f32.mrf.mxu0
      %v1596 = vadd.f32 %v1459, %v1595
      %v1597 = vpop.f32.mrf.mxu0
      %v1598 = vadd.f32 %v1461, %v1597
      %1599 = vmatmul.bf16.gmra.mxu0 %v1152
      %v1600 = vpop.f32.mrf.mxu0
      %v1601 = vadd.f32 %v1464, %v1600
      %v1602 = vpop.f32.mrf.mxu0
      %v1603 = vadd.f32 %v1466, %v1602
      %1604 = vmatmul.bf16.gmra.mxu0 %v1153
      %v1605 = vpop.f32.mrf.mxu0
      %v1606 = vadd.f32 %v1469, %v1605
      %v1607 = vpop.f32.mrf.mxu0
      %v1608 = vadd.f32 %v1471, %v1607
      %1609 = vmatmul.bf16.gmra.mxu0 %v1154
      %v1610 = vpop.f32.mrf.mxu0
      %v1611 = vadd.f32 %v1474, %v1610
      %v1612 = vpop.f32.mrf.mxu0
      %v1613 = vadd.f32 %v1476, %v1612
      %1614 = vmatmul.bf16.gmra.mxu0 %v1155
      %v1615 = vpop.f32.mrf.mxu0
      %v1616 = vadd.f32 %v1479, %v1615
      %v1617 = vpop.f32.mrf.mxu0
      %v1618 = vadd.f32 %v1481, %v1617
      %1619 = vmatmul.bf16.gmra.mxu0 %v1156
      %v1620 = vpop.f32.mrf.mxu0
      %v1621 = vadd.f32 %v1484, %v1620
      %v1622 = vpop.f32.mrf.mxu0
      %v1623 = vadd.f32 %v1486, %v1622
      %1624 = vmatmul.bf16.gmra.mxu0 %v1157
      %v1625 = vpop.f32.mrf.mxu0
      %v1626 = vadd.f32 %v1489, %v1625
      %v1627 = vpop.f32.mrf.mxu0
      %v1628 = vadd.f32 %v1491, %v1627
      %1629 = vmatmul.bf16.gmra.mxu0 %v1158
      %v1630 = vpop.f32.mrf.mxu0
      %v1631 = vadd.f32 %v1494, %v1630
      %v1632 = vpop.f32.mrf.mxu0
      %v1633 = vadd.f32 %v1496, %v1632
      %1634 = vmatmul.bf16.gmra.mxu0 %v1159
      %v1635 = vpop.f32.mrf.mxu0
      %v1636 = vadd.f32 %v1499, %v1635
      %v1637 = vpop.f32.mrf.mxu0
      %v1638 = vadd.f32 %v1501, %v1637
      %1639 = vmatmul.bf16.gmra.mxu0 %v1160
      %v1640 = vpop.f32.mrf.mxu0
      %v1641 = vadd.f32 %v1504, %v1640
      %v1642 = vpop.f32.mrf.mxu0
      %v1643 = vadd.f32 %v1506, %v1642
      %1644 = vdwg.mxu0
      %vm1645 = vcmask 1045504
      %v1646 = vrot.slane %v1091, 2
      %v1647 = vrot.slane %v1092, 2
      %v1648 = vsel %vm1645, %v1646, %v1647
      %v1649 = vrot.slane %v1093, 2
      %v1650 = vsel %vm1645, %v1647, %v1649
      %v1651 = vrot.slane %v1094, 2
      %v1652 = vrot.slane %v1095, 2
      %v1653 = vsel %vm1645, %v1651, %v1652
      %v1654 = vrot.slane %v1096, 2
      %v1655 = vsel %vm1645, %v1652, %v1654
      %v1656 = vrot.slane %v1097, 2
      %v1657 = vrot.slane %v1098, 2
      %v1658 = vsel %vm1645, %v1656, %v1657
      %v1659 = vrot.slane %v1099, 2
      %v1660 = vsel %vm1645, %v1657, %v1659
      %v1661 = vrot.slane %v1100, 2
      %v1662 = vrot.slane %v1101, 2
      %v1663 = vsel %vm1645, %v1661, %v1662
      %v1664 = vrot.slane %v1102, 2
      %v1665 = vsel %vm1645, %v1662, %v1664
      %v1666 = vrot.slane %v1103, 2
      %v1667 = vrot.slane %v1104, 2
      %v1668 = vsel %vm1645, %v1666, %v1667
      %v1669 = vrot.slane %v1105, 2
      %v1670 = vsel %vm1645, %v1667, %v1669
      %v1671 = vrot.slane %v1106, 2
      %v1672 = vrot.slane %v1107, 2
      %v1673 = vsel %vm1645, %v1671, %v1672
      %v1674 = vrot.slane %v1108, 2
      %v1675 = vsel %vm1645, %v1672, %v1674
      %v1676 = vrot.slane %v1109, 2
      %v1677 = vrot.slane %v1110, 2
      %v1678 = vsel %vm1645, %v1676, %v1677
      %v1679 = vrot.slane %v1111, 2
      %v1680 = vsel %vm1645, %v1677, %v1679
      %v1681 = vrot.slane %v1112, 2
      %v1682 = vrot.slane %v1113, 2
      %v1683 = vsel %vm1645, %v1681, %v1682
      %v1684 = vrot.slane %v1114, 2
      %v1685 = vsel %vm1645, %v1682, %v1684
      %v1686 = vrot.slane %v1115, 2
      %v1687 = vrot.slane %v1116, 2
      %v1688 = vsel %vm1645, %v1686, %v1687
      %v1689 = vrot.slane %v1117, 2
      %v1690 = vsel %vm1645, %v1687, %v1689
      %v1691 = vrot.slane %v1118, 2
      %v1692 = vrot.slane %v1119, 2
      %v1693 = vsel %vm1645, %v1691, %v1692
      %v1694 = vrot.slane %v1120, 2
      %v1695 = vsel %vm1645, %v1692, %v1694
      %v1696 = vrot.slane %v1121, 2
      %v1697 = vrot.slane %v1122, 2
      %v1698 = vsel %vm1645, %v1696, %v1697
      %v1699 = vrot.slane %v1123, 2
      %v1700 = vsel %vm1645, %v1697, %v1699
      %v1701 = vrot.slane %v1124, 2
      %v1702 = vrot.slane %v1125, 2
      %v1703 = vsel %vm1645, %v1701, %v1702
      %v1704 = vrot.slane %v1126, 2
      %v1705 = vsel %vm1645, %v1702, %v1704
      %v1706 = vrot.slane %v1127, 2
      %v1707 = vrot.slane %v1128, 2
      %v1708 = vsel %vm1645, %v1706, %v1707
      %v1709 = vrot.slane %v1129, 2
      %v1710 = vsel %vm1645, %v1707, %v1709
      %v1711 = vrot.slane %v1130, 2
      %v1712 = vrot.slane %v1131, 2
      %v1713 = vsel %vm1645, %v1711, %v1712
      %v1714 = vrot.slane %v1132, 2
      %v1715 = vsel %vm1645, %v1712, %v1714
      %v1716 = vrot.slane %v1133, 2
      %v1717 = vrot.slane %v1134, 2
      %v1718 = vsel %vm1645, %v1716, %v1717
      %v1719 = vrot.slane %v1135, 2
      %v1720 = vsel %vm1645, %v1717, %v1719
      %v1721 = vrot.slane %v1136, 2
      %v1722 = vrot.slane %v1137, 2
      %v1723 = vsel %vm1645, %v1721, %v1722
      %v1724 = vrot.slane %v1138, 2
      %v1725 = vsel %vm1645, %v1722, %v1724
      %v1758 = vpack.c.bf16 %v1650, %v1648
      %v1759 = vpack.c.bf16 %v1655, %v1653
      %v1760 = vpack.c.bf16 %v1660, %v1658
      %v1761 = vpack.c.bf16 %v1665, %v1663
      %v1762 = vpack.c.bf16 %v1670, %v1668
      %v1763 = vpack.c.bf16 %v1675, %v1673
      %v1764 = vpack.c.bf16 %v1680, %v1678
      %v1765 = vpack.c.bf16 %v1685, %v1683
      %v1766 = vpack.c.bf16 %v1690, %v1688
      %v1767 = vpack.c.bf16 %v1695, %v1693
      %v1768 = vpack.c.bf16 %v1700, %v1698
      %v1769 = vpack.c.bf16 %v1705, %v1703
      %v1770 = vpack.c.bf16 %v1710, %v1708
      %v1771 = vpack.c.bf16 %v1715, %v1713
      %v1772 = vpack.c.bf16 %v1720, %v1718
      %v1773 = vpack.c.bf16 %v1725, %v1723
      %s1774 = scalar_lea.vmem %s1, 128
      %v1775 = vld [vmem:[%s1774] sm:$0xf]
      %v1776 = vld [vmem:[%s1774 + $0x4] sm:$0xf]
      %v1777 = vld [vmem:[%s1774 + $0x8] sm:$0xf]
      %v1778 = vld [vmem:[%s1774 + $0xc] sm:$0xf]
      %v1779 = vld [vmem:[%s1774 + $0x10] sm:$0xf]
      %v1780 = vld [vmem:[%s1774 + $0x14] sm:$0xf]
      %v1781 = vld [vmem:[%s1774 + $0x18] sm:$0xf]
      %v1782 = vld [vmem:[%s1774 + $0x1c] sm:$0xf]
      %v1783 = vld [vmem:[%s1774 + $0x20] sm:$0xf]
      %v1784 = vld [vmem:[%s1774 + $0x24] sm:$0xf]
      %v1785 = vld [vmem:[%s1774 + $0x28] sm:$0xf]
      %v1786 = vld [vmem:[%s1774 + $0x2c] sm:$0xf]
      %v1787 = vld [vmem:[%s1774 + $0x30] sm:$0xf]
      %v1788 = vld [vmem:[%s1774 + $0x34] sm:$0xf]
      %v1789 = vld [vmem:[%s1774 + $0x38] sm:$0xf]
      %v1790 = vld [vmem:[%s1774 + $0x3c] sm:$0xf]
      %v1807 = vunpack.c.l.b16 %v1775
      %v1808 = vunpack.c.l.b16 %v1776
      %v1809 = vunpack.c.l.b16 %v1777
      %v1810 = vunpack.c.l.b16 %v1778
      %v1811 = vunpack.c.l.b16 %v1779
      %v1812 = vunpack.c.l.b16 %v1780
      %v1813 = vunpack.c.l.b16 %v1781
      %v1814 = vunpack.c.l.b16 %v1782
      %v1815 = vunpack.c.l.b16 %v1783
      %v1816 = vunpack.c.l.b16 %v1784
      %v1817 = vunpack.c.l.b16 %v1785
      %v1818 = vunpack.c.l.b16 %v1786
      %v1819 = vunpack.c.l.b16 %v1787
      %v1820 = vunpack.c.l.b16 %v1788
      %v1821 = vunpack.c.l.b16 %v1789
      %v1822 = vunpack.c.l.b16 %v1790
      %v1823 = vpack.c.b16 %v1808, %v1807
      %v1824 = vpack.c.b16 %v1810, %v1809
      %v1825 = vpack.c.b16 %v1812, %v1811
      %v1826 = vpack.c.b16 %v1814, %v1813
      %v1827 = vpack.c.b16 %v1816, %v1815
      %v1828 = vpack.c.b16 %v1818, %v1817
      %v1829 = vpack.c.b16 %v1820, %v1819
      %v1830 = vpack.c.b16 %v1822, %v1821
      %1839 = vmatpush.bf16.msra.mxu0 %v1830
      %1840 = vmatpush.bf16.msra.mxu0 %v1829
      %1841 = vmatpush.bf16.msra.mxu0 %v1828
      %1842 = vmatpush.bf16.msra.mxu0 %v1827
      %1843 = vmatpush.bf16.msra.mxu0 %v1826
      %1844 = vmatpush.bf16.msra.mxu0 %v1825
      %1845 = vmatpush.bf16.msra.mxu0 %v1824
      %1846 = vmatpush.bf16.msra.mxu0 %v1823
      %1847 = vmatmul.bf16.gmra.mxu0 %v1758
      %v1848 = vpop.f32.mrf.mxu0
      %v1849 = vadd.f32 0.0, %v1848
      %v1850 = vpop.f32.mrf.mxu0
      %v1851 = vadd.f32 0.0, %v1850
      %1852 = vmatmul.bf16.gmra.mxu0 %v1759
      %v1853 = vpop.f32.mrf.mxu0
      %v1854 = vadd.f32 0.0, %v1853
      %v1855 = vpop.f32.mrf.mxu0
      %v1856 = vadd.f32 0.0, %v1855
      %1857 = vmatmul.bf16.gmra.mxu0 %v1760
      %v1858 = vpop.f32.mrf.mxu0
      %v1859 = vadd.f32 0.0, %v1858
      %v1860 = vpop.f32.mrf.mxu0
      %v1861 = vadd.f32 0.0, %v1860
      %1862 = vmatmul.bf16.gmra.mxu0 %v1761
      %v1863 = vpop.f32.mrf.mxu0
      %v1864 = vadd.f32 0.0, %v1863
      %v1865 = vpop.f32.mrf.mxu0
      %v1866 = vadd.f32 0.0, %v1865
      %1867 = vmatmul.bf16.gmra.mxu0 %v1762
      %v1868 = vpop.f32.mrf.mxu0
      %v1869 = vadd.f32 0.0, %v1868
      %v1870 = vpop.f32.mrf.mxu0
      %v1871 = vadd.f32 0.0, %v1870
      %1872 = vmatmul.bf16.gmra.mxu0 %v1763
      %v1873 = vpop.f32.mrf.mxu0
      %v1874 = vadd.f32 0.0, %v1873
      %v1875 = vpop.f32.mrf.mxu0
      %v1876 = vadd.f32 0.0, %v1875
      %1877 = vmatmul.bf16.gmra.mxu0 %v1764
      %v1878 = vpop.f32.mrf.mxu0
      %v1879 = vadd.f32 0.0, %v1878
      %v1880 = vpop.f32.mrf.mxu0
      %v1881 = vadd.f32 0.0, %v1880
      %1882 = vmatmul.bf16.gmra.mxu0 %v1765
      %v1883 = vpop.f32.mrf.mxu0
      %v1884 = vadd.f32 0.0, %v1883
      %v1885 = vpop.f32.mrf.mxu0
      %v1886 = vadd.f32 0.0, %v1885
      %1887 = vmatmul.bf16.gmra.mxu0 %v1766
      %v1888 = vpop.f32.mrf.mxu0
      %v1889 = vadd.f32 0.0, %v1888
      %v1890 = vpop.f32.mrf.mxu0
      %v1891 = vadd.f32 0.0, %v1890
      %1892 = vmatmul.bf16.gmra.mxu0 %v1767
      %v1893 = vpop.f32.mrf.mxu0
      %v1894 = vadd.f32 0.0, %v1893
      %v1895 = vpop.f32.mrf.mxu0
      %v1896 = vadd.f32 0.0, %v1895
      %1897 = vmatmul.bf16.gmra.mxu0 %v1768
      %v1898 = vpop.f32.mrf.mxu0
      %v1899 = vadd.f32 0.0, %v1898
      %v1900 = vpop.f32.mrf.mxu0
      %v1901 = vadd.f32 0.0, %v1900
      %1902 = vmatmul.bf16.gmra.mxu0 %v1769
      %v1903 = vpop.f32.mrf.mxu0
      %v1904 = vadd.f32 0.0, %v1903
      %v1905 = vpop.f32.mrf.mxu0
      %v1906 = vadd.f32 0.0, %v1905
      %1907 = vmatmul.bf16.gmra.mxu0 %v1770
      %v1908 = vpop.f32.mrf.mxu0
      %v1909 = vadd.f32 0.0, %v1908
      %v1910 = vpop.f32.mrf.mxu0
      %v1911 = vadd.f32 0.0, %v1910
      %1912 = vmatmul.bf16.gmra.mxu0 %v1771
      %v1913 = vpop.f32.mrf.mxu0
      %v1914 = vadd.f32 0.0, %v1913
      %v1915 = vpop.f32.mrf.mxu0
      %v1916 = vadd.f32 0.0, %v1915
      %1917 = vmatmul.bf16.gmra.mxu0 %v1772
      %v1918 = vpop.f32.mrf.mxu0
      %v1919 = vadd.f32 0.0, %v1918
      %v1920 = vpop.f32.mrf.mxu0
      %v1921 = vadd.f32 0.0, %v1920
      %1922 = vmatmul.bf16.gmra.mxu0 %v1773
      %v1923 = vpop.f32.mrf.mxu0
      %v1924 = vadd.f32 0.0, %v1923
      %v1925 = vpop.f32.mrf.mxu0
      %v1926 = vadd.f32 0.0, %v1925
      %1927 = vdwg.mxu0
      %v1928 = vadd.f32 %v1566, %v1849
      %v1929 = vadd.f32 %v1568, %v1851
      %v1930 = vadd.f32 %v1571, %v1854
      %v1931 = vadd.f32 %v1573, %v1856
      %v1932 = vadd.f32 %v1576, %v1859
      %v1933 = vadd.f32 %v1578, %v1861
      %v1934 = vadd.f32 %v1581, %v1864
      %v1935 = vadd.f32 %v1583, %v1866
      %v1936 = vadd.f32 %v1586, %v1869
      %v1937 = vadd.f32 %v1588, %v1871
      %v1938 = vadd.f32 %v1591, %v1874
      %v1939 = vadd.f32 %v1593, %v1876
      %v1940 = vadd.f32 %v1596, %v1879
      %v1941 = vadd.f32 %v1598, %v1881
      %v1942 = vadd.f32 %v1601, %v1884
      %v1943 = vadd.f32 %v1603, %v1886
      %v1944 = vadd.f32 %v1606, %v1889
      %v1945 = vadd.f32 %v1608, %v1891
      %v1946 = vadd.f32 %v1611, %v1894
      %v1947 = vadd.f32 %v1613, %v1896
      %v1948 = vadd.f32 %v1616, %v1899
      %v1949 = vadd.f32 %v1618, %v1901
      %v1950 = vadd.f32 %v1621, %v1904
      %v1951 = vadd.f32 %v1623, %v1906
      %v1952 = vadd.f32 %v1626, %v1909
      %v1953 = vadd.f32 %v1628, %v1911
      %v1954 = vadd.f32 %v1631, %v1914
      %v1955 = vadd.f32 %v1633, %v1916
      %v1956 = vadd.f32 %v1636, %v1919
      %v1957 = vadd.f32 %v1638, %v1921
      %v1958 = vadd.f32 %v1641, %v1924
      %v1959 = vadd.f32 %v1643, %v1926
      %v1960 = vpack.c.bf16 %v1140, %v1139
      %s1961 = scalar_lea.vmem %s1, 192
      %v1962 = vld [vmem:[%s1961] sm:$0xf]
      %v1963 = vld [vmem:[%s1961 + $0x4] sm:$0xf]
      %v1964 = vld [vmem:[%s1961 + $0x8] sm:$0xf]
      %v1965 = vld [vmem:[%s1961 + $0xc] sm:$0xf]
      %v1966 = vld [vmem:[%s1961 + $0x10] sm:$0xf]
      %v1967 = vld [vmem:[%s1961 + $0x14] sm:$0xf]
      %v1968 = vld [vmem:[%s1961 + $0x18] sm:$0xf]
      %v1969 = vld [vmem:[%s1961 + $0x1c] sm:$0xf]
      %v1970 = vld [vmem:[%s1961 + $0x20] sm:$0xf]
      %v1971 = vld [vmem:[%s1961 + $0x24] sm:$0xf]
      %v1972 = vld [vmem:[%s1961 + $0x28] sm:$0xf]
      %v1973 = vld [vmem:[%s1961 + $0x2c] sm:$0xf]
      %v1974 = vld [vmem:[%s1961 + $0x30] sm:$0xf]
      %v1975 = vld [vmem:[%s1961 + $0x34] sm:$0xf]
      %v1976 = vld [vmem:[%s1961 + $0x38] sm:$0xf]
      %v1977 = vld [vmem:[%s1961 + $0x3c] sm:$0xf]
      %v1994 = vunpack.c.l.b16 %v1962
      %v1995 = vunpack.c.l.b16 %v1963
      %v1996 = vunpack.c.l.b16 %v1964
      %v1997 = vunpack.c.l.b16 %v1965
      %v1998 = vunpack.c.l.b16 %v1966
      %v1999 = vunpack.c.l.b16 %v1967
      %v2000 = vunpack.c.l.b16 %v1968
      %v2001 = vunpack.c.l.b16 %v1969
      %v2002 = vunpack.c.l.b16 %v1970
      %v2003 = vunpack.c.l.b16 %v1971
      %v2004 = vunpack.c.l.b16 %v1972
      %v2005 = vunpack.c.l.b16 %v1973
      %v2006 = vunpack.c.l.b16 %v1974
      %v2007 = vunpack.c.l.b16 %v1975
      %v2008 = vunpack.c.l.b16 %v1976
      %v2009 = vunpack.c.l.b16 %v1977
      %v2010 = vpack.c.b16 %v1995, %v1994
      %v2011 = vpack.c.b16 %v1997, %v1996
      %v2012 = vpack.c.b16 %v1999, %v1998
      %v2013 = vpack.c.b16 %v2001, %v2000
      %v2014 = vpack.c.b16 %v2003, %v2002
      %v2015 = vpack.c.b16 %v2005, %v2004
      %v2016 = vpack.c.b16 %v2007, %v2006
      %v2017 = vpack.c.b16 %v2009, %v2008
      %2026 = vmatpush.bf16.msra.mxu0 %v2017
      %2027 = vmatpush.bf16.msra.mxu0 %v2016
      %2028 = vmatpush.bf16.msra.mxu0 %v2015
      %2029 = vmatpush.bf16.msra.mxu0 %v2014
      %2030 = vmatpush.bf16.msra.mxu0 %v2013
      %2031 = vmatpush.bf16.msra.mxu0 %v2012
      %2032 = vmatpush.bf16.msra.mxu0 %v2011
      %2033 = vmatpush.bf16.msra.mxu0 %v2010
      %2034 = vmatmul.bf16.gmra.mxu0 %v1146
      %v2035 = vpop.f32.mrf.mxu0
      %v2036 = vadd.f32 0.0, %v2035
      %v2037 = vpop.f32.mrf.mxu0
      %v2038 = vadd.f32 0.0, %v2037
      %2039 = vmatmul.bf16.gmra.mxu0 %v1147
      %v2040 = vpop.f32.mrf.mxu0
      %v2041 = vadd.f32 0.0, %v2040
      %v2042 = vpop.f32.mrf.mxu0
      %v2043 = vadd.f32 0.0, %v2042
      %2044 = vmatmul.bf16.gmra.mxu0 %v1148
      %v2045 = vpop.f32.mrf.mxu0
      %v2046 = vadd.f32 0.0, %v2045
      %v2047 = vpop.f32.mrf.mxu0
      %v2048 = vadd.f32 0.0, %v2047
      %2049 = vmatmul.bf16.gmra.mxu0 %v1149
      %v2050 = vpop.f32.mrf.mxu0
      %v2051 = vadd.f32 0.0, %v2050
      %v2052 = vpop.f32.mrf.mxu0
      %v2053 = vadd.f32 0.0, %v2052
      %2054 = vmatmul.bf16.gmra.mxu0 %v1150
      %v2055 = vpop.f32.mrf.mxu0
      %v2056 = vadd.f32 0.0, %v2055
      %v2057 = vpop.f32.mrf.mxu0
      %v2058 = vadd.f32 0.0, %v2057
      %2059 = vmatmul.bf16.gmra.mxu0 %v1151
      %v2060 = vpop.f32.mrf.mxu0
      %v2061 = vadd.f32 0.0, %v2060
      %v2062 = vpop.f32.mrf.mxu0
      %v2063 = vadd.f32 0.0, %v2062
      %2064 = vmatmul.bf16.gmra.mxu0 %v1152
      %v2065 = vpop.f32.mrf.mxu0
      %v2066 = vadd.f32 0.0, %v2065
      %v2067 = vpop.f32.mrf.mxu0
      %v2068 = vadd.f32 0.0, %v2067
      %2069 = vmatmul.bf16.gmra.mxu0 %v1153
      %v2070 = vpop.f32.mrf.mxu0
      %v2071 = vadd.f32 0.0, %v2070
      %v2072 = vpop.f32.mrf.mxu0
      %v2073 = vadd.f32 0.0, %v2072
      %2074 = vmatmul.bf16.gmra.mxu0 %v1154
      %v2075 = vpop.f32.mrf.mxu0
      %v2076 = vadd.f32 0.0, %v2075
      %v2077 = vpop.f32.mrf.mxu0
      %v2078 = vadd.f32 0.0, %v2077
      %2079 = vmatmul.bf16.gmra.mxu0 %v1155
      %v2080 = vpop.f32.mrf.mxu0
      %v2081 = vadd.f32 0.0, %v2080
      %v2082 = vpop.f32.mrf.mxu0
      %v2083 = vadd.f32 0.0, %v2082
      %2084 = vmatmul.bf16.gmra.mxu0 %v1156
      %v2085 = vpop.f32.mrf.mxu0
      %v2086 = vadd.f32 0.0, %v2085
      %v2087 = vpop.f32.mrf.mxu0
      %v2088 = vadd.f32 0.0, %v2087
      %2089 = vmatmul.bf16.gmra.mxu0 %v1157
      %v2090 = vpop.f32.mrf.mxu0
      %v2091 = vadd.f32 0.0, %v2090
      %v2092 = vpop.f32.mrf.mxu0
      %v2093 = vadd.f32 0.0, %v2092
      %2094 = vmatmul.bf16.gmra.mxu0 %v1158
      %v2095 = vpop.f32.mrf.mxu0
      %v2096 = vadd.f32 0.0, %v2095
      %v2097 = vpop.f32.mrf.mxu0
      %v2098 = vadd.f32 0.0, %v2097
      %2099 = vmatmul.bf16.gmra.mxu0 %v1159
      %v2100 = vpop.f32.mrf.mxu0
      %v2101 = vadd.f32 0.0, %v2100
      %v2102 = vpop.f32.mrf.mxu0
      %v2103 = vadd.f32 0.0, %v2102
      %2104 = vmatmul.bf16.gmra.mxu0 %v1160
      %v2105 = vpop.f32.mrf.mxu0
      %v2106 = vadd.f32 0.0, %v2105
      %v2107 = vpop.f32.mrf.mxu0
      %v2108 = vadd.f32 0.0, %v2107
      %2109 = vmatmul.bf16.gmra.mxu0 %v1960
      %v2110 = vpop.f32.mrf.mxu0
      %v2111 = vadd.f32 0.0, %v2110
      %v2112 = vpop.f32.mrf.mxu0
      %v2113 = vadd.f32 0.0, %v2112
      %2114 = vdwg.mxu0
      %v2115 = vadd.f32 %v1928, %v2036
      %v2116 = vadd.f32 %v1929, %v2038
      %v2117 = vadd.f32 %v1930, %v2041
      %v2118 = vadd.f32 %v1931, %v2043
      %v2119 = vadd.f32 %v1932, %v2046
      %v2120 = vadd.f32 %v1933, %v2048
      %v2121 = vadd.f32 %v1934, %v2051
      %v2122 = vadd.f32 %v1935, %v2053
      %v2123 = vadd.f32 %v1936, %v2056
      %v2124 = vadd.f32 %v1937, %v2058
      %v2125 = vadd.f32 %v1938, %v2061
      %v2126 = vadd.f32 %v1939, %v2063
      %v2127 = vadd.f32 %v1940, %v2066
      %v2128 = vadd.f32 %v1941, %v2068
      %v2129 = vadd.f32 %v1942, %v2071
      %v2130 = vadd.f32 %v1943, %v2073
      %v2131 = vadd.f32 %v1944, %v2076
      %v2132 = vadd.f32 %v1945, %v2078
      %v2133 = vadd.f32 %v1946, %v2081
      %v2134 = vadd.f32 %v1947, %v2083
      %v2135 = vadd.f32 %v1948, %v2086
      %v2136 = vadd.f32 %v1949, %v2088
      %v2137 = vadd.f32 %v1950, %v2091
      %v2138 = vadd.f32 %v1951, %v2093
      %v2139 = vadd.f32 %v1952, %v2096
      %v2140 = vadd.f32 %v1953, %v2098
      %v2141 = vadd.f32 %v1954, %v2101
      %v2142 = vadd.f32 %v1955, %v2103
      %v2143 = vadd.f32 %v1956, %v2106
      %v2144 = vadd.f32 %v1957, %v2108
      %v2145 = vadd.f32 %v1958, %v2111
      %v2146 = vadd.f32 %v1959, %v2113
      %v2150 = vrot.slane %v1139, 1
      %v2151 = vrot.slane %v1140, 1
      %v2152 = vsel %vm1225, %v2150, %v2151
      %v2153 = vrot.slane %v1141, 1
      %v2154 = vsel %vm1225, %v2151, %v2153
      %v2157 = vpack.c.bf16 %v2154, %v2152
      %s2158 = scalar_lea.vmem %s1, 256
      %v2159 = vld [vmem:[%s2158] sm:$0xf]
      %v2160 = vld [vmem:[%s2158 + $0x4] sm:$0xf]
      %v2161 = vld [vmem:[%s2158 + $0x8] sm:$0xf]
      %v2162 = vld [vmem:[%s2158 + $0xc] sm:$0xf]
      %v2163 = vld [vmem:[%s2158 + $0x10] sm:$0xf]
      %v2164 = vld [vmem:[%s2158 + $0x14] sm:$0xf]
      %v2165 = vld [vmem:[%s2158 + $0x18] sm:$0xf]
      %v2166 = vld [vmem:[%s2158 + $0x1c] sm:$0xf]
      %v2167 = vld [vmem:[%s2158 + $0x20] sm:$0xf]
      %v2168 = vld [vmem:[%s2158 + $0x24] sm:$0xf]
      %v2169 = vld [vmem:[%s2158 + $0x28] sm:$0xf]
      %v2170 = vld [vmem:[%s2158 + $0x2c] sm:$0xf]
      %v2171 = vld [vmem:[%s2158 + $0x30] sm:$0xf]
      %v2172 = vld [vmem:[%s2158 + $0x34] sm:$0xf]
      %v2173 = vld [vmem:[%s2158 + $0x38] sm:$0xf]
      %v2174 = vld [vmem:[%s2158 + $0x3c] sm:$0xf]
      %v2191 = vunpack.c.l.b16 %v2159
      %v2192 = vunpack.c.l.b16 %v2160
      %v2193 = vunpack.c.l.b16 %v2161
      %v2194 = vunpack.c.l.b16 %v2162
      %v2195 = vunpack.c.l.b16 %v2163
      %v2196 = vunpack.c.l.b16 %v2164
      %v2197 = vunpack.c.l.b16 %v2165
      %v2198 = vunpack.c.l.b16 %v2166
      %v2199 = vunpack.c.l.b16 %v2167
      %v2200 = vunpack.c.l.b16 %v2168
      %v2201 = vunpack.c.l.b16 %v2169
      %v2202 = vunpack.c.l.b16 %v2170
      %v2203 = vunpack.c.l.b16 %v2171
      %v2204 = vunpack.c.l.b16 %v2172
      %v2205 = vunpack.c.l.b16 %v2173
      %v2206 = vunpack.c.l.b16 %v2174
      %v2207 = vpack.c.b16 %v2192, %v2191
      %v2208 = vpack.c.b16 %v2194, %v2193
      %v2209 = vpack.c.b16 %v2196, %v2195
      %v2210 = vpack.c.b16 %v2198, %v2197
      %v2211 = vpack.c.b16 %v2200, %v2199
      %v2212 = vpack.c.b16 %v2202, %v2201
      %v2213 = vpack.c.b16 %v2204, %v2203
      %v2214 = vpack.c.b16 %v2206, %v2205
      %2223 = vmatpush.bf16.msra.mxu0 %v2214
      %2224 = vmatpush.bf16.msra.mxu0 %v2213
      %2225 = vmatpush.bf16.msra.mxu0 %v2212
      %2226 = vmatpush.bf16.msra.mxu0 %v2211
      %2227 = vmatpush.bf16.msra.mxu0 %v2210
      %2228 = vmatpush.bf16.msra.mxu0 %v2209
      %2229 = vmatpush.bf16.msra.mxu0 %v2208
      %2230 = vmatpush.bf16.msra.mxu0 %v2207
      %2231 = vmatmul.bf16.gmra.mxu0 %v1339
      %v2232 = vpop.f32.mrf.mxu0
      %v2233 = vadd.f32 0.0, %v2232
      %v2234 = vpop.f32.mrf.mxu0
      %v2235 = vadd.f32 0.0, %v2234
      %2236 = vmatmul.bf16.gmra.mxu0 %v1340
      %v2237 = vpop.f32.mrf.mxu0
      %v2238 = vadd.f32 0.0, %v2237
      %v2239 = vpop.f32.mrf.mxu0
      %v2240 = vadd.f32 0.0, %v2239
      %2241 = vmatmul.bf16.gmra.mxu0 %v1341
      %v2242 = vpop.f32.mrf.mxu0
      %v2243 = vadd.f32 0.0, %v2242
      %v2244 = vpop.f32.mrf.mxu0
      %v2245 = vadd.f32 0.0, %v2244
      %2246 = vmatmul.bf16.gmra.mxu0 %v1342
      %v2247 = vpop.f32.mrf.mxu0
      %v2248 = vadd.f32 0.0, %v2247
      %v2249 = vpop.f32.mrf.mxu0
      %v2250 = vadd.f32 0.0, %v2249
      %2251 = vmatmul.bf16.gmra.mxu0 %v1343
      %v2252 = vpop.f32.mrf.mxu0
      %v2253 = vadd.f32 0.0, %v2252
      %v2254 = vpop.f32.mrf.mxu0
      %v2255 = vadd.f32 0.0, %v2254
      %2256 = vmatmul.bf16.gmra.mxu0 %v1344
      %v2257 = vpop.f32.mrf.mxu0
      %v2258 = vadd.f32 0.0, %v2257
      %v2259 = vpop.f32.mrf.mxu0
      %v2260 = vadd.f32 0.0, %v2259
      %2261 = vmatmul.bf16.gmra.mxu0 %v1345
      %v2262 = vpop.f32.mrf.mxu0
      %v2263 = vadd.f32 0.0, %v2262
      %v2264 = vpop.f32.mrf.mxu0
      %v2265 = vadd.f32 0.0, %v2264
      %2266 = vmatmul.bf16.gmra.mxu0 %v1346
      %v2267 = vpop.f32.mrf.mxu0
      %v2268 = vadd.f32 0.0, %v2267
      %v2269 = vpop.f32.mrf.mxu0
      %v2270 = vadd.f32 0.0, %v2269
      %2271 = vmatmul.bf16.gmra.mxu0 %v1347
      %v2272 = vpop.f32.mrf.mxu0
      %v2273 = vadd.f32 0.0, %v2272
      %v2274 = vpop.f32.mrf.mxu0
      %v2275 = vadd.f32 0.0, %v2274
      %2276 = vmatmul.bf16.gmra.mxu0 %v1348
      %v2277 = vpop.f32.mrf.mxu0
      %v2278 = vadd.f32 0.0, %v2277
      %v2279 = vpop.f32.mrf.mxu0
      %v2280 = vadd.f32 0.0, %v2279
      %2281 = vmatmul.bf16.gmra.mxu0 %v1349
      %v2282 = vpop.f32.mrf.mxu0
      %v2283 = vadd.f32 0.0, %v2282
      %v2284 = vpop.f32.mrf.mxu0
      %v2285 = vadd.f32 0.0, %v2284
      %2286 = vmatmul.bf16.gmra.mxu0 %v1350
      %v2287 = vpop.f32.mrf.mxu0
      %v2288 = vadd.f32 0.0, %v2287
      %v2289 = vpop.f32.mrf.mxu0
      %v2290 = vadd.f32 0.0, %v2289
      %2291 = vmatmul.bf16.gmra.mxu0 %v1351
      %v2292 = vpop.f32.mrf.mxu0
      %v2293 = vadd.f32 0.0, %v2292
      %v2294 = vpop.f32.mrf.mxu0
      %v2295 = vadd.f32 0.0, %v2294
      %2296 = vmatmul.bf16.gmra.mxu0 %v1352
      %v2297 = vpop.f32.mrf.mxu0
      %v2298 = vadd.f32 0.0, %v2297
      %v2299 = vpop.f32.mrf.mxu0
      %v2300 = vadd.f32 0.0, %v2299
      %2301 = vmatmul.bf16.gmra.mxu0 %v1353
      %v2302 = vpop.f32.mrf.mxu0
      %v2303 = vadd.f32 0.0, %v2302
      %v2304 = vpop.f32.mrf.mxu0
      %v2305 = vadd.f32 0.0, %v2304
      %2306 = vmatmul.bf16.gmra.mxu0 %v2157
      %v2307 = vpop.f32.mrf.mxu0
      %v2308 = vadd.f32 0.0, %v2307
      %v2309 = vpop.f32.mrf.mxu0
      %v2310 = vadd.f32 0.0, %v2309
      %2311 = vdwg.mxu0
      %v2312 = vadd.f32 %v2115, %v2233
      %v2313 = vadd.f32 %v2116, %v2235
      %v2314 = vadd.f32 %v2117, %v2238
      %v2315 = vadd.f32 %v2118, %v2240
      %v2316 = vadd.f32 %v2119, %v2243
      %v2317 = vadd.f32 %v2120, %v2245
      %v2318 = vadd.f32 %v2121, %v2248
      %v2319 = vadd.f32 %v2122, %v2250
      %v2320 = vadd.f32 %v2123, %v2253
      %v2321 = vadd.f32 %v2124, %v2255
      %v2322 = vadd.f32 %v2125, %v2258
      %v2323 = vadd.f32 %v2126, %v2260
      %v2324 = vadd.f32 %v2127, %v2263
      %v2325 = vadd.f32 %v2128, %v2265
      %v2326 = vadd.f32 %v2129, %v2268
      %v2327 = vadd.f32 %v2130, %v2270
      %v2328 = vadd.f32 %v2131, %v2273
      %v2329 = vadd.f32 %v2132, %v2275
      %v2330 = vadd.f32 %v2133, %v2278
      %v2331 = vadd.f32 %v2134, %v2280
      %v2332 = vadd.f32 %v2135, %v2283
      %v2333 = vadd.f32 %v2136, %v2285
      %v2334 = vadd.f32 %v2137, %v2288
      %v2335 = vadd.f32 %v2138, %v2290
      %v2336 = vadd.f32 %v2139, %v2293
      %v2337 = vadd.f32 %v2140, %v2295
      %v2338 = vadd.f32 %v2141, %v2298
      %v2339 = vadd.f32 %v2142, %v2300
      %v2340 = vadd.f32 %v2143, %v2303
      %v2341 = vadd.f32 %v2144, %v2305
      %v2342 = vadd.f32 %v2145, %v2308
      %v2343 = vadd.f32 %v2146, %v2310
      %v2344 = vrot.slane %v1139, 2
      %v2345 = vrot.slane %v1140, 2
      %v2346 = vsel %vm1645, %v2344, %v2345
      %v2347 = vrot.slane %v1141, 2
      %v2348 = vsel %vm1645, %v2345, %v2347
      %v2351 = vpack.c.bf16 %v2348, %v2346
      %s2352 = scalar_lea.vmem %s1, 320
      %v2353 = vld [vmem:[%s2352] sm:$0xf]
      %v2354 = vld [vmem:[%s2352 + $0x4] sm:$0xf]
      %v2355 = vld [vmem:[%s2352 + $0x8] sm:$0xf]
      %v2356 = vld [vmem:[%s2352 + $0xc] sm:$0xf]
      %v2357 = vld [vmem:[%s2352 + $0x10] sm:$0xf]
      %v2358 = vld [vmem:[%s2352 + $0x14] sm:$0xf]
      %v2359 = vld [vmem:[%s2352 + $0x18] sm:$0xf]
      %v2360 = vld [vmem:[%s2352 + $0x1c] sm:$0xf]
      %v2361 = vld [vmem:[%s2352 + $0x20] sm:$0xf]
      %v2362 = vld [vmem:[%s2352 + $0x24] sm:$0xf]
      %v2363 = vld [vmem:[%s2352 + $0x28] sm:$0xf]
      %v2364 = vld [vmem:[%s2352 + $0x2c] sm:$0xf]
      %v2365 = vld [vmem:[%s2352 + $0x30] sm:$0xf]
      %v2366 = vld [vmem:[%s2352 + $0x34] sm:$0xf]
      %v2367 = vld [vmem:[%s2352 + $0x38] sm:$0xf]
      %v2368 = vld [vmem:[%s2352 + $0x3c] sm:$0xf]
      %v2385 = vunpack.c.l.b16 %v2353
      %v2386 = vunpack.c.l.b16 %v2354
      %v2387 = vunpack.c.l.b16 %v2355
      %v2388 = vunpack.c.l.b16 %v2356
      %v2389 = vunpack.c.l.b16 %v2357
      %v2390 = vunpack.c.l.b16 %v2358
      %v2391 = vunpack.c.l.b16 %v2359
      %v2392 = vunpack.c.l.b16 %v2360
      %v2393 = vunpack.c.l.b16 %v2361
      %v2394 = vunpack.c.l.b16 %v2362
      %v2395 = vunpack.c.l.b16 %v2363
      %v2396 = vunpack.c.l.b16 %v2364
      %v2397 = vunpack.c.l.b16 %v2365
      %v2398 = vunpack.c.l.b16 %v2366
      %v2399 = vunpack.c.l.b16 %v2367
      %v2400 = vunpack.c.l.b16 %v2368
      %v2401 = vpack.c.b16 %v2386, %v2385
      %v2402 = vpack.c.b16 %v2388, %v2387
      %v2403 = vpack.c.b16 %v2390, %v2389
      %v2404 = vpack.c.b16 %v2392, %v2391
      %v2405 = vpack.c.b16 %v2394, %v2393
      %v2406 = vpack.c.b16 %v2396, %v2395
      %v2407 = vpack.c.b16 %v2398, %v2397
      %v2408 = vpack.c.b16 %v2400, %v2399
      %2417 = vmatpush.bf16.msra.mxu0 %v2408
      %2418 = vmatpush.bf16.msra.mxu0 %v2407
      %2419 = vmatpush.bf16.msra.mxu0 %v2406
      %2420 = vmatpush.bf16.msra.mxu0 %v2405
      %2421 = vmatpush.bf16.msra.mxu0 %v2404
      %2422 = vmatpush.bf16.msra.mxu0 %v2403
      %2423 = vmatpush.bf16.msra.mxu0 %v2402
      %2424 = vmatpush.bf16.msra.mxu0 %v2401
      %2425 = vmatmul.bf16.gmra.mxu0 %v1759
      %v2426 = vpop.f32.mrf.mxu0
      %v2427 = vadd.f32 0.0, %v2426
      %v2428 = vpop.f32.mrf.mxu0
      %v2429 = vadd.f32 0.0, %v2428
      %2430 = vmatmul.bf16.gmra.mxu0 %v1760
      %v2431 = vpop.f32.mrf.mxu0
      %v2432 = vadd.f32 0.0, %v2431
      %v2433 = vpop.f32.mrf.mxu0
      %v2434 = vadd.f32 0.0, %v2433
      %2435 = vmatmul.bf16.gmra.mxu0 %v1761
      %v2436 = vpop.f32.mrf.mxu0
      %v2437 = vadd.f32 0.0, %v2436
      %v2438 = vpop.f32.mrf.mxu0
      %v2439 = vadd.f32 0.0, %v2438
      %2440 = vmatmul.bf16.gmra.mxu0 %v1762
      %v2441 = vpop.f32.mrf.mxu0
      %v2442 = vadd.f32 0.0, %v2441
      %v2443 = vpop.f32.mrf.mxu0
      %v2444 = vadd.f32 0.0, %v2443
      %2445 = vmatmul.bf16.gmra.mxu0 %v1763
      %v2446 = vpop.f32.mrf.mxu0
      %v2447 = vadd.f32 0.0, %v2446
      %v2448 = vpop.f32.mrf.mxu0
      %v2449 = vadd.f32 0.0, %v2448
      %2450 = vmatmul.bf16.gmra.mxu0 %v1764
      %v2451 = vpop.f32.mrf.mxu0
      %v2452 = vadd.f32 0.0, %v2451
      %v2453 = vpop.f32.mrf.mxu0
      %v2454 = vadd.f32 0.0, %v2453
      %2455 = vmatmul.bf16.gmra.mxu0 %v1765
      %v2456 = vpop.f32.mrf.mxu0
      %v2457 = vadd.f32 0.0, %v2456
      %v2458 = vpop.f32.mrf.mxu0
      %v2459 = vadd.f32 0.0, %v2458
      %2460 = vmatmul.bf16.gmra.mxu0 %v1766
      %v2461 = vpop.f32.mrf.mxu0
      %v2462 = vadd.f32 0.0, %v2461
      %v2463 = vpop.f32.mrf.mxu0
      %v2464 = vadd.f32 0.0, %v2463
      %2465 = vmatmul.bf16.gmra.mxu0 %v1767
      %v2466 = vpop.f32.mrf.mxu0
      %v2467 = vadd.f32 0.0, %v2466
      %v2468 = vpop.f32.mrf.mxu0
      %v2469 = vadd.f32 0.0, %v2468
      %2470 = vmatmul.bf16.gmra.mxu0 %v1768
      %v2471 = vpop.f32.mrf.mxu0
      %v2472 = vadd.f32 0.0, %v2471
      %v2473 = vpop.f32.mrf.mxu0
      %v2474 = vadd.f32 0.0, %v2473
      %2475 = vmatmul.bf16.gmra.mxu0 %v1769
      %v2476 = vpop.f32.mrf.mxu0
      %v2477 = vadd.f32 0.0, %v2476
      %v2478 = vpop.f32.mrf.mxu0
      %v2479 = vadd.f32 0.0, %v2478
      %2480 = vmatmul.bf16.gmra.mxu0 %v1770
      %v2481 = vpop.f32.mrf.mxu0
      %v2482 = vadd.f32 0.0, %v2481
      %v2483 = vpop.f32.mrf.mxu0
      %v2484 = vadd.f32 0.0, %v2483
      %2485 = vmatmul.bf16.gmra.mxu0 %v1771
      %v2486 = vpop.f32.mrf.mxu0
      %v2487 = vadd.f32 0.0, %v2486
      %v2488 = vpop.f32.mrf.mxu0
      %v2489 = vadd.f32 0.0, %v2488
      %2490 = vmatmul.bf16.gmra.mxu0 %v1772
      %v2491 = vpop.f32.mrf.mxu0
      %v2492 = vadd.f32 0.0, %v2491
      %v2493 = vpop.f32.mrf.mxu0
      %v2494 = vadd.f32 0.0, %v2493
      %2495 = vmatmul.bf16.gmra.mxu0 %v1773
      %v2496 = vpop.f32.mrf.mxu0
      %v2497 = vadd.f32 0.0, %v2496
      %v2498 = vpop.f32.mrf.mxu0
      %v2499 = vadd.f32 0.0, %v2498
      %2500 = vmatmul.bf16.gmra.mxu0 %v2351
      %v2501 = vpop.f32.mrf.mxu0
      %v2502 = vadd.f32 0.0, %v2501
      %v2503 = vpop.f32.mrf.mxu0
      %v2504 = vadd.f32 0.0, %v2503
      %2505 = vdwg.mxu0
      %v2506 = vadd.f32 %v2312, %v2427
      %v2507 = vadd.f32 %v2313, %v2429
      %v2508 = vadd.f32 %v2314, %v2432
      %v2509 = vadd.f32 %v2315, %v2434
      %v2510 = vadd.f32 %v2316, %v2437
      %v2511 = vadd.f32 %v2317, %v2439
      %v2512 = vadd.f32 %v2318, %v2442
      %v2513 = vadd.f32 %v2319, %v2444
      %v2514 = vadd.f32 %v2320, %v2447
      %v2515 = vadd.f32 %v2321, %v2449
      %v2516 = vadd.f32 %v2322, %v2452
      %v2517 = vadd.f32 %v2323, %v2454
      %v2518 = vadd.f32 %v2324, %v2457
      %v2519 = vadd.f32 %v2325, %v2459
      %v2520 = vadd.f32 %v2326, %v2462
      %v2521 = vadd.f32 %v2327, %v2464
      %v2522 = vadd.f32 %v2328, %v2467
      %v2523 = vadd.f32 %v2329, %v2469
      %v2524 = vadd.f32 %v2330, %v2472
      %v2525 = vadd.f32 %v2331, %v2474
      %v2526 = vadd.f32 %v2332, %v2477
      %v2527 = vadd.f32 %v2333, %v2479
      %v2528 = vadd.f32 %v2334, %v2482
      %v2529 = vadd.f32 %v2335, %v2484
      %v2530 = vadd.f32 %v2336, %v2487
      %v2531 = vadd.f32 %v2337, %v2489
      %v2532 = vadd.f32 %v2338, %v2492
      %v2533 = vadd.f32 %v2339, %v2494
      %v2534 = vadd.f32 %v2340, %v2497
      %v2535 = vadd.f32 %v2341, %v2499
      %v2536 = vadd.f32 %v2342, %v2502
      %v2537 = vadd.f32 %v2343, %v2504
      %v2538 = vpack.c.bf16 %v1143, %v1142
      %s2539 = scalar_lea.vmem %s1, 384
      %v2540 = vld [vmem:[%s2539] sm:$0xf]
      %v2541 = vld [vmem:[%s2539 + $0x4] sm:$0xf]
      %v2542 = vld [vmem:[%s2539 + $0x8] sm:$0xf]
      %v2543 = vld [vmem:[%s2539 + $0xc] sm:$0xf]
      %v2544 = vld [vmem:[%s2539 + $0x10] sm:$0xf]
      %v2545 = vld [vmem:[%s2539 + $0x14] sm:$0xf]
      %v2546 = vld [vmem:[%s2539 + $0x18] sm:$0xf]
      %v2547 = vld [vmem:[%s2539 + $0x1c] sm:$0xf]
      %v2548 = vld [vmem:[%s2539 + $0x20] sm:$0xf]
      %v2549 = vld [vmem:[%s2539 + $0x24] sm:$0xf]
      %v2550 = vld [vmem:[%s2539 + $0x28] sm:$0xf]
      %v2551 = vld [vmem:[%s2539 + $0x2c] sm:$0xf]
      %v2552 = vld [vmem:[%s2539 + $0x30] sm:$0xf]
      %v2553 = vld [vmem:[%s2539 + $0x34] sm:$0xf]
      %v2554 = vld [vmem:[%s2539 + $0x38] sm:$0xf]
      %v2555 = vld [vmem:[%s2539 + $0x3c] sm:$0xf]
      %v2572 = vunpack.c.l.b16 %v2540
      %v2573 = vunpack.c.l.b16 %v2541
      %v2574 = vunpack.c.l.b16 %v2542
      %v2575 = vunpack.c.l.b16 %v2543
      %v2576 = vunpack.c.l.b16 %v2544
      %v2577 = vunpack.c.l.b16 %v2545
      %v2578 = vunpack.c.l.b16 %v2546
      %v2579 = vunpack.c.l.b16 %v2547
      %v2580 = vunpack.c.l.b16 %v2548
      %v2581 = vunpack.c.l.b16 %v2549
      %v2582 = vunpack.c.l.b16 %v2550
      %v2583 = vunpack.c.l.b16 %v2551
      %v2584 = vunpack.c.l.b16 %v2552
      %v2585 = vunpack.c.l.b16 %v2553
      %v2586 = vunpack.c.l.b16 %v2554
      %v2587 = vunpack.c.l.b16 %v2555
      %v2588 = vpack.c.b16 %v2573, %v2572
      %v2589 = vpack.c.b16 %v2575, %v2574
      %v2590 = vpack.c.b16 %v2577, %v2576
      %v2591 = vpack.c.b16 %v2579, %v2578
      %v2592 = vpack.c.b16 %v2581, %v2580
      %v2593 = vpack.c.b16 %v2583, %v2582
      %v2594 = vpack.c.b16 %v2585, %v2584
      %v2595 = vpack.c.b16 %v2587, %v2586
      %2604 = vmatpush.bf16.msra.mxu0 %v2595
      %2605 = vmatpush.bf16.msra.mxu0 %v2594
      %2606 = vmatpush.bf16.msra.mxu0 %v2593
      %2607 = vmatpush.bf16.msra.mxu0 %v2592
      %2608 = vmatpush.bf16.msra.mxu0 %v2591
      %2609 = vmatpush.bf16.msra.mxu0 %v2590
      %2610 = vmatpush.bf16.msra.mxu0 %v2589
      %2611 = vmatpush.bf16.msra.mxu0 %v2588
      %2612 = vmatmul.bf16.gmra.mxu0 %v1147
      %v2613 = vpop.f32.mrf.mxu0
      %v2614 = vadd.f32 0.0, %v2613
      %v2615 = vpop.f32.mrf.mxu0
      %v2616 = vadd.f32 0.0, %v2615
      %2617 = vmatmul.bf16.gmra.mxu0 %v1148
      %v2618 = vpop.f32.mrf.mxu0
      %v2619 = vadd.f32 0.0, %v2618
      %v2620 = vpop.f32.mrf.mxu0
      %v2621 = vadd.f32 0.0, %v2620
      %2622 = vmatmul.bf16.gmra.mxu0 %v1149
      %v2623 = vpop.f32.mrf.mxu0
      %v2624 = vadd.f32 0.0, %v2623
      %v2625 = vpop.f32.mrf.mxu0
      %v2626 = vadd.f32 0.0, %v2625
      %2627 = vmatmul.bf16.gmra.mxu0 %v1150
      %v2628 = vpop.f32.mrf.mxu0
      %v2629 = vadd.f32 0.0, %v2628
      %v2630 = vpop.f32.mrf.mxu0
      %v2631 = vadd.f32 0.0, %v2630
      %2632 = vmatmul.bf16.gmra.mxu0 %v1151
      %v2633 = vpop.f32.mrf.mxu0
      %v2634 = vadd.f32 0.0, %v2633
      %v2635 = vpop.f32.mrf.mxu0
      %v2636 = vadd.f32 0.0, %v2635
      %2637 = vmatmul.bf16.gmra.mxu0 %v1152
      %v2638 = vpop.f32.mrf.mxu0
      %v2639 = vadd.f32 0.0, %v2638
      %v2640 = vpop.f32.mrf.mxu0
      %v2641 = vadd.f32 0.0, %v2640
      %2642 = vmatmul.bf16.gmra.mxu0 %v1153
      %v2643 = vpop.f32.mrf.mxu0
      %v2644 = vadd.f32 0.0, %v2643
      %v2645 = vpop.f32.mrf.mxu0
      %v2646 = vadd.f32 0.0, %v2645
      %2647 = vmatmul.bf16.gmra.mxu0 %v1154
      %v2648 = vpop.f32.mrf.mxu0
      %v2649 = vadd.f32 0.0, %v2648
      %v2650 = vpop.f32.mrf.mxu0
      %v2651 = vadd.f32 0.0, %v2650
      %2652 = vmatmul.bf16.gmra.mxu0 %v1155
      %v2653 = vpop.f32.mrf.mxu0
      %v2654 = vadd.f32 0.0, %v2653
      %v2655 = vpop.f32.mrf.mxu0
      %v2656 = vadd.f32 0.0, %v2655
      %2657 = vmatmul.bf16.gmra.mxu0 %v1156
      %v2658 = vpop.f32.mrf.mxu0
      %v2659 = vadd.f32 0.0, %v2658
      %v2660 = vpop.f32.mrf.mxu0
      %v2661 = vadd.f32 0.0, %v2660
      %2662 = vmatmul.bf16.gmra.mxu0 %v1157
      %v2663 = vpop.f32.mrf.mxu0
      %v2664 = vadd.f32 0.0, %v2663
      %v2665 = vpop.f32.mrf.mxu0
      %v2666 = vadd.f32 0.0, %v2665
      %2667 = vmatmul.bf16.gmra.mxu0 %v1158
      %v2668 = vpop.f32.mrf.mxu0
      %v2669 = vadd.f32 0.0, %v2668
      %v2670 = vpop.f32.mrf.mxu0
      %v2671 = vadd.f32 0.0, %v2670
      %2672 = vmatmul.bf16.gmra.mxu0 %v1159
      %v2673 = vpop.f32.mrf.mxu0
      %v2674 = vadd.f32 0.0, %v2673
      %v2675 = vpop.f32.mrf.mxu0
      %v2676 = vadd.f32 0.0, %v2675
      %2677 = vmatmul.bf16.gmra.mxu0 %v1160
      %v2678 = vpop.f32.mrf.mxu0
      %v2679 = vadd.f32 0.0, %v2678
      %v2680 = vpop.f32.mrf.mxu0
      %v2681 = vadd.f32 0.0, %v2680
      %2682 = vmatmul.bf16.gmra.mxu0 %v1960
      %v2683 = vpop.f32.mrf.mxu0
      %v2684 = vadd.f32 0.0, %v2683
      %v2685 = vpop.f32.mrf.mxu0
      %v2686 = vadd.f32 0.0, %v2685
      %2687 = vmatmul.bf16.gmra.mxu0 %v2538
      %v2688 = vpop.f32.mrf.mxu0
      %v2689 = vadd.f32 0.0, %v2688
      %v2690 = vpop.f32.mrf.mxu0
      %v2691 = vadd.f32 0.0, %v2690
      %2692 = vdwg.mxu0
      %v2693 = vadd.f32 %v2506, %v2614
      %v2694 = vadd.f32 %v2507, %v2616
      %v2695 = vadd.f32 %v2508, %v2619
      %v2696 = vadd.f32 %v2509, %v2621
      %v2697 = vadd.f32 %v2510, %v2624
      %v2698 = vadd.f32 %v2511, %v2626
      %v2699 = vadd.f32 %v2512, %v2629
      %v2700 = vadd.f32 %v2513, %v2631
      %v2701 = vadd.f32 %v2514, %v2634
      %v2702 = vadd.f32 %v2515, %v2636
      %v2703 = vadd.f32 %v2516, %v2639
      %v2704 = vadd.f32 %v2517, %v2641
      %v2705 = vadd.f32 %v2518, %v2644
      %v2706 = vadd.f32 %v2519, %v2646
      %v2707 = vadd.f32 %v2520, %v2649
      %v2708 = vadd.f32 %v2521, %v2651
      %v2709 = vadd.f32 %v2522, %v2654
      %v2710 = vadd.f32 %v2523, %v2656
      %v2711 = vadd.f32 %v2524, %v2659
      %v2712 = vadd.f32 %v2525, %v2661
      %v2713 = vadd.f32 %v2526, %v2664
      %v2714 = vadd.f32 %v2527, %v2666
      %v2715 = vadd.f32 %v2528, %v2669
      %v2716 = vadd.f32 %v2529, %v2671
      %v2717 = vadd.f32 %v2530, %v2674
      %v2718 = vadd.f32 %v2531, %v2676
      %v2719 = vadd.f32 %v2532, %v2679
      %v2720 = vadd.f32 %v2533, %v2681
      %v2721 = vadd.f32 %v2534, %v2684
      %v2722 = vadd.f32 %v2535, %v2686
      %v2723 = vadd.f32 %v2536, %v2689
      %v2724 = vadd.f32 %v2537, %v2691
      %v2728 = vrot.slane %v1142, 1
      %v2729 = vrot.slane %v1143, 1
      %v2730 = vsel %vm1225, %v2728, %v2729
      %v2731 = vrot.slane %v1144, 1
      %v2732 = vsel %vm1225, %v2729, %v2731
      %v2735 = vpack.c.bf16 %v2732, %v2730
      %s2736 = scalar_lea.vmem %s1, 448
      %v2737 = vld [vmem:[%s2736] sm:$0xf]
      %v2738 = vld [vmem:[%s2736 + $0x4] sm:$0xf]
      %v2739 = vld [vmem:[%s2736 + $0x8] sm:$0xf]
      %v2740 = vld [vmem:[%s2736 + $0xc] sm:$0xf]
      %v2741 = vld [vmem:[%s2736 + $0x10] sm:$0xf]
      %v2742 = vld [vmem:[%s2736 + $0x14] sm:$0xf]
      %v2743 = vld [vmem:[%s2736 + $0x18] sm:$0xf]
      %v2744 = vld [vmem:[%s2736 + $0x1c] sm:$0xf]
      %v2745 = vld [vmem:[%s2736 + $0x20] sm:$0xf]
      %v2746 = vld [vmem:[%s2736 + $0x24] sm:$0xf]
      %v2747 = vld [vmem:[%s2736 + $0x28] sm:$0xf]
      %v2748 = vld [vmem:[%s2736 + $0x2c] sm:$0xf]
      %v2749 = vld [vmem:[%s2736 + $0x30] sm:$0xf]
      %v2750 = vld [vmem:[%s2736 + $0x34] sm:$0xf]
      %v2751 = vld [vmem:[%s2736 + $0x38] sm:$0xf]
      %v2752 = vld [vmem:[%s2736 + $0x3c] sm:$0xf]
      %v2769 = vunpack.c.l.b16 %v2737
      %v2770 = vunpack.c.l.b16 %v2738
      %v2771 = vunpack.c.l.b16 %v2739
      %v2772 = vunpack.c.l.b16 %v2740
      %v2773 = vunpack.c.l.b16 %v2741
      %v2774 = vunpack.c.l.b16 %v2742
      %v2775 = vunpack.c.l.b16 %v2743
      %v2776 = vunpack.c.l.b16 %v2744
      %v2777 = vunpack.c.l.b16 %v2745
      %v2778 = vunpack.c.l.b16 %v2746
      %v2779 = vunpack.c.l.b16 %v2747
      %v2780 = vunpack.c.l.b16 %v2748
      %v2781 = vunpack.c.l.b16 %v2749
      %v2782 = vunpack.c.l.b16 %v2750
      %v2783 = vunpack.c.l.b16 %v2751
      %v2784 = vunpack.c.l.b16 %v2752
      %v2785 = vpack.c.b16 %v2770, %v2769
      %v2786 = vpack.c.b16 %v2772, %v2771
      %v2787 = vpack.c.b16 %v2774, %v2773
      %v2788 = vpack.c.b16 %v2776, %v2775
      %v2789 = vpack.c.b16 %v2778, %v2777
      %v2790 = vpack.c.b16 %v2780, %v2779
      %v2791 = vpack.c.b16 %v2782, %v2781
      %v2792 = vpack.c.b16 %v2784, %v2783
      %2801 = vmatpush.bf16.msra.mxu0 %v2792
      %2802 = vmatpush.bf16.msra.mxu0 %v2791
      %2803 = vmatpush.bf16.msra.mxu0 %v2790
      %2804 = vmatpush.bf16.msra.mxu0 %v2789
      %2805 = vmatpush.bf16.msra.mxu0 %v2788
      %2806 = vmatpush.bf16.msra.mxu0 %v2787
      %2807 = vmatpush.bf16.msra.mxu0 %v2786
      %2808 = vmatpush.bf16.msra.mxu0 %v2785
      %2809 = vmatmul.bf16.gmra.mxu0 %v1340
      %v2810 = vpop.f32.mrf.mxu0
      %v2811 = vadd.f32 0.0, %v2810
      %v2812 = vpop.f32.mrf.mxu0
      %v2813 = vadd.f32 0.0, %v2812
      %2814 = vmatmul.bf16.gmra.mxu0 %v1341
      %v2815 = vpop.f32.mrf.mxu0
      %v2816 = vadd.f32 0.0, %v2815
      %v2817 = vpop.f32.mrf.mxu0
      %v2818 = vadd.f32 0.0, %v2817
      %2819 = vmatmul.bf16.gmra.mxu0 %v1342
      %v2820 = vpop.f32.mrf.mxu0
      %v2821 = vadd.f32 0.0, %v2820
      %v2822 = vpop.f32.mrf.mxu0
      %v2823 = vadd.f32 0.0, %v2822
      %2824 = vmatmul.bf16.gmra.mxu0 %v1343
      %v2825 = vpop.f32.mrf.mxu0
      %v2826 = vadd.f32 0.0, %v2825
      %v2827 = vpop.f32.mrf.mxu0
      %v2828 = vadd.f32 0.0, %v2827
      %2829 = vmatmul.bf16.gmra.mxu0 %v1344
      %v2830 = vpop.f32.mrf.mxu0
      %v2831 = vadd.f32 0.0, %v2830
      %v2832 = vpop.f32.mrf.mxu0
      %v2833 = vadd.f32 0.0, %v2832
      %2834 = vmatmul.bf16.gmra.mxu0 %v1345
      %v2835 = vpop.f32.mrf.mxu0
      %v2836 = vadd.f32 0.0, %v2835
      %v2837 = vpop.f32.mrf.mxu0
      %v2838 = vadd.f32 0.0, %v2837
      %2839 = vmatmul.bf16.gmra.mxu0 %v1346
      %v2840 = vpop.f32.mrf.mxu0
      %v2841 = vadd.f32 0.0, %v2840
      %v2842 = vpop.f32.mrf.mxu0
      %v2843 = vadd.f32 0.0, %v2842
      %2844 = vmatmul.bf16.gmra.mxu0 %v1347
      %v2845 = vpop.f32.mrf.mxu0
      %v2846 = vadd.f32 0.0, %v2845
      %v2847 = vpop.f32.mrf.mxu0
      %v2848 = vadd.f32 0.0, %v2847
      %2849 = vmatmul.bf16.gmra.mxu0 %v1348
      %v2850 = vpop.f32.mrf.mxu0
      %v2851 = vadd.f32 0.0, %v2850
      %v2852 = vpop.f32.mrf.mxu0
      %v2853 = vadd.f32 0.0, %v2852
      %2854 = vmatmul.bf16.gmra.mxu0 %v1349
      %v2855 = vpop.f32.mrf.mxu0
      %v2856 = vadd.f32 0.0, %v2855
      %v2857 = vpop.f32.mrf.mxu0
      %v2858 = vadd.f32 0.0, %v2857
      %2859 = vmatmul.bf16.gmra.mxu0 %v1350
      %v2860 = vpop.f32.mrf.mxu0
      %v2861 = vadd.f32 0.0, %v2860
      %v2862 = vpop.f32.mrf.mxu0
      %v2863 = vadd.f32 0.0, %v2862
      %2864 = vmatmul.bf16.gmra.mxu0 %v1351
      %v2865 = vpop.f32.mrf.mxu0
      %v2866 = vadd.f32 0.0, %v2865
      %v2867 = vpop.f32.mrf.mxu0
      %v2868 = vadd.f32 0.0, %v2867
      %2869 = vmatmul.bf16.gmra.mxu0 %v1352
      %v2870 = vpop.f32.mrf.mxu0
      %v2871 = vadd.f32 0.0, %v2870
      %v2872 = vpop.f32.mrf.mxu0
      %v2873 = vadd.f32 0.0, %v2872
      %2874 = vmatmul.bf16.gmra.mxu0 %v1353
      %v2875 = vpop.f32.mrf.mxu0
      %v2876 = vadd.f32 0.0, %v2875
      %v2877 = vpop.f32.mrf.mxu0
      %v2878 = vadd.f32 0.0, %v2877
      %2879 = vmatmul.bf16.gmra.mxu0 %v2157
      %v2880 = vpop.f32.mrf.mxu0
      %v2881 = vadd.f32 0.0, %v2880
      %v2882 = vpop.f32.mrf.mxu0
      %v2883 = vadd.f32 0.0, %v2882
      %2884 = vmatmul.bf16.gmra.mxu0 %v2735
      %v2885 = vpop.f32.mrf.mxu0
      %v2886 = vadd.f32 0.0, %v2885
      %v2887 = vpop.f32.mrf.mxu0
      %v2888 = vadd.f32 0.0, %v2887
      %2889 = vdwg.mxu0
      %v2890 = vadd.f32 %v2693, %v2811
      %v2891 = vadd.f32 %v2694, %v2813
      %v2892 = vadd.f32 %v2695, %v2816
      %v2893 = vadd.f32 %v2696, %v2818
      %v2894 = vadd.f32 %v2697, %v2821
      %v2895 = vadd.f32 %v2698, %v2823
      %v2896 = vadd.f32 %v2699, %v2826
      %v2897 = vadd.f32 %v2700, %v2828
      %v2898 = vadd.f32 %v2701, %v2831
      %v2899 = vadd.f32 %v2702, %v2833
      %v2900 = vadd.f32 %v2703, %v2836
      %v2901 = vadd.f32 %v2704, %v2838
      %v2902 = vadd.f32 %v2705, %v2841
      %v2903 = vadd.f32 %v2706, %v2843
      %v2904 = vadd.f32 %v2707, %v2846
      %v2905 = vadd.f32 %v2708, %v2848
      %v2906 = vadd.f32 %v2709, %v2851
      %v2907 = vadd.f32 %v2710, %v2853
      %v2908 = vadd.f32 %v2711, %v2856
      %v2909 = vadd.f32 %v2712, %v2858
      %v2910 = vadd.f32 %v2713, %v2861
      %v2911 = vadd.f32 %v2714, %v2863
      %v2912 = vadd.f32 %v2715, %v2866
      %v2913 = vadd.f32 %v2716, %v2868
      %v2914 = vadd.f32 %v2717, %v2871
      %v2915 = vadd.f32 %v2718, %v2873
      %v2916 = vadd.f32 %v2719, %v2876
      %v2917 = vadd.f32 %v2720, %v2878
      %v2918 = vadd.f32 %v2721, %v2881
      %v2919 = vadd.f32 %v2722, %v2883
      %v2920 = vadd.f32 %v2723, %v2886
      %v2921 = vadd.f32 %v2724, %v2888
      %v2922 = vrot.slane %v1142, 2
      %v2923 = vrot.slane %v1143, 2
      %v2924 = vsel %vm1645, %v2922, %v2923
      %v2925 = vrot.slane %v1144, 2
      %v2926 = vsel %vm1645, %v2923, %v2925
      %v2929 = vpack.c.bf16 %v2926, %v2924
      %s2930 = scalar_lea.vmem %s1, 512
      %v2931 = vld [vmem:[%s2930] sm:$0xf]
      %v2932 = vld [vmem:[%s2930 + $0x4] sm:$0xf]
      %v2933 = vld [vmem:[%s2930 + $0x8] sm:$0xf]
      %v2934 = vld [vmem:[%s2930 + $0xc] sm:$0xf]
      %v2935 = vld [vmem:[%s2930 + $0x10] sm:$0xf]
      %v2936 = vld [vmem:[%s2930 + $0x14] sm:$0xf]
      %v2937 = vld [vmem:[%s2930 + $0x18] sm:$0xf]
      %v2938 = vld [vmem:[%s2930 + $0x1c] sm:$0xf]
      %v2939 = vld [vmem:[%s2930 + $0x20] sm:$0xf]
      %v2940 = vld [vmem:[%s2930 + $0x24] sm:$0xf]
      %v2941 = vld [vmem:[%s2930 + $0x28] sm:$0xf]
      %v2942 = vld [vmem:[%s2930 + $0x2c] sm:$0xf]
      %v2943 = vld [vmem:[%s2930 + $0x30] sm:$0xf]
      %v2944 = vld [vmem:[%s2930 + $0x34] sm:$0xf]
      %v2945 = vld [vmem:[%s2930 + $0x38] sm:$0xf]
      %v2946 = vld [vmem:[%s2930 + $0x3c] sm:$0xf]
      %v2963 = vunpack.c.l.b16 %v2931
      %v2964 = vunpack.c.l.b16 %v2932
      %v2965 = vunpack.c.l.b16 %v2933
      %v2966 = vunpack.c.l.b16 %v2934
      %v2967 = vunpack.c.l.b16 %v2935
      %v2968 = vunpack.c.l.b16 %v2936
      %v2969 = vunpack.c.l.b16 %v2937
      %v2970 = vunpack.c.l.b16 %v2938
      %v2971 = vunpack.c.l.b16 %v2939
      %v2972 = vunpack.c.l.b16 %v2940
      %v2973 = vunpack.c.l.b16 %v2941
      %v2974 = vunpack.c.l.b16 %v2942
      %v2975 = vunpack.c.l.b16 %v2943
      %v2976 = vunpack.c.l.b16 %v2944
      %v2977 = vunpack.c.l.b16 %v2945
      %v2978 = vunpack.c.l.b16 %v2946
      %v2979 = vpack.c.b16 %v2964, %v2963
      %v2980 = vpack.c.b16 %v2966, %v2965
      %v2981 = vpack.c.b16 %v2968, %v2967
      %v2982 = vpack.c.b16 %v2970, %v2969
      %v2983 = vpack.c.b16 %v2972, %v2971
      %v2984 = vpack.c.b16 %v2974, %v2973
      %v2985 = vpack.c.b16 %v2976, %v2975
      %v2986 = vpack.c.b16 %v2978, %v2977
      %2995 = vmatpush.bf16.msra.mxu0 %v2986
      %2996 = vmatpush.bf16.msra.mxu0 %v2985
      %2997 = vmatpush.bf16.msra.mxu0 %v2984
      %2998 = vmatpush.bf16.msra.mxu0 %v2983
      %2999 = vmatpush.bf16.msra.mxu0 %v2982
      %3000 = vmatpush.bf16.msra.mxu0 %v2981
      %3001 = vmatpush.bf16.msra.mxu0 %v2980
      %3002 = vmatpush.bf16.msra.mxu0 %v2979
      %3003 = vmatmul.bf16.gmra.mxu0 %v1760
      %v3004 = vpop.f32.mrf.mxu0
      %v3005 = vadd.f32 0.0, %v3004
      %v3006 = vpop.f32.mrf.mxu0
      %v3007 = vadd.f32 0.0, %v3006
      %3008 = vmatmul.bf16.gmra.mxu0 %v1761
      %v3009 = vpop.f32.mrf.mxu0
      %v3010 = vadd.f32 0.0, %v3009
      %v3011 = vpop.f32.mrf.mxu0
      %v3012 = vadd.f32 0.0, %v3011
      %3013 = vmatmul.bf16.gmra.mxu0 %v1762
      %v3014 = vpop.f32.mrf.mxu0
      %v3015 = vadd.f32 0.0, %v3014
      %v3016 = vpop.f32.mrf.mxu0
      %v3017 = vadd.f32 0.0, %v3016
      %3018 = vmatmul.bf16.gmra.mxu0 %v1763
      %v3019 = vpop.f32.mrf.mxu0
      %v3020 = vadd.f32 0.0, %v3019
      %v3021 = vpop.f32.mrf.mxu0
      %v3022 = vadd.f32 0.0, %v3021
      %3023 = vmatmul.bf16.gmra.mxu0 %v1764
      %v3024 = vpop.f32.mrf.mxu0
      %v3025 = vadd.f32 0.0, %v3024
      %v3026 = vpop.f32.mrf.mxu0
      %v3027 = vadd.f32 0.0, %v3026
      %3028 = vmatmul.bf16.gmra.mxu0 %v1765
      %v3029 = vpop.f32.mrf.mxu0
      %v3030 = vadd.f32 0.0, %v3029
      %v3031 = vpop.f32.mrf.mxu0
      %v3032 = vadd.f32 0.0, %v3031
      %3033 = vmatmul.bf16.gmra.mxu0 %v1766
      %v3034 = vpop.f32.mrf.mxu0
      %v3035 = vadd.f32 0.0, %v3034
      %v3036 = vpop.f32.mrf.mxu0
      %v3037 = vadd.f32 0.0, %v3036
      %3038 = vmatmul.bf16.gmra.mxu0 %v1767
      %v3039 = vpop.f32.mrf.mxu0
      %v3040 = vadd.f32 0.0, %v3039
      %v3041 = vpop.f32.mrf.mxu0
      %v3042 = vadd.f32 0.0, %v3041
      %3043 = vmatmul.bf16.gmra.mxu0 %v1768
      %v3044 = vpop.f32.mrf.mxu0
      %v3045 = vadd.f32 0.0, %v3044
      %v3046 = vpop.f32.mrf.mxu0
      %v3047 = vadd.f32 0.0, %v3046
      %3048 = vmatmul.bf16.gmra.mxu0 %v1769
      %v3049 = vpop.f32.mrf.mxu0
      %v3050 = vadd.f32 0.0, %v3049
      %v3051 = vpop.f32.mrf.mxu0
      %v3052 = vadd.f32 0.0, %v3051
      %3053 = vmatmul.bf16.gmra.mxu0 %v1770
      %v3054 = vpop.f32.mrf.mxu0
      %v3055 = vadd.f32 0.0, %v3054
      %v3056 = vpop.f32.mrf.mxu0
      %v3057 = vadd.f32 0.0, %v3056
      %3058 = vmatmul.bf16.gmra.mxu0 %v1771
      %v3059 = vpop.f32.mrf.mxu0
      %v3060 = vadd.f32 0.0, %v3059
      %v3061 = vpop.f32.mrf.mxu0
      %v3062 = vadd.f32 0.0, %v3061
      %3063 = vmatmul.bf16.gmra.mxu0 %v1772
      %v3064 = vpop.f32.mrf.mxu0
      %v3065 = vadd.f32 0.0, %v3064
      %v3066 = vpop.f32.mrf.mxu0
      %v3067 = vadd.f32 0.0, %v3066
      %3068 = vmatmul.bf16.gmra.mxu0 %v1773
      %v3069 = vpop.f32.mrf.mxu0
      %v3070 = vadd.f32 0.0, %v3069
      %v3071 = vpop.f32.mrf.mxu0
      %v3072 = vadd.f32 0.0, %v3071
      %3073 = vmatmul.bf16.gmra.mxu0 %v2351
      %v3074 = vpop.f32.mrf.mxu0
      %v3075 = vadd.f32 0.0, %v3074
      %v3076 = vpop.f32.mrf.mxu0
      %v3077 = vadd.f32 0.0, %v3076
      %3078 = vmatmul.bf16.gmra.mxu0 %v2929
      %v3079 = vpop.f32.mrf.mxu0
      %v3080 = vadd.f32 0.0, %v3079
      %v3081 = vpop.f32.mrf.mxu0
      %v3082 = vadd.f32 0.0, %v3081
      %3083 = vdwg.mxu0
      %v3084 = vadd.f32 %v2890, %v3005
      %v3085 = vadd.f32 %v2891, %v3007
      %v3086 = vadd.f32 %v2892, %v3010
      %v3087 = vadd.f32 %v2893, %v3012
      %v3088 = vadd.f32 %v2894, %v3015
      %v3089 = vadd.f32 %v2895, %v3017
      %v3090 = vadd.f32 %v2896, %v3020
      %v3091 = vadd.f32 %v2897, %v3022
      %v3092 = vadd.f32 %v2898, %v3025
      %v3093 = vadd.f32 %v2899, %v3027
      %v3094 = vadd.f32 %v2900, %v3030
      %v3095 = vadd.f32 %v2901, %v3032
      %v3096 = vadd.f32 %v2902, %v3035
      %v3097 = vadd.f32 %v2903, %v3037
      %v3098 = vadd.f32 %v2904, %v3040
      %v3099 = vadd.f32 %v2905, %v3042
      %v3100 = vadd.f32 %v2906, %v3045
      %v3101 = vadd.f32 %v2907, %v3047
      %v3102 = vadd.f32 %v2908, %v3050
      %v3103 = vadd.f32 %v2909, %v3052
      %v3104 = vadd.f32 %v2910, %v3055
      %v3105 = vadd.f32 %v2911, %v3057
      %v3106 = vadd.f32 %v2912, %v3060
      %v3107 = vadd.f32 %v2913, %v3062
      %v3108 = vadd.f32 %v2914, %v3065
      %v3109 = vadd.f32 %v2915, %v3067
      %v3110 = vadd.f32 %v2916, %v3070
      %v3111 = vadd.f32 %v2917, %v3072
      %v3112 = vadd.f32 %v2918, %v3075
      %v3113 = vadd.f32 %v2919, %v3077
      %v3114 = vadd.f32 %v2920, %v3080
      %v3115 = vadd.f32 %v2921, %v3082
      %3116 = vst [vmem:[%s214] sm:$0xff] %v3084
      %3117 = vst [vmem:[%s214 + $0x8] sm:$0xff] %v3085
      %3118 = vst [vmem:[%s214 + $0x10] sm:$0xff] %v3086
      %3119 = vst [vmem:[%s214 + $0x18] sm:$0xff] %v3087
      %3120 = vst [vmem:[%s214 + $0x20] sm:$0xff] %v3088
      %3121 = vst [vmem:[%s214 + $0x28] sm:$0xff] %v3089
      %3122 = vst [vmem:[%s214 + $0x30] sm:$0xff] %v3090
      %3123 = vst [vmem:[%s214 + $0x38] sm:$0xff] %v3091
      %3124 = vst [vmem:[%s214 + $0x40] sm:$0xff] %v3092
      %3125 = vst [vmem:[%s214 + $0x48] sm:$0xff] %v3093
      %3126 = vst [vmem:[%s214 + $0x50] sm:$0xff] %v3094
      %3127 = vst [vmem:[%s214 + $0x58] sm:$0xff] %v3095
      %3128 = vst [vmem:[%s214 + $0x60] sm:$0xff] %v3096
      %3129 = vst [vmem:[%s214 + $0x68] sm:$0xff] %v3097
      %3130 = vst [vmem:[%s214 + $0x70] sm:$0xff] %v3098
      %3131 = vst [vmem:[%s214 + $0x78] sm:$0xff] %v3099
      %3132 = vst [vmem:[%s214 + $0x80] sm:$0xff] %v3100
      %3133 = vst [vmem:[%s214 + $0x88] sm:$0xff] %v3101
      %3134 = vst [vmem:[%s214 + $0x90] sm:$0xff] %v3102
      %3135 = vst [vmem:[%s214 + $0x98] sm:$0xff] %v3103
      %3136 = vst [vmem:[%s214 + $0xa0] sm:$0xff] %v3104
      %3137 = vst [vmem:[%s214 + $0xa8] sm:$0xff] %v3105
      %3138 = vst [vmem:[%s214 + $0xb0] sm:$0xff] %v3106
      %3139 = vst [vmem:[%s214 + $0xb8] sm:$0xff] %v3107
      %3140 = vst [vmem:[%s214 + $0xc0] sm:$0xff] %v3108
      %3141 = vst [vmem:[%s214 + $0xc8] sm:$0xff] %v3109
      %3142 = vst [vmem:[%s214 + $0xd0] sm:$0xff] %v3110
      %3143 = vst [vmem:[%s214 + $0xd8] sm:$0xff] %v3111
      %3144 = vst [vmem:[%s214 + $0xe0] sm:$0xff] %v3112
      %3145 = vst [vmem:[%s214 + $0xe8] sm:$0xff] %v3113
      %3146 = vst [vmem:[%s214 + $0xf0] sm:$0xff] %v3114
      %3147 = vst [vmem:[%s214 + $0xf8] sm:$0xff] %v3115
      %v3148 = vadd.f32 %v3084, %v3085
      %v3149 = vadd.f32 %v3148, %v3086
      %v3150 = vadd.f32 %v3149, %v3087
      %v3151 = vadd.f32 %v3150, %v3088
      %v3152 = vadd.f32 %v3151, %v3089
      %v3153 = vadd.f32 %v3152, %v3090
      %v3154 = vadd.f32 %v3153, %v3091
      %v3155 = vadd.f32 %v3154, %v3092
      %v3156 = vadd.f32 %v3155, %v3093
      %v3157 = vadd.f32 %v3156, %v3094
      %v3158 = vadd.f32 %v3157, %v3095
      %v3159 = vadd.f32 %v3158, %v3096
      %v3160 = vadd.f32 %v3159, %v3097
      %v3161 = vadd.f32 %v3160, %v3098
      %v3162 = vadd.f32 %v3161, %v3099
      %v3163 = vadd.f32 %v3162, %v3100
      %v3164 = vadd.f32 %v3163, %v3101
      %v3165 = vadd.f32 %v3164, %v3102
      %v3166 = vadd.f32 %v3165, %v3103
      %v3167 = vadd.f32 %v3166, %v3104
      %v3168 = vadd.f32 %v3167, %v3105
      %v3169 = vadd.f32 %v3168, %v3106
      %v3170 = vadd.f32 %v3169, %v3107
      %v3171 = vadd.f32 %v3170, %v3108
      %v3172 = vadd.f32 %v3171, %v3109
      %v3173 = vadd.f32 %v3172, %v3110
      %v3174 = vadd.f32 %v3173, %v3111
      %v3175 = vadd.f32 %v3174, %v3112
      %v3176 = vadd.f32 %v3175, %v3113
      %v3177 = vadd.f32 %v3176, %v3114
      %v3178 = vadd.f32 %v3177, %v3115
      %v3179 = vrot.slane %v3178, 4
      %v3180 = vadd.f32 %v3178, %v3179
      %v3181 = vrot.slane %v3180, 2
      %v3182 = vadd.f32 %v3180, %v3181
      %v3183 = vrot.slane %v3182, 1
      %v3184 = vadd.f32 %v3182, %v3183
      %v3185 = vmul.f32 %v3084, %v3084
      %v3186 = vmul.f32 %v3085, %v3085
      %v3187 = vmul.f32 %v3086, %v3086
      %v3188 = vmul.f32 %v3087, %v3087
      %v3189 = vmul.f32 %v3088, %v3088
      %v3190 = vmul.f32 %v3089, %v3089
      %v3191 = vmul.f32 %v3090, %v3090
      %v3192 = vmul.f32 %v3091, %v3091
      %v3193 = vmul.f32 %v3092, %v3092
      %v3194 = vmul.f32 %v3093, %v3093
      %v3195 = vmul.f32 %v3094, %v3094
      %v3196 = vmul.f32 %v3095, %v3095
      %v3197 = vmul.f32 %v3096, %v3096
      %v3198 = vmul.f32 %v3097, %v3097
      %v3199 = vmul.f32 %v3098, %v3098
      %v3200 = vmul.f32 %v3099, %v3099
      %v3201 = vmul.f32 %v3100, %v3100
      %v3202 = vmul.f32 %v3101, %v3101
      %v3203 = vmul.f32 %v3102, %v3102
      %v3204 = vmul.f32 %v3103, %v3103
      %v3205 = vmul.f32 %v3104, %v3104
      %v3206 = vmul.f32 %v3105, %v3105
      %v3207 = vmul.f32 %v3106, %v3106
      %v3208 = vmul.f32 %v3107, %v3107
      %v3209 = vmul.f32 %v3108, %v3108
      %v3210 = vmul.f32 %v3109, %v3109
      %v3211 = vmul.f32 %v3110, %v3110
      %v3212 = vmul.f32 %v3111, %v3111
      %v3213 = vmul.f32 %v3112, %v3112
      %v3214 = vmul.f32 %v3113, %v3113
      %v3215 = vmul.f32 %v3114, %v3114
      %v3216 = vmul.f32 %v3115, %v3115
      %v3217 = vadd.f32 %v3185, %v3186
      %v3218 = vadd.f32 %v3217, %v3187
      %v3219 = vadd.f32 %v3218, %v3188
      %v3220 = vadd.f32 %v3219, %v3189
      %v3221 = vadd.f32 %v3220, %v3190
      %v3222 = vadd.f32 %v3221, %v3191
      %v3223 = vadd.f32 %v3222, %v3192
      %v3224 = vadd.f32 %v3223, %v3193
      %v3225 = vadd.f32 %v3224, %v3194
      %v3226 = vadd.f32 %v3225, %v3195
      %v3227 = vadd.f32 %v3226, %v3196
      %v3228 = vadd.f32 %v3227, %v3197
      %v3229 = vadd.f32 %v3228, %v3198
      %v3230 = vadd.f32 %v3229, %v3199
      %v3231 = vadd.f32 %v3230, %v3200
      %v3232 = vadd.f32 %v3231, %v3201
      %v3233 = vadd.f32 %v3232, %v3202
      %v3234 = vadd.f32 %v3233, %v3203
      %v3235 = vadd.f32 %v3234, %v3204
      %v3236 = vadd.f32 %v3235, %v3205
      %v3237 = vadd.f32 %v3236, %v3206
      %v3238 = vadd.f32 %v3237, %v3207
      %v3239 = vadd.f32 %v3238, %v3208
      %v3240 = vadd.f32 %v3239, %v3209
      %v3241 = vadd.f32 %v3240, %v3210
      %v3242 = vadd.f32 %v3241, %v3211
      %v3243 = vadd.f32 %v3242, %v3212
      %v3244 = vadd.f32 %v3243, %v3213
      %v3245 = vadd.f32 %v3244, %v3214
      %v3246 = vadd.f32 %v3245, %v3215
      %v3247 = vadd.f32 %v3246, %v3216
      %v3248 = vrot.slane %v3247, 4
      %v3249 = vadd.f32 %v3247, %v3248
      %v3250 = vrot.slane %v3249, 2
      %v3251 = vadd.f32 %v3249, %v3250
      %v3252 = vrot.slane %v3251, 1
      %v3253 = vadd.f32 %v3251, %v3252
      %vm3254 = vcmask 1040384
      %v3255 = vsel %vm3254, %v3184, %v3253
      %3256 = vst [vmem:[%s222] sm:$0x3] %v3255
      %s3257 = smul.u32 16, %s22
      %p3258 = scmp.lt.s32.totalorder %s21, 1
      %s3259 = scalar_select %p3258, %s21, 1
      %p3260 = scmp.lt.s32.totalorder %s3257, 15
      %s3261 = scalar_select %p3260, %s3257, 15
      %s3262 = smul.addr %s3261, 2
      %s3263 = smul.addr %s3259, 32
      %s3264 = sadd.s32 %s3262, %s3263
      %s3265 = smul.addr %s3264, 8
      %s3266 = scalar_lea.vmem %s4, %s3265
      %p3267 = scmp.lt.s32.totalorder %s21, 1
      %s3268 = scalar_select %p3267, %s21, 1
      %p3269 = scmp.lt.s32.totalorder %s22, 0
      %s3270 = scalar_select %p3269, %s22, 0
      %s3271 = sadd.s32 %s3270, %s3268
      %s3272 = smul.addr %s3271, 2
      %s3273 = scalar_lea.vmem %s5, %s3272
      // Predicated region
      $region179: #{double_conv.4} parent=31 // pred_check
        %p3274 = pneg %p112
      $region180: #{double_conv.4} parent=31 // pred_check_branch
        %3276 = sbr.rel (%p3274) target = $region182
      $region181: #{double_conv.4} parent=31 // pred_region
        %s3277 = smul.u32 16, %s22
      $region182: #{double_conv.4} parent=31 // pred_fallthru
        _
      // Predicated region
      $region183: #{double_conv.4} parent=31 // pred_check
        %p3278 = pneg %p140
      $region184: #{double_conv.4} parent=31 // pred_check_branch
        %3280 = sbr.rel (%p3278) target = $region186
      $region185: #{double_conv.4} parent=31 // pred_region
        _
      $region186: #{double_conv.4} parent=31 // pred_fallthru
        _
    $region32: #{double_conv.4} parent=5 // pred_fallthru
      _
    %p3281 = scmp.le.s32.totalorder 2, %s12
    // Predicated region
    $region187: #{double_conv.4} parent=5 // pred_check
      %p3282 = pneg %p3281
    $region188: #{double_conv.4} parent=5 // pred_check_branch
      %3284 = sbr.rel (%p3282) target = $region190
    $region189: #{double_conv.4} parent=5 // pred_region
      %s3285 = ssub.s32 %s12, 2
      // Predicated region
      $region191: #{double_conv.4} parent=189 // pred_check
        %p3286 = pneg %p118
      $region192: #{double_conv.4} parent=189 // pred_check_branch
        %3288 = sbr.rel (%p3286) target = $region194
      $region193: #{double_conv.4} parent=189 // pred_region
        %s3289 = smul.u32 16, %s24
        %p3290 = scmp.lt.s32.totalorder %s23, 1
        %s3291 = scalar_select %p3290, %s23, 1
        %p3292 = scmp.lt.s32.totalorder %s3289, 15
        %s3293 = scalar_select %p3292, %s3289, 15
        %s3294 = smul.addr %s3293, 2
        %s3295 = smul.addr %s3291, 32
        %s3296 = sadd.s32 %s3294, %s3295
        %s3297 = smul.addr %s3296, 8
        %s3298 = scalar_lea.vmem %s4, %s3297
      $region194: #{double_conv.4} parent=189 // pred_fallthru
        _
      // Predicated region
      $region195: #{double_conv.4} parent=189 // pred_check
        %p3299 = pneg %p146
      $region196: #{double_conv.4} parent=189 // pred_check_branch
        %3301 = sbr.rel (%p3299) target = $region198
      $region197: #{double_conv.4} parent=189 // pred_region
        %p3302 = scmp.lt.s32.totalorder %s23, 1
        %s3303 = scalar_select %p3302, %s23, 1
        %p3304 = scmp.lt.s32.totalorder %s24, 0
        %s3305 = scalar_select %p3304, %s24, 0
        %s3306 = sadd.s32 %s3305, %s3303
        %s3307 = smul.addr %s3306, 2
        %s3308 = scalar_lea.vmem %s5, %s3307
      $region198: #{double_conv.4} parent=189 // pred_fallthru
        _
    $region190: #{double_conv.4} parent=5 // pred_fallthru
      _
  $region6: #{double_conv.4} parent=0 // loop_footer
    %s16 = sadd.s32 1, %s12
  $region7: #{double_conv.4} parent=0 // loop_footer_branch
    %11 = sbr.rel target = $region3
  $region8: #{double_conv.4} parent=0 // loop_exit
    _
  %3309 = vsyncmov [#allocation3]
  %s3310 = vpop.sfrf %3309
  %p3311 = scmp.eq.s32.totalorder %s3310, 0
  %p3312 = pneg %p3311
  %3314 = shalt.err (%p3312)
  %s3315 = scalar_lea.sflag [#allocation3], 1
  %3316 = vsyncmov %s3315
  %s3317 = vpop.sfrf %3316
  %p3318 = scmp.eq.s32.totalorder %s3317, 0
  %p3319 = pneg %p3318
  %3321 = shalt.err (%p3319)
  %s3322 = scalar_lea.sflag [#allocation3], 2
  %3323 = vsyncmov %s3322
  %s3324 = vpop.sfrf %3323
  %p3325 = scmp.eq.s32.totalorder %s3324, 0
  %p3326 = pneg %p3325
  %3328 = shalt.err (%p3326)
  %s3329 = scalar_lea.sflag [#allocation3], 3
  %3330 = vsyncmov %s3329
  %s3331 = vpop.sfrf %3330
  %p3332 = scmp.eq.s32.totalorder %s3331, 0
  %p3333 = pneg %p3332
  %3335 = shalt.err (%p3333)
  %s3336 = scalar_lea.sflag [#allocation3], 4
  %3337 = vsyncmov %s3336
  %s3338 = vpop.sfrf %3337
  %p3339 = scmp.eq.s32.totalorder %s3338, 0
  %p3340 = pneg %p3339
  %3342 = shalt.err (%p3340)
  %s3343 = scalar_lea.sflag [#allocation3], 5
  %3344 = vsyncmov %s3343
  %s3345 = vpop.sfrf %3344
  %p3346 = scmp.eq.s32.totalorder %s3345, 0
  %p3347 = pneg %p3346
  %3349 = shalt.err (%p3347)

</llo_original>
